<compile_context>
chip_gen: v6e
topology: v6e:2x2x1
jax: 0.10.0
libtpu: 0.0.40
codegen_flags: <defaults>
</compile_context>

<pallas_src>
import math
import jax
import jax.numpy as jnp
from jax.experimental import pallas as pl
from jax.experimental.pallas import tpu as pltpu

# ---------------- configuration ----------------
NUM_LAYERS = 2
D_MODEL = 32
N_HEAD = 4
HEAD_DIM = D_MODEL // N_HEAD
DIM_FF = 64
LN_EPS = 1e-5
_VEC_ROWS_PER_LAYER = 9   # bq, bkv, bo, b1, b2, ln1w, ln1b, ln2w, ln2b


def _layernorm(x, w, b):
    # E[x^2] - E[x]^2 form: the two lane reductions depend only on x and can
    # overlap on the XLU instead of serializing var behind mean.
    mean = jnp.mean(x, axis=-1, keepdims=True)
    mean_sq = jnp.mean(x * x, axis=-1, keepdims=True)
    var = mean_sq - mean * mean
    return (x - mean) * jax.lax.rsqrt(var + LN_EPS) * w + b


# ---------------- kernel ----------------
def encoder_kernel(src_ref, other_ref, wn_ref, ww_ref, vec_ref, o_ref):
    S, BB, D = src_ref.shape           # src block: (S, BB, D), seq-first
    T = other_ref.shape[0]             # other block: (T, BB, D)
    H, hd = N_HEAD, HEAD_DIM
    scale = 1.0 / math.sqrt(hd)

    vec = vec_ref[...]                                        # (9L+2, 2D) f32
    # keys/values source, cast once for the MXU
    src_bf = src_ref[...].reshape(S * BB, D).astype(jnp.bfloat16)
    out2d = other_ref[...].reshape(T * BB, D)                 # f32 residual stream, rows (t, b)

    for l in range(NUM_LAYERS):
        wn = wn_ref[l]            # (2D+F, D) bf16: rows [Wq^T ; Wo^T ; W2^T]
        ww = ww_ref[l]            # (2D, 2D)  bf16: rows [Wk^T|Wv^T ; W1^T]
        r = _VEC_ROWS_PER_LAYER * l
        bq = vec[r + 0:r + 1, :D]
        bkv = vec[r + 1:r + 2, :]
        bo = vec[r + 2:r + 3, :D]
        b1 = vec[r + 3:r + 4, :]
        b2 = vec[r + 4:r + 5, :D]
        ln1w, ln1b = vec[r + 5:r + 6, :D], vec[r + 6:r + 7, :D]
        ln2w, ln2b = vec[r + 7:r + 8, :D], vec[r + 8:r + 9, :D]

        # ---- multi-head cross attention (q = running output, k = v = src) ----
        q2d = jnp.dot(out2d.astype(jnp.bfloat16), wn[:D],
                      preferred_element_type=jnp.float32) + bq            # (T*BB, D)
        kv2d = jnp.dot(src_bf, ww[:D],
                       preferred_element_type=jnp.float32) + bkv          # (S*BB, 2D)
        # (key bias shifts every score row by a per-query constant -> softmax
        #  invariant; kept fused in the single bkv add for fidelity.)

        q4 = q2d.reshape(T, BB, H, hd)
        k4 = kv2d[:, :D].reshape(S, BB, H, hd)
        v4 = kv2d[:, D:].reshape(S, BB, H, hd)
        q_bh = jnp.transpose(q4, (1, 2, 0, 3)).reshape(BB * H, T, hd).astype(jnp.bfloat16)
        k_bh = jnp.transpose(k4, (1, 2, 0, 3)).reshape(BB * H, S, hd).astype(jnp.bfloat16)
        v_bh = jnp.transpose(v4, (1, 2, 0, 3)).reshape(BB * H, S, hd).astype(jnp.bfloat16)

        s = jnp.einsum('btd,bsd->bts', q_bh, k_bh,
                       preferred_element_type=jnp.float32) * scale        # (BB*H, T, S) f32
        s = s - jnp.max(s, axis=-1, keepdims=True)
        p = jnp.exp(s)
        p = p * pl.reciprocal(jnp.sum(p, axis=-1, keepdims=True), approx=True)
        o_bh = jnp.einsum('bts,bsd->btd', p.astype(jnp.bfloat16), v_bh,
                          preferred_element_type=jnp.float32)             # (BB*H, T, hd)

        # lane-concatenated heads -> single out-projection matmul
        o_tb = jnp.transpose(o_bh.reshape(BB, H, T, hd), (2, 0, 1, 3)).reshape(T * BB, D)
        attn = jnp.dot(o_tb.astype(jnp.bfloat16), wn[D:2 * D],
                       preferred_element_type=jnp.float32) + bo
        out2d = _layernorm(out2d + attn, ln1w, ln1b)

        # ---- feed forward ----
        h1 = jnp.dot(out2d.astype(jnp.bfloat16), ww[D:],
                     preferred_element_type=jnp.float32) + b1
        h1 = jnp.maximum(h1, 0.0)
        h2 = jnp.dot(h1.astype(jnp.bfloat16), wn[2 * D:],
                     preferred_element_type=jnp.float32) + b2
        out2d = _layernorm(out2d + h2, ln2w, ln2b)

    fr = _VEC_ROWS_PER_LAYER * NUM_LAYERS
    out2d = _layernorm(out2d, vec[fr:fr + 1, :D], vec[fr + 1:fr + 2, :D])
    o_ref[...] = out2d.reshape(T, BB, D)


# ---------------- host-side param packing (done ONCE, outside the hot path) ---
def prepare_params(p):
    """Pack the 18 PyTorch-layout tensors into 3 buffers (2 bf16 + 1 f32)."""
    L, D, F = NUM_LAYERS, D_MODEL, DIM_FF
    assert F == 2 * D, "weight packing below assumes dim_feedforward == 2*d_model"

    wqT = jnp.transpose(p["in_proj_w"][:, :D], (0, 2, 1))          # (L, D, D)
    wkT = jnp.transpose(p["in_proj_w"][:, D:2 * D], (0, 2, 1))     # (L, D, D)
    wvT = jnp.transpose(p["in_proj_w"][:, 2 * D:], (0, 2, 1))      # (L, D, D)
    wkv = jnp.concatenate([wkT, wvT], axis=-1)                     # (L, D, 2D)
    woT = jnp.transpose(p["out_proj_w"], (0, 2, 1))                # (L, D, D)
    w1T = jnp.transpose(p["lin1_w"], (0, 2, 1))                    # (L, D, F)
    w2T = jnp.transpose(p["lin2_w"], (0, 2, 1))                    # (L, F, D)

    # lane-width-D slab (rows: Wq^T | Wo^T | W2^T) and lane-width-2D slab
    wn = jnp.concatenate([wqT, woT, w2T], axis=1).astype(jnp.bfloat16)   # (L, 2D+F, D)
    ww = jnp.concatenate([wkv, w1T], axis=1).astype(jnp.bfloat16)        # (L, 2D, 2D)

    def pad_row(v):   # (D,) -> (2D,) zero-padded on the right
        return jnp.pad(v, (0, 2 * D - v.shape[-1]))

    rows = []
    for l in range(L):
        rows += [pad_row(p["in_proj_b"][l, :D]),      # bq
                 p["in_proj_b"][l, D:],               # bk||bv (2D)
                 pad_row(p["out_proj_b"][l]),         # bo
                 p["lin1_b"][l],                      # b1 (F == 2D)
                 pad_row(p["lin2_b"][l]),             # b2
                 pad_row(p["ln1_w"][l]), pad_row(p["ln1_b"][l]),
                 pad_row(p["ln2_w"][l]), pad_row(p["ln2_b"][l])]
    rows += [pad_row(p["final_norm_w"]), pad_row(p["final_norm_b"])]
    vec = jnp.stack(rows, axis=0).astype(jnp.float32)               # (9L+2, 2D)
    return {"wn": wn, "ww": ww, "vec": vec}


def _default_batch_block(B, T):
    """Fold the batch into grid=(1,) unless a 2-TC chip (v7x) has enough work."""
    kind = ""
    try:
        kind = jax.devices()[0].device_kind.lower()
    except Exception:
        pass
    two_tc = ("v7" in kind) or ("7x" in kind)
    if two_tc and B % 2 == 0 and (B // 2) % 8 == 0 and B * T >= 256:
        return B // 2
    return B


# ---------------- wrapper ----------------
def phrase_transformer_encoder(src, other_src, prepared, *, batch_block=None):
    """src: (S, B, D), other_src: (T, B, D) — seq-first like PyTorch.
    `prepared` is the output of prepare_params() (hoisted out of the hot path)."""
    S, B, D = src.shape
    T = other_src.shape[0]
    assert D == D_MODEL
    if batch_block is None:
        batch_block = _default_batch_block(B, T)
    assert B % batch_block == 0
    n_blocks = B // batch_block

    wn, ww, vec = prepared["wn"], prepared["ww"], prepared["vec"]

    def full_spec(a):
        nd = a.ndim
        return pl.BlockSpec(a.shape, lambda b, _nd=nd: (0,) * _nd)

    in_specs = [pl.BlockSpec((S, batch_block, D), lambda b: (0, b, 0)),
                pl.BlockSpec((T, batch_block, D), lambda b: (0, b, 0)),
                full_spec(wn), full_spec(ww), full_spec(vec)]

    flops = NUM_LAYERS * (
        2 * B * T * D * D            # q projection
        + 2 * B * S * D * (2 * D)    # fused kv projection
        + 2 * B * T * D * D          # out projection
        + 4 * B * T * S * D          # scores + attn @ V (all heads)
        + 4 * B * T * D * DIM_FF)    # FFN
    transcendentals = NUM_LAYERS * B * N_HEAD * T * S
    bytes_accessed = (4 * (src.size + other_src.size + B * T * D)
                      + 2 * (wn.size + ww.size) + 4 * vec.size)
    cost = pl.CostEstimate(flops=int(flops),
                           transcendentals=int(transcendentals),
                           bytes_accessed=int(bytes_accessed))

    return pl.pallas_call(
        encoder_kernel,
        out_shape=jax.ShapeDtypeStruct((T, B, D), jnp.float32),
        grid=(n_blocks,),
        in_specs=in_specs,
        out_specs=pl.BlockSpec((T, batch_block, D), lambda b: (0, b, 0)),
        compiler_params=pltpu.CompilerParams(
            dimension_semantics=("parallel",)),
        cost_estimate=cost,
    )(src, other_src, wn, ww, vec)


# ---------------- PyTorch-layout params + pure-JAX reference ----------------
def init_params(key):
    L, D, F = NUM_LAYERS, D_MODEL, DIM_FF
    ks = jax.random.split(key, 4)
    scale = 0.2
    return {
        "in_proj_w":  scale * jax.random.normal(ks[0], (L, 3 * D, D), jnp.float32),
        "in_proj_b":  jnp.zeros((L, 3 * D), jnp.float32),
        "out_proj_w": scale * jax.random.normal(ks[1], (L, D, D), jnp.float32),
        "out_proj_b": jnp.zeros((L, D), jnp.float32),
        "ln1_w": jnp.ones((L, D), jnp.float32), "ln1_b": jnp.zeros((L, D), jnp.float32),
        "ln2_w": jnp.ones((L, D), jnp.float32), "ln2_b": jnp.zeros((L, D), jnp.float32),
        "lin1_w": scale * jax.random.normal(ks[2], (L, F, D), jnp.float32),
        "lin1_b": jnp.zeros((L, F), jnp.float32),
        "lin2_w": scale * jax.random.normal(ks[3], (L, D, F), jnp.float32),
        "lin2_b": jnp.zeros((L, D), jnp.float32),
        "final_norm_w": jnp.ones((D,), jnp.float32),
        "final_norm_b": jnp.zeros((D,), jnp.float32),
    }


def _reference(src, other_src, p):
    """Pure-JAX f32 reference in PyTorch layout: src (S,B,D), other (T,B,D)."""
    D, H, hd = D_MODEL, N_HEAD, HEAD_DIM
    hp = jax.lax.Precision.HIGHEST
    S, B, _ = src.shape
    T = other_src.shape[0]
    out = other_src
    for l in range(NUM_LAYERS):
        W, bias = p["in_proj_w"][l], p["in_proj_b"][l]
        q = jnp.einsum('tbd,ed->tbe', out, W[:D], precision=hp) + bias[:D]
        k = jnp.einsum('sbd,ed->sbe', src, W[D:2 * D], precision=hp) + bias[D:2 * D]
        v = jnp.einsum('sbd,ed->sbe', src, W[2 * D:], precision=hp) + bias[2 * D:]
        qh, kh, vh = (q.reshape(T, B, H, hd), k.reshape(S, B, H, hd),
                      v.reshape(S, B, H, hd))
        sc = jnp.einsum('tbhd,sbhd->bhts', qh, kh, precision=hp) / math.sqrt(hd)
        pr = jax.nn.softmax(sc, axis=-1)
        o = jnp.einsum('bhts,sbhd->tbhd', pr, vh, precision=hp).reshape(T, B, D)
        o = jnp.einsum('tbd,ed->tbe', o, p["out_proj_w"][l], precision=hp) \
            + p["out_proj_b"][l]
        out = _layernorm(out + o, p["ln1_w"][l], p["ln1_b"][l])
        h1 = jax.nn.relu(jnp.einsum('tbd,fd->tbf', out, p["lin1_w"][l], precision=hp)
                         + p["lin1_b"][l])
        h2 = jnp.einsum('tbf,df->tbd', h1, p["lin2_w"][l], precision=hp) \
            + p["lin2_b"][l]
        out = _layernorm(out + h2, p["ln2_w"][l], p["ln2_b"][l])
    return _layernorm(out, p["final_norm_w"], p["final_norm_b"])


if __name__ == "__main__":
    key = jax.random.PRNGKey(0)
    k_src, k_other, k_par = jax.random.split(key, 3)

    B = 2          # batch
    S = 16         # src (key/value) sequence length
    T = 8          # other_src (query / phrase) sequence length

    src = jax.random.normal(k_src, (S, B, D_MODEL), jnp.float32)
    other_src = jax.random.normal(k_other, (T, B, D_MODEL), jnp.float32)
    params = init_params(k_par)

    prepared = prepare_params(params)          # hoisted: done once, not per call

    out = phrase_transformer_encoder(src, other_src, prepared)
    out = jax.block_until_ready(out)
    assert out.shape == (T, B, D_MODEL)
    assert bool(jnp.all(jnp.isfinite(out)))

    ref = _reference(src, other_src, params)
    max_err = float(jnp.max(jnp.abs(out - ref)))
    # Deviation vs the HIGHEST-precision f32 reference is dominated by the
    # bf16 MXU operands (plus the approx softmax reciprocal).
    assert max_err < 1e-1, f"kernel deviates from reference: max_err={max_err}"
    print("KERNEL_OK")
</pallas_src>

<mosaic_0001>
module attributes {stable_mosaic.version = 11 : i64} {
  func.func @encoder_kernel(%arg0: i32, %arg1: memref<16x2x32xf32, #tpu.memory_space<vmem>>, %arg2: memref<8x2x32xf32, #tpu.memory_space<vmem>>, %arg3: memref<2x128x32xbf16, #tpu.memory_space<vmem>>, %arg4: memref<2x64x64xbf16, #tpu.memory_space<vmem>>, %arg5: memref<20x64xf32, #tpu.memory_space<vmem>>, %arg6: memref<8x2x32xf32, #tpu.memory_space<vmem>>) attributes {dimension_semantics = [#tpu.dimension_semantics<parallel>], iteration_bounds = array<i64: 1>, scalar_prefetch = 0 : i64, scratch_operands = 0 : i64, tpu.core_type = #tpu.core_type<tc>, window_params = [{transform_indices = @transform_0, window_bounds = array<i64: 16, 2, 32>}, {transform_indices = @transform_1, window_bounds = array<i64: 8, 2, 32>}, {pipeline_mode = #tpu.pipeline_mode<synchronous>, transform_indices = @transform_2, window_bounds = array<i64: 2, 128, 32>}, {pipeline_mode = #tpu.pipeline_mode<synchronous>, transform_indices = @transform_3, window_bounds = array<i64: 2, 64, 64>}, {pipeline_mode = #tpu.pipeline_mode<synchronous>, transform_indices = @transform_4, window_bounds = array<i64: 20, 64>}, {transform_indices = @transform_5, window_bounds = array<i64: 8, 2, 32>}]} {
    %c0 = arith.constant 0 : index
    %c0_0 = arith.constant 0 : index
    %0 = vector.load %arg5[%c0, %c0_0] : memref<20x64xf32, #tpu.memory_space<vmem>>, vector<20x64xf32>
    %c0_1 = arith.constant 0 : index
    %c0_2 = arith.constant 0 : index
    %c0_3 = arith.constant 0 : index
    %1 = vector.load %arg1[%c0_1, %c0_2, %c0_3] : memref<16x2x32xf32, #tpu.memory_space<vmem>>, vector<16x2x32xf32>
    %2 = vector.shape_cast %1 : vector<16x2x32xf32> to vector<32x32xf32>
    %3 = arith.truncf %2 : vector<32x32xf32> to vector<32x32xbf16>
    %c0_4 = arith.constant 0 : index
    %c0_5 = arith.constant 0 : index
    %c0_6 = arith.constant 0 : index
    %4 = vector.load %arg2[%c0_4, %c0_5, %c0_6] : memref<8x2x32xf32, #tpu.memory_space<vmem>>, vector<8x2x32xf32>
    %5 = vector.shape_cast %4 : vector<8x2x32xf32> to vector<16x32xf32>
    %c0_7 = arith.constant 0 : index
    %c0_8 = arith.constant 0 : index
    %c0_9 = arith.constant 0 : index
    %6 = vector.load %arg3[%c0_7, %c0_8, %c0_9] : memref<2x128x32xbf16, #tpu.memory_space<vmem>>, vector<1x128x32xbf16>
    %7 = vector.shape_cast %6 : vector<1x128x32xbf16> to vector<128x32xbf16>
    %c0_10 = arith.constant 0 : index
    %c0_11 = arith.constant 0 : index
    %c0_12 = arith.constant 0 : index
    %8 = vector.load %arg4[%c0_10, %c0_11, %c0_12] : memref<2x64x64xbf16, #tpu.memory_space<vmem>>, vector<1x64x64xbf16>
    %9 = vector.shape_cast %8 : vector<1x64x64xbf16> to vector<64x64xbf16>
    %10 = vector.extract_strided_slice %0 {offsets = [0, 0], sizes = [1, 32], strides = [1, 1]} : vector<20x64xf32> to vector<1x32xf32>
    %11 = vector.extract_strided_slice %0 {offsets = [1, 0], sizes = [1, 64], strides = [1, 1]} : vector<20x64xf32> to vector<1x64xf32>
    %12 = vector.extract_strided_slice %0 {offsets = [2, 0], sizes = [1, 32], strides = [1, 1]} : vector<20x64xf32> to vector<1x32xf32>
    %13 = vector.extract_strided_slice %0 {offsets = [3, 0], sizes = [1, 64], strides = [1, 1]} : vector<20x64xf32> to vector<1x64xf32>
    %14 = vector.extract_strided_slice %0 {offsets = [4, 0], sizes = [1, 32], strides = [1, 1]} : vector<20x64xf32> to vector<1x32xf32>
    %15 = vector.extract_strided_slice %0 {offsets = [5, 0], sizes = [1, 32], strides = [1, 1]} : vector<20x64xf32> to vector<1x32xf32>
    %16 = vector.extract_strided_slice %0 {offsets = [6, 0], sizes = [1, 32], strides = [1, 1]} : vector<20x64xf32> to vector<1x32xf32>
    %17 = vector.extract_strided_slice %0 {offsets = [7, 0], sizes = [1, 32], strides = [1, 1]} : vector<20x64xf32> to vector<1x32xf32>
    %18 = vector.extract_strided_slice %0 {offsets = [8, 0], sizes = [1, 32], strides = [1, 1]} : vector<20x64xf32> to vector<1x32xf32>
    %19 = arith.truncf %5 : vector<16x32xf32> to vector<16x32xbf16>
    %20 = vector.extract_strided_slice %7 {offsets = [0, 0], sizes = [32, 32], strides = [1, 1]} : vector<128x32xbf16> to vector<32x32xbf16>
    %cst = arith.constant dense<0.000000e+00> : vector<16x32xf32>
    %21 = tpu.matmul %19, %20, %cst {dimension_numbers = #tpu.dot_dimension_numbers<[1], [0], [0], [1], [0, 0, 1, 1], [], []>} : vector<16x32xbf16>, vector<32x32xbf16>, vector<16x32xf32> -> vector<16x32xf32>
    %22 = vector.broadcast %10 : vector<1x32xf32> to vector<16x32xf32>
    %23 = arith.addf %21, %22 : vector<16x32xf32>
    %24 = vector.extract_strided_slice %9 {offsets = [0, 0], sizes = [32, 64], strides = [1, 1]} : vector<64x64xbf16> to vector<32x64xbf16>
    %cst_13 = arith.constant dense<0.000000e+00> : vector<32x64xf32>
    %25 = tpu.matmul %3, %24, %cst_13 {dimension_numbers = #tpu.dot_dimension_numbers<[1], [0], [0], [1], [0, 0, 1, 1], [], []>} : vector<32x32xbf16>, vector<32x64xbf16>, vector<32x64xf32> -> vector<32x64xf32>
    %26 = vector.broadcast %11 : vector<1x64xf32> to vector<32x64xf32>
    %27 = arith.addf %25, %26 : vector<32x64xf32>
    %28 = vector.shape_cast %23 : vector<16x32xf32> to vector<8x2x4x8xf32>
    %29 = vector.extract_strided_slice %27 {offsets = [0, 0], sizes = [32, 32], strides = [1, 1]} : vector<32x64xf32> to vector<32x32xf32>
    %30 = vector.shape_cast %29 : vector<32x32xf32> to vector<16x2x4x8xf32>
    %31 = vector.extract_strided_slice %27 {offsets = [0, 32], sizes = [32, 32], strides = [1, 1]} : vector<32x64xf32> to vector<32x32xf32>
    %32 = vector.shape_cast %31 : vector<32x32xf32> to vector<16x2x4x8xf32>
    %33 = tpu.transpose %28, [1, 2, 0, 3] : vector<8x2x4x8xf32> -> vector<2x4x8x8xf32>
    %34 = vector.shape_cast %33 : vector<2x4x8x8xf32> to vector<8x8x8xf32>
    %35 = arith.truncf %34 : vector<8x8x8xf32> to vector<8x8x8xbf16>
    %36 = tpu.transpose %30, [1, 2, 0, 3] : vector<16x2x4x8xf32> -> vector<2x4x16x8xf32>
    %37 = vector.shape_cast %36 : vector<2x4x16x8xf32> to vector<8x16x8xf32>
    %38 = arith.truncf %37 : vector<8x16x8xf32> to vector<8x16x8xbf16>
    %39 = tpu.transpose %32, [1, 2, 0, 3] : vector<16x2x4x8xf32> -> vector<2x4x16x8xf32>
    %40 = vector.shape_cast %39 : vector<2x4x16x8xf32> to vector<8x16x8xf32>
    %41 = arith.truncf %40 : vector<8x16x8xf32> to vector<8x16x8xbf16>
    "tpu.trace_start"() <{level = 10 : i32, message = "btd,bsd->bts"}> : () -> ()
    %cst_14 = arith.constant dense<0.000000e+00> : vector<8x8x16xf32>
    %42 = tpu.matmul %35, %38, %cst_14 {dimension_numbers = #tpu.dot_dimension_numbers<[2], [2], [1], [1], [0, 0, 0, 1, 1, 1], [0], [0]>} : vector<8x8x8xbf16>, vector<8x16x8xbf16>, vector<8x8x16xf32> -> vector<8x8x16xf32>
    "tpu.trace_stop"() : () -> ()
    %cst_15 = arith.constant 0.353553385 : f32
    %43 = vector.broadcast %cst_15 : f32 to vector<8x8x16xf32>
    %44 = arith.mulf %42, %43 : vector<8x8x16xf32>
    %cst_16 = arith.constant dense<0xFF800000> : vector<8x8xf32>
    %45 = vector.multi_reduction <maximumf>, %44, %cst_16 [2] : vector<8x8x16xf32> to vector<8x8xf32>
    %46 = vector.shape_cast %45 : vector<8x8xf32> to vector<8x8x1xf32>
    %47 = vector.broadcast %46 : vector<8x8x1xf32> to vector<8x8x16xf32>
    %48 = arith.subf %44, %47 : vector<8x8x16xf32>
    %49 = math.exp %48 : vector<8x8x16xf32>
    %cst_17 = arith.constant dense<0.000000e+00> : vector<8x8xf32>
    %50 = vector.multi_reduction <add>, %49, %cst_17 [2] : vector<8x8x16xf32> to vector<8x8xf32>
    %51 = vector.shape_cast %50 : vector<8x8xf32> to vector<8x8x1xf32>
    %52 = tpu.reciprocal %51 {approx = true} : vector<8x8x1xf32> -> vector<8x8x1xf32>
    %53 = vector.broadcast %52 : vector<8x8x1xf32> to vector<8x8x16xf32>
    %54 = arith.mulf %49, %53 : vector<8x8x16xf32>
    %55 = arith.truncf %54 : vector<8x8x16xf32> to vector<8x8x16xbf16>
    "tpu.trace_start"() <{level = 10 : i32, message = "bts,bsd->btd"}> : () -> ()
    %cst_18 = arith.constant dense<0.000000e+00> : vector<8x8x8xf32>
    %56 = tpu.matmul %55, %41, %cst_18 {dimension_numbers = #tpu.dot_dimension_numbers<[2], [1], [1], [2], [0, 0, 0, 1, 1, 2], [0], [0]>} : vector<8x8x16xbf16>, vector<8x16x8xbf16>, vector<8x8x8xf32> -> vector<8x8x8xf32>
    "tpu.trace_stop"() : () -> ()
    %57 = vector.shape_cast %56 : vector<8x8x8xf32> to vector<2x4x8x8xf32>
    %58 = tpu.transpose %57, [2, 0, 1, 3] : vector<2x4x8x8xf32> -> vector<8x2x4x8xf32>
    %59 = vector.shape_cast %58 : vector<8x2x4x8xf32> to vector<16x32xf32>
    %60 = arith.truncf %59 : vector<16x32xf32> to vector<16x32xbf16>
    %61 = vector.extract_strided_slice %7 {offsets = [32, 0], sizes = [32, 32], strides = [1, 1]} : vector<128x32xbf16> to vector<32x32xbf16>
    %cst_19 = arith.constant dense<0.000000e+00> : vector<16x32xf32>
    %62 = tpu.matmul %60, %61, %cst_19 {dimension_numbers = #tpu.dot_dimension_numbers<[1], [0], [0], [1], [0, 0, 1, 1], [], []>} : vector<16x32xbf16>, vector<32x32xbf16>, vector<16x32xf32> -> vector<16x32xf32>
    %63 = vector.broadcast %12 : vector<1x32xf32> to vector<16x32xf32>
    %64 = arith.addf %62, %63 : vector<16x32xf32>
    %65 = arith.addf %5, %64 : vector<16x32xf32>
    %cst_20 = arith.constant dense<0.000000e+00> : vector<16xf32>
    %66 = vector.multi_reduction <add>, %65, %cst_20 [1] : vector<16x32xf32> to vector<16xf32>
    %67 = vector.shape_cast %66 : vector<16xf32> to vector<16x1xf32>
    %cst_21 = arith.constant 3.200000e+01 : f32
    %68 = vector.broadcast %cst_21 : f32 to vector<16x1xf32>
    %69 = arith.divf %67, %68 : vector<16x1xf32>
    %70 = arith.mulf %65, %65 : vector<16x32xf32>
    %cst_22 = arith.constant dense<0.000000e+00> : vector<16xf32>
    %71 = vector.multi_reduction <add>, %70, %cst_22 [1] : vector<16x32xf32> to vector<16xf32>
    %72 = vector.shape_cast %71 : vector<16xf32> to vector<16x1xf32>
    %cst_23 = arith.constant 3.200000e+01 : f32
    %73 = vector.broadcast %cst_23 : f32 to vector<16x1xf32>
    %74 = arith.divf %72, %73 : vector<16x1xf32>
    %75 = arith.mulf %69, %69 : vector<16x1xf32>
    %76 = arith.subf %74, %75 : vector<16x1xf32>
    %77 = vector.broadcast %69 : vector<16x1xf32> to vector<16x32xf32>
    %78 = arith.subf %65, %77 : vector<16x32xf32>
    %cst_24 = arith.constant 9.99999974E-6 : f32
    %79 = vector.broadcast %cst_24 : f32 to vector<16x1xf32>
    %80 = arith.addf %76, %79 : vector<16x1xf32>
    %81 = math.rsqrt %80 : vector<16x1xf32>
    %82 = vector.broadcast %81 : vector<16x1xf32> to vector<16x32xf32>
    %83 = arith.mulf %78, %82 : vector<16x32xf32>
    %84 = vector.broadcast %15 : vector<1x32xf32> to vector<16x32xf32>
    %85 = arith.mulf %83, %84 : vector<16x32xf32>
    %86 = vector.broadcast %16 : vector<1x32xf32> to vector<16x32xf32>
    %87 = arith.addf %85, %86 : vector<16x32xf32>
    %88 = arith.truncf %87 : vector<16x32xf32> to vector<16x32xbf16>
    %89 = vector.extract_strided_slice %9 {offsets = [32, 0], sizes = [32, 64], strides = [1, 1]} : vector<64x64xbf16> to vector<32x64xbf16>
    %cst_25 = arith.constant dense<0.000000e+00> : vector<16x64xf32>
    %90 = tpu.matmul %88, %89, %cst_25 {dimension_numbers = #tpu.dot_dimension_numbers<[1], [0], [0], [1], [0, 0, 1, 1], [], []>} : vector<16x32xbf16>, vector<32x64xbf16>, vector<16x64xf32> -> vector<16x64xf32>
    %91 = vector.broadcast %13 : vector<1x64xf32> to vector<16x64xf32>
    %92 = arith.addf %90, %91 : vector<16x64xf32>
    %cst_26 = arith.constant 0.000000e+00 : f32
    %93 = vector.broadcast %cst_26 : f32 to vector<16x64xf32>
    %94 = arith.maximumf %92, %93 : vector<16x64xf32>
    %95 = arith.truncf %94 : vector<16x64xf32> to vector<16x64xbf16>
    %96 = vector.extract_strided_slice %7 {offsets = [64, 0], sizes = [64, 32], strides = [1, 1]} : vector<128x32xbf16> to vector<64x32xbf16>
    %cst_27 = arith.constant dense<0.000000e+00> : vector<16x32xf32>
    %97 = tpu.matmul %95, %96, %cst_27 {dimension_numbers = #tpu.dot_dimension_numbers<[1], [0], [0], [1], [0, 0, 1, 1], [], []>} : vector<16x64xbf16>, vector<64x32xbf16>, vector<16x32xf32> -> vector<16x32xf32>
    %98 = vector.broadcast %14 : vector<1x32xf32> to vector<16x32xf32>
    %99 = arith.addf %97, %98 : vector<16x32xf32>
    %100 = arith.addf %87, %99 : vector<16x32xf32>
    %cst_28 = arith.constant dense<0.000000e+00> : vector<16xf32>
    %101 = vector.multi_reduction <add>, %100, %cst_28 [1] : vector<16x32xf32> to vector<16xf32>
    %102 = vector.shape_cast %101 : vector<16xf32> to vector<16x1xf32>
    %cst_29 = arith.constant 3.200000e+01 : f32
    %103 = vector.broadcast %cst_29 : f32 to vector<16x1xf32>
    %104 = arith.divf %102, %103 : vector<16x1xf32>
    %105 = arith.mulf %100, %100 : vector<16x32xf32>
    %cst_30 = arith.constant dense<0.000000e+00> : vector<16xf32>
    %106 = vector.multi_reduction <add>, %105, %cst_30 [1] : vector<16x32xf32> to vector<16xf32>
    %107 = vector.shape_cast %106 : vector<16xf32> to vector<16x1xf32>
    %cst_31 = arith.constant 3.200000e+01 : f32
    %108 = vector.broadcast %cst_31 : f32 to vector<16x1xf32>
    %109 = arith.divf %107, %108 : vector<16x1xf32>
    %110 = arith.mulf %104, %104 : vector<16x1xf32>
    %111 = arith.subf %109, %110 : vector<16x1xf32>
    %112 = vector.broadcast %104 : vector<16x1xf32> to vector<16x32xf32>
    %113 = arith.subf %100, %112 : vector<16x32xf32>
    %cst_32 = arith.constant 9.99999974E-6 : f32
    %114 = vector.broadcast %cst_32 : f32 to vector<16x1xf32>
    %115 = arith.addf %111, %114 : vector<16x1xf32>
    %116 = math.rsqrt %115 : vector<16x1xf32>
    %117 = vector.broadcast %116 : vector<16x1xf32> to vector<16x32xf32>
    %118 = arith.mulf %113, %117 : vector<16x32xf32>
    %119 = vector.broadcast %17 : vector<1x32xf32> to vector<16x32xf32>
    %120 = arith.mulf %118, %119 : vector<16x32xf32>
    %121 = vector.broadcast %18 : vector<1x32xf32> to vector<16x32xf32>
    %122 = arith.addf %120, %121 : vector<16x32xf32>
    %c1 = arith.constant 1 : index
    %c0_33 = arith.constant 0 : index
    %c0_34 = arith.constant 0 : index
    %123 = vector.load %arg3[%c1, %c0_33, %c0_34] : memref<2x128x32xbf16, #tpu.memory_space<vmem>>, vector<1x128x32xbf16>
    %124 = vector.shape_cast %123 : vector<1x128x32xbf16> to vector<128x32xbf16>
    %c1_35 = arith.constant 1 : index
    %c0_36 = arith.constant 0 : index
    %c0_37 = arith.constant 0 : index
    %125 = vector.load %arg4[%c1_35, %c0_36, %c0_37] : memref<2x64x64xbf16, #tpu.memory_space<vmem>>, vector<1x64x64xbf16>
    %126 = vector.shape_cast %125 : vector<1x64x64xbf16> to vector<64x64xbf16>
    %127 = vector.extract_strided_slice %0 {offsets = [9, 0], sizes = [1, 32], strides = [1, 1]} : vector<20x64xf32> to vector<1x32xf32>
    %128 = vector.extract_strided_slice %0 {offsets = [10, 0], sizes = [1, 64], strides = [1, 1]} : vector<20x64xf32> to vector<1x64xf32>
    %129 = vector.extract_strided_slice %0 {offsets = [11, 0], sizes = [1, 32], strides = [1, 1]} : vector<20x64xf32> to vector<1x32xf32>
    %130 = vector.extract_strided_slice %0 {offsets = [12, 0], sizes = [1, 64], strides = [1, 1]} : vector<20x64xf32> to vector<1x64xf32>
    %131 = vector.extract_strided_slice %0 {offsets = [13, 0], sizes = [1, 32], strides = [1, 1]} : vector<20x64xf32> to vector<1x32xf32>
    %132 = vector.extract_strided_slice %0 {offsets = [14, 0], sizes = [1, 32], strides = [1, 1]} : vector<20x64xf32> to vector<1x32xf32>
    %133 = vector.extract_strided_slice %0 {offsets = [15, 0], sizes = [1, 32], strides = [1, 1]} : vector<20x64xf32> to vector<1x32xf32>
    %134 = vector.extract_strided_slice %0 {offsets = [16, 0], sizes = [1, 32], strides = [1, 1]} : vector<20x64xf32> to vector<1x32xf32>
    %135 = vector.extract_strided_slice %0 {offsets = [17, 0], sizes = [1, 32], strides = [1, 1]} : vector<20x64xf32> to vector<1x32xf32>
    %136 = arith.truncf %122 : vector<16x32xf32> to vector<16x32xbf16>
    %137 = vector.extract_strided_slice %124 {offsets = [0, 0], sizes = [32, 32], strides = [1, 1]} : vector<128x32xbf16> to vector<32x32xbf16>
    %cst_38 = arith.constant dense<0.000000e+00> : vector<16x32xf32>
    %138 = tpu.matmul %136, %137, %cst_38 {dimension_numbers = #tpu.dot_dimension_numbers<[1], [0], [0], [1], [0, 0, 1, 1], [], []>} : vector<16x32xbf16>, vector<32x32xbf16>, vector<16x32xf32> -> vector<16x32xf32>
    %139 = vector.broadcast %127 : vector<1x32xf32> to vector<16x32xf32>
    %140 = arith.addf %138, %139 : vector<16x32xf32>
    %141 = vector.extract_strided_slice %126 {offsets = [0, 0], sizes = [32, 64], strides = [1, 1]} : vector<64x64xbf16> to vector<32x64xbf16>
    %cst_39 = arith.constant dense<0.000000e+00> : vector<32x64xf32>
    %142 = tpu.matmul %3, %141, %cst_39 {dimension_numbers = #tpu.dot_dimension_numbers<[1], [0], [0], [1], [0, 0, 1, 1], [], []>} : vector<32x32xbf16>, vector<32x64xbf16>, vector<32x64xf32> -> vector<32x64xf32>
    %143 = vector.broadcast %128 : vector<1x64xf32> to vector<32x64xf32>
    %144 = arith.addf %142, %143 : vector<32x64xf32>
    %145 = vector.shape_cast %140 : vector<16x32xf32> to vector<8x2x4x8xf32>
    %146 = vector.extract_strided_slice %144 {offsets = [0, 0], sizes = [32, 32], strides = [1, 1]} : vector<32x64xf32> to vector<32x32xf32>
    %147 = vector.shape_cast %146 : vector<32x32xf32> to vector<16x2x4x8xf32>
    %148 = vector.extract_strided_slice %144 {offsets = [0, 32], sizes = [32, 32], strides = [1, 1]} : vector<32x64xf32> to vector<32x32xf32>
    %149 = vector.shape_cast %148 : vector<32x32xf32> to vector<16x2x4x8xf32>
    %150 = tpu.transpose %145, [1, 2, 0, 3] : vector<8x2x4x8xf32> -> vector<2x4x8x8xf32>
    %151 = vector.shape_cast %150 : vector<2x4x8x8xf32> to vector<8x8x8xf32>
    %152 = arith.truncf %151 : vector<8x8x8xf32> to vector<8x8x8xbf16>
    %153 = tpu.transpose %147, [1, 2, 0, 3] : vector<16x2x4x8xf32> -> vector<2x4x16x8xf32>
    %154 = vector.shape_cast %153 : vector<2x4x16x8xf32> to vector<8x16x8xf32>
    %155 = arith.truncf %154 : vector<8x16x8xf32> to vector<8x16x8xbf16>
    %156 = tpu.transpose %149, [1, 2, 0, 3] : vector<16x2x4x8xf32> -> vector<2x4x16x8xf32>
    %157 = vector.shape_cast %156 : vector<2x4x16x8xf32> to vector<8x16x8xf32>
    %158 = arith.truncf %157 : vector<8x16x8xf32> to vector<8x16x8xbf16>
    "tpu.trace_start"() <{level = 10 : i32, message = "btd,bsd->bts"}> : () -> ()
    %cst_40 = arith.constant dense<0.000000e+00> : vector<8x8x16xf32>
    %159 = tpu.matmul %152, %155, %cst_40 {dimension_numbers = #tpu.dot_dimension_numbers<[2], [2], [1], [1], [0, 0, 0, 1, 1, 1], [0], [0]>} : vector<8x8x8xbf16>, vector<8x16x8xbf16>, vector<8x8x16xf32> -> vector<8x8x16xf32>
    "tpu.trace_stop"() : () -> ()
    %cst_41 = arith.constant 0.353553385 : f32
    %160 = vector.broadcast %cst_41 : f32 to vector<8x8x16xf32>
    %161 = arith.mulf %159, %160 : vector<8x8x16xf32>
    %cst_42 = arith.constant dense<0xFF800000> : vector<8x8xf32>
    %162 = vector.multi_reduction <maximumf>, %161, %cst_42 [2] : vector<8x8x16xf32> to vector<8x8xf32>
    %163 = vector.shape_cast %162 : vector<8x8xf32> to vector<8x8x1xf32>
    %164 = vector.broadcast %163 : vector<8x8x1xf32> to vector<8x8x16xf32>
    %165 = arith.subf %161, %164 : vector<8x8x16xf32>
    %166 = math.exp %165 : vector<8x8x16xf32>
    %cst_43 = arith.constant dense<0.000000e+00> : vector<8x8xf32>
    %167 = vector.multi_reduction <add>, %166, %cst_43 [2] : vector<8x8x16xf32> to vector<8x8xf32>
    %168 = vector.shape_cast %167 : vector<8x8xf32> to vector<8x8x1xf32>
    %169 = tpu.reciprocal %168 {approx = true} : vector<8x8x1xf32> -> vector<8x8x1xf32>
    %170 = vector.broadcast %169 : vector<8x8x1xf32> to vector<8x8x16xf32>
    %171 = arith.mulf %166, %170 : vector<8x8x16xf32>
    %172 = arith.truncf %171 : vector<8x8x16xf32> to vector<8x8x16xbf16>
    "tpu.trace_start"() <{level = 10 : i32, message = "bts,bsd->btd"}> : () -> ()
    %cst_44 = arith.constant dense<0.000000e+00> : vector<8x8x8xf32>
    %173 = tpu.matmul %172, %158, %cst_44 {dimension_numbers = #tpu.dot_dimension_numbers<[2], [1], [1], [2], [0, 0, 0, 1, 1, 2], [0], [0]>} : vector<8x8x16xbf16>, vector<8x16x8xbf16>, vector<8x8x8xf32> -> vector<8x8x8xf32>
    "tpu.trace_stop"() : () -> ()
    %174 = vector.shape_cast %173 : vector<8x8x8xf32> to vector<2x4x8x8xf32>
    %175 = tpu.transpose %174, [2, 0, 1, 3] : vector<2x4x8x8xf32> -> vector<8x2x4x8xf32>
    %176 = vector.shape_cast %175 : vector<8x2x4x8xf32> to vector<16x32xf32>
    %177 = arith.truncf %176 : vector<16x32xf32> to vector<16x32xbf16>
    %178 = vector.extract_strided_slice %124 {offsets = [32, 0], sizes = [32, 32], strides = [1, 1]} : vector<128x32xbf16> to vector<32x32xbf16>
    %cst_45 = arith.constant dense<0.000000e+00> : vector<16x32xf32>
    %179 = tpu.matmul %177, %178, %cst_45 {dimension_numbers = #tpu.dot_dimension_numbers<[1], [0], [0], [1], [0, 0, 1, 1], [], []>} : vector<16x32xbf16>, vector<32x32xbf16>, vector<16x32xf32> -> vector<16x32xf32>
    %180 = vector.broadcast %129 : vector<1x32xf32> to vector<16x32xf32>
    %181 = arith.addf %179, %180 : vector<16x32xf32>
    %182 = arith.addf %122, %181 : vector<16x32xf32>
    %cst_46 = arith.constant dense<0.000000e+00> : vector<16xf32>
    %183 = vector.multi_reduction <add>, %182, %cst_46 [1] : vector<16x32xf32> to vector<16xf32>
    %184 = vector.shape_cast %183 : vector<16xf32> to vector<16x1xf32>
    %cst_47 = arith.constant 3.200000e+01 : f32
    %185 = vector.broadcast %cst_47 : f32 to vector<16x1xf32>
    %186 = arith.divf %184, %185 : vector<16x1xf32>
    %187 = arith.mulf %182, %182 : vector<16x32xf32>
    %cst_48 = arith.constant dense<0.000000e+00> : vector<16xf32>
    %188 = vector.multi_reduction <add>, %187, %cst_48 [1] : vector<16x32xf32> to vector<16xf32>
    %189 = vector.shape_cast %188 : vector<16xf32> to vector<16x1xf32>
    %cst_49 = arith.constant 3.200000e+01 : f32
    %190 = vector.broadcast %cst_49 : f32 to vector<16x1xf32>
    %191 = arith.divf %189, %190 : vector<16x1xf32>
    %192 = arith.mulf %186, %186 : vector<16x1xf32>
    %193 = arith.subf %191, %192 : vector<16x1xf32>
    %194 = vector.broadcast %186 : vector<16x1xf32> to vector<16x32xf32>
    %195 = arith.subf %182, %194 : vector<16x32xf32>
    %cst_50 = arith.constant 9.99999974E-6 : f32
    %196 = vector.broadcast %cst_50 : f32 to vector<16x1xf32>
    %197 = arith.addf %193, %196 : vector<16x1xf32>
    %198 = math.rsqrt %197 : vector<16x1xf32>
    %199 = vector.broadcast %198 : vector<16x1xf32> to vector<16x32xf32>
    %200 = arith.mulf %195, %199 : vector<16x32xf32>
    %201 = vector.broadcast %132 : vector<1x32xf32> to vector<16x32xf32>
    %202 = arith.mulf %200, %201 : vector<16x32xf32>
    %203 = vector.broadcast %133 : vector<1x32xf32> to vector<16x32xf32>
    %204 = arith.addf %202, %203 : vector<16x32xf32>
    %205 = arith.truncf %204 : vector<16x32xf32> to vector<16x32xbf16>
    %206 = vector.extract_strided_slice %126 {offsets = [32, 0], sizes = [32, 64], strides = [1, 1]} : vector<64x64xbf16> to vector<32x64xbf16>
    %cst_51 = arith.constant dense<0.000000e+00> : vector<16x64xf32>
    %207 = tpu.matmul %205, %206, %cst_51 {dimension_numbers = #tpu.dot_dimension_numbers<[1], [0], [0], [1], [0, 0, 1, 1], [], []>} : vector<16x32xbf16>, vector<32x64xbf16>, vector<16x64xf32> -> vector<16x64xf32>
    %208 = vector.broadcast %130 : vector<1x64xf32> to vector<16x64xf32>
    %209 = arith.addf %207, %208 : vector<16x64xf32>
    %cst_52 = arith.constant 0.000000e+00 : f32
    %210 = vector.broadcast %cst_52 : f32 to vector<16x64xf32>
    %211 = arith.maximumf %209, %210 : vector<16x64xf32>
    %212 = arith.truncf %211 : vector<16x64xf32> to vector<16x64xbf16>
    %213 = vector.extract_strided_slice %124 {offsets = [64, 0], sizes = [64, 32], strides = [1, 1]} : vector<128x32xbf16> to vector<64x32xbf16>
    %cst_53 = arith.constant dense<0.000000e+00> : vector<16x32xf32>
    %214 = tpu.matmul %212, %213, %cst_53 {dimension_numbers = #tpu.dot_dimension_numbers<[1], [0], [0], [1], [0, 0, 1, 1], [], []>} : vector<16x64xbf16>, vector<64x32xbf16>, vector<16x32xf32> -> vector<16x32xf32>
    %215 = vector.broadcast %131 : vector<1x32xf32> to vector<16x32xf32>
    %216 = arith.addf %214, %215 : vector<16x32xf32>
    %217 = arith.addf %204, %216 : vector<16x32xf32>
    %cst_54 = arith.constant dense<0.000000e+00> : vector<16xf32>
    %218 = vector.multi_reduction <add>, %217, %cst_54 [1] : vector<16x32xf32> to vector<16xf32>
    %219 = vector.shape_cast %218 : vector<16xf32> to vector<16x1xf32>
    %cst_55 = arith.constant 3.200000e+01 : f32
    %220 = vector.broadcast %cst_55 : f32 to vector<16x1xf32>
    %221 = arith.divf %219, %220 : vector<16x1xf32>
    %222 = arith.mulf %217, %217 : vector<16x32xf32>
    %cst_56 = arith.constant dense<0.000000e+00> : vector<16xf32>
    %223 = vector.multi_reduction <add>, %222, %cst_56 [1] : vector<16x32xf32> to vector<16xf32>
    %224 = vector.shape_cast %223 : vector<16xf32> to vector<16x1xf32>
    %cst_57 = arith.constant 3.200000e+01 : f32
    %225 = vector.broadcast %cst_57 : f32 to vector<16x1xf32>
    %226 = arith.divf %224, %225 : vector<16x1xf32>
    %227 = arith.mulf %221, %221 : vector<16x1xf32>
    %228 = arith.subf %226, %227 : vector<16x1xf32>
    %229 = vector.broadcast %221 : vector<16x1xf32> to vector<16x32xf32>
    %230 = arith.subf %217, %229 : vector<16x32xf32>
    %cst_58 = arith.constant 9.99999974E-6 : f32
    %231 = vector.broadcast %cst_58 : f32 to vector<16x1xf32>
    %232 = arith.addf %228, %231 : vector<16x1xf32>
    %233 = math.rsqrt %232 : vector<16x1xf32>
    %234 = vector.broadcast %233 : vector<16x1xf32> to vector<16x32xf32>
    %235 = arith.mulf %230, %234 : vector<16x32xf32>
    %236 = vector.broadcast %134 : vector<1x32xf32> to vector<16x32xf32>
    %237 = arith.mulf %235, %236 : vector<16x32xf32>
    %238 = vector.broadcast %135 : vector<1x32xf32> to vector<16x32xf32>
    %239 = arith.addf %237, %238 : vector<16x32xf32>
    %240 = vector.extract_strided_slice %0 {offsets = [18, 0], sizes = [1, 32], strides = [1, 1]} : vector<20x64xf32> to vector<1x32xf32>
    %241 = vector.extract_strided_slice %0 {offsets = [19, 0], sizes = [1, 32], strides = [1, 1]} : vector<20x64xf32> to vector<1x32xf32>
    %cst_59 = arith.constant dense<0.000000e+00> : vector<16xf32>
    %242 = vector.multi_reduction <add>, %239, %cst_59 [1] : vector<16x32xf32> to vector<16xf32>
    %243 = vector.shape_cast %242 : vector<16xf32> to vector<16x1xf32>
    %cst_60 = arith.constant 3.200000e+01 : f32
    %244 = vector.broadcast %cst_60 : f32 to vector<16x1xf32>
    %245 = arith.divf %243, %244 : vector<16x1xf32>
    %246 = arith.mulf %239, %239 : vector<16x32xf32>
    %cst_61 = arith.constant dense<0.000000e+00> : vector<16xf32>
    %247 = vector.multi_reduction <add>, %246, %cst_61 [1] : vector<16x32xf32> to vector<16xf32>
    %248 = vector.shape_cast %247 : vector<16xf32> to vector<16x1xf32>
    %cst_62 = arith.constant 3.200000e+01 : f32
    %249 = vector.broadcast %cst_62 : f32 to vector<16x1xf32>
    %250 = arith.divf %248, %249 : vector<16x1xf32>
    %251 = arith.mulf %245, %245 : vector<16x1xf32>
    %252 = arith.subf %250, %251 : vector<16x1xf32>
    %253 = vector.broadcast %245 : vector<16x1xf32> to vector<16x32xf32>
    %254 = arith.subf %239, %253 : vector<16x32xf32>
    %cst_63 = arith.constant 9.99999974E-6 : f32
    %255 = vector.broadcast %cst_63 : f32 to vector<16x1xf32>
    %256 = arith.addf %252, %255 : vector<16x1xf32>
    %257 = math.rsqrt %256 : vector<16x1xf32>
    %258 = vector.broadcast %257 : vector<16x1xf32> to vector<16x32xf32>
    %259 = arith.mulf %254, %258 : vector<16x32xf32>
    %260 = vector.broadcast %240 : vector<1x32xf32> to vector<16x32xf32>
    %261 = arith.mulf %259, %260 : vector<16x32xf32>
    %262 = vector.broadcast %241 : vector<1x32xf32> to vector<16x32xf32>
    %263 = arith.addf %261, %262 : vector<16x32xf32>
    %264 = vector.shape_cast %263 : vector<16x32xf32> to vector<8x2x32xf32>
    %c0_64 = arith.constant 0 : index
    %c0_65 = arith.constant 0 : index
    %c0_66 = arith.constant 0 : index
    %265 = vector.load %arg6[%c0_64, %c0_65, %c0_66] : memref<8x2x32xf32, #tpu.memory_space<vmem>>, vector<8x2x32xf32>
    tpu.vector_store %arg6[%c0_64, %c0_65, %c0_66], %264 {strides = array<i32>} : memref<8x2x32xf32, #tpu.memory_space<vmem>>, vector<8x2x32xf32>,
    return
  }
  func.func @transform_0(%arg0: i32) -> (i32, i32, i32) {
    %c0_i32 = arith.constant 0 : i32
    %c0_i32_0 = arith.constant 0 : i32
    %c0_i32_1 = arith.constant 0 : i32
    return %c0_i32, %arg0, %c0_i32_0 : i32, i32, i32
  }
  func.func @transform_1(%arg0: i32) -> (i32, i32, i32) {
    %c0_i32 = arith.constant 0 : i32
    %c0_i32_0 = arith.constant 0 : i32
    %c0_i32_1 = arith.constant 0 : i32
    return %c0_i32, %arg0, %c0_i32_0 : i32, i32, i32
  }
  func.func @transform_2(%arg0: i32) -> (i32, i32, i32) {
    %c0_i32 = arith.constant 0 : i32
    %c0_i32_0 = arith.constant 0 : i32
    %c0_i32_1 = arith.constant 0 : i32
    %c0_i32_2 = arith.constant 0 : i32
    return %c0_i32, %c0_i32_0, %c0_i32_1 : i32, i32, i32
  }
  func.func @transform_3(%arg0: i32) -> (i32, i32, i32) {
    %c0_i32 = arith.constant 0 : i32
    %c0_i32_0 = arith.constant 0 : i32
    %c0_i32_1 = arith.constant 0 : i32
    %c0_i32_2 = arith.constant 0 : i32
    return %c0_i32, %c0_i32_0, %c0_i32_1 : i32, i32, i32
  }
  func.func @transform_4(%arg0: i32) -> (i32, i32) {
    %c0_i32 = arith.constant 0 : i32
    %c0_i32_0 = arith.constant 0 : i32
    %c0_i32_1 = arith.constant 0 : i32
    return %c0_i32, %c0_i32_0 : i32, i32
  }
  func.func @transform_5(%arg0: i32) -> (i32, i32, i32) {
    %c0_i32 = arith.constant 0 : i32
    %c0_i32_0 = arith.constant 0 : i32
    %c0_i32_1 = arith.constant 0 : i32
    return %c0_i32, %arg0, %c0_i32_0 : i32, i32, i32
  }
}

</mosaic_0001>

<llo_original>
// kernel: tpu_custom_call.1
$region0: #{tpu_custom_call.1}
  #allocation0 [shape = 'u32[]', space=smem, size = 0x4, offset = 0x4, fixed_abs, tag = 'smem constant byte address 0x4 - core index']
  #allocation1 [shape = 'u32[144,128]{1,0:T(1,128)}', space=vmem, size = 0x12000, scoped, tag = 'internal scratch']
  %s0 = inlined_call_operand.vmem [shape: f32[16,2,32], index: 0, kind: input, shape index: {}]
  %s1 = inlined_call_operand.vmem [shape: f32[8,2,32], index: 1, kind: input, shape index: {}]
  %s2 = inlined_call_operand.vmem [shape: bf16[2,128,32], index: 2, kind: input, shape index: {}]
  %s3 = inlined_call_operand.vmem [shape: bf16[2,64,64], index: 3, kind: input, shape index: {}]
  %s4 = inlined_call_operand.vmem [shape: f32[20,64], index: 4, kind: input, shape index: {}]
  %s5 = inlined_call_operand.hbm [shape: f32[8,2,32], index: 5, kind: output, shape index: {}]
  %s6 = sld [smem:[#allocation0]]
  $region30: #{tpu_custom_call.1} parent=0
    _
  %s8 = ssub.s32 1, %s6
  %s9 = scalar_select 0, %s8, %s6
  $region1: #{tpu_custom_call.1} parent=0
    #allocation2 [shape = 'u8[8192]{0}', space=vmem, size = 0x2000, scoped, tag = 'output window, operand 0, single buffered']
    #allocation3 [shape = 's32[1]{0}', space=sflag, size = 0x4, scoped, tag = 'scoped memory for tpu_custom_call.1']
    %10 = vsyncpa [#allocation3], 0
    // Predicated region
    $region2: #{tpu_custom_call.1} parent=1 // pred_check
      _
    $region3: #{tpu_custom_call.1} parent=1 // pred_check_branch
      %12 = sbr.rel (0) target = $region5
    $region4: #{tpu_custom_call.1} parent=1 // pred_region
      _
    $region5: #{tpu_custom_call.1} parent=1 // pred_fallthru
      _
    // Predicated region
    $region6: #{tpu_custom_call.1} parent=1 // pred_check
      _
    $region7: #{tpu_custom_call.1} parent=1 // pred_check_branch
      %14 = sbr.rel (0) target = $region9
    $region8: #{tpu_custom_call.1} parent=1 // pred_region
      _
    $region9: #{tpu_custom_call.1} parent=1 // pred_fallthru
      _
    // Predicated region
    $region10: #{tpu_custom_call.1} parent=1 // pred_check
      _
    $region11: #{tpu_custom_call.1} parent=1 // pred_check_branch
      %16 = sbr.rel (0) target = $region13
    $region12: #{tpu_custom_call.1} parent=1 // pred_region
      _
    $region13: #{tpu_custom_call.1} parent=1 // pred_fallthru
      _
    // Predicated region
    $region14: #{tpu_custom_call.1} parent=1 // pred_check
      _
    $region15: #{tpu_custom_call.1} parent=1 // pred_check_branch
      %18 = sbr.rel (0) target = $region17
    $region16: #{tpu_custom_call.1} parent=1 // pred_region
      _
    $region17: #{tpu_custom_call.1} parent=1 // pred_fallthru
      _
    // Predicated region
    $region18: #{tpu_custom_call.1} parent=1 // pred_check
      _
    $region19: #{tpu_custom_call.1} parent=1 // pred_check_branch
      %20 = sbr.rel (0) target = $region21
    $region20: #{tpu_custom_call.1} parent=1 // pred_region
      _
    $region21: #{tpu_custom_call.1} parent=1 // pred_fallthru
      _
    %v22 = vld [vmem:[%s4] sm:$0xff]
    %v23 = vld [vmem:[%s4 + $0x8] sm:$0xff]
    %v24 = vld [vmem:[%s4 + $0x10] sm:$0xf]
    %v25 = vld [vmem:[%s0] sm:$0x3]
    %v26 = vld [vmem:[%s0 + $0x2] sm:$0x3]
    %v27 = vld [vmem:[%s0 + $0x4] sm:$0x3]
    %v28 = vld [vmem:[%s0 + $0x6] sm:$0x3]
    %v29 = vld [vmem:[%s0 + $0x8] sm:$0x3]
    %v30 = vld [vmem:[%s0 + $0xa] sm:$0x3]
    %v31 = vld [vmem:[%s0 + $0xc] sm:$0x3]
    %v32 = vld [vmem:[%s0 + $0xe] sm:$0x3]
    %v33 = vld [vmem:[%s0 + $0x10] sm:$0x3]
    %v34 = vld [vmem:[%s0 + $0x12] sm:$0x3]
    %v35 = vld [vmem:[%s0 + $0x14] sm:$0x3]
    %v36 = vld [vmem:[%s0 + $0x16] sm:$0x3]
    %v37 = vld [vmem:[%s0 + $0x18] sm:$0x3]
    %v38 = vld [vmem:[%s0 + $0x1a] sm:$0x3]
    %v39 = vld [vmem:[%s0 + $0x1c] sm:$0x3]
    %v40 = vld [vmem:[%s0 + $0x1e] sm:$0x3]
    %v57 = vcombine.low %v25, %v26
    %v58 = vcombine.low %v27, %v28
    %v60 = vunpack.c.l.s4 1983009808
    %v61 = vunpack.c.0.s8 %v60
    %v62 = vlaneseq
    %v63 = vshrl.u32 %v62, 7
    %v64 = vsub.s32 %v61, %v63
    %v65 = vrot.slane %v57, %v64
    %v67 = vunpack.c.l.s4 1983009808
    %v68 = vunpack.c.0.s8 %v67
    %v69 = vlaneseq
    %v70 = vshrl.u32 %v69, 7
    %v71 = vsub.s32 %v68, %v70
    %v72 = vrot.slane %v58, %v71
    %v73 = vcombine.low %v65, %v72
    %v74 = vcombine.low %v29, %v30
    %v75 = vcombine.low %v31, %v32
    %v77 = vunpack.c.l.s4 1983009808
    %v78 = vunpack.c.0.s8 %v77
    %v79 = vlaneseq
    %v80 = vshrl.u32 %v79, 7
    %v81 = vsub.s32 %v78, %v80
    %v82 = vrot.slane %v74, %v81
    %v84 = vunpack.c.l.s4 1983009808
    %v85 = vunpack.c.0.s8 %v84
    %v86 = vlaneseq
    %v87 = vshrl.u32 %v86, 7
    %v88 = vsub.s32 %v85, %v87
    %v89 = vrot.slane %v75, %v88
    %v90 = vcombine.low %v82, %v89
    %v91 = vcombine.low %v33, %v34
    %v92 = vcombine.low %v35, %v36
    %v94 = vunpack.c.l.s4 1983009808
    %v95 = vunpack.c.0.s8 %v94
    %v96 = vlaneseq
    %v97 = vshrl.u32 %v96, 7
    %v98 = vsub.s32 %v95, %v97
    %v99 = vrot.slane %v91, %v98
    %v101 = vunpack.c.l.s4 1983009808
    %v102 = vunpack.c.0.s8 %v101
    %v103 = vlaneseq
    %v104 = vshrl.u32 %v103, 7
    %v105 = vsub.s32 %v102, %v104
    %v106 = vrot.slane %v92, %v105
    %v107 = vcombine.low %v99, %v106
    %v108 = vcombine.low %v37, %v38
    %v109 = vcombine.low %v39, %v40
    %v111 = vunpack.c.l.s4 1983009808
    %v112 = vunpack.c.0.s8 %v111
    %v113 = vlaneseq
    %v114 = vshrl.u32 %v113, 7
    %v115 = vsub.s32 %v112, %v114
    %v116 = vrot.slane %v108, %v115
    %v118 = vunpack.c.l.s4 1983009808
    %v119 = vunpack.c.0.s8 %v118
    %v120 = vlaneseq
    %v121 = vshrl.u32 %v120, 7
    %v122 = vsub.s32 %v119, %v121
    %v123 = vrot.slane %v109, %v122
    %v124 = vcombine.low %v116, %v123
    %v129 = vpack.c.bf16 %v90, %v73
    %v130 = vpack.c.bf16 %v124, %v107
    %v131 = vld [vmem:[%s1] sm:$0x3]
    %v132 = vld [vmem:[%s1 + $0x2] sm:$0x3]
    %v133 = vld [vmem:[%s1 + $0x4] sm:$0x3]
    %v134 = vld [vmem:[%s1 + $0x6] sm:$0x3]
    %v135 = vld [vmem:[%s1 + $0x8] sm:$0x3]
    %v136 = vld [vmem:[%s1 + $0xa] sm:$0x3]
    %v137 = vld [vmem:[%s1 + $0xc] sm:$0x3]
    %v138 = vld [vmem:[%s1 + $0xe] sm:$0x3]
    %v139 = vld [vmem:[%s2] sm:$0xf]
    %v140 = vld [vmem:[%s2 + $0x4] sm:$0xf]
    %v141 = vld [vmem:[%s2 + $0x8] sm:$0xf]
    %v142 = vld [vmem:[%s2 + $0xc] sm:$0xf]
    %v143 = vld [vmem:[%s2 + $0x10] sm:$0xf]
    %v144 = vld [vmem:[%s2 + $0x14] sm:$0xf]
    %v145 = vld [vmem:[%s2 + $0x18] sm:$0xf]
    %v146 = vld [vmem:[%s2 + $0x1c] sm:$0xf]
    %v147 = vld [vmem:[%s2 + $0x20] sm:$0xf]
    %v148 = vld [vmem:[%s2 + $0x24] sm:$0xf]
    %v149 = vld [vmem:[%s2 + $0x28] sm:$0xf]
    %v150 = vld [vmem:[%s2 + $0x2c] sm:$0xf]
    %v151 = vld [vmem:[%s2 + $0x30] sm:$0xf]
    %v152 = vld [vmem:[%s2 + $0x34] sm:$0xf]
    %v153 = vld [vmem:[%s2 + $0x38] sm:$0xf]
    %v154 = vld [vmem:[%s2 + $0x3c] sm:$0xf]
    %v155 = vld [vmem:[%s3] sm:$0xf]
    %v156 = vld [vmem:[%s3 + $0x4] sm:$0xf]
    %v157 = vld [vmem:[%s3 + $0x8] sm:$0xf]
    %v158 = vld [vmem:[%s3 + $0xc] sm:$0xf]
    %v159 = vld [vmem:[%s3 + $0x10] sm:$0xf]
    %v160 = vld [vmem:[%s3 + $0x14] sm:$0xf]
    %v161 = vld [vmem:[%s3 + $0x18] sm:$0xf]
    %v162 = vld [vmem:[%s3 + $0x1c] sm:$0xf]
    %v171 = vcombine.low %v131, %v132
    %v172 = vcombine.low %v133, %v134
    %v174 = vunpack.c.l.s4 1983009808
    %v175 = vunpack.c.0.s8 %v174
    %v176 = vlaneseq
    %v177 = vshrl.u32 %v176, 7
    %v178 = vsub.s32 %v175, %v177
    %v179 = vrot.slane %v171, %v178
    %v181 = vunpack.c.l.s4 1983009808
    %v182 = vunpack.c.0.s8 %v181
    %v183 = vlaneseq
    %v184 = vshrl.u32 %v183, 7
    %v185 = vsub.s32 %v182, %v184
    %v186 = vrot.slane %v172, %v185
    %v187 = vcombine.low %v179, %v186
    %v188 = vcombine.low %v135, %v136
    %v189 = vcombine.low %v137, %v138
    %v191 = vunpack.c.l.s4 1983009808
    %v192 = vunpack.c.0.s8 %v191
    %v193 = vlaneseq
    %v194 = vshrl.u32 %v193, 7
    %v195 = vsub.s32 %v192, %v194
    %v196 = vrot.slane %v188, %v195
    %v198 = vunpack.c.l.s4 1983009808
    %v199 = vunpack.c.0.s8 %v198
    %v200 = vlaneseq
    %v201 = vshrl.u32 %v200, 7
    %v202 = vsub.s32 %v199, %v201
    %v203 = vrot.slane %v189, %v202
    %v204 = vcombine.low %v196, %v203
    %v207 = vpack.c.bf16 %v204, %v187
    %v208 = vlaneseq
    %v209 = vshrl.u32 %v208, 7
    %v210 = vsub.s32 0, %v209
    %v211 = vrot.slane %v22, %v210
    %v216 = vunpack.c.l.b16 %v139
    %v217 = vunpack.c.l.b16 %v140
    %v218 = vunpack.c.l.b16 %v141
    %v219 = vunpack.c.l.b16 %v142
    %v220 = vpack.c.b16 %v217, %v216
    %v221 = vpack.c.b16 %v219, %v218
    %vm224 = vcmask 261120
    %v226 = vsel %vm224, %v207, 0
    %228 = vmatprep.subr.bf16.mxu0 0
    %229 = vmatpush1.bf16.msra.mxu0 0
    %230 = vmatprep.subr.bf16.mxu0 0
    %231 = vmatpush1.bf16.msra.mxu0 0
    %232 = vmatprep.subr.bf16.mxu0 0
    %233 = vmatpush1.bf16.msra.mxu0 0
    %234 = vmatprep.subr.bf16.mxu0 0
    %235 = vmatpush1.bf16.msra.mxu0 0
    %236 = vmatprep.subr.bf16.mxu0 0
    %237 = vmatpush1.bf16.msra.mxu0 0
    %238 = vmatprep.subr.bf16.mxu0 0
    %239 = vmatpush1.bf16.msra.mxu0 0
    %240 = vmatprep.subr.bf16.mxu0 0
    %241 = vmatpush1.bf16.msra.mxu0 %v221
    %242 = vmatprep.subr.bf16.mxu0 0
    %243 = vmatpush1.bf16.msra.mxu0 %v220
    %244 = vmatprep.subr.bf16.mxu0 0
    %245 = vmatpush2.bf16.msra.mxu0 0
    %246 = vmatprep.subr.bf16.mxu0 0
    %247 = vmatpush2.bf16.msra.mxu0 0
    %248 = vmatprep.subr.bf16.mxu0 0
    %249 = vmatpush2.bf16.msra.mxu0 0
    %250 = vmatprep.subr.bf16.mxu0 0
    %251 = vmatpush2.bf16.msra.mxu0 0
    %252 = vmatprep.subr.bf16.mxu0 0
    %253 = vmatpush2.bf16.msra.mxu0 0
    %254 = vmatprep.subr.bf16.mxu0 0
    %255 = vmatpush2.bf16.msra.mxu0 0
    %256 = vmatprep.subr.bf16.mxu0 0
    %257 = vmatpush2.bf16.msra.mxu0 0
    %258 = vmatprep.subr.bf16.mxu0 0
    %259 = vmatpush2.bf16.msra.mxu0 0
    %260 = vmatprep.mubr.bf16.mxu0 0
    %261 = vmatmul.mubr.bf16.gmra.mxu0 %v226
    %v262 = vpop.f32.mrf.mxu0
    %v263 = vadd.f32 %v211, %v262
    %v264 = vpop.f32.mrf.mxu0
    %v265 = vpop.f32.mrf.mxu0
    %v266 = vadd.f32 %v211, %v265
    %v267 = vpop.f32.mrf.mxu0
    %268 = vdwg.mxu0
    %v269 = vlaneseq
    %v270 = vshrl.u32 %v269, 7
    %v271 = vsub.s32 1, %v270
    %v272 = vrot.slane %v22, %v271
    %v277 = vunpack.c.l.b16 %v155
    %v278 = vunpack.c.l.b16 %v156
    %v279 = vunpack.c.l.b16 %v157
    %v280 = vunpack.c.l.b16 %v158
    %v281 = vpack.c.b16 %v278, %v277
    %v282 = vpack.c.b16 %v280, %v279
    %v286 = vsel %vm224, %v129, 0
    %v289 = vsel %vm224, %v130, 0
    %291 = vmatprep.subr.bf16.mxu0 0
    %292 = vmatpush1.bf16.msra.mxu0 0
    %293 = vmatprep.subr.bf16.mxu0 0
    %294 = vmatpush1.bf16.msra.mxu0 0
    %295 = vmatprep.subr.bf16.mxu0 0
    %296 = vmatpush1.bf16.msra.mxu0 0
    %297 = vmatprep.subr.bf16.mxu0 0
    %298 = vmatpush1.bf16.msra.mxu0 0
    %299 = vmatprep.subr.bf16.mxu0 0
    %300 = vmatpush1.bf16.msra.mxu0 0
    %301 = vmatprep.subr.bf16.mxu0 0
    %302 = vmatpush1.bf16.msra.mxu0 0
    %303 = vmatprep.subr.bf16.mxu0 0
    %304 = vmatpush1.bf16.msra.mxu0 %v282
    %305 = vmatprep.subr.bf16.mxu0 0
    %306 = vmatpush1.bf16.msra.mxu0 %v281
    %307 = vmatprep.subr.bf16.mxu0 0
    %308 = vmatpush2.bf16.msra.mxu0 0
    %309 = vmatprep.subr.bf16.mxu0 0
    %310 = vmatpush2.bf16.msra.mxu0 0
    %311 = vmatprep.subr.bf16.mxu0 0
    %312 = vmatpush2.bf16.msra.mxu0 0
    %313 = vmatprep.subr.bf16.mxu0 0
    %314 = vmatpush2.bf16.msra.mxu0 0
    %315 = vmatprep.subr.bf16.mxu0 0
    %316 = vmatpush2.bf16.msra.mxu0 0
    %317 = vmatprep.subr.bf16.mxu0 0
    %318 = vmatpush2.bf16.msra.mxu0 0
    %319 = vmatprep.subr.bf16.mxu0 0
    %320 = vmatpush2.bf16.msra.mxu0 0
    %321 = vmatprep.subr.bf16.mxu0 0
    %322 = vmatpush2.bf16.msra.mxu0 0
    %323 = vmatprep.mubr.bf16.mxu0 0
    %324 = vmatmul.mubr.bf16.gmra.mxu0 %v286
    %v325 = vpop.f32.mrf.mxu0
    %v326 = vadd.f32 %v272, %v325
    %v327 = vpop.f32.mrf.mxu0
    %v328 = vpop.f32.mrf.mxu0
    %v329 = vadd.f32 %v272, %v328
    %v330 = vpop.f32.mrf.mxu0
    %331 = vmatprep.mubr.bf16.mxu0 0
    %332 = vmatmul.mubr.bf16.gmra.mxu0 %v289
    %v333 = vpop.f32.mrf.mxu0
    %v334 = vadd.f32 %v272, %v333
    %v335 = vpop.f32.mrf.mxu0
    %v336 = vpop.f32.mrf.mxu0
    %v337 = vadd.f32 %v272, %v336
    %v338 = vpop.f32.mrf.mxu0
    %339 = vdwg.mxu0
    %342 = vrot.lane.b32.xlu0 %v263, 120
    %v343 = vpop.permute.xlu0 %342
    %344 = vrot.lane.b32.xlu0 %v266, 120
    %v345 = vpop.permute.xlu0 %344
    %348 = vrot.lane.b32.xlu0 %v263, 112
    %v349 = vpop.permute.xlu0 %348
    %350 = vrot.lane.b32.xlu0 %v266, 112
    %v351 = vpop.permute.xlu0 %350
    %354 = vrot.lane.b32.xlu0 %v263, 104
    %v355 = vpop.permute.xlu0 %354
    %356 = vrot.lane.b32.xlu0 %v266, 104
    %v357 = vpop.permute.xlu0 %356
    %v360 = vcombine.low %v263, %v349
    %v361 = vcombine.high %v263, %v349
    %v363 = vunpack.c.l.s4 1983009808
    %v364 = vunpack.c.0.s8 %v363
    %v365 = vlaneseq
    %v366 = vshrl.u32 %v365, 7
    %v367 = vsub.s32 %v364, %v366
    %v368 = vrot.slane %v360, %v367
    %v370 = vunpack.c.l.s4 1983009808
    %v371 = vunpack.c.0.s8 %v370
    %v372 = vlaneseq
    %v373 = vshrl.u32 %v372, 7
    %v374 = vsub.s32 %v371, %v373
    %v375 = vrot.slane %v361, %v374
    %v376 = vcombine.low %v343, %v355
    %v377 = vcombine.high %v343, %v355
    %v379 = vunpack.c.l.s4 1983009808
    %v380 = vunpack.c.0.s8 %v379
    %v381 = vlaneseq
    %v382 = vshrl.u32 %v381, 7
    %v383 = vsub.s32 %v380, %v382
    %v384 = vrot.slane %v376, %v383
    %v386 = vunpack.c.l.s4 1983009808
    %v387 = vunpack.c.0.s8 %v386
    %v388 = vlaneseq
    %v389 = vshrl.u32 %v388, 7
    %v390 = vsub.s32 %v387, %v389
    %v391 = vrot.slane %v377, %v390
    %v392 = vcombine.low %v368, %v384
    %v393 = vcombine.high %v368, %v384
    %v395 = vunpack.c.l.s4 1934713408
    %v396 = vunpack.c.0.s8 %v395
    %v397 = vlaneseq
    %v398 = vshrl.u32 %v397, 7
    %v399 = vsub.s32 %v396, %v398
    %v400 = vrot.slane %v392, %v399
    %v402 = vunpack.c.l.s4 1934713408
    %v403 = vunpack.c.0.s8 %v402
    %v404 = vlaneseq
    %v405 = vshrl.u32 %v404, 7
    %v406 = vsub.s32 %v403, %v405
    %v407 = vrot.slane %v393, %v406
    %v408 = vcombine.low %v375, %v391
    %v409 = vcombine.high %v375, %v391
    %v411 = vunpack.c.l.s4 1934713408
    %v412 = vunpack.c.0.s8 %v411
    %v413 = vlaneseq
    %v414 = vshrl.u32 %v413, 7
    %v415 = vsub.s32 %v412, %v414
    %v416 = vrot.slane %v408, %v415
    %v418 = vunpack.c.l.s4 1934713408
    %v419 = vunpack.c.0.s8 %v418
    %v420 = vlaneseq
    %v421 = vshrl.u32 %v420, 7
    %v422 = vsub.s32 %v419, %v421
    %v423 = vrot.slane %v409, %v422
    %v424 = vcombine.high %v400, 0.0
    %v425 = vcombine.high %v407, 0.0
    %v426 = vcombine.high %v416, 0.0
    %v427 = vcombine.high %v423, 0.0
    %v428 = vcombine.low %v266, %v351
    %v429 = vcombine.high %v266, %v351
    %v431 = vunpack.c.l.s4 1983009808
    %v432 = vunpack.c.0.s8 %v431
    %v433 = vlaneseq
    %v434 = vshrl.u32 %v433, 7
    %v435 = vsub.s32 %v432, %v434
    %v436 = vrot.slane %v428, %v435
    %v438 = vunpack.c.l.s4 1983009808
    %v439 = vunpack.c.0.s8 %v438
    %v440 = vlaneseq
    %v441 = vshrl.u32 %v440, 7
    %v442 = vsub.s32 %v439, %v441
    %v443 = vrot.slane %v429, %v442
    %v444 = vcombine.low %v345, %v357
    %v445 = vcombine.high %v345, %v357
    %v447 = vunpack.c.l.s4 1983009808
    %v448 = vunpack.c.0.s8 %v447
    %v449 = vlaneseq
    %v450 = vshrl.u32 %v449, 7
    %v451 = vsub.s32 %v448, %v450
    %v452 = vrot.slane %v444, %v451
    %v454 = vunpack.c.l.s4 1983009808
    %v455 = vunpack.c.0.s8 %v454
    %v456 = vlaneseq
    %v457 = vshrl.u32 %v456, 7
    %v458 = vsub.s32 %v455, %v457
    %v459 = vrot.slane %v445, %v458
    %v460 = vcombine.low %v436, %v452
    %v461 = vcombine.high %v436, %v452
    %v463 = vunpack.c.l.s4 1934713408
    %v464 = vunpack.c.0.s8 %v463
    %v465 = vlaneseq
    %v466 = vshrl.u32 %v465, 7
    %v467 = vsub.s32 %v464, %v466
    %v468 = vrot.slane %v460, %v467
    %v470 = vunpack.c.l.s4 1934713408
    %v471 = vunpack.c.0.s8 %v470
    %v472 = vlaneseq
    %v473 = vshrl.u32 %v472, 7
    %v474 = vsub.s32 %v471, %v473
    %v475 = vrot.slane %v461, %v474
    %v476 = vcombine.low %v443, %v459
    %v477 = vcombine.high %v443, %v459
    %v479 = vunpack.c.l.s4 1934713408
    %v480 = vunpack.c.0.s8 %v479
    %v481 = vlaneseq
    %v482 = vshrl.u32 %v481, 7
    %v483 = vsub.s32 %v480, %v482
    %v484 = vrot.slane %v476, %v483
    %v486 = vunpack.c.l.s4 1934713408
    %v487 = vunpack.c.0.s8 %v486
    %v488 = vlaneseq
    %v489 = vshrl.u32 %v488, 7
    %v490 = vsub.s32 %v487, %v489
    %v491 = vrot.slane %v477, %v490
    %v492 = vcombine.high %v468, 0.0
    %v493 = vcombine.high %v475, 0.0
    %v494 = vcombine.high %v484, 0.0
    %v495 = vcombine.high %v491, 0.0
    %500 = vrot.lane.b32.xlu0 %v326, 120
    %v501 = vpop.permute.xlu0 %500
    %502 = vrot.lane.b32.xlu0 %v329, 120
    %v503 = vpop.permute.xlu0 %502
    %504 = vrot.lane.b32.xlu0 %v334, 120
    %v505 = vpop.permute.xlu0 %504
    %506 = vrot.lane.b32.xlu0 %v337, 120
    %v507 = vpop.permute.xlu0 %506
    %512 = vrot.lane.b32.xlu0 %v326, 112
    %v513 = vpop.permute.xlu0 %512
    %514 = vrot.lane.b32.xlu0 %v329, 112
    %v515 = vpop.permute.xlu0 %514
    %516 = vrot.lane.b32.xlu0 %v334, 112
    %v517 = vpop.permute.xlu0 %516
    %518 = vrot.lane.b32.xlu0 %v337, 112
    %v519 = vpop.permute.xlu0 %518
    %524 = vrot.lane.b32.xlu0 %v326, 104
    %v525 = vpop.permute.xlu0 %524
    %526 = vrot.lane.b32.xlu0 %v329, 104
    %v527 = vpop.permute.xlu0 %526
    %528 = vrot.lane.b32.xlu0 %v334, 104
    %v529 = vpop.permute.xlu0 %528
    %530 = vrot.lane.b32.xlu0 %v337, 104
    %v531 = vpop.permute.xlu0 %530
    %v536 = vcombine.low %v326, %v513
    %v537 = vcombine.high %v326, %v513
    %v539 = vunpack.c.l.s4 1983009808
    %v540 = vunpack.c.0.s8 %v539
    %v541 = vlaneseq
    %v542 = vshrl.u32 %v541, 7
    %v543 = vsub.s32 %v540, %v542
    %v544 = vrot.slane %v536, %v543
    %v546 = vunpack.c.l.s4 1983009808
    %v547 = vunpack.c.0.s8 %v546
    %v548 = vlaneseq
    %v549 = vshrl.u32 %v548, 7
    %v550 = vsub.s32 %v547, %v549
    %v551 = vrot.slane %v537, %v550
    %v552 = vcombine.low %v501, %v525
    %v553 = vcombine.high %v501, %v525
    %v555 = vunpack.c.l.s4 1983009808
    %v556 = vunpack.c.0.s8 %v555
    %v557 = vlaneseq
    %v558 = vshrl.u32 %v557, 7
    %v559 = vsub.s32 %v556, %v558
    %v560 = vrot.slane %v552, %v559
    %v562 = vunpack.c.l.s4 1983009808
    %v563 = vunpack.c.0.s8 %v562
    %v564 = vlaneseq
    %v565 = vshrl.u32 %v564, 7
    %v566 = vsub.s32 %v563, %v565
    %v567 = vrot.slane %v553, %v566
    %v568 = vcombine.low %v544, %v560
    %v569 = vcombine.high %v544, %v560
    %v571 = vunpack.c.l.s4 1934713408
    %v572 = vunpack.c.0.s8 %v571
    %v573 = vlaneseq
    %v574 = vshrl.u32 %v573, 7
    %v575 = vsub.s32 %v572, %v574
    %v576 = vrot.slane %v568, %v575
    %v578 = vunpack.c.l.s4 1934713408
    %v579 = vunpack.c.0.s8 %v578
    %v580 = vlaneseq
    %v581 = vshrl.u32 %v580, 7
    %v582 = vsub.s32 %v579, %v581
    %v583 = vrot.slane %v569, %v582
    %v584 = vcombine.low %v551, %v567
    %v585 = vcombine.high %v551, %v567
    %v587 = vunpack.c.l.s4 1934713408
    %v588 = vunpack.c.0.s8 %v587
    %v589 = vlaneseq
    %v590 = vshrl.u32 %v589, 7
    %v591 = vsub.s32 %v588, %v590
    %v592 = vrot.slane %v584, %v591
    %v594 = vunpack.c.l.s4 1934713408
    %v595 = vunpack.c.0.s8 %v594
    %v596 = vlaneseq
    %v597 = vshrl.u32 %v596, 7
    %v598 = vsub.s32 %v595, %v597
    %v599 = vrot.slane %v585, %v598
    %v600 = vcombine.high %v576, 0.0
    %v601 = vcombine.high %v583, 0.0
    %v602 = vcombine.high %v592, 0.0
    %v603 = vcombine.high %v599, 0.0
    %v604 = vcombine.low %v329, %v515
    %v605 = vcombine.high %v329, %v515
    %v607 = vunpack.c.l.s4 1983009808
    %v608 = vunpack.c.0.s8 %v607
    %v609 = vlaneseq
    %v610 = vshrl.u32 %v609, 7
    %v611 = vsub.s32 %v608, %v610
    %v612 = vrot.slane %v604, %v611
    %v614 = vunpack.c.l.s4 1983009808
    %v615 = vunpack.c.0.s8 %v614
    %v616 = vlaneseq
    %v617 = vshrl.u32 %v616, 7
    %v618 = vsub.s32 %v615, %v617
    %v619 = vrot.slane %v605, %v618
    %v620 = vcombine.low %v503, %v527
    %v621 = vcombine.high %v503, %v527
    %v623 = vunpack.c.l.s4 1983009808
    %v624 = vunpack.c.0.s8 %v623
    %v625 = vlaneseq
    %v626 = vshrl.u32 %v625, 7
    %v627 = vsub.s32 %v624, %v626
    %v628 = vrot.slane %v620, %v627
    %v630 = vunpack.c.l.s4 1983009808
    %v631 = vunpack.c.0.s8 %v630
    %v632 = vlaneseq
    %v633 = vshrl.u32 %v632, 7
    %v634 = vsub.s32 %v631, %v633
    %v635 = vrot.slane %v621, %v634
    %v636 = vcombine.low %v612, %v628
    %v637 = vcombine.high %v612, %v628
    %v639 = vunpack.c.l.s4 1934713408
    %v640 = vunpack.c.0.s8 %v639
    %v641 = vlaneseq
    %v642 = vshrl.u32 %v641, 7
    %v643 = vsub.s32 %v640, %v642
    %v644 = vrot.slane %v636, %v643
    %v646 = vunpack.c.l.s4 1934713408
    %v647 = vunpack.c.0.s8 %v646
    %v648 = vlaneseq
    %v649 = vshrl.u32 %v648, 7
    %v650 = vsub.s32 %v647, %v649
    %v651 = vrot.slane %v637, %v650
    %v652 = vcombine.low %v619, %v635
    %v653 = vcombine.high %v619, %v635
    %v655 = vunpack.c.l.s4 1934713408
    %v656 = vunpack.c.0.s8 %v655
    %v657 = vlaneseq
    %v658 = vshrl.u32 %v657, 7
    %v659 = vsub.s32 %v656, %v658
    %v660 = vrot.slane %v652, %v659
    %v662 = vunpack.c.l.s4 1934713408
    %v663 = vunpack.c.0.s8 %v662
    %v664 = vlaneseq
    %v665 = vshrl.u32 %v664, 7
    %v666 = vsub.s32 %v663, %v665
    %v667 = vrot.slane %v653, %v666
    %v668 = vcombine.high %v644, 0.0
    %v669 = vcombine.high %v651, 0.0
    %v670 = vcombine.high %v660, 0.0
    %v671 = vcombine.high %v667, 0.0
    %v672 = vcombine.low %v334, %v517
    %v673 = vcombine.high %v334, %v517
    %v675 = vunpack.c.l.s4 1983009808
    %v676 = vunpack.c.0.s8 %v675
    %v677 = vlaneseq
    %v678 = vshrl.u32 %v677, 7
    %v679 = vsub.s32 %v676, %v678
    %v680 = vrot.slane %v672, %v679
    %v682 = vunpack.c.l.s4 1983009808
    %v683 = vunpack.c.0.s8 %v682
    %v684 = vlaneseq
    %v685 = vshrl.u32 %v684, 7
    %v686 = vsub.s32 %v683, %v685
    %v687 = vrot.slane %v673, %v686
    %v688 = vcombine.low %v505, %v529
    %v689 = vcombine.high %v505, %v529
    %v691 = vunpack.c.l.s4 1983009808
    %v692 = vunpack.c.0.s8 %v691
    %v693 = vlaneseq
    %v694 = vshrl.u32 %v693, 7
    %v695 = vsub.s32 %v692, %v694
    %v696 = vrot.slane %v688, %v695
    %v698 = vunpack.c.l.s4 1983009808
    %v699 = vunpack.c.0.s8 %v698
    %v700 = vlaneseq
    %v701 = vshrl.u32 %v700, 7
    %v702 = vsub.s32 %v699, %v701
    %v703 = vrot.slane %v689, %v702
    %v704 = vcombine.low %v680, %v696
    %v705 = vcombine.high %v680, %v696
    %v707 = vunpack.c.l.s4 1934713408
    %v708 = vunpack.c.0.s8 %v707
    %v709 = vlaneseq
    %v710 = vshrl.u32 %v709, 7
    %v711 = vsub.s32 %v708, %v710
    %v712 = vrot.slane %v704, %v711
    %v714 = vunpack.c.l.s4 1934713408
    %v715 = vunpack.c.0.s8 %v714
    %v716 = vlaneseq
    %v717 = vshrl.u32 %v716, 7
    %v718 = vsub.s32 %v715, %v717
    %v719 = vrot.slane %v705, %v718
    %v720 = vcombine.low %v687, %v703
    %v721 = vcombine.high %v687, %v703
    %v723 = vunpack.c.l.s4 1934713408
    %v724 = vunpack.c.0.s8 %v723
    %v725 = vlaneseq
    %v726 = vshrl.u32 %v725, 7
    %v727 = vsub.s32 %v724, %v726
    %v728 = vrot.slane %v720, %v727
    %v730 = vunpack.c.l.s4 1934713408
    %v731 = vunpack.c.0.s8 %v730
    %v732 = vlaneseq
    %v733 = vshrl.u32 %v732, 7
    %v734 = vsub.s32 %v731, %v733
    %v735 = vrot.slane %v721, %v734
    %v736 = vcombine.high %v712, 0.0
    %v737 = vcombine.high %v719, 0.0
    %v738 = vcombine.high %v728, 0.0
    %v739 = vcombine.high %v735, 0.0
    %v740 = vcombine.low %v337, %v519
    %v741 = vcombine.high %v337, %v519
    %v743 = vunpack.c.l.s4 1983009808
    %v744 = vunpack.c.0.s8 %v743
    %v745 = vlaneseq
    %v746 = vshrl.u32 %v745, 7
    %v747 = vsub.s32 %v744, %v746
    %v748 = vrot.slane %v740, %v747
    %v750 = vunpack.c.l.s4 1983009808
    %v751 = vunpack.c.0.s8 %v750
    %v752 = vlaneseq
    %v753 = vshrl.u32 %v752, 7
    %v754 = vsub.s32 %v751, %v753
    %v755 = vrot.slane %v741, %v754
    %v756 = vcombine.low %v507, %v531
    %v757 = vcombine.high %v507, %v531
    %v759 = vunpack.c.l.s4 1983009808
    %v760 = vunpack.c.0.s8 %v759
    %v761 = vlaneseq
    %v762 = vshrl.u32 %v761, 7
    %v763 = vsub.s32 %v760, %v762
    %v764 = vrot.slane %v756, %v763
    %v766 = vunpack.c.l.s4 1983009808
    %v767 = vunpack.c.0.s8 %v766
    %v768 = vlaneseq
    %v769 = vshrl.u32 %v768, 7
    %v770 = vsub.s32 %v767, %v769
    %v771 = vrot.slane %v757, %v770
    %v772 = vcombine.low %v748, %v764
    %v773 = vcombine.high %v748, %v764
    %v775 = vunpack.c.l.s4 1934713408
    %v776 = vunpack.c.0.s8 %v775
    %v777 = vlaneseq
    %v778 = vshrl.u32 %v777, 7
    %v779 = vsub.s32 %v776, %v778
    %v780 = vrot.slane %v772, %v779
    %v782 = vunpack.c.l.s4 1934713408
    %v783 = vunpack.c.0.s8 %v782
    %v784 = vlaneseq
    %v785 = vshrl.u32 %v784, 7
    %v786 = vsub.s32 %v783, %v785
    %v787 = vrot.slane %v773, %v786
    %v788 = vcombine.low %v755, %v771
    %v789 = vcombine.high %v755, %v771
    %v791 = vunpack.c.l.s4 1934713408
    %v792 = vunpack.c.0.s8 %v791
    %v793 = vlaneseq
    %v794 = vshrl.u32 %v793, 7
    %v795 = vsub.s32 %v792, %v794
    %v796 = vrot.slane %v788, %v795
    %v798 = vunpack.c.l.s4 1934713408
    %v799 = vunpack.c.0.s8 %v798
    %v800 = vlaneseq
    %v801 = vshrl.u32 %v800, 7
    %v802 = vsub.s32 %v799, %v801
    %v803 = vrot.slane %v789, %v802
    %v804 = vcombine.high %v780, 0.0
    %v805 = vcombine.high %v787, 0.0
    %v806 = vcombine.high %v796, 0.0
    %v807 = vcombine.high %v803, 0.0
    %808 = vrot.lane.b32.xlu0 %v326, 96
    %v809 = vpop.permute.xlu0 %808
    %810 = vrot.lane.b32.xlu0 %v329, 96
    %v811 = vpop.permute.xlu0 %810
    %812 = vrot.lane.b32.xlu0 %v334, 96
    %v813 = vpop.permute.xlu0 %812
    %814 = vrot.lane.b32.xlu0 %v337, 96
    %v815 = vpop.permute.xlu0 %814
    %816 = vrot.lane.b32.xlu0 %v501, 96
    %v817 = vpop.permute.xlu0 %816
    %818 = vrot.lane.b32.xlu0 %v503, 96
    %v819 = vpop.permute.xlu0 %818
    %820 = vrot.lane.b32.xlu0 %v505, 96
    %v821 = vpop.permute.xlu0 %820
    %822 = vrot.lane.b32.xlu0 %v507, 96
    %v823 = vpop.permute.xlu0 %822
    %824 = vrot.lane.b32.xlu0 %v513, 96
    %v825 = vpop.permute.xlu0 %824
    %826 = vrot.lane.b32.xlu0 %v515, 96
    %v827 = vpop.permute.xlu0 %826
    %828 = vrot.lane.b32.xlu0 %v517, 96
    %v829 = vpop.permute.xlu0 %828
    %830 = vrot.lane.b32.xlu0 %v519, 96
    %v831 = vpop.permute.xlu0 %830
    %832 = vrot.lane.b32.xlu0 %v525, 96
    %v833 = vpop.permute.xlu0 %832
    %834 = vrot.lane.b32.xlu0 %v527, 96
    %v835 = vpop.permute.xlu0 %834
    %836 = vrot.lane.b32.xlu0 %v529, 96
    %v837 = vpop.permute.xlu0 %836
    %838 = vrot.lane.b32.xlu0 %v531, 96
    %v839 = vpop.permute.xlu0 %838
    %v856 = vcombine.low %v809, %v825
    %v857 = vcombine.high %v809, %v825
    %v859 = vunpack.c.l.s4 1983009808
    %v860 = vunpack.c.0.s8 %v859
    %v861 = vlaneseq
    %v862 = vshrl.u32 %v861, 7
    %v863 = vsub.s32 %v860, %v862
    %v864 = vrot.slane %v856, %v863
    %v866 = vunpack.c.l.s4 1983009808
    %v867 = vunpack.c.0.s8 %v866
    %v868 = vlaneseq
    %v869 = vshrl.u32 %v868, 7
    %v870 = vsub.s32 %v867, %v869
    %v871 = vrot.slane %v857, %v870
    %v872 = vcombine.low %v817, %v833
    %v873 = vcombine.high %v817, %v833
    %v875 = vunpack.c.l.s4 1983009808
    %v876 = vunpack.c.0.s8 %v875
    %v877 = vlaneseq
    %v878 = vshrl.u32 %v877, 7
    %v879 = vsub.s32 %v876, %v878
    %v880 = vrot.slane %v872, %v879
    %v882 = vunpack.c.l.s4 1983009808
    %v883 = vunpack.c.0.s8 %v882
    %v884 = vlaneseq
    %v885 = vshrl.u32 %v884, 7
    %v886 = vsub.s32 %v883, %v885
    %v887 = vrot.slane %v873, %v886
    %v888 = vcombine.low %v864, %v880
    %v889 = vcombine.high %v864, %v880
    %v891 = vunpack.c.l.s4 1934713408
    %v892 = vunpack.c.0.s8 %v891
    %v893 = vlaneseq
    %v894 = vshrl.u32 %v893, 7
    %v895 = vsub.s32 %v892, %v894
    %v896 = vrot.slane %v888, %v895
    %v898 = vunpack.c.l.s4 1934713408
    %v899 = vunpack.c.0.s8 %v898
    %v900 = vlaneseq
    %v901 = vshrl.u32 %v900, 7
    %v902 = vsub.s32 %v899, %v901
    %v903 = vrot.slane %v889, %v902
    %v904 = vcombine.low %v871, %v887
    %v905 = vcombine.high %v871, %v887
    %v907 = vunpack.c.l.s4 1934713408
    %v908 = vunpack.c.0.s8 %v907
    %v909 = vlaneseq
    %v910 = vshrl.u32 %v909, 7
    %v911 = vsub.s32 %v908, %v910
    %v912 = vrot.slane %v904, %v911
    %v914 = vunpack.c.l.s4 1934713408
    %v915 = vunpack.c.0.s8 %v914
    %v916 = vlaneseq
    %v917 = vshrl.u32 %v916, 7
    %v918 = vsub.s32 %v915, %v917
    %v919 = vrot.slane %v905, %v918
    %v920 = vcombine.high %v896, 0.0
    %v921 = vcombine.high %v903, 0.0
    %v922 = vcombine.high %v912, 0.0
    %v923 = vcombine.high %v919, 0.0
    %v924 = vcombine.low %v811, %v827
    %v925 = vcombine.high %v811, %v827
    %v927 = vunpack.c.l.s4 1983009808
    %v928 = vunpack.c.0.s8 %v927
    %v929 = vlaneseq
    %v930 = vshrl.u32 %v929, 7
    %v931 = vsub.s32 %v928, %v930
    %v932 = vrot.slane %v924, %v931
    %v934 = vunpack.c.l.s4 1983009808
    %v935 = vunpack.c.0.s8 %v934
    %v936 = vlaneseq
    %v937 = vshrl.u32 %v936, 7
    %v938 = vsub.s32 %v935, %v937
    %v939 = vrot.slane %v925, %v938
    %v940 = vcombine.low %v819, %v835
    %v941 = vcombine.high %v819, %v835
    %v943 = vunpack.c.l.s4 1983009808
    %v944 = vunpack.c.0.s8 %v943
    %v945 = vlaneseq
    %v946 = vshrl.u32 %v945, 7
    %v947 = vsub.s32 %v944, %v946
    %v948 = vrot.slane %v940, %v947
    %v950 = vunpack.c.l.s4 1983009808
    %v951 = vunpack.c.0.s8 %v950
    %v952 = vlaneseq
    %v953 = vshrl.u32 %v952, 7
    %v954 = vsub.s32 %v951, %v953
    %v955 = vrot.slane %v941, %v954
    %v956 = vcombine.low %v932, %v948
    %v957 = vcombine.high %v932, %v948
    %v959 = vunpack.c.l.s4 1934713408
    %v960 = vunpack.c.0.s8 %v959
    %v961 = vlaneseq
    %v962 = vshrl.u32 %v961, 7
    %v963 = vsub.s32 %v960, %v962
    %v964 = vrot.slane %v956, %v963
    %v966 = vunpack.c.l.s4 1934713408
    %v967 = vunpack.c.0.s8 %v966
    %v968 = vlaneseq
    %v969 = vshrl.u32 %v968, 7
    %v970 = vsub.s32 %v967, %v969
    %v971 = vrot.slane %v957, %v970
    %v972 = vcombine.low %v939, %v955
    %v973 = vcombine.high %v939, %v955
    %v975 = vunpack.c.l.s4 1934713408
    %v976 = vunpack.c.0.s8 %v975
    %v977 = vlaneseq
    %v978 = vshrl.u32 %v977, 7
    %v979 = vsub.s32 %v976, %v978
    %v980 = vrot.slane %v972, %v979
    %v982 = vunpack.c.l.s4 1934713408
    %v983 = vunpack.c.0.s8 %v982
    %v984 = vlaneseq
    %v985 = vshrl.u32 %v984, 7
    %v986 = vsub.s32 %v983, %v985
    %v987 = vrot.slane %v973, %v986
    %v988 = vcombine.high %v964, 0.0
    %v989 = vcombine.high %v971, 0.0
    %v990 = vcombine.high %v980, 0.0
    %v991 = vcombine.high %v987, 0.0
    %v992 = vcombine.low %v813, %v829
    %v993 = vcombine.high %v813, %v829
    %v995 = vunpack.c.l.s4 1983009808
    %v996 = vunpack.c.0.s8 %v995
    %v997 = vlaneseq
    %v998 = vshrl.u32 %v997, 7
    %v999 = vsub.s32 %v996, %v998
    %v1000 = vrot.slane %v992, %v999
    %v1002 = vunpack.c.l.s4 1983009808
    %v1003 = vunpack.c.0.s8 %v1002
    %v1004 = vlaneseq
    %v1005 = vshrl.u32 %v1004, 7
    %v1006 = vsub.s32 %v1003, %v1005
    %v1007 = vrot.slane %v993, %v1006
    %v1008 = vcombine.low %v821, %v837
    %v1009 = vcombine.high %v821, %v837
    %v1011 = vunpack.c.l.s4 1983009808
    %v1012 = vunpack.c.0.s8 %v1011
    %v1013 = vlaneseq
    %v1014 = vshrl.u32 %v1013, 7
    %v1015 = vsub.s32 %v1012, %v1014
    %v1016 = vrot.slane %v1008, %v1015
    %v1018 = vunpack.c.l.s4 1983009808
    %v1019 = vunpack.c.0.s8 %v1018
    %v1020 = vlaneseq
    %v1021 = vshrl.u32 %v1020, 7
    %v1022 = vsub.s32 %v1019, %v1021
    %v1023 = vrot.slane %v1009, %v1022
    %v1024 = vcombine.low %v1000, %v1016
    %v1025 = vcombine.high %v1000, %v1016
    %v1027 = vunpack.c.l.s4 1934713408
    %v1028 = vunpack.c.0.s8 %v1027
    %v1029 = vlaneseq
    %v1030 = vshrl.u32 %v1029, 7
    %v1031 = vsub.s32 %v1028, %v1030
    %v1032 = vrot.slane %v1024, %v1031
    %v1034 = vunpack.c.l.s4 1934713408
    %v1035 = vunpack.c.0.s8 %v1034
    %v1036 = vlaneseq
    %v1037 = vshrl.u32 %v1036, 7
    %v1038 = vsub.s32 %v1035, %v1037
    %v1039 = vrot.slane %v1025, %v1038
    %v1040 = vcombine.low %v1007, %v1023
    %v1041 = vcombine.high %v1007, %v1023
    %v1043 = vunpack.c.l.s4 1934713408
    %v1044 = vunpack.c.0.s8 %v1043
    %v1045 = vlaneseq
    %v1046 = vshrl.u32 %v1045, 7
    %v1047 = vsub.s32 %v1044, %v1046
    %v1048 = vrot.slane %v1040, %v1047
    %v1050 = vunpack.c.l.s4 1934713408
    %v1051 = vunpack.c.0.s8 %v1050
    %v1052 = vlaneseq
    %v1053 = vshrl.u32 %v1052, 7
    %v1054 = vsub.s32 %v1051, %v1053
    %v1055 = vrot.slane %v1041, %v1054
    %v1056 = vcombine.high %v1032, 0.0
    %v1057 = vcombine.high %v1039, 0.0
    %v1058 = vcombine.high %v1048, 0.0
    %v1059 = vcombine.high %v1055, 0.0
    %v1060 = vcombine.low %v815, %v831
    %v1061 = vcombine.high %v815, %v831
    %v1063 = vunpack.c.l.s4 1983009808
    %v1064 = vunpack.c.0.s8 %v1063
    %v1065 = vlaneseq
    %v1066 = vshrl.u32 %v1065, 7
    %v1067 = vsub.s32 %v1064, %v1066
    %v1068 = vrot.slane %v1060, %v1067
    %v1070 = vunpack.c.l.s4 1983009808
    %v1071 = vunpack.c.0.s8 %v1070
    %v1072 = vlaneseq
    %v1073 = vshrl.u32 %v1072, 7
    %v1074 = vsub.s32 %v1071, %v1073
    %v1075 = vrot.slane %v1061, %v1074
    %v1076 = vcombine.low %v823, %v839
    %v1077 = vcombine.high %v823, %v839
    %v1079 = vunpack.c.l.s4 1983009808
    %v1080 = vunpack.c.0.s8 %v1079
    %v1081 = vlaneseq
    %v1082 = vshrl.u32 %v1081, 7
    %v1083 = vsub.s32 %v1080, %v1082
    %v1084 = vrot.slane %v1076, %v1083
    %v1086 = vunpack.c.l.s4 1983009808
    %v1087 = vunpack.c.0.s8 %v1086
    %v1088 = vlaneseq
    %v1089 = vshrl.u32 %v1088, 7
    %v1090 = vsub.s32 %v1087, %v1089
    %v1091 = vrot.slane %v1077, %v1090
    %v1092 = vcombine.low %v1068, %v1084
    %v1093 = vcombine.high %v1068, %v1084
    %v1095 = vunpack.c.l.s4 1934713408
    %v1096 = vunpack.c.0.s8 %v1095
    %v1097 = vlaneseq
    %v1098 = vshrl.u32 %v1097, 7
    %v1099 = vsub.s32 %v1096, %v1098
    %v1100 = vrot.slane %v1092, %v1099
    %v1102 = vunpack.c.l.s4 1934713408
    %v1103 = vunpack.c.0.s8 %v1102
    %v1104 = vlaneseq
    %v1105 = vshrl.u32 %v1104, 7
    %v1106 = vsub.s32 %v1103, %v1105
    %v1107 = vrot.slane %v1093, %v1106
    %v1108 = vcombine.low %v1075, %v1091
    %v1109 = vcombine.high %v1075, %v1091
    %v1111 = vunpack.c.l.s4 1934713408
    %v1112 = vunpack.c.0.s8 %v1111
    %v1113 = vlaneseq
    %v1114 = vshrl.u32 %v1113, 7
    %v1115 = vsub.s32 %v1112, %v1114
    %v1116 = vrot.slane %v1108, %v1115
    %v1118 = vunpack.c.l.s4 1934713408
    %v1119 = vunpack.c.0.s8 %v1118
    %v1120 = vlaneseq
    %v1121 = vshrl.u32 %v1120, 7
    %v1122 = vsub.s32 %v1119, %v1121
    %v1123 = vrot.slane %v1109, %v1122
    %v1124 = vcombine.high %v1100, 0.0
    %v1125 = vcombine.high %v1107, 0.0
    %v1126 = vcombine.high %v1116, 0.0
    %v1127 = vcombine.high %v1123, 0.0
    %v1128 = vcombine.low %v400, %v416
    %v1130 = vunpack.c.l.s4 1983009808
    %v1131 = vunpack.c.0.s8 %v1130
    %v1132 = vlaneseq
    %v1133 = vshrl.u32 %v1132, 7
    %v1134 = vsub.s32 %v1131, %v1133
    %v1135 = vrot.slane %v1128, %v1134
    %v1136 = vcombine.low %v407, %v423
    %v1138 = vunpack.c.l.s4 1983009808
    %v1139 = vunpack.c.0.s8 %v1138
    %v1140 = vlaneseq
    %v1141 = vshrl.u32 %v1140, 7
    %v1142 = vsub.s32 %v1139, %v1141
    %v1143 = vrot.slane %v1136, %v1142
    %v1144 = vcombine.low %v468, %v484
    %v1146 = vunpack.c.l.s4 1983009808
    %v1147 = vunpack.c.0.s8 %v1146
    %v1148 = vlaneseq
    %v1149 = vshrl.u32 %v1148, 7
    %v1150 = vsub.s32 %v1147, %v1149
    %v1151 = vrot.slane %v1144, %v1150
    %v1152 = vcombine.low %v475, %v491
    %v1154 = vunpack.c.l.s4 1983009808
    %v1155 = vunpack.c.0.s8 %v1154
    %v1156 = vlaneseq
    %v1157 = vshrl.u32 %v1156, 7
    %v1158 = vsub.s32 %v1155, %v1157
    %v1159 = vrot.slane %v1152, %v1158
    %v1160 = vcombine.low %v1135, %v1143
    %v1161 = vcombine.high %v1135, %v1143
    %v1163 = vunpack.c.l.s4 1934713408
    %v1164 = vunpack.c.0.s8 %v1163
    %v1165 = vlaneseq
    %v1166 = vshrl.u32 %v1165, 7
    %v1167 = vsub.s32 %v1164, %v1166
    %v1168 = vrot.slane %v1160, %v1167
    %v1170 = vunpack.c.l.s4 1934713408
    %v1171 = vunpack.c.0.s8 %v1170
    %v1172 = vlaneseq
    %v1173 = vshrl.u32 %v1172, 7
    %v1174 = vsub.s32 %v1171, %v1173
    %v1175 = vrot.slane %v1161, %v1174
    %v1176 = vcombine.low %v1151, %v1159
    %v1177 = vcombine.high %v1151, %v1159
    %v1179 = vunpack.c.l.s4 1934713408
    %v1180 = vunpack.c.0.s8 %v1179
    %v1181 = vlaneseq
    %v1182 = vshrl.u32 %v1181, 7
    %v1183 = vsub.s32 %v1180, %v1182
    %v1184 = vrot.slane %v1176, %v1183
    %v1186 = vunpack.c.l.s4 1934713408
    %v1187 = vunpack.c.0.s8 %v1186
    %v1188 = vlaneseq
    %v1189 = vshrl.u32 %v1188, 7
    %v1190 = vsub.s32 %v1187, %v1189
    %v1191 = vrot.slane %v1177, %v1190
    %v1192 = vcombine.low %v1168, %v1184
    %v1193 = vcombine.high %v1168, %v1184
    %v1194 = vcombine.low %v1175, %v1191
    %v1195 = vcombine.high %v1175, %v1191
    %v1196 = vcombine.low %v424, %v426
    %v1198 = vunpack.c.l.s4 1983009808
    %v1199 = vunpack.c.0.s8 %v1198
    %v1200 = vlaneseq
    %v1201 = vshrl.u32 %v1200, 7
    %v1202 = vsub.s32 %v1199, %v1201
    %v1203 = vrot.slane %v1196, %v1202
    %v1204 = vcombine.low %v425, %v427
    %v1206 = vunpack.c.l.s4 1983009808
    %v1207 = vunpack.c.0.s8 %v1206
    %v1208 = vlaneseq
    %v1209 = vshrl.u32 %v1208, 7
    %v1210 = vsub.s32 %v1207, %v1209
    %v1211 = vrot.slane %v1204, %v1210
    %v1212 = vcombine.low %v492, %v494
    %v1214 = vunpack.c.l.s4 1983009808
    %v1215 = vunpack.c.0.s8 %v1214
    %v1216 = vlaneseq
    %v1217 = vshrl.u32 %v1216, 7
    %v1218 = vsub.s32 %v1215, %v1217
    %v1219 = vrot.slane %v1212, %v1218
    %v1220 = vcombine.low %v493, %v495
    %v1222 = vunpack.c.l.s4 1983009808
    %v1223 = vunpack.c.0.s8 %v1222
    %v1224 = vlaneseq
    %v1225 = vshrl.u32 %v1224, 7
    %v1226 = vsub.s32 %v1223, %v1225
    %v1227 = vrot.slane %v1220, %v1226
    %v1228 = vcombine.low %v1203, %v1211
    %v1229 = vcombine.high %v1203, %v1211
    %v1231 = vunpack.c.l.s4 1934713408
    %v1232 = vunpack.c.0.s8 %v1231
    %v1233 = vlaneseq
    %v1234 = vshrl.u32 %v1233, 7
    %v1235 = vsub.s32 %v1232, %v1234
    %v1236 = vrot.slane %v1228, %v1235
    %v1238 = vunpack.c.l.s4 1934713408
    %v1239 = vunpack.c.0.s8 %v1238
    %v1240 = vlaneseq
    %v1241 = vshrl.u32 %v1240, 7
    %v1242 = vsub.s32 %v1239, %v1241
    %v1243 = vrot.slane %v1229, %v1242
    %v1244 = vcombine.low %v1219, %v1227
    %v1245 = vcombine.high %v1219, %v1227
    %v1247 = vunpack.c.l.s4 1934713408
    %v1248 = vunpack.c.0.s8 %v1247
    %v1249 = vlaneseq
    %v1250 = vshrl.u32 %v1249, 7
    %v1251 = vsub.s32 %v1248, %v1250
    %v1252 = vrot.slane %v1244, %v1251
    %v1254 = vunpack.c.l.s4 1934713408
    %v1255 = vunpack.c.0.s8 %v1254
    %v1256 = vlaneseq
    %v1257 = vshrl.u32 %v1256, 7
    %v1258 = vsub.s32 %v1255, %v1257
    %v1259 = vrot.slane %v1245, %v1258
    %v1260 = vcombine.low %v1236, %v1252
    %v1261 = vcombine.high %v1236, %v1252
    %v1262 = vcombine.low %v1243, %v1259
    %v1263 = vcombine.high %v1243, %v1259
    %v1264 = vpack.c.bf16 %v1192, %v1192
    %v1265 = vpack.c.bf16 %v1193, %v1193
    %v1266 = vpack.c.bf16 %v1194, %v1194
    %v1267 = vpack.c.bf16 %v1195, %v1195
    %v1268 = vpack.c.bf16 %v1260, %v1260
    %v1269 = vpack.c.bf16 %v1261, %v1261
    %v1270 = vpack.c.bf16 %v1262, %v1262
    %v1271 = vpack.c.bf16 %v1263, %v1263
    %v1272 = vcombine.low %v576, %v592
    %v1274 = vunpack.c.l.s4 1983009808
    %v1275 = vunpack.c.0.s8 %v1274
    %v1276 = vlaneseq
    %v1277 = vshrl.u32 %v1276, 7
    %v1278 = vsub.s32 %v1275, %v1277
    %v1279 = vrot.slane %v1272, %v1278
    %v1280 = vcombine.low %v583, %v599
    %v1282 = vunpack.c.l.s4 1983009808
    %v1283 = vunpack.c.0.s8 %v1282
    %v1284 = vlaneseq
    %v1285 = vshrl.u32 %v1284, 7
    %v1286 = vsub.s32 %v1283, %v1285
    %v1287 = vrot.slane %v1280, %v1286
    %v1288 = vcombine.low %v644, %v660
    %v1290 = vunpack.c.l.s4 1983009808
    %v1291 = vunpack.c.0.s8 %v1290
    %v1292 = vlaneseq
    %v1293 = vshrl.u32 %v1292, 7
    %v1294 = vsub.s32 %v1291, %v1293
    %v1295 = vrot.slane %v1288, %v1294
    %v1296 = vcombine.low %v651, %v667
    %v1298 = vunpack.c.l.s4 1983009808
    %v1299 = vunpack.c.0.s8 %v1298
    %v1300 = vlaneseq
    %v1301 = vshrl.u32 %v1300, 7
    %v1302 = vsub.s32 %v1299, %v1301
    %v1303 = vrot.slane %v1296, %v1302
    %v1304 = vcombine.low %v1279, %v1287
    %v1305 = vcombine.high %v1279, %v1287
    %v1307 = vunpack.c.l.s4 1934713408
    %v1308 = vunpack.c.0.s8 %v1307
    %v1309 = vlaneseq
    %v1310 = vshrl.u32 %v1309, 7
    %v1311 = vsub.s32 %v1308, %v1310
    %v1312 = vrot.slane %v1304, %v1311
    %v1314 = vunpack.c.l.s4 1934713408
    %v1315 = vunpack.c.0.s8 %v1314
    %v1316 = vlaneseq
    %v1317 = vshrl.u32 %v1316, 7
    %v1318 = vsub.s32 %v1315, %v1317
    %v1319 = vrot.slane %v1305, %v1318
    %v1320 = vcombine.low %v1295, %v1303
    %v1321 = vcombine.high %v1295, %v1303
    %v1323 = vunpack.c.l.s4 1934713408
    %v1324 = vunpack.c.0.s8 %v1323
    %v1325 = vlaneseq
    %v1326 = vshrl.u32 %v1325, 7
    %v1327 = vsub.s32 %v1324, %v1326
    %v1328 = vrot.slane %v1320, %v1327
    %v1330 = vunpack.c.l.s4 1934713408
    %v1331 = vunpack.c.0.s8 %v1330
    %v1332 = vlaneseq
    %v1333 = vshrl.u32 %v1332, 7
    %v1334 = vsub.s32 %v1331, %v1333
    %v1335 = vrot.slane %v1321, %v1334
    %v1336 = vcombine.low %v1312, %v1328
    %v1337 = vcombine.high %v1312, %v1328
    %v1338 = vcombine.low %v1319, %v1335
    %v1339 = vcombine.high %v1319, %v1335
    %v1340 = vcombine.low %v712, %v728
    %v1342 = vunpack.c.l.s4 1983009808
    %v1343 = vunpack.c.0.s8 %v1342
    %v1344 = vlaneseq
    %v1345 = vshrl.u32 %v1344, 7
    %v1346 = vsub.s32 %v1343, %v1345
    %v1347 = vrot.slane %v1340, %v1346
    %v1348 = vcombine.low %v719, %v735
    %v1350 = vunpack.c.l.s4 1983009808
    %v1351 = vunpack.c.0.s8 %v1350
    %v1352 = vlaneseq
    %v1353 = vshrl.u32 %v1352, 7
    %v1354 = vsub.s32 %v1351, %v1353
    %v1355 = vrot.slane %v1348, %v1354
    %v1356 = vcombine.low %v780, %v796
    %v1358 = vunpack.c.l.s4 1983009808
    %v1359 = vunpack.c.0.s8 %v1358
    %v1360 = vlaneseq
    %v1361 = vshrl.u32 %v1360, 7
    %v1362 = vsub.s32 %v1359, %v1361
    %v1363 = vrot.slane %v1356, %v1362
    %v1364 = vcombine.low %v787, %v803
    %v1366 = vunpack.c.l.s4 1983009808
    %v1367 = vunpack.c.0.s8 %v1366
    %v1368 = vlaneseq
    %v1369 = vshrl.u32 %v1368, 7
    %v1370 = vsub.s32 %v1367, %v1369
    %v1371 = vrot.slane %v1364, %v1370
    %v1372 = vcombine.low %v1347, %v1355
    %v1373 = vcombine.high %v1347, %v1355
    %v1375 = vunpack.c.l.s4 1934713408
    %v1376 = vunpack.c.0.s8 %v1375
    %v1377 = vlaneseq
    %v1378 = vshrl.u32 %v1377, 7
    %v1379 = vsub.s32 %v1376, %v1378
    %v1380 = vrot.slane %v1372, %v1379
    %v1382 = vunpack.c.l.s4 1934713408
    %v1383 = vunpack.c.0.s8 %v1382
    %v1384 = vlaneseq
    %v1385 = vshrl.u32 %v1384, 7
    %v1386 = vsub.s32 %v1383, %v1385
    %v1387 = vrot.slane %v1373, %v1386
    %v1388 = vcombine.low %v1363, %v1371
    %v1389 = vcombine.high %v1363, %v1371
    %v1391 = vunpack.c.l.s4 1934713408
    %v1392 = vunpack.c.0.s8 %v1391
    %v1393 = vlaneseq
    %v1394 = vshrl.u32 %v1393, 7
    %v1395 = vsub.s32 %v1392, %v1394
    %v1396 = vrot.slane %v1388, %v1395
    %v1398 = vunpack.c.l.s4 1934713408
    %v1399 = vunpack.c.0.s8 %v1398
    %v1400 = vlaneseq
    %v1401 = vshrl.u32 %v1400, 7
    %v1402 = vsub.s32 %v1399, %v1401
    %v1403 = vrot.slane %v1389, %v1402
    %v1404 = vcombine.low %v1380, %v1396
    %v1405 = vcombine.high %v1380, %v1396
    %v1406 = vcombine.low %v1387, %v1403
    %v1407 = vcombine.high %v1387, %v1403
    %v1408 = vcombine.low %v600, %v602
    %v1410 = vunpack.c.l.s4 1983009808
    %v1411 = vunpack.c.0.s8 %v1410
    %v1412 = vlaneseq
    %v1413 = vshrl.u32 %v1412, 7
    %v1414 = vsub.s32 %v1411, %v1413
    %v1415 = vrot.slane %v1408, %v1414
    %v1416 = vcombine.low %v601, %v603
    %v1418 = vunpack.c.l.s4 1983009808
    %v1419 = vunpack.c.0.s8 %v1418
    %v1420 = vlaneseq
    %v1421 = vshrl.u32 %v1420, 7
    %v1422 = vsub.s32 %v1419, %v1421
    %v1423 = vrot.slane %v1416, %v1422
    %v1424 = vcombine.low %v668, %v670
    %v1426 = vunpack.c.l.s4 1983009808
    %v1427 = vunpack.c.0.s8 %v1426
    %v1428 = vlaneseq
    %v1429 = vshrl.u32 %v1428, 7
    %v1430 = vsub.s32 %v1427, %v1429
    %v1431 = vrot.slane %v1424, %v1430
    %v1432 = vcombine.low %v669, %v671
    %v1434 = vunpack.c.l.s4 1983009808
    %v1435 = vunpack.c.0.s8 %v1434
    %v1436 = vlaneseq
    %v1437 = vshrl.u32 %v1436, 7
    %v1438 = vsub.s32 %v1435, %v1437
    %v1439 = vrot.slane %v1432, %v1438
    %v1440 = vcombine.low %v1415, %v1423
    %v1441 = vcombine.high %v1415, %v1423
    %v1443 = vunpack.c.l.s4 1934713408
    %v1444 = vunpack.c.0.s8 %v1443
    %v1445 = vlaneseq
    %v1446 = vshrl.u32 %v1445, 7
    %v1447 = vsub.s32 %v1444, %v1446
    %v1448 = vrot.slane %v1440, %v1447
    %v1450 = vunpack.c.l.s4 1934713408
    %v1451 = vunpack.c.0.s8 %v1450
    %v1452 = vlaneseq
    %v1453 = vshrl.u32 %v1452, 7
    %v1454 = vsub.s32 %v1451, %v1453
    %v1455 = vrot.slane %v1441, %v1454
    %v1456 = vcombine.low %v1431, %v1439
    %v1457 = vcombine.high %v1431, %v1439
    %v1459 = vunpack.c.l.s4 1934713408
    %v1460 = vunpack.c.0.s8 %v1459
    %v1461 = vlaneseq
    %v1462 = vshrl.u32 %v1461, 7
    %v1463 = vsub.s32 %v1460, %v1462
    %v1464 = vrot.slane %v1456, %v1463
    %v1466 = vunpack.c.l.s4 1934713408
    %v1467 = vunpack.c.0.s8 %v1466
    %v1468 = vlaneseq
    %v1469 = vshrl.u32 %v1468, 7
    %v1470 = vsub.s32 %v1467, %v1469
    %v1471 = vrot.slane %v1457, %v1470
    %v1472 = vcombine.low %v1448, %v1464
    %v1473 = vcombine.high %v1448, %v1464
    %v1474 = vcombine.low %v1455, %v1471
    %v1475 = vcombine.high %v1455, %v1471
    %v1476 = vcombine.low %v736, %v738
    %v1478 = vunpack.c.l.s4 1983009808
    %v1479 = vunpack.c.0.s8 %v1478
    %v1480 = vlaneseq
    %v1481 = vshrl.u32 %v1480, 7
    %v1482 = vsub.s32 %v1479, %v1481
    %v1483 = vrot.slane %v1476, %v1482
    %v1484 = vcombine.low %v737, %v739
    %v1486 = vunpack.c.l.s4 1983009808
    %v1487 = vunpack.c.0.s8 %v1486
    %v1488 = vlaneseq
    %v1489 = vshrl.u32 %v1488, 7
    %v1490 = vsub.s32 %v1487, %v1489
    %v1491 = vrot.slane %v1484, %v1490
    %v1492 = vcombine.low %v804, %v806
    %v1494 = vunpack.c.l.s4 1983009808
    %v1495 = vunpack.c.0.s8 %v1494
    %v1496 = vlaneseq
    %v1497 = vshrl.u32 %v1496, 7
    %v1498 = vsub.s32 %v1495, %v1497
    %v1499 = vrot.slane %v1492, %v1498
    %v1500 = vcombine.low %v805, %v807
    %v1502 = vunpack.c.l.s4 1983009808
    %v1503 = vunpack.c.0.s8 %v1502
    %v1504 = vlaneseq
    %v1505 = vshrl.u32 %v1504, 7
    %v1506 = vsub.s32 %v1503, %v1505
    %v1507 = vrot.slane %v1500, %v1506
    %v1508 = vcombine.low %v1483, %v1491
    %v1509 = vcombine.high %v1483, %v1491
    %v1511 = vunpack.c.l.s4 1934713408
    %v1512 = vunpack.c.0.s8 %v1511
    %v1513 = vlaneseq
    %v1514 = vshrl.u32 %v1513, 7
    %v1515 = vsub.s32 %v1512, %v1514
    %v1516 = vrot.slane %v1508, %v1515
    %v1518 = vunpack.c.l.s4 1934713408
    %v1519 = vunpack.c.0.s8 %v1518
    %v1520 = vlaneseq
    %v1521 = vshrl.u32 %v1520, 7
    %v1522 = vsub.s32 %v1519, %v1521
    %v1523 = vrot.slane %v1509, %v1522
    %v1524 = vcombine.low %v1499, %v1507
    %v1525 = vcombine.high %v1499, %v1507
    %v1527 = vunpack.c.l.s4 1934713408
    %v1528 = vunpack.c.0.s8 %v1527
    %v1529 = vlaneseq
    %v1530 = vshrl.u32 %v1529, 7
    %v1531 = vsub.s32 %v1528, %v1530
    %v1532 = vrot.slane %v1524, %v1531
    %v1534 = vunpack.c.l.s4 1934713408
    %v1535 = vunpack.c.0.s8 %v1534
    %v1536 = vlaneseq
    %v1537 = vshrl.u32 %v1536, 7
    %v1538 = vsub.s32 %v1535, %v1537
    %v1539 = vrot.slane %v1525, %v1538
    %v1540 = vcombine.low %v1516, %v1532
    %v1541 = vcombine.high %v1516, %v1532
    %v1542 = vcombine.low %v1523, %v1539
    %v1543 = vcombine.high %v1523, %v1539
    %v1544 = vpack.c.bf16 %v1404, %v1336
    %v1545 = vpack.c.bf16 %v1405, %v1337
    %v1546 = vpack.c.bf16 %v1406, %v1338
    %v1547 = vpack.c.bf16 %v1407, %v1339
    %v1548 = vpack.c.bf16 %v1540, %v1472
    %v1549 = vpack.c.bf16 %v1541, %v1473
    %v1550 = vpack.c.bf16 %v1542, %v1474
    %v1551 = vpack.c.bf16 %v1543, %v1475
    %v1552 = vcombine.low %v896, %v912
    %v1554 = vunpack.c.l.s4 1983009808
    %v1555 = vunpack.c.0.s8 %v1554
    %v1556 = vlaneseq
    %v1557 = vshrl.u32 %v1556, 7
    %v1558 = vsub.s32 %v1555, %v1557
    %v1559 = vrot.slane %v1552, %v1558
    %v1560 = vcombine.low %v903, %v919
    %v1562 = vunpack.c.l.s4 1983009808
    %v1563 = vunpack.c.0.s8 %v1562
    %v1564 = vlaneseq
    %v1565 = vshrl.u32 %v1564, 7
    %v1566 = vsub.s32 %v1563, %v1565
    %v1567 = vrot.slane %v1560, %v1566
    %v1568 = vcombine.low %v964, %v980
    %v1570 = vunpack.c.l.s4 1983009808
    %v1571 = vunpack.c.0.s8 %v1570
    %v1572 = vlaneseq
    %v1573 = vshrl.u32 %v1572, 7
    %v1574 = vsub.s32 %v1571, %v1573
    %v1575 = vrot.slane %v1568, %v1574
    %v1576 = vcombine.low %v971, %v987
    %v1578 = vunpack.c.l.s4 1983009808
    %v1579 = vunpack.c.0.s8 %v1578
    %v1580 = vlaneseq
    %v1581 = vshrl.u32 %v1580, 7
    %v1582 = vsub.s32 %v1579, %v1581
    %v1583 = vrot.slane %v1576, %v1582
    %v1584 = vcombine.low %v1559, %v1567
    %v1585 = vcombine.high %v1559, %v1567
    %v1587 = vunpack.c.l.s4 1934713408
    %v1588 = vunpack.c.0.s8 %v1587
    %v1589 = vlaneseq
    %v1590 = vshrl.u32 %v1589, 7
    %v1591 = vsub.s32 %v1588, %v1590
    %v1592 = vrot.slane %v1584, %v1591
    %v1594 = vunpack.c.l.s4 1934713408
    %v1595 = vunpack.c.0.s8 %v1594
    %v1596 = vlaneseq
    %v1597 = vshrl.u32 %v1596, 7
    %v1598 = vsub.s32 %v1595, %v1597
    %v1599 = vrot.slane %v1585, %v1598
    %v1600 = vcombine.low %v1575, %v1583
    %v1601 = vcombine.high %v1575, %v1583
    %v1603 = vunpack.c.l.s4 1934713408
    %v1604 = vunpack.c.0.s8 %v1603
    %v1605 = vlaneseq
    %v1606 = vshrl.u32 %v1605, 7
    %v1607 = vsub.s32 %v1604, %v1606
    %v1608 = vrot.slane %v1600, %v1607
    %v1610 = vunpack.c.l.s4 1934713408
    %v1611 = vunpack.c.0.s8 %v1610
    %v1612 = vlaneseq
    %v1613 = vshrl.u32 %v1612, 7
    %v1614 = vsub.s32 %v1611, %v1613
    %v1615 = vrot.slane %v1601, %v1614
    %v1616 = vcombine.low %v1592, %v1608
    %v1617 = vcombine.high %v1592, %v1608
    %v1618 = vcombine.low %v1599, %v1615
    %v1619 = vcombine.high %v1599, %v1615
    %v1620 = vcombine.low %v1032, %v1048
    %v1622 = vunpack.c.l.s4 1983009808
    %v1623 = vunpack.c.0.s8 %v1622
    %v1624 = vlaneseq
    %v1625 = vshrl.u32 %v1624, 7
    %v1626 = vsub.s32 %v1623, %v1625
    %v1627 = vrot.slane %v1620, %v1626
    %v1628 = vcombine.low %v1039, %v1055
    %v1630 = vunpack.c.l.s4 1983009808
    %v1631 = vunpack.c.0.s8 %v1630
    %v1632 = vlaneseq
    %v1633 = vshrl.u32 %v1632, 7
    %v1634 = vsub.s32 %v1631, %v1633
    %v1635 = vrot.slane %v1628, %v1634
    %v1636 = vcombine.low %v1100, %v1116
    %v1638 = vunpack.c.l.s4 1983009808
    %v1639 = vunpack.c.0.s8 %v1638
    %v1640 = vlaneseq
    %v1641 = vshrl.u32 %v1640, 7
    %v1642 = vsub.s32 %v1639, %v1641
    %v1643 = vrot.slane %v1636, %v1642
    %v1644 = vcombine.low %v1107, %v1123
    %v1646 = vunpack.c.l.s4 1983009808
    %v1647 = vunpack.c.0.s8 %v1646
    %v1648 = vlaneseq
    %v1649 = vshrl.u32 %v1648, 7
    %v1650 = vsub.s32 %v1647, %v1649
    %v1651 = vrot.slane %v1644, %v1650
    %v1652 = vcombine.low %v1627, %v1635
    %v1653 = vcombine.high %v1627, %v1635
    %v1655 = vunpack.c.l.s4 1934713408
    %v1656 = vunpack.c.0.s8 %v1655
    %v1657 = vlaneseq
    %v1658 = vshrl.u32 %v1657, 7
    %v1659 = vsub.s32 %v1656, %v1658
    %v1660 = vrot.slane %v1652, %v1659
    %v1662 = vunpack.c.l.s4 1934713408
    %v1663 = vunpack.c.0.s8 %v1662
    %v1664 = vlaneseq
    %v1665 = vshrl.u32 %v1664, 7
    %v1666 = vsub.s32 %v1663, %v1665
    %v1667 = vrot.slane %v1653, %v1666
    %v1668 = vcombine.low %v1643, %v1651
    %v1669 = vcombine.high %v1643, %v1651
    %v1671 = vunpack.c.l.s4 1934713408
    %v1672 = vunpack.c.0.s8 %v1671
    %v1673 = vlaneseq
    %v1674 = vshrl.u32 %v1673, 7
    %v1675 = vsub.s32 %v1672, %v1674
    %v1676 = vrot.slane %v1668, %v1675
    %v1678 = vunpack.c.l.s4 1934713408
    %v1679 = vunpack.c.0.s8 %v1678
    %v1680 = vlaneseq
    %v1681 = vshrl.u32 %v1680, 7
    %v1682 = vsub.s32 %v1679, %v1681
    %v1683 = vrot.slane %v1669, %v1682
    %v1684 = vcombine.low %v1660, %v1676
    %v1685 = vcombine.high %v1660, %v1676
    %v1686 = vcombine.low %v1667, %v1683
    %v1687 = vcombine.high %v1667, %v1683
    %v1688 = vcombine.low %v920, %v922
    %v1690 = vunpack.c.l.s4 1983009808
    %v1691 = vunpack.c.0.s8 %v1690
    %v1692 = vlaneseq
    %v1693 = vshrl.u32 %v1692, 7
    %v1694 = vsub.s32 %v1691, %v1693
    %v1695 = vrot.slane %v1688, %v1694
    %v1696 = vcombine.low %v921, %v923
    %v1698 = vunpack.c.l.s4 1983009808
    %v1699 = vunpack.c.0.s8 %v1698
    %v1700 = vlaneseq
    %v1701 = vshrl.u32 %v1700, 7
    %v1702 = vsub.s32 %v1699, %v1701
    %v1703 = vrot.slane %v1696, %v1702
    %v1704 = vcombine.low %v988, %v990
    %v1706 = vunpack.c.l.s4 1983009808
    %v1707 = vunpack.c.0.s8 %v1706
    %v1708 = vlaneseq
    %v1709 = vshrl.u32 %v1708, 7
    %v1710 = vsub.s32 %v1707, %v1709
    %v1711 = vrot.slane %v1704, %v1710
    %v1712 = vcombine.low %v989, %v991
    %v1714 = vunpack.c.l.s4 1983009808
    %v1715 = vunpack.c.0.s8 %v1714
    %v1716 = vlaneseq
    %v1717 = vshrl.u32 %v1716, 7
    %v1718 = vsub.s32 %v1715, %v1717
    %v1719 = vrot.slane %v1712, %v1718
    %v1720 = vcombine.low %v1695, %v1703
    %v1721 = vcombine.high %v1695, %v1703
    %v1723 = vunpack.c.l.s4 1934713408
    %v1724 = vunpack.c.0.s8 %v1723
    %v1725 = vlaneseq
    %v1726 = vshrl.u32 %v1725, 7
    %v1727 = vsub.s32 %v1724, %v1726
    %v1728 = vrot.slane %v1720, %v1727
    %v1730 = vunpack.c.l.s4 1934713408
    %v1731 = vunpack.c.0.s8 %v1730
    %v1732 = vlaneseq
    %v1733 = vshrl.u32 %v1732, 7
    %v1734 = vsub.s32 %v1731, %v1733
    %v1735 = vrot.slane %v1721, %v1734
    %v1736 = vcombine.low %v1711, %v1719
    %v1737 = vcombine.high %v1711, %v1719
    %v1739 = vunpack.c.l.s4 1934713408
    %v1740 = vunpack.c.0.s8 %v1739
    %v1741 = vlaneseq
    %v1742 = vshrl.u32 %v1741, 7
    %v1743 = vsub.s32 %v1740, %v1742
    %v1744 = vrot.slane %v1736, %v1743
    %v1746 = vunpack.c.l.s4 1934713408
    %v1747 = vunpack.c.0.s8 %v1746
    %v1748 = vlaneseq
    %v1749 = vshrl.u32 %v1748, 7
    %v1750 = vsub.s32 %v1747, %v1749
    %v1751 = vrot.slane %v1737, %v1750
    %v1752 = vcombine.low %v1728, %v1744
    %v1753 = vcombine.high %v1728, %v1744
    %v1754 = vcombine.low %v1735, %v1751
    %v1755 = vcombine.high %v1735, %v1751
    %v1756 = vcombine.low %v1056, %v1058
    %v1758 = vunpack.c.l.s4 1983009808
    %v1759 = vunpack.c.0.s8 %v1758
    %v1760 = vlaneseq
    %v1761 = vshrl.u32 %v1760, 7
    %v1762 = vsub.s32 %v1759, %v1761
    %v1763 = vrot.slane %v1756, %v1762
    %v1764 = vcombine.low %v1057, %v1059
    %v1766 = vunpack.c.l.s4 1983009808
    %v1767 = vunpack.c.0.s8 %v1766
    %v1768 = vlaneseq
    %v1769 = vshrl.u32 %v1768, 7
    %v1770 = vsub.s32 %v1767, %v1769
    %v1771 = vrot.slane %v1764, %v1770
    %v1772 = vcombine.low %v1124, %v1126
    %v1774 = vunpack.c.l.s4 1983009808
    %v1775 = vunpack.c.0.s8 %v1774
    %v1776 = vlaneseq
    %v1777 = vshrl.u32 %v1776, 7
    %v1778 = vsub.s32 %v1775, %v1777
    %v1779 = vrot.slane %v1772, %v1778
    %v1780 = vcombine.low %v1125, %v1127
    %v1782 = vunpack.c.l.s4 1983009808
    %v1783 = vunpack.c.0.s8 %v1782
    %v1784 = vlaneseq
    %v1785 = vshrl.u32 %v1784, 7
    %v1786 = vsub.s32 %v1783, %v1785
    %v1787 = vrot.slane %v1780, %v1786
    %v1788 = vcombine.low %v1763, %v1771
    %v1789 = vcombine.high %v1763, %v1771
    %v1791 = vunpack.c.l.s4 1934713408
    %v1792 = vunpack.c.0.s8 %v1791
    %v1793 = vlaneseq
    %v1794 = vshrl.u32 %v1793, 7
    %v1795 = vsub.s32 %v1792, %v1794
    %v1796 = vrot.slane %v1788, %v1795
    %v1798 = vunpack.c.l.s4 1934713408
    %v1799 = vunpack.c.0.s8 %v1798
    %v1800 = vlaneseq
    %v1801 = vshrl.u32 %v1800, 7
    %v1802 = vsub.s32 %v1799, %v1801
    %v1803 = vrot.slane %v1789, %v1802
    %v1804 = vcombine.low %v1779, %v1787
    %v1805 = vcombine.high %v1779, %v1787
    %v1807 = vunpack.c.l.s4 1934713408
    %v1808 = vunpack.c.0.s8 %v1807
    %v1809 = vlaneseq
    %v1810 = vshrl.u32 %v1809, 7
    %v1811 = vsub.s32 %v1808, %v1810
    %v1812 = vrot.slane %v1804, %v1811
    %v1814 = vunpack.c.l.s4 1934713408
    %v1815 = vunpack.c.0.s8 %v1814
    %v1816 = vlaneseq
    %v1817 = vshrl.u32 %v1816, 7
    %v1818 = vsub.s32 %v1815, %v1817
    %v1819 = vrot.slane %v1805, %v1818
    %v1820 = vcombine.low %v1796, %v1812
    %v1821 = vcombine.high %v1796, %v1812
    %v1822 = vcombine.low %v1803, %v1819
    %v1823 = vcombine.high %v1803, %v1819
    %v1824 = vpack.c.bf16 %v1684, %v1616
    %v1825 = vpack.c.bf16 %v1685, %v1617
    %v1826 = vpack.c.bf16 %v1686, %v1618
    %v1827 = vpack.c.bf16 %v1687, %v1619
    %v1828 = vpack.c.bf16 %v1820, %v1752
    %v1829 = vpack.c.bf16 %v1821, %v1753
    %v1830 = vpack.c.bf16 %v1822, %v1754
    %v1831 = vpack.c.bf16 %v1823, %v1755
    %vm1832 = vcmask 64512
    %v1834 = vsel %vm1832, %v1264, 0
    %v1837 = vsel %vm1832, %v1544, 0
    %1839 = vmatprep.subr.bf16.mxu0 0
    %1840 = vmatpush1.bf16.xpose.msra.mxu0 0
    %1841 = vmatprep.subr.bf16.mxu0 0
    %1842 = vmatpush1.bf16.xpose.msra.mxu0 0
    %1843 = vmatprep.subr.bf16.mxu0 0
    %1844 = vmatpush1.bf16.xpose.msra.mxu0 0
    %1845 = vmatprep.subr.bf16.mxu0 0
    %1846 = vmatpush1.bf16.xpose.msra.mxu0 0
    %1847 = vmatprep.subr.bf16.mxu0 0
    %1848 = vmatpush1.bf16.xpose.msra.mxu0 0
    %1849 = vmatprep.subr.bf16.mxu0 0
    %1850 = vmatpush1.bf16.xpose.msra.mxu0 0
    %1851 = vmatprep.subr.bf16.mxu0 0
    %1852 = vmatpush1.bf16.xpose.msra.mxu0 0
    %1853 = vmatprep.subr.bf16.mxu0 0
    %1854 = vmatpush1.bf16.xpose.msra.mxu0 %v1837
    %1855 = vmatprep.subr.bf16.mxu0 0
    %1856 = vmatpush2.bf16.xpose.msra.mxu0 0
    %1857 = vmatprep.subr.bf16.mxu0 0
    %1858 = vmatpush2.bf16.xpose.msra.mxu0 0
    %1859 = vmatprep.subr.bf16.mxu0 0
    %1860 = vmatpush2.bf16.xpose.msra.mxu0 0
    %1861 = vmatprep.subr.bf16.mxu0 0
    %1862 = vmatpush2.bf16.xpose.msra.mxu0 0
    %1863 = vmatprep.subr.bf16.mxu0 0
    %1864 = vmatpush2.bf16.xpose.msra.mxu0 0
    %1865 = vmatprep.subr.bf16.mxu0 0
    %1866 = vmatpush2.bf16.xpose.msra.mxu0 0
    %1867 = vmatprep.subr.bf16.mxu0 0
    %1868 = vmatpush2.bf16.xpose.msra.mxu0 0
    %1869 = vmatprep.subr.bf16.mxu0 0
    %1870 = vmatpush2.bf16.xpose.msra.mxu0 0
    %1871 = vmatprep.mubr.bf16.mxu0 0
    %1872 = vmatmul.mubr.bf16.gmra.mxu0 %v1834
    %v1873 = vpop.f32.mrf.mxu0
    %v1874 = vadd.f32 0.0, %v1873
    %v1875 = vpop.f32.mrf.mxu0
    %v1876 = vpop.f32.mrf.mxu0
    %v1877 = vpop.f32.mrf.mxu0
    %1878 = vdwg.mxu0
    %v1880 = vsel %vm1832, %v1265, 0
    %v1883 = vsel %vm1832, %v1545, 0
    %1885 = vmatprep.subr.bf16.mxu0 0
    %1886 = vmatpush1.bf16.xpose.msra.mxu0 0
    %1887 = vmatprep.subr.bf16.mxu0 0
    %1888 = vmatpush1.bf16.xpose.msra.mxu0 0
    %1889 = vmatprep.subr.bf16.mxu0 0
    %1890 = vmatpush1.bf16.xpose.msra.mxu0 0
    %1891 = vmatprep.subr.bf16.mxu0 0
    %1892 = vmatpush1.bf16.xpose.msra.mxu0 0
    %1893 = vmatprep.subr.bf16.mxu0 0
    %1894 = vmatpush1.bf16.xpose.msra.mxu0 0
    %1895 = vmatprep.subr.bf16.mxu0 0
    %1896 = vmatpush1.bf16.xpose.msra.mxu0 0
    %1897 = vmatprep.subr.bf16.mxu0 0
    %1898 = vmatpush1.bf16.xpose.msra.mxu0 0
    %1899 = vmatprep.subr.bf16.mxu0 0
    %1900 = vmatpush1.bf16.xpose.msra.mxu0 %v1883
    %1901 = vmatprep.subr.bf16.mxu0 0
    %1902 = vmatpush2.bf16.xpose.msra.mxu0 0
    %1903 = vmatprep.subr.bf16.mxu0 0
    %1904 = vmatpush2.bf16.xpose.msra.mxu0 0
    %1905 = vmatprep.subr.bf16.mxu0 0
    %1906 = vmatpush2.bf16.xpose.msra.mxu0 0
    %1907 = vmatprep.subr.bf16.mxu0 0
    %1908 = vmatpush2.bf16.xpose.msra.mxu0 0
    %1909 = vmatprep.subr.bf16.mxu0 0
    %1910 = vmatpush2.bf16.xpose.msra.mxu0 0
    %1911 = vmatprep.subr.bf16.mxu0 0
    %1912 = vmatpush2.bf16.xpose.msra.mxu0 0
    %1913 = vmatprep.subr.bf16.mxu0 0
    %1914 = vmatpush2.bf16.xpose.msra.mxu0 0
    %1915 = vmatprep.subr.bf16.mxu0 0
    %1916 = vmatpush2.bf16.xpose.msra.mxu0 0
    %1917 = vmatprep.mubr.bf16.mxu0 0
    %1918 = vmatmul.mubr.bf16.gmra.mxu0 %v1880
    %v1919 = vpop.f32.mrf.mxu0
    %v1920 = vadd.f32 0.0, %v1919
    %v1921 = vpop.f32.mrf.mxu0
    %v1922 = vpop.f32.mrf.mxu0
    %v1923 = vpop.f32.mrf.mxu0
    %1924 = vdwg.mxu0
    %v1926 = vsel %vm1832, %v1266, 0
    %v1929 = vsel %vm1832, %v1546, 0
    %1931 = vmatprep.subr.bf16.mxu0 0
    %1932 = vmatpush1.bf16.xpose.msra.mxu0 0
    %1933 = vmatprep.subr.bf16.mxu0 0
    %1934 = vmatpush1.bf16.xpose.msra.mxu0 0
    %1935 = vmatprep.subr.bf16.mxu0 0
    %1936 = vmatpush1.bf16.xpose.msra.mxu0 0
    %1937 = vmatprep.subr.bf16.mxu0 0
    %1938 = vmatpush1.bf16.xpose.msra.mxu0 0
    %1939 = vmatprep.subr.bf16.mxu0 0
    %1940 = vmatpush1.bf16.xpose.msra.mxu0 0
    %1941 = vmatprep.subr.bf16.mxu0 0
    %1942 = vmatpush1.bf16.xpose.msra.mxu0 0
    %1943 = vmatprep.subr.bf16.mxu0 0
    %1944 = vmatpush1.bf16.xpose.msra.mxu0 0
    %1945 = vmatprep.subr.bf16.mxu0 0
    %1946 = vmatpush1.bf16.xpose.msra.mxu0 %v1929
    %1947 = vmatprep.subr.bf16.mxu0 0
    %1948 = vmatpush2.bf16.xpose.msra.mxu0 0
    %1949 = vmatprep.subr.bf16.mxu0 0
    %1950 = vmatpush2.bf16.xpose.msra.mxu0 0
    %1951 = vmatprep.subr.bf16.mxu0 0
    %1952 = vmatpush2.bf16.xpose.msra.mxu0 0
    %1953 = vmatprep.subr.bf16.mxu0 0
    %1954 = vmatpush2.bf16.xpose.msra.mxu0 0
    %1955 = vmatprep.subr.bf16.mxu0 0
    %1956 = vmatpush2.bf16.xpose.msra.mxu0 0
    %1957 = vmatprep.subr.bf16.mxu0 0
    %1958 = vmatpush2.bf16.xpose.msra.mxu0 0
    %1959 = vmatprep.subr.bf16.mxu0 0
    %1960 = vmatpush2.bf16.xpose.msra.mxu0 0
    %1961 = vmatprep.subr.bf16.mxu0 0
    %1962 = vmatpush2.bf16.xpose.msra.mxu0 0
    %1963 = vmatprep.mubr.bf16.mxu0 0
    %1964 = vmatmul.mubr.bf16.gmra.mxu0 %v1926
    %v1965 = vpop.f32.mrf.mxu0
    %v1966 = vadd.f32 0.0, %v1965
    %v1967 = vpop.f32.mrf.mxu0
    %v1968 = vpop.f32.mrf.mxu0
    %v1969 = vpop.f32.mrf.mxu0
    %1970 = vdwg.mxu0
    %v1972 = vsel %vm1832, %v1267, 0
    %v1975 = vsel %vm1832, %v1547, 0
    %1977 = vmatprep.subr.bf16.mxu0 0
    %1978 = vmatpush1.bf16.xpose.msra.mxu0 0
    %1979 = vmatprep.subr.bf16.mxu0 0
    %1980 = vmatpush1.bf16.xpose.msra.mxu0 0
    %1981 = vmatprep.subr.bf16.mxu0 0
    %1982 = vmatpush1.bf16.xpose.msra.mxu0 0
    %1983 = vmatprep.subr.bf16.mxu0 0
    %1984 = vmatpush1.bf16.xpose.msra.mxu0 0
    %1985 = vmatprep.subr.bf16.mxu0 0
    %1986 = vmatpush1.bf16.xpose.msra.mxu0 0
    %1987 = vmatprep.subr.bf16.mxu0 0
    %1988 = vmatpush1.bf16.xpose.msra.mxu0 0
    %1989 = vmatprep.subr.bf16.mxu0 0
    %1990 = vmatpush1.bf16.xpose.msra.mxu0 0
    %1991 = vmatprep.subr.bf16.mxu0 0
    %1992 = vmatpush1.bf16.xpose.msra.mxu0 %v1975
    %1993 = vmatprep.subr.bf16.mxu0 0
    %1994 = vmatpush2.bf16.xpose.msra.mxu0 0
    %1995 = vmatprep.subr.bf16.mxu0 0
    %1996 = vmatpush2.bf16.xpose.msra.mxu0 0
    %1997 = vmatprep.subr.bf16.mxu0 0
    %1998 = vmatpush2.bf16.xpose.msra.mxu0 0
    %1999 = vmatprep.subr.bf16.mxu0 0
    %2000 = vmatpush2.bf16.xpose.msra.mxu0 0
    %2001 = vmatprep.subr.bf16.mxu0 0
    %2002 = vmatpush2.bf16.xpose.msra.mxu0 0
    %2003 = vmatprep.subr.bf16.mxu0 0
    %2004 = vmatpush2.bf16.xpose.msra.mxu0 0
    %2005 = vmatprep.subr.bf16.mxu0 0
    %2006 = vmatpush2.bf16.xpose.msra.mxu0 0
    %2007 = vmatprep.subr.bf16.mxu0 0
    %2008 = vmatpush2.bf16.xpose.msra.mxu0 0
    %2009 = vmatprep.mubr.bf16.mxu0 0
    %2010 = vmatmul.mubr.bf16.gmra.mxu0 %v1972
    %v2011 = vpop.f32.mrf.mxu0
    %v2012 = vadd.f32 0.0, %v2011
    %v2013 = vpop.f32.mrf.mxu0
    %v2014 = vpop.f32.mrf.mxu0
    %v2015 = vpop.f32.mrf.mxu0
    %2016 = vdwg.mxu0
    %v2018 = vsel %vm1832, %v1268, 0
    %v2021 = vsel %vm1832, %v1548, 0
    %2023 = vmatprep.subr.bf16.mxu0 0
    %2024 = vmatpush1.bf16.xpose.msra.mxu0 0
    %2025 = vmatprep.subr.bf16.mxu0 0
    %2026 = vmatpush1.bf16.xpose.msra.mxu0 0
    %2027 = vmatprep.subr.bf16.mxu0 0
    %2028 = vmatpush1.bf16.xpose.msra.mxu0 0
    %2029 = vmatprep.subr.bf16.mxu0 0
    %2030 = vmatpush1.bf16.xpose.msra.mxu0 0
    %2031 = vmatprep.subr.bf16.mxu0 0
    %2032 = vmatpush1.bf16.xpose.msra.mxu0 0
    %2033 = vmatprep.subr.bf16.mxu0 0
    %2034 = vmatpush1.bf16.xpose.msra.mxu0 0
    %2035 = vmatprep.subr.bf16.mxu0 0
    %2036 = vmatpush1.bf16.xpose.msra.mxu0 0
    %2037 = vmatprep.subr.bf16.mxu0 0
    %2038 = vmatpush1.bf16.xpose.msra.mxu0 %v2021
    %2039 = vmatprep.subr.bf16.mxu0 0
    %2040 = vmatpush2.bf16.xpose.msra.mxu0 0
    %2041 = vmatprep.subr.bf16.mxu0 0
    %2042 = vmatpush2.bf16.xpose.msra.mxu0 0
    %2043 = vmatprep.subr.bf16.mxu0 0
    %2044 = vmatpush2.bf16.xpose.msra.mxu0 0
    %2045 = vmatprep.subr.bf16.mxu0 0
    %2046 = vmatpush2.bf16.xpose.msra.mxu0 0
    %2047 = vmatprep.subr.bf16.mxu0 0
    %2048 = vmatpush2.bf16.xpose.msra.mxu0 0
    %2049 = vmatprep.subr.bf16.mxu0 0
    %2050 = vmatpush2.bf16.xpose.msra.mxu0 0
    %2051 = vmatprep.subr.bf16.mxu0 0
    %2052 = vmatpush2.bf16.xpose.msra.mxu0 0
    %2053 = vmatprep.subr.bf16.mxu0 0
    %2054 = vmatpush2.bf16.xpose.msra.mxu0 0
    %2055 = vmatprep.mubr.bf16.mxu0 0
    %2056 = vmatmul.mubr.bf16.gmra.mxu0 %v2018
    %v2057 = vpop.f32.mrf.mxu0
    %v2058 = vadd.f32 0.0, %v2057
    %v2059 = vpop.f32.mrf.mxu0
    %v2060 = vpop.f32.mrf.mxu0
    %v2061 = vpop.f32.mrf.mxu0
    %2062 = vdwg.mxu0
    %v2064 = vsel %vm1832, %v1269, 0
    %v2067 = vsel %vm1832, %v1549, 0
    %2069 = vmatprep.subr.bf16.mxu0 0
    %2070 = vmatpush1.bf16.xpose.msra.mxu0 0
    %2071 = vmatprep.subr.bf16.mxu0 0
    %2072 = vmatpush1.bf16.xpose.msra.mxu0 0
    %2073 = vmatprep.subr.bf16.mxu0 0
    %2074 = vmatpush1.bf16.xpose.msra.mxu0 0
    %2075 = vmatprep.subr.bf16.mxu0 0
    %2076 = vmatpush1.bf16.xpose.msra.mxu0 0
    %2077 = vmatprep.subr.bf16.mxu0 0
    %2078 = vmatpush1.bf16.xpose.msra.mxu0 0
    %2079 = vmatprep.subr.bf16.mxu0 0
    %2080 = vmatpush1.bf16.xpose.msra.mxu0 0
    %2081 = vmatprep.subr.bf16.mxu0 0
    %2082 = vmatpush1.bf16.xpose.msra.mxu0 0
    %2083 = vmatprep.subr.bf16.mxu0 0
    %2084 = vmatpush1.bf16.xpose.msra.mxu0 %v2067
    %2085 = vmatprep.subr.bf16.mxu0 0
    %2086 = vmatpush2.bf16.xpose.msra.mxu0 0
    %2087 = vmatprep.subr.bf16.mxu0 0
    %2088 = vmatpush2.bf16.xpose.msra.mxu0 0
    %2089 = vmatprep.subr.bf16.mxu0 0
    %2090 = vmatpush2.bf16.xpose.msra.mxu0 0
    %2091 = vmatprep.subr.bf16.mxu0 0
    %2092 = vmatpush2.bf16.xpose.msra.mxu0 0
    %2093 = vmatprep.subr.bf16.mxu0 0
    %2094 = vmatpush2.bf16.xpose.msra.mxu0 0
    %2095 = vmatprep.subr.bf16.mxu0 0
    %2096 = vmatpush2.bf16.xpose.msra.mxu0 0
    %2097 = vmatprep.subr.bf16.mxu0 0
    %2098 = vmatpush2.bf16.xpose.msra.mxu0 0
    %2099 = vmatprep.subr.bf16.mxu0 0
    %2100 = vmatpush2.bf16.xpose.msra.mxu0 0
    %2101 = vmatprep.mubr.bf16.mxu0 0
    %2102 = vmatmul.mubr.bf16.gmra.mxu0 %v2064
    %v2103 = vpop.f32.mrf.mxu0
    %v2104 = vadd.f32 0.0, %v2103
    %v2105 = vpop.f32.mrf.mxu0
    %v2106 = vpop.f32.mrf.mxu0
    %v2107 = vpop.f32.mrf.mxu0
    %2108 = vdwg.mxu0
    %v2110 = vsel %vm1832, %v1270, 0
    %v2113 = vsel %vm1832, %v1550, 0
    %2115 = vmatprep.subr.bf16.mxu0 0
    %2116 = vmatpush1.bf16.xpose.msra.mxu0 0
    %2117 = vmatprep.subr.bf16.mxu0 0
    %2118 = vmatpush1.bf16.xpose.msra.mxu0 0
    %2119 = vmatprep.subr.bf16.mxu0 0
    %2120 = vmatpush1.bf16.xpose.msra.mxu0 0
    %2121 = vmatprep.subr.bf16.mxu0 0
    %2122 = vmatpush1.bf16.xpose.msra.mxu0 0
    %2123 = vmatprep.subr.bf16.mxu0 0
    %2124 = vmatpush1.bf16.xpose.msra.mxu0 0
    %2125 = vmatprep.subr.bf16.mxu0 0
    %2126 = vmatpush1.bf16.xpose.msra.mxu0 0
    %2127 = vmatprep.subr.bf16.mxu0 0
    %2128 = vmatpush1.bf16.xpose.msra.mxu0 0
    %2129 = vmatprep.subr.bf16.mxu0 0
    %2130 = vmatpush1.bf16.xpose.msra.mxu0 %v2113
    %2131 = vmatprep.subr.bf16.mxu0 0
    %2132 = vmatpush2.bf16.xpose.msra.mxu0 0
    %2133 = vmatprep.subr.bf16.mxu0 0
    %2134 = vmatpush2.bf16.xpose.msra.mxu0 0
    %2135 = vmatprep.subr.bf16.mxu0 0
    %2136 = vmatpush2.bf16.xpose.msra.mxu0 0
    %2137 = vmatprep.subr.bf16.mxu0 0
    %2138 = vmatpush2.bf16.xpose.msra.mxu0 0
    %2139 = vmatprep.subr.bf16.mxu0 0
    %2140 = vmatpush2.bf16.xpose.msra.mxu0 0
    %2141 = vmatprep.subr.bf16.mxu0 0
    %2142 = vmatpush2.bf16.xpose.msra.mxu0 0
    %2143 = vmatprep.subr.bf16.mxu0 0
    %2144 = vmatpush2.bf16.xpose.msra.mxu0 0
    %2145 = vmatprep.subr.bf16.mxu0 0
    %2146 = vmatpush2.bf16.xpose.msra.mxu0 0
    %2147 = vmatprep.mubr.bf16.mxu0 0
    %2148 = vmatmul.mubr.bf16.gmra.mxu0 %v2110
    %v2149 = vpop.f32.mrf.mxu0
    %v2150 = vadd.f32 0.0, %v2149
    %v2151 = vpop.f32.mrf.mxu0
    %v2152 = vpop.f32.mrf.mxu0
    %v2153 = vpop.f32.mrf.mxu0
    %2154 = vdwg.mxu0
    %v2156 = vsel %vm1832, %v1271, 0
    %v2159 = vsel %vm1832, %v1551, 0
    %2161 = vmatprep.subr.bf16.mxu0 0
    %2162 = vmatpush1.bf16.xpose.msra.mxu0 0
    %2163 = vmatprep.subr.bf16.mxu0 0
    %2164 = vmatpush1.bf16.xpose.msra.mxu0 0
    %2165 = vmatprep.subr.bf16.mxu0 0
    %2166 = vmatpush1.bf16.xpose.msra.mxu0 0
    %2167 = vmatprep.subr.bf16.mxu0 0
    %2168 = vmatpush1.bf16.xpose.msra.mxu0 0
    %2169 = vmatprep.subr.bf16.mxu0 0
    %2170 = vmatpush1.bf16.xpose.msra.mxu0 0
    %2171 = vmatprep.subr.bf16.mxu0 0
    %2172 = vmatpush1.bf16.xpose.msra.mxu0 0
    %2173 = vmatprep.subr.bf16.mxu0 0
    %2174 = vmatpush1.bf16.xpose.msra.mxu0 0
    %2175 = vmatprep.subr.bf16.mxu0 0
    %2176 = vmatpush1.bf16.xpose.msra.mxu0 %v2159
    %2177 = vmatprep.subr.bf16.mxu0 0
    %2178 = vmatpush2.bf16.xpose.msra.mxu0 0
    %2179 = vmatprep.subr.bf16.mxu0 0
    %2180 = vmatpush2.bf16.xpose.msra.mxu0 0
    %2181 = vmatprep.subr.bf16.mxu0 0
    %2182 = vmatpush2.bf16.xpose.msra.mxu0 0
    %2183 = vmatprep.subr.bf16.mxu0 0
    %2184 = vmatpush2.bf16.xpose.msra.mxu0 0
    %2185 = vmatprep.subr.bf16.mxu0 0
    %2186 = vmatpush2.bf16.xpose.msra.mxu0 0
    %2187 = vmatprep.subr.bf16.mxu0 0
    %2188 = vmatpush2.bf16.xpose.msra.mxu0 0
    %2189 = vmatprep.subr.bf16.mxu0 0
    %2190 = vmatpush2.bf16.xpose.msra.mxu0 0
    %2191 = vmatprep.subr.bf16.mxu0 0
    %2192 = vmatpush2.bf16.xpose.msra.mxu0 0
    %2193 = vmatprep.mubr.bf16.mxu0 0
    %2194 = vmatmul.mubr.bf16.gmra.mxu0 %v2156
    %v2195 = vpop.f32.mrf.mxu0
    %v2196 = vadd.f32 0.0, %v2195
    %v2197 = vpop.f32.mrf.mxu0
    %v2198 = vpop.f32.mrf.mxu0
    %v2199 = vpop.f32.mrf.mxu0
    %2200 = vdwg.mxu0
    %v2201 = vmul.f32 %v1874, 0.35355338
    %v2202 = vmul.f32 %v1920, 0.35355338
    %v2203 = vmul.f32 %v1966, 0.35355338
    %v2204 = vmul.f32 %v2012, 0.35355338
    %v2205 = vmul.f32 %v2058, 0.35355338
    %v2206 = vmul.f32 %v2104, 0.35355338
    %v2207 = vmul.f32 %v2150, 0.35355338
    %v2208 = vmul.f32 %v2196, 0.35355338
    %vm2209 = vcmask 130048
    %v2210 = vsel %vm2209, %v2201, -inf
    %2211 = vmax.xlane.f32.xlu0 %v2210
    %v2212 = vpop.xlane.xlu0 %2211
    %v2213 = vsel %vm2209, %v2202, -inf
    %2214 = vmax.xlane.f32.xlu0 %v2213
    %v2215 = vpop.xlane.xlu0 %2214
    %v2216 = vsel %vm2209, %v2203, -inf
    %2217 = vmax.xlane.f32.xlu0 %v2216
    %v2218 = vpop.xlane.xlu0 %2217
    %v2219 = vsel %vm2209, %v2204, -inf
    %2220 = vmax.xlane.f32.xlu0 %v2219
    %v2221 = vpop.xlane.xlu0 %2220
    %v2222 = vsel %vm2209, %v2205, -inf
    %2223 = vmax.xlane.f32.xlu0 %v2222
    %v2224 = vpop.xlane.xlu0 %2223
    %v2225 = vsel %vm2209, %v2206, -inf
    %2226 = vmax.xlane.f32.xlu0 %v2225
    %v2227 = vpop.xlane.xlu0 %2226
    %v2228 = vsel %vm2209, %v2207, -inf
    %2229 = vmax.xlane.f32.xlu0 %v2228
    %v2230 = vpop.xlane.xlu0 %2229
    %v2231 = vsel %vm2209, %v2208, -inf
    %2232 = vmax.xlane.f32.xlu0 %v2231
    %v2233 = vpop.xlane.xlu0 %2232
    %v2234 = vsub.f32 %v2201, %v2212
    %v2235 = vsub.f32 %v2202, %v2215
    %v2236 = vsub.f32 %v2203, %v2218
    %v2237 = vsub.f32 %v2204, %v2221
    %v2238 = vsub.f32 %v2205, %v2224
    %v2239 = vsub.f32 %v2206, %v2227
    %v2240 = vsub.f32 %v2207, %v2230
    %v2241 = vsub.f32 %v2208, %v2233
    %v2242 = vmul.f32 %v2234, 1.442695
    %v2243 = vpow.pop %v2242
    %v2244 = vmul.f32 %v2235, 1.442695
    %v2245 = vpow.pop %v2244
    %v2246 = vmul.f32 %v2236, 1.442695
    %v2247 = vpow.pop %v2246
    %v2248 = vmul.f32 %v2237, 1.442695
    %v2249 = vpow.pop %v2248
    %v2250 = vmul.f32 %v2238, 1.442695
    %v2251 = vpow.pop %v2250
    %v2252 = vmul.f32 %v2239, 1.442695
    %v2253 = vpow.pop %v2252
    %v2254 = vmul.f32 %v2240, 1.442695
    %v2255 = vpow.pop %v2254
    %v2256 = vmul.f32 %v2241, 1.442695
    %v2257 = vpow.pop %v2256
    %v2258 = vsel %vm2209, %v2243, 0.0
    %2259 = vadd.xlane.f32.xlu0 %v2258
    %v2260 = vpop.xlane.xlu0 %2259
    %v2261 = vsel %vm2209, %v2245, 0.0
    %2262 = vadd.xlane.f32.xlu0 %v2261
    %v2263 = vpop.xlane.xlu0 %2262
    %v2264 = vsel %vm2209, %v2247, 0.0
    %2265 = vadd.xlane.f32.xlu0 %v2264
    %v2266 = vpop.xlane.xlu0 %2265
    %v2267 = vsel %vm2209, %v2249, 0.0
    %2268 = vadd.xlane.f32.xlu0 %v2267
    %v2269 = vpop.xlane.xlu0 %2268
    %v2270 = vsel %vm2209, %v2251, 0.0
    %2271 = vadd.xlane.f32.xlu0 %v2270
    %v2272 = vpop.xlane.xlu0 %2271
    %v2273 = vsel %vm2209, %v2253, 0.0
    %2274 = vadd.xlane.f32.xlu0 %v2273
    %v2275 = vpop.xlane.xlu0 %2274
    %v2276 = vsel %vm2209, %v2255, 0.0
    %2277 = vadd.xlane.f32.xlu0 %v2276
    %v2278 = vpop.xlane.xlu0 %2277
    %v2279 = vsel %vm2209, %v2257, 0.0
    %2280 = vadd.xlane.f32.xlu0 %v2279
    %v2281 = vpop.xlane.xlu0 %2280
    %v2282 = vrcp.pop %v2260
    %v2283 = vrcp.pop %v2263
    %v2284 = vrcp.pop %v2266
    %v2285 = vrcp.pop %v2269
    %v2286 = vrcp.pop %v2272
    %v2287 = vrcp.pop %v2275
    %v2288 = vrcp.pop %v2278
    %v2289 = vrcp.pop %v2281
    %v2290 = vmul.f32 %v2243, %v2282
    %v2291 = vmul.f32 %v2245, %v2283
    %v2292 = vmul.f32 %v2247, %v2284
    %v2293 = vmul.f32 %v2249, %v2285
    %v2294 = vmul.f32 %v2251, %v2286
    %v2295 = vmul.f32 %v2253, %v2287
    %v2296 = vmul.f32 %v2255, %v2288
    %v2297 = vmul.f32 %v2257, %v2289
    %v2298 = vpack.c.bf16 %v2290, %v2290
    %v2299 = vpack.c.bf16 %v2291, %v2291
    %v2300 = vpack.c.bf16 %v2292, %v2292
    %v2301 = vpack.c.bf16 %v2293, %v2293
    %v2302 = vpack.c.bf16 %v2294, %v2294
    %v2303 = vpack.c.bf16 %v2295, %v2295
    %v2304 = vpack.c.bf16 %v2296, %v2296
    %v2305 = vpack.c.bf16 %v2297, %v2297
    %v2307 = vsel %vm2209, %v2298, 0
    %2309 = vmatprep.subr.bf16.mxu0 0
    %2310 = vmatpush1.bf16.msra.mxu0 0
    %2311 = vmatprep.subr.bf16.mxu0 0
    %2312 = vmatpush1.bf16.msra.mxu0 0
    %2313 = vmatprep.subr.bf16.mxu0 0
    %2314 = vmatpush1.bf16.msra.mxu0 0
    %2315 = vmatprep.subr.bf16.mxu0 0
    %2316 = vmatpush1.bf16.msra.mxu0 0
    %2317 = vmatprep.subr.bf16.mxu0 0
    %2318 = vmatpush1.bf16.msra.mxu0 0
    %2319 = vmatprep.subr.bf16.mxu0 0
    %2320 = vmatpush1.bf16.msra.mxu0 0
    %2321 = vmatprep.subr.bf16.mxu0 0
    %2322 = vmatpush1.bf16.msra.mxu0 0
    %2323 = vmatprep.subr.bf16.mxu0 0
    %2324 = vmatpush1.bf16.msra.mxu0 %v1824
    %2325 = vmatprep.subr.bf16.mxu0 0
    %2326 = vmatpush2.bf16.msra.mxu0 0
    %2327 = vmatprep.subr.bf16.mxu0 0
    %2328 = vmatpush2.bf16.msra.mxu0 0
    %2329 = vmatprep.subr.bf16.mxu0 0
    %2330 = vmatpush2.bf16.msra.mxu0 0
    %2331 = vmatprep.subr.bf16.mxu0 0
    %2332 = vmatpush2.bf16.msra.mxu0 0
    %2333 = vmatprep.subr.bf16.mxu0 0
    %2334 = vmatpush2.bf16.msra.mxu0 0
    %2335 = vmatprep.subr.bf16.mxu0 0
    %2336 = vmatpush2.bf16.msra.mxu0 0
    %2337 = vmatprep.subr.bf16.mxu0 0
    %2338 = vmatpush2.bf16.msra.mxu0 0
    %2339 = vmatprep.subr.bf16.mxu0 0
    %2340 = vmatpush2.bf16.msra.mxu0 0
    %2341 = vmatprep.mubr.bf16.mxu0 0
    %2342 = vmatmul.mubr.bf16.gmra.mxu0 %v2307
    %v2343 = vpop.f32.mrf.mxu0
    %v2344 = vadd.f32 0.0, %v2343
    %v2345 = vpop.f32.mrf.mxu0
    %v2346 = vpop.f32.mrf.mxu0
    %v2347 = vpop.f32.mrf.mxu0
    %2348 = vdwg.mxu0
    %v2350 = vsel %vm2209, %v2299, 0
    %2352 = vmatprep.subr.bf16.mxu0 0
    %2353 = vmatpush1.bf16.msra.mxu0 0
    %2354 = vmatprep.subr.bf16.mxu0 0
    %2355 = vmatpush1.bf16.msra.mxu0 0
    %2356 = vmatprep.subr.bf16.mxu0 0
    %2357 = vmatpush1.bf16.msra.mxu0 0
    %2358 = vmatprep.subr.bf16.mxu0 0
    %2359 = vmatpush1.bf16.msra.mxu0 0
    %2360 = vmatprep.subr.bf16.mxu0 0
    %2361 = vmatpush1.bf16.msra.mxu0 0
    %2362 = vmatprep.subr.bf16.mxu0 0
    %2363 = vmatpush1.bf16.msra.mxu0 0
    %2364 = vmatprep.subr.bf16.mxu0 0
    %2365 = vmatpush1.bf16.msra.mxu0 0
    %2366 = vmatprep.subr.bf16.mxu0 0
    %2367 = vmatpush1.bf16.msra.mxu0 %v1825
    %2368 = vmatprep.subr.bf16.mxu0 0
    %2369 = vmatpush2.bf16.msra.mxu0 0
    %2370 = vmatprep.subr.bf16.mxu0 0
    %2371 = vmatpush2.bf16.msra.mxu0 0
    %2372 = vmatprep.subr.bf16.mxu0 0
    %2373 = vmatpush2.bf16.msra.mxu0 0
    %2374 = vmatprep.subr.bf16.mxu0 0
    %2375 = vmatpush2.bf16.msra.mxu0 0
    %2376 = vmatprep.subr.bf16.mxu0 0
    %2377 = vmatpush2.bf16.msra.mxu0 0
    %2378 = vmatprep.subr.bf16.mxu0 0
    %2379 = vmatpush2.bf16.msra.mxu0 0
    %2380 = vmatprep.subr.bf16.mxu0 0
    %2381 = vmatpush2.bf16.msra.mxu0 0
    %2382 = vmatprep.subr.bf16.mxu0 0
    %2383 = vmatpush2.bf16.msra.mxu0 0
    %2384 = vmatprep.mubr.bf16.mxu0 0
    %2385 = vmatmul.mubr.bf16.gmra.mxu0 %v2350
    %v2386 = vpop.f32.mrf.mxu0
    %v2387 = vadd.f32 0.0, %v2386
    %v2388 = vpop.f32.mrf.mxu0
    %v2389 = vpop.f32.mrf.mxu0
    %v2390 = vpop.f32.mrf.mxu0
    %2391 = vdwg.mxu0
    %v2393 = vsel %vm2209, %v2300, 0
    %2395 = vmatprep.subr.bf16.mxu0 0
    %2396 = vmatpush1.bf16.msra.mxu0 0
    %2397 = vmatprep.subr.bf16.mxu0 0
    %2398 = vmatpush1.bf16.msra.mxu0 0
    %2399 = vmatprep.subr.bf16.mxu0 0
    %2400 = vmatpush1.bf16.msra.mxu0 0
    %2401 = vmatprep.subr.bf16.mxu0 0
    %2402 = vmatpush1.bf16.msra.mxu0 0
    %2403 = vmatprep.subr.bf16.mxu0 0
    %2404 = vmatpush1.bf16.msra.mxu0 0
    %2405 = vmatprep.subr.bf16.mxu0 0
    %2406 = vmatpush1.bf16.msra.mxu0 0
    %2407 = vmatprep.subr.bf16.mxu0 0
    %2408 = vmatpush1.bf16.msra.mxu0 0
    %2409 = vmatprep.subr.bf16.mxu0 0
    %2410 = vmatpush1.bf16.msra.mxu0 %v1826
    %2411 = vmatprep.subr.bf16.mxu0 0
    %2412 = vmatpush2.bf16.msra.mxu0 0
    %2413 = vmatprep.subr.bf16.mxu0 0
    %2414 = vmatpush2.bf16.msra.mxu0 0
    %2415 = vmatprep.subr.bf16.mxu0 0
    %2416 = vmatpush2.bf16.msra.mxu0 0
    %2417 = vmatprep.subr.bf16.mxu0 0
    %2418 = vmatpush2.bf16.msra.mxu0 0
    %2419 = vmatprep.subr.bf16.mxu0 0
    %2420 = vmatpush2.bf16.msra.mxu0 0
    %2421 = vmatprep.subr.bf16.mxu0 0
    %2422 = vmatpush2.bf16.msra.mxu0 0
    %2423 = vmatprep.subr.bf16.mxu0 0
    %2424 = vmatpush2.bf16.msra.mxu0 0
    %2425 = vmatprep.subr.bf16.mxu0 0
    %2426 = vmatpush2.bf16.msra.mxu0 0
    %2427 = vmatprep.mubr.bf16.mxu0 0
    %2428 = vmatmul.mubr.bf16.gmra.mxu0 %v2393
    %v2429 = vpop.f32.mrf.mxu0
    %v2430 = vadd.f32 0.0, %v2429
    %v2431 = vpop.f32.mrf.mxu0
    %v2432 = vpop.f32.mrf.mxu0
    %v2433 = vpop.f32.mrf.mxu0
    %2434 = vdwg.mxu0
    %v2436 = vsel %vm2209, %v2301, 0
    %2438 = vmatprep.subr.bf16.mxu0 0
    %2439 = vmatpush1.bf16.msra.mxu0 0
    %2440 = vmatprep.subr.bf16.mxu0 0
    %2441 = vmatpush1.bf16.msra.mxu0 0
    %2442 = vmatprep.subr.bf16.mxu0 0
    %2443 = vmatpush1.bf16.msra.mxu0 0
    %2444 = vmatprep.subr.bf16.mxu0 0
    %2445 = vmatpush1.bf16.msra.mxu0 0
    %2446 = vmatprep.subr.bf16.mxu0 0
    %2447 = vmatpush1.bf16.msra.mxu0 0
    %2448 = vmatprep.subr.bf16.mxu0 0
    %2449 = vmatpush1.bf16.msra.mxu0 0
    %2450 = vmatprep.subr.bf16.mxu0 0
    %2451 = vmatpush1.bf16.msra.mxu0 0
    %2452 = vmatprep.subr.bf16.mxu0 0
    %2453 = vmatpush1.bf16.msra.mxu0 %v1827
    %2454 = vmatprep.subr.bf16.mxu0 0
    %2455 = vmatpush2.bf16.msra.mxu0 0
    %2456 = vmatprep.subr.bf16.mxu0 0
    %2457 = vmatpush2.bf16.msra.mxu0 0
    %2458 = vmatprep.subr.bf16.mxu0 0
    %2459 = vmatpush2.bf16.msra.mxu0 0
    %2460 = vmatprep.subr.bf16.mxu0 0
    %2461 = vmatpush2.bf16.msra.mxu0 0
    %2462 = vmatprep.subr.bf16.mxu0 0
    %2463 = vmatpush2.bf16.msra.mxu0 0
    %2464 = vmatprep.subr.bf16.mxu0 0
    %2465 = vmatpush2.bf16.msra.mxu0 0
    %2466 = vmatprep.subr.bf16.mxu0 0
    %2467 = vmatpush2.bf16.msra.mxu0 0
    %2468 = vmatprep.subr.bf16.mxu0 0
    %2469 = vmatpush2.bf16.msra.mxu0 0
    %2470 = vmatprep.mubr.bf16.mxu0 0
    %2471 = vmatmul.mubr.bf16.gmra.mxu0 %v2436
    %v2472 = vpop.f32.mrf.mxu0
    %v2473 = vadd.f32 0.0, %v2472
    %v2474 = vpop.f32.mrf.mxu0
    %v2475 = vpop.f32.mrf.mxu0
    %v2476 = vpop.f32.mrf.mxu0
    %2477 = vdwg.mxu0
    %v2479 = vsel %vm2209, %v2302, 0
    %2481 = vmatprep.subr.bf16.mxu0 0
    %2482 = vmatpush1.bf16.msra.mxu0 0
    %2483 = vmatprep.subr.bf16.mxu0 0
    %2484 = vmatpush1.bf16.msra.mxu0 0
    %2485 = vmatprep.subr.bf16.mxu0 0
    %2486 = vmatpush1.bf16.msra.mxu0 0
    %2487 = vmatprep.subr.bf16.mxu0 0
    %2488 = vmatpush1.bf16.msra.mxu0 0
    %2489 = vmatprep.subr.bf16.mxu0 0
    %2490 = vmatpush1.bf16.msra.mxu0 0
    %2491 = vmatprep.subr.bf16.mxu0 0
    %2492 = vmatpush1.bf16.msra.mxu0 0
    %2493 = vmatprep.subr.bf16.mxu0 0
    %2494 = vmatpush1.bf16.msra.mxu0 0
    %2495 = vmatprep.subr.bf16.mxu0 0
    %2496 = vmatpush1.bf16.msra.mxu0 %v1828
    %2497 = vmatprep.subr.bf16.mxu0 0
    %2498 = vmatpush2.bf16.msra.mxu0 0
    %2499 = vmatprep.subr.bf16.mxu0 0
    %2500 = vmatpush2.bf16.msra.mxu0 0
    %2501 = vmatprep.subr.bf16.mxu0 0
    %2502 = vmatpush2.bf16.msra.mxu0 0
    %2503 = vmatprep.subr.bf16.mxu0 0
    %2504 = vmatpush2.bf16.msra.mxu0 0
    %2505 = vmatprep.subr.bf16.mxu0 0
    %2506 = vmatpush2.bf16.msra.mxu0 0
    %2507 = vmatprep.subr.bf16.mxu0 0
    %2508 = vmatpush2.bf16.msra.mxu0 0
    %2509 = vmatprep.subr.bf16.mxu0 0
    %2510 = vmatpush2.bf16.msra.mxu0 0
    %2511 = vmatprep.subr.bf16.mxu0 0
    %2512 = vmatpush2.bf16.msra.mxu0 0
    %2513 = vmatprep.mubr.bf16.mxu0 0
    %2514 = vmatmul.mubr.bf16.gmra.mxu0 %v2479
    %v2515 = vpop.f32.mrf.mxu0
    %v2516 = vadd.f32 0.0, %v2515
    %v2517 = vpop.f32.mrf.mxu0
    %v2518 = vpop.f32.mrf.mxu0
    %v2519 = vpop.f32.mrf.mxu0
    %2520 = vdwg.mxu0
    %v2522 = vsel %vm2209, %v2303, 0
    %2524 = vmatprep.subr.bf16.mxu0 0
    %2525 = vmatpush1.bf16.msra.mxu0 0
    %2526 = vmatprep.subr.bf16.mxu0 0
    %2527 = vmatpush1.bf16.msra.mxu0 0
    %2528 = vmatprep.subr.bf16.mxu0 0
    %2529 = vmatpush1.bf16.msra.mxu0 0
    %2530 = vmatprep.subr.bf16.mxu0 0
    %2531 = vmatpush1.bf16.msra.mxu0 0
    %2532 = vmatprep.subr.bf16.mxu0 0
    %2533 = vmatpush1.bf16.msra.mxu0 0
    %2534 = vmatprep.subr.bf16.mxu0 0
    %2535 = vmatpush1.bf16.msra.mxu0 0
    %2536 = vmatprep.subr.bf16.mxu0 0
    %2537 = vmatpush1.bf16.msra.mxu0 0
    %2538 = vmatprep.subr.bf16.mxu0 0
    %2539 = vmatpush1.bf16.msra.mxu0 %v1829
    %2540 = vmatprep.subr.bf16.mxu0 0
    %2541 = vmatpush2.bf16.msra.mxu0 0
    %2542 = vmatprep.subr.bf16.mxu0 0
    %2543 = vmatpush2.bf16.msra.mxu0 0
    %2544 = vmatprep.subr.bf16.mxu0 0
    %2545 = vmatpush2.bf16.msra.mxu0 0
    %2546 = vmatprep.subr.bf16.mxu0 0
    %2547 = vmatpush2.bf16.msra.mxu0 0
    %2548 = vmatprep.subr.bf16.mxu0 0
    %2549 = vmatpush2.bf16.msra.mxu0 0
    %2550 = vmatprep.subr.bf16.mxu0 0
    %2551 = vmatpush2.bf16.msra.mxu0 0
    %2552 = vmatprep.subr.bf16.mxu0 0
    %2553 = vmatpush2.bf16.msra.mxu0 0
    %2554 = vmatprep.subr.bf16.mxu0 0
    %2555 = vmatpush2.bf16.msra.mxu0 0
    %2556 = vmatprep.mubr.bf16.mxu0 0
    %2557 = vmatmul.mubr.bf16.gmra.mxu0 %v2522
    %v2558 = vpop.f32.mrf.mxu0
    %v2559 = vadd.f32 0.0, %v2558
    %v2560 = vpop.f32.mrf.mxu0
    %v2561 = vpop.f32.mrf.mxu0
    %v2562 = vpop.f32.mrf.mxu0
    %2563 = vdwg.mxu0
    %v2565 = vsel %vm2209, %v2304, 0
    %2567 = vmatprep.subr.bf16.mxu0 0
    %2568 = vmatpush1.bf16.msra.mxu0 0
    %2569 = vmatprep.subr.bf16.mxu0 0
    %2570 = vmatpush1.bf16.msra.mxu0 0
    %2571 = vmatprep.subr.bf16.mxu0 0
    %2572 = vmatpush1.bf16.msra.mxu0 0
    %2573 = vmatprep.subr.bf16.mxu0 0
    %2574 = vmatpush1.bf16.msra.mxu0 0
    %2575 = vmatprep.subr.bf16.mxu0 0
    %2576 = vmatpush1.bf16.msra.mxu0 0
    %2577 = vmatprep.subr.bf16.mxu0 0
    %2578 = vmatpush1.bf16.msra.mxu0 0
    %2579 = vmatprep.subr.bf16.mxu0 0
    %2580 = vmatpush1.bf16.msra.mxu0 0
    %2581 = vmatprep.subr.bf16.mxu0 0
    %2582 = vmatpush1.bf16.msra.mxu0 %v1830
    %2583 = vmatprep.subr.bf16.mxu0 0
    %2584 = vmatpush2.bf16.msra.mxu0 0
    %2585 = vmatprep.subr.bf16.mxu0 0
    %2586 = vmatpush2.bf16.msra.mxu0 0
    %2587 = vmatprep.subr.bf16.mxu0 0
    %2588 = vmatpush2.bf16.msra.mxu0 0
    %2589 = vmatprep.subr.bf16.mxu0 0
    %2590 = vmatpush2.bf16.msra.mxu0 0
    %2591 = vmatprep.subr.bf16.mxu0 0
    %2592 = vmatpush2.bf16.msra.mxu0 0
    %2593 = vmatprep.subr.bf16.mxu0 0
    %2594 = vmatpush2.bf16.msra.mxu0 0
    %2595 = vmatprep.subr.bf16.mxu0 0
    %2596 = vmatpush2.bf16.msra.mxu0 0
    %2597 = vmatprep.subr.bf16.mxu0 0
    %2598 = vmatpush2.bf16.msra.mxu0 0
    %2599 = vmatprep.mubr.bf16.mxu0 0
    %2600 = vmatmul.mubr.bf16.gmra.mxu0 %v2565
    %v2601 = vpop.f32.mrf.mxu0
    %v2602 = vadd.f32 0.0, %v2601
    %v2603 = vpop.f32.mrf.mxu0
    %v2604 = vpop.f32.mrf.mxu0
    %v2605 = vpop.f32.mrf.mxu0
    %2606 = vdwg.mxu0
    %v2608 = vsel %vm2209, %v2305, 0
    %2610 = vmatprep.subr.bf16.mxu0 0
    %2611 = vmatpush1.bf16.msra.mxu0 0
    %2612 = vmatprep.subr.bf16.mxu0 0
    %2613 = vmatpush1.bf16.msra.mxu0 0
    %2614 = vmatprep.subr.bf16.mxu0 0
    %2615 = vmatpush1.bf16.msra.mxu0 0
    %2616 = vmatprep.subr.bf16.mxu0 0
    %2617 = vmatpush1.bf16.msra.mxu0 0
    %2618 = vmatprep.subr.bf16.mxu0 0
    %2619 = vmatpush1.bf16.msra.mxu0 0
    %2620 = vmatprep.subr.bf16.mxu0 0
    %2621 = vmatpush1.bf16.msra.mxu0 0
    %2622 = vmatprep.subr.bf16.mxu0 0
    %2623 = vmatpush1.bf16.msra.mxu0 0
    %2624 = vmatprep.subr.bf16.mxu0 0
    %2625 = vmatpush1.bf16.msra.mxu0 %v1831
    %2626 = vmatprep.subr.bf16.mxu0 0
    %2627 = vmatpush2.bf16.msra.mxu0 0
    %2628 = vmatprep.subr.bf16.mxu0 0
    %2629 = vmatpush2.bf16.msra.mxu0 0
    %2630 = vmatprep.subr.bf16.mxu0 0
    %2631 = vmatpush2.bf16.msra.mxu0 0
    %2632 = vmatprep.subr.bf16.mxu0 0
    %2633 = vmatpush2.bf16.msra.mxu0 0
    %2634 = vmatprep.subr.bf16.mxu0 0
    %2635 = vmatpush2.bf16.msra.mxu0 0
    %2636 = vmatprep.subr.bf16.mxu0 0
    %2637 = vmatpush2.bf16.msra.mxu0 0
    %2638 = vmatprep.subr.bf16.mxu0 0
    %2639 = vmatpush2.bf16.msra.mxu0 0
    %2640 = vmatprep.subr.bf16.mxu0 0
    %2641 = vmatpush2.bf16.msra.mxu0 0
    %2642 = vmatprep.mubr.bf16.mxu0 0
    %2643 = vmatmul.mubr.bf16.gmra.mxu0 %v2608
    %v2644 = vpop.f32.mrf.mxu0
    %v2645 = vadd.f32 0.0, %v2644
    %v2646 = vpop.f32.mrf.mxu0
    %v2647 = vpop.f32.mrf.mxu0
    %v2648 = vpop.f32.mrf.mxu0
    %2649 = vdwg.mxu0
    %v2650 = vcombine.low %v2344, %v2430
    %v2651 = vcombine.high %v2344, %v2430
    %v2653 = vunpack.c.l.s4 1983009808
    %v2654 = vunpack.c.0.s8 %v2653
    %v2655 = vlaneseq
    %v2656 = vshrl.u32 %v2655, 7
    %v2657 = vsub.s32 %v2654, %v2656
    %v2658 = vrot.slane %v2650, %v2657
    %v2660 = vunpack.c.l.s4 1983009808
    %v2661 = vunpack.c.0.s8 %v2660
    %v2662 = vlaneseq
    %v2663 = vshrl.u32 %v2662, 7
    %v2664 = vsub.s32 %v2661, %v2663
    %v2665 = vrot.slane %v2651, %v2664
    %v2666 = vcombine.low %v2387, %v2473
    %v2667 = vcombine.high %v2387, %v2473
    %v2669 = vunpack.c.l.s4 1983009808
    %v2670 = vunpack.c.0.s8 %v2669
    %v2671 = vlaneseq
    %v2672 = vshrl.u32 %v2671, 7
    %v2673 = vsub.s32 %v2670, %v2672
    %v2674 = vrot.slane %v2666, %v2673
    %v2676 = vunpack.c.l.s4 1983009808
    %v2677 = vunpack.c.0.s8 %v2676
    %v2678 = vlaneseq
    %v2679 = vshrl.u32 %v2678, 7
    %v2680 = vsub.s32 %v2677, %v2679
    %v2681 = vrot.slane %v2667, %v2680
    %v2682 = vcombine.low %v2658, %v2674
    %v2683 = vcombine.high %v2658, %v2674
    %v2685 = vunpack.c.l.s4 1934713408
    %v2686 = vunpack.c.0.s8 %v2685
    %v2687 = vlaneseq
    %v2688 = vshrl.u32 %v2687, 7
    %v2689 = vsub.s32 %v2686, %v2688
    %v2690 = vrot.slane %v2682, %v2689
    %v2692 = vunpack.c.l.s4 1934713408
    %v2693 = vunpack.c.0.s8 %v2692
    %v2694 = vlaneseq
    %v2695 = vshrl.u32 %v2694, 7
    %v2696 = vsub.s32 %v2693, %v2695
    %v2697 = vrot.slane %v2683, %v2696
    %v2698 = vcombine.low %v2665, %v2681
    %v2699 = vcombine.high %v2665, %v2681
    %v2701 = vunpack.c.l.s4 1934713408
    %v2702 = vunpack.c.0.s8 %v2701
    %v2703 = vlaneseq
    %v2704 = vshrl.u32 %v2703, 7
    %v2705 = vsub.s32 %v2702, %v2704
    %v2706 = vrot.slane %v2698, %v2705
    %v2708 = vunpack.c.l.s4 1934713408
    %v2709 = vunpack.c.0.s8 %v2708
    %v2710 = vlaneseq
    %v2711 = vshrl.u32 %v2710, 7
    %v2712 = vsub.s32 %v2709, %v2711
    %v2713 = vrot.slane %v2699, %v2712
    %v2714 = vcombine.high %v2690, 0.0
    %v2715 = vcombine.high %v2697, 0.0
    %v2716 = vcombine.high %v2706, 0.0
    %v2717 = vcombine.high %v2713, 0.0
    %v2718 = vcombine.low %v2516, %v2602
    %v2719 = vcombine.high %v2516, %v2602
    %v2721 = vunpack.c.l.s4 1983009808
    %v2722 = vunpack.c.0.s8 %v2721
    %v2723 = vlaneseq
    %v2724 = vshrl.u32 %v2723, 7
    %v2725 = vsub.s32 %v2722, %v2724
    %v2726 = vrot.slane %v2718, %v2725
    %v2728 = vunpack.c.l.s4 1983009808
    %v2729 = vunpack.c.0.s8 %v2728
    %v2730 = vlaneseq
    %v2731 = vshrl.u32 %v2730, 7
    %v2732 = vsub.s32 %v2729, %v2731
    %v2733 = vrot.slane %v2719, %v2732
    %v2734 = vcombine.low %v2559, %v2645
    %v2735 = vcombine.high %v2559, %v2645
    %v2737 = vunpack.c.l.s4 1983009808
    %v2738 = vunpack.c.0.s8 %v2737
    %v2739 = vlaneseq
    %v2740 = vshrl.u32 %v2739, 7
    %v2741 = vsub.s32 %v2738, %v2740
    %v2742 = vrot.slane %v2734, %v2741
    %v2744 = vunpack.c.l.s4 1983009808
    %v2745 = vunpack.c.0.s8 %v2744
    %v2746 = vlaneseq
    %v2747 = vshrl.u32 %v2746, 7
    %v2748 = vsub.s32 %v2745, %v2747
    %v2749 = vrot.slane %v2735, %v2748
    %v2750 = vcombine.low %v2726, %v2742
    %v2751 = vcombine.high %v2726, %v2742
    %v2753 = vunpack.c.l.s4 1934713408
    %v2754 = vunpack.c.0.s8 %v2753
    %v2755 = vlaneseq
    %v2756 = vshrl.u32 %v2755, 7
    %v2757 = vsub.s32 %v2754, %v2756
    %v2758 = vrot.slane %v2750, %v2757
    %v2760 = vunpack.c.l.s4 1934713408
    %v2761 = vunpack.c.0.s8 %v2760
    %v2762 = vlaneseq
    %v2763 = vshrl.u32 %v2762, 7
    %v2764 = vsub.s32 %v2761, %v2763
    %v2765 = vrot.slane %v2751, %v2764
    %v2766 = vcombine.low %v2733, %v2749
    %v2767 = vcombine.high %v2733, %v2749
    %v2769 = vunpack.c.l.s4 1934713408
    %v2770 = vunpack.c.0.s8 %v2769
    %v2771 = vlaneseq
    %v2772 = vshrl.u32 %v2771, 7
    %v2773 = vsub.s32 %v2770, %v2772
    %v2774 = vrot.slane %v2766, %v2773
    %v2776 = vunpack.c.l.s4 1934713408
    %v2777 = vunpack.c.0.s8 %v2776
    %v2778 = vlaneseq
    %v2779 = vshrl.u32 %v2778, 7
    %v2780 = vsub.s32 %v2777, %v2779
    %v2781 = vrot.slane %v2767, %v2780
    %v2782 = vcombine.high %v2758, 0.0
    %v2783 = vcombine.high %v2765, 0.0
    %v2784 = vcombine.high %v2774, 0.0
    %v2785 = vcombine.high %v2781, 0.0
    %v2786 = vcombine.low %v2690, %v2714
    %v2788 = vunpack.c.l.s4 1983009808
    %v2789 = vunpack.c.0.s8 %v2788
    %v2790 = vlaneseq
    %v2791 = vshrl.u32 %v2790, 7
    %v2792 = vsub.s32 %v2789, %v2791
    %v2793 = vrot.slane %v2786, %v2792
    %v2794 = vcombine.low %v2758, %v2782
    %v2796 = vunpack.c.l.s4 1983009808
    %v2797 = vunpack.c.0.s8 %v2796
    %v2798 = vlaneseq
    %v2799 = vshrl.u32 %v2798, 7
    %v2800 = vsub.s32 %v2797, %v2799
    %v2801 = vrot.slane %v2794, %v2800
    %v2802 = vcombine.low %v2697, %v2715
    %v2804 = vunpack.c.l.s4 1983009808
    %v2805 = vunpack.c.0.s8 %v2804
    %v2806 = vlaneseq
    %v2807 = vshrl.u32 %v2806, 7
    %v2808 = vsub.s32 %v2805, %v2807
    %v2809 = vrot.slane %v2802, %v2808
    %v2810 = vcombine.low %v2765, %v2783
    %v2812 = vunpack.c.l.s4 1983009808
    %v2813 = vunpack.c.0.s8 %v2812
    %v2814 = vlaneseq
    %v2815 = vshrl.u32 %v2814, 7
    %v2816 = vsub.s32 %v2813, %v2815
    %v2817 = vrot.slane %v2810, %v2816
    %v2818 = vcombine.low %v2793, %v2801
    %v2819 = vcombine.high %v2793, %v2801
    %v2821 = vunpack.c.l.s4 1934713408
    %v2822 = vunpack.c.0.s8 %v2821
    %v2823 = vlaneseq
    %v2824 = vshrl.u32 %v2823, 7
    %v2825 = vsub.s32 %v2822, %v2824
    %v2826 = vrot.slane %v2818, %v2825
    %v2828 = vunpack.c.l.s4 1934713408
    %v2829 = vunpack.c.0.s8 %v2828
    %v2830 = vlaneseq
    %v2831 = vshrl.u32 %v2830, 7
    %v2832 = vsub.s32 %v2829, %v2831
    %v2833 = vrot.slane %v2819, %v2832
    %v2834 = vcombine.low %v2809, %v2817
    %v2835 = vcombine.high %v2809, %v2817
    %v2837 = vunpack.c.l.s4 1934713408
    %v2838 = vunpack.c.0.s8 %v2837
    %v2839 = vlaneseq
    %v2840 = vshrl.u32 %v2839, 7
    %v2841 = vsub.s32 %v2838, %v2840
    %v2842 = vrot.slane %v2834, %v2841
    %v2844 = vunpack.c.l.s4 1934713408
    %v2845 = vunpack.c.0.s8 %v2844
    %v2846 = vlaneseq
    %v2847 = vshrl.u32 %v2846, 7
    %v2848 = vsub.s32 %v2845, %v2847
    %v2849 = vrot.slane %v2835, %v2848
    %v2850 = vcombine.low %v2826, %v2842
    %v2851 = vcombine.high %v2826, %v2842
    %v2852 = vcombine.low %v2833, %v2849
    %v2853 = vcombine.high %v2833, %v2849
    %v2854 = vcombine.low %v2706, %v2716
    %v2856 = vunpack.c.l.s4 1983009808
    %v2857 = vunpack.c.0.s8 %v2856
    %v2858 = vlaneseq
    %v2859 = vshrl.u32 %v2858, 7
    %v2860 = vsub.s32 %v2857, %v2859
    %v2861 = vrot.slane %v2854, %v2860
    %v2862 = vcombine.low %v2774, %v2784
    %v2864 = vunpack.c.l.s4 1983009808
    %v2865 = vunpack.c.0.s8 %v2864
    %v2866 = vlaneseq
    %v2867 = vshrl.u32 %v2866, 7
    %v2868 = vsub.s32 %v2865, %v2867
    %v2869 = vrot.slane %v2862, %v2868
    %v2870 = vcombine.low %v2713, %v2717
    %v2872 = vunpack.c.l.s4 1983009808
    %v2873 = vunpack.c.0.s8 %v2872
    %v2874 = vlaneseq
    %v2875 = vshrl.u32 %v2874, 7
    %v2876 = vsub.s32 %v2873, %v2875
    %v2877 = vrot.slane %v2870, %v2876
    %v2878 = vcombine.low %v2781, %v2785
    %v2880 = vunpack.c.l.s4 1983009808
    %v2881 = vunpack.c.0.s8 %v2880
    %v2882 = vlaneseq
    %v2883 = vshrl.u32 %v2882, 7
    %v2884 = vsub.s32 %v2881, %v2883
    %v2885 = vrot.slane %v2878, %v2884
    %v2886 = vcombine.low %v2861, %v2869
    %v2887 = vcombine.high %v2861, %v2869
    %v2889 = vunpack.c.l.s4 1934713408
    %v2890 = vunpack.c.0.s8 %v2889
    %v2891 = vlaneseq
    %v2892 = vshrl.u32 %v2891, 7
    %v2893 = vsub.s32 %v2890, %v2892
    %v2894 = vrot.slane %v2886, %v2893
    %v2896 = vunpack.c.l.s4 1934713408
    %v2897 = vunpack.c.0.s8 %v2896
    %v2898 = vlaneseq
    %v2899 = vshrl.u32 %v2898, 7
    %v2900 = vsub.s32 %v2897, %v2899
    %v2901 = vrot.slane %v2887, %v2900
    %v2902 = vcombine.low %v2877, %v2885
    %v2903 = vcombine.high %v2877, %v2885
    %v2905 = vunpack.c.l.s4 1934713408
    %v2906 = vunpack.c.0.s8 %v2905
    %v2907 = vlaneseq
    %v2908 = vshrl.u32 %v2907, 7
    %v2909 = vsub.s32 %v2906, %v2908
    %v2910 = vrot.slane %v2902, %v2909
    %v2912 = vunpack.c.l.s4 1934713408
    %v2913 = vunpack.c.0.s8 %v2912
    %v2914 = vlaneseq
    %v2915 = vshrl.u32 %v2914, 7
    %v2916 = vsub.s32 %v2913, %v2915
    %v2917 = vrot.slane %v2903, %v2916
    %v2918 = vcombine.low %v2894, %v2910
    %v2919 = vcombine.high %v2894, %v2910
    %v2920 = vcombine.low %v2901, %v2917
    %v2921 = vcombine.high %v2901, %v2917
    %2924 = vrot.lane.b32.xlu0 %v2851, 8
    %v2925 = vpop.permute.xlu0 %2924
    %2926 = vrot.lane.b32.xlu0 %v2919, 8
    %v2927 = vpop.permute.xlu0 %2926
    %2932 = vrot.lane.b32.xlu0 %v2852, 16
    %v2933 = vpop.permute.xlu0 %2932
    %2934 = vrot.lane.b32.xlu0 %v2920, 16
    %v2935 = vpop.permute.xlu0 %2934
    %2940 = vrot.lane.b32.xlu0 %v2853, 24
    %v2941 = vpop.permute.xlu0 %2940
    %2942 = vrot.lane.b32.xlu0 %v2921, 24
    %v2943 = vpop.permute.xlu0 %2942
    %v2946 = vsel %vm1832, %v2850, %v2925
    %v2947 = vsel %vm1832, %v2918, %v2927
    %v2948 = vsel %vm2209, %v2946, %v2933
    %v2949 = vsel %vm2209, %v2947, %v2935
    %vm2950 = vcmask 195584
    %v2951 = vsel %vm2950, %v2948, %v2941
    %v2952 = vsel %vm2950, %v2949, %v2943
    %v2953 = vpack.c.bf16 %v2952, %v2951
    %v2954 = vlaneseq
    %v2955 = vshrl.u32 %v2954, 7
    %v2956 = vsub.s32 2, %v2955
    %v2957 = vrot.slane %v22, %v2956
    %v2962 = vunpack.c.l.b16 %v143
    %v2963 = vunpack.c.l.b16 %v144
    %v2964 = vunpack.c.l.b16 %v145
    %v2965 = vunpack.c.l.b16 %v146
    %v2966 = vpack.c.b16 %v2963, %v2962
    %v2967 = vpack.c.b16 %v2965, %v2964
    %v2971 = vsel %vm224, %v2953, 0
    %2973 = vmatprep.subr.bf16.mxu0 0
    %2974 = vmatpush1.bf16.msra.mxu0 0
    %2975 = vmatprep.subr.bf16.mxu0 0
    %2976 = vmatpush1.bf16.msra.mxu0 0
    %2977 = vmatprep.subr.bf16.mxu0 0
    %2978 = vmatpush1.bf16.msra.mxu0 0
    %2979 = vmatprep.subr.bf16.mxu0 0
    %2980 = vmatpush1.bf16.msra.mxu0 0
    %2981 = vmatprep.subr.bf16.mxu0 0
    %2982 = vmatpush1.bf16.msra.mxu0 0
    %2983 = vmatprep.subr.bf16.mxu0 0
    %2984 = vmatpush1.bf16.msra.mxu0 0
    %2985 = vmatprep.subr.bf16.mxu0 0
    %2986 = vmatpush1.bf16.msra.mxu0 %v2967
    %2987 = vmatprep.subr.bf16.mxu0 0
    %2988 = vmatpush1.bf16.msra.mxu0 %v2966
    %2989 = vmatprep.subr.bf16.mxu0 0
    %2990 = vmatpush2.bf16.msra.mxu0 0
    %2991 = vmatprep.subr.bf16.mxu0 0
    %2992 = vmatpush2.bf16.msra.mxu0 0
    %2993 = vmatprep.subr.bf16.mxu0 0
    %2994 = vmatpush2.bf16.msra.mxu0 0
    %2995 = vmatprep.subr.bf16.mxu0 0
    %2996 = vmatpush2.bf16.msra.mxu0 0
    %2997 = vmatprep.subr.bf16.mxu0 0
    %2998 = vmatpush2.bf16.msra.mxu0 0
    %2999 = vmatprep.subr.bf16.mxu0 0
    %3000 = vmatpush2.bf16.msra.mxu0 0
    %3001 = vmatprep.subr.bf16.mxu0 0
    %3002 = vmatpush2.bf16.msra.mxu0 0
    %3003 = vmatprep.subr.bf16.mxu0 0
    %3004 = vmatpush2.bf16.msra.mxu0 0
    %3005 = vmatprep.mubr.bf16.mxu0 0
    %3006 = vmatmul.mubr.bf16.gmra.mxu0 %v2971
    %v3007 = vpop.f32.mrf.mxu0
    %v3008 = vadd.f32 %v2957, %v3007
    %v3009 = vpop.f32.mrf.mxu0
    %v3010 = vpop.f32.mrf.mxu0
    %v3011 = vadd.f32 %v2957, %v3010
    %v3012 = vpop.f32.mrf.mxu0
    %3013 = vdwg.mxu0
    %v3016 = vcombine.high %v3008, %v3008
    %v3018 = vunpack.c.l.s4 1983009808
    %v3019 = vunpack.c.0.s8 %v3018
    %v3020 = vlaneseq
    %v3021 = vshrl.u32 %v3020, 7
    %v3022 = vsub.s32 %v3019, %v3021
    %v3023 = vrot.slane %v3008, %v3022
    %v3025 = vunpack.c.l.s4 1983009808
    %v3026 = vunpack.c.0.s8 %v3025
    %v3027 = vlaneseq
    %v3028 = vshrl.u32 %v3027, 7
    %v3029 = vsub.s32 %v3026, %v3028
    %v3030 = vrot.slane %v3016, %v3029
    %v3031 = vcombine.high %v3023, %v3023
    %v3032 = vcombine.high %v3030, %v3030
    %v3033 = vcombine.high %v3011, %v3011
    %v3035 = vunpack.c.l.s4 1983009808
    %v3036 = vunpack.c.0.s8 %v3035
    %v3037 = vlaneseq
    %v3038 = vshrl.u32 %v3037, 7
    %v3039 = vsub.s32 %v3036, %v3038
    %v3040 = vrot.slane %v3011, %v3039
    %v3042 = vunpack.c.l.s4 1983009808
    %v3043 = vunpack.c.0.s8 %v3042
    %v3044 = vlaneseq
    %v3045 = vshrl.u32 %v3044, 7
    %v3046 = vsub.s32 %v3043, %v3045
    %v3047 = vrot.slane %v3033, %v3046
    %v3048 = vcombine.high %v3040, %v3040
    %v3049 = vcombine.high %v3047, %v3047
    %v3058 = vadd.f32 %v131, %v3023
    %v3059 = vadd.f32 %v132, %v3031
    %v3060 = vadd.f32 %v133, %v3030
    %v3061 = vadd.f32 %v134, %v3032
    %v3062 = vadd.f32 %v135, %v3040
    %v3063 = vadd.f32 %v136, %v3048
    %v3064 = vadd.f32 %v137, %v3047
    %v3065 = vadd.f32 %v138, %v3049
    %v3074 = vcombine.low %v3058, %v3059
    %v3075 = vcombine.low %v3060, %v3061
    %v3077 = vunpack.c.l.s4 1983009808
    %v3078 = vunpack.c.0.s8 %v3077
    %v3079 = vlaneseq
    %v3080 = vshrl.u32 %v3079, 7
    %v3081 = vsub.s32 %v3078, %v3080
    %v3082 = vrot.slane %v3074, %v3081
    %v3084 = vunpack.c.l.s4 1983009808
    %v3085 = vunpack.c.0.s8 %v3084
    %v3086 = vlaneseq
    %v3087 = vshrl.u32 %v3086, 7
    %v3088 = vsub.s32 %v3085, %v3087
    %v3089 = vrot.slane %v3075, %v3088
    %v3090 = vcombine.low %v3082, %v3089
    %v3091 = vcombine.low %v3062, %v3063
    %v3092 = vcombine.low %v3064, %v3065
    %v3094 = vunpack.c.l.s4 1983009808
    %v3095 = vunpack.c.0.s8 %v3094
    %v3096 = vlaneseq
    %v3097 = vshrl.u32 %v3096, 7
    %v3098 = vsub.s32 %v3095, %v3097
    %v3099 = vrot.slane %v3091, %v3098
    %v3101 = vunpack.c.l.s4 1983009808
    %v3102 = vunpack.c.0.s8 %v3101
    %v3103 = vlaneseq
    %v3104 = vshrl.u32 %v3103, 7
    %v3105 = vsub.s32 %v3102, %v3104
    %v3106 = vrot.slane %v3092, %v3105
    %v3107 = vcombine.low %v3099, %v3106
    %v3110 = vsel %vm224, %v3090, 0.0
    %3111 = vadd.xlane.f32.xlu0 %v3110
    %v3112 = vpop.xlane.xlu0 %3111
    %v3113 = vsel %vm224, %v3107, 0.0
    %3114 = vadd.xlane.f32.xlu0 %v3113
    %v3115 = vpop.xlane.xlu0 %3114
    %v3116 = vrcp.pop 32.0
    %v3117 = vmul.f32 %v3112, %v3116
    %v3118 = vmul.f32 %v3115, %v3116
    %v3119 = vmul.f32 %v3058, %v3058
    %v3120 = vmul.f32 %v3059, %v3059
    %v3121 = vmul.f32 %v3060, %v3060
    %v3122 = vmul.f32 %v3061, %v3061
    %v3123 = vmul.f32 %v3062, %v3062
    %v3124 = vmul.f32 %v3063, %v3063
    %v3125 = vmul.f32 %v3064, %v3064
    %v3126 = vmul.f32 %v3065, %v3065
    %v3135 = vcombine.low %v3119, %v3120
    %v3136 = vcombine.low %v3121, %v3122
    %v3138 = vunpack.c.l.s4 1983009808
    %v3139 = vunpack.c.0.s8 %v3138
    %v3140 = vlaneseq
    %v3141 = vshrl.u32 %v3140, 7
    %v3142 = vsub.s32 %v3139, %v3141
    %v3143 = vrot.slane %v3135, %v3142
    %v3145 = vunpack.c.l.s4 1983009808
    %v3146 = vunpack.c.0.s8 %v3145
    %v3147 = vlaneseq
    %v3148 = vshrl.u32 %v3147, 7
    %v3149 = vsub.s32 %v3146, %v3148
    %v3150 = vrot.slane %v3136, %v3149
    %v3151 = vcombine.low %v3143, %v3150
    %v3152 = vcombine.low %v3123, %v3124
    %v3153 = vcombine.low %v3125, %v3126
    %v3155 = vunpack.c.l.s4 1983009808
    %v3156 = vunpack.c.0.s8 %v3155
    %v3157 = vlaneseq
    %v3158 = vshrl.u32 %v3157, 7
    %v3159 = vsub.s32 %v3156, %v3158
    %v3160 = vrot.slane %v3152, %v3159
    %v3162 = vunpack.c.l.s4 1983009808
    %v3163 = vunpack.c.0.s8 %v3162
    %v3164 = vlaneseq
    %v3165 = vshrl.u32 %v3164, 7
    %v3166 = vsub.s32 %v3163, %v3165
    %v3167 = vrot.slane %v3153, %v3166
    %v3168 = vcombine.low %v3160, %v3167
    %v3171 = vsel %vm224, %v3151, 0.0
    %3172 = vadd.xlane.f32.xlu0 %v3171
    %v3173 = vpop.xlane.xlu0 %3172
    %v3174 = vsel %vm224, %v3168, 0.0
    %3175 = vadd.xlane.f32.xlu0 %v3174
    %v3176 = vpop.xlane.xlu0 %3175
    %v3177 = vmul.f32 %v3173, %v3116
    %v3178 = vmul.f32 %v3176, %v3116
    %v3179 = vmul.f32 %v3117, %v3117
    %v3180 = vmul.f32 %v3118, %v3118
    %v3181 = vsub.f32 %v3177, %v3179
    %v3182 = vsub.f32 %v3178, %v3180
    %v3186 = vunpack.c.l.s4 269488144
    %v3187 = vunpack.c.0.s8 %v3186
    %v3188 = vlaneseq
    %v3189 = vshrl.u32 %v3188, 7
    %v3190 = vsub.s32 %v3187, %v3189
    %v3191 = vrot.slane %v3117, %v3190
    %v3193 = vunpack.c.l.s4 842150450
    %v3194 = vunpack.c.0.s8 %v3193
    %v3195 = vlaneseq
    %v3196 = vshrl.u32 %v3195, 7
    %v3197 = vsub.s32 %v3194, %v3196
    %v3198 = vrot.slane %v3117, %v3197
    %v3200 = vunpack.c.l.s4 1414812756
    %v3201 = vunpack.c.0.s8 %v3200
    %v3202 = vlaneseq
    %v3203 = vshrl.u32 %v3202, 7
    %v3204 = vsub.s32 %v3201, %v3203
    %v3205 = vrot.slane %v3117, %v3204
    %v3207 = vunpack.c.l.s4 1987475062
    %v3208 = vunpack.c.0.s8 %v3207
    %v3209 = vlaneseq
    %v3210 = vshrl.u32 %v3209, 7
    %v3211 = vsub.s32 %v3208, %v3210
    %v3212 = vrot.slane %v3117, %v3211
    %v3214 = vunpack.c.l.s4 269488144
    %v3215 = vunpack.c.0.s8 %v3214
    %v3216 = vlaneseq
    %v3217 = vshrl.u32 %v3216, 7
    %v3218 = vsub.s32 %v3215, %v3217
    %v3219 = vrot.slane %v3118, %v3218
    %v3221 = vunpack.c.l.s4 842150450
    %v3222 = vunpack.c.0.s8 %v3221
    %v3223 = vlaneseq
    %v3224 = vshrl.u32 %v3223, 7
    %v3225 = vsub.s32 %v3222, %v3224
    %v3226 = vrot.slane %v3118, %v3225
    %v3228 = vunpack.c.l.s4 1414812756
    %v3229 = vunpack.c.0.s8 %v3228
    %v3230 = vlaneseq
    %v3231 = vshrl.u32 %v3230, 7
    %v3232 = vsub.s32 %v3229, %v3231
    %v3233 = vrot.slane %v3118, %v3232
    %v3235 = vunpack.c.l.s4 1987475062
    %v3236 = vunpack.c.0.s8 %v3235
    %v3237 = vlaneseq
    %v3238 = vshrl.u32 %v3237, 7
    %v3239 = vsub.s32 %v3236, %v3238
    %v3240 = vrot.slane %v3118, %v3239
    %v3249 = vsub.f32 %v3058, %v3191
    %v3250 = vsub.f32 %v3059, %v3198
    %v3251 = vsub.f32 %v3060, %v3205
    %v3252 = vsub.f32 %v3061, %v3212
    %v3253 = vsub.f32 %v3062, %v3219
    %v3254 = vsub.f32 %v3063, %v3226
    %v3255 = vsub.f32 %v3064, %v3233
    %v3256 = vsub.f32 %v3065, %v3240
    %v3257 = vadd.f32 %v3181, 1e-05
    %v3258 = vadd.f32 %v3182, 1e-05
    %v3259 = vrsqrt.pop %v3257
    %v3260 = vrsqrt.pop %v3258
    %v3264 = vunpack.c.l.s4 269488144
    %v3265 = vunpack.c.0.s8 %v3264
    %v3266 = vlaneseq
    %v3267 = vshrl.u32 %v3266, 7
    %v3268 = vsub.s32 %v3265, %v3267
    %v3269 = vrot.slane %v3259, %v3268
    %v3271 = vunpack.c.l.s4 842150450
    %v3272 = vunpack.c.0.s8 %v3271
    %v3273 = vlaneseq
    %v3274 = vshrl.u32 %v3273, 7
    %v3275 = vsub.s32 %v3272, %v3274
    %v3276 = vrot.slane %v3259, %v3275
    %v3278 = vunpack.c.l.s4 1414812756
    %v3279 = vunpack.c.0.s8 %v3278
    %v3280 = vlaneseq
    %v3281 = vshrl.u32 %v3280, 7
    %v3282 = vsub.s32 %v3279, %v3281
    %v3283 = vrot.slane %v3259, %v3282
    %v3285 = vunpack.c.l.s4 1987475062
    %v3286 = vunpack.c.0.s8 %v3285
    %v3287 = vlaneseq
    %v3288 = vshrl.u32 %v3287, 7
    %v3289 = vsub.s32 %v3286, %v3288
    %v3290 = vrot.slane %v3259, %v3289
    %v3292 = vunpack.c.l.s4 269488144
    %v3293 = vunpack.c.0.s8 %v3292
    %v3294 = vlaneseq
    %v3295 = vshrl.u32 %v3294, 7
    %v3296 = vsub.s32 %v3293, %v3295
    %v3297 = vrot.slane %v3260, %v3296
    %v3299 = vunpack.c.l.s4 842150450
    %v3300 = vunpack.c.0.s8 %v3299
    %v3301 = vlaneseq
    %v3302 = vshrl.u32 %v3301, 7
    %v3303 = vsub.s32 %v3300, %v3302
    %v3304 = vrot.slane %v3260, %v3303
    %v3306 = vunpack.c.l.s4 1414812756
    %v3307 = vunpack.c.0.s8 %v3306
    %v3308 = vlaneseq
    %v3309 = vshrl.u32 %v3308, 7
    %v3310 = vsub.s32 %v3307, %v3309
    %v3311 = vrot.slane %v3260, %v3310
    %v3313 = vunpack.c.l.s4 1987475062
    %v3314 = vunpack.c.0.s8 %v3313
    %v3315 = vlaneseq
    %v3316 = vshrl.u32 %v3315, 7
    %v3317 = vsub.s32 %v3314, %v3316
    %v3318 = vrot.slane %v3260, %v3317
    %v3327 = vmul.f32 %v3249, %v3269
    %v3328 = vmul.f32 %v3250, %v3276
    %v3329 = vmul.f32 %v3251, %v3283
    %v3330 = vmul.f32 %v3252, %v3290
    %v3331 = vmul.f32 %v3253, %v3297
    %v3332 = vmul.f32 %v3254, %v3304
    %v3333 = vmul.f32 %v3255, %v3311
    %v3334 = vmul.f32 %v3256, %v3318
    %v3335 = vlaneseq
    %v3336 = vshrl.u32 %v3335, 7
    %v3337 = vsub.s32 5, %v3336
    %v3338 = vrot.slane %v22, %v3337
    %v3340 = vcombine.high %v3338, %v3338
    %v3342 = vunpack.c.l.s4 1983009808
    %v3343 = vunpack.c.0.s8 %v3342
    %v3344 = vlaneseq
    %v3345 = vshrl.u32 %v3344, 7
    %v3346 = vsub.s32 %v3343, %v3345
    %v3347 = vrot.slane %v3338, %v3346
    %v3349 = vunpack.c.l.s4 1983009808
    %v3350 = vunpack.c.0.s8 %v3349
    %v3351 = vlaneseq
    %v3352 = vshrl.u32 %v3351, 7
    %v3353 = vsub.s32 %v3350, %v3352
    %v3354 = vrot.slane %v3340, %v3353
    %v3355 = vcombine.high %v3347, %v3347
    %v3356 = vcombine.high %v3354, %v3354
    %v3361 = vmul.f32 %v3327, %v3347
    %v3362 = vmul.f32 %v3328, %v3355
    %v3363 = vmul.f32 %v3329, %v3354
    %v3364 = vmul.f32 %v3330, %v3356
    %v3365 = vmul.f32 %v3331, %v3347
    %v3366 = vmul.f32 %v3332, %v3355
    %v3367 = vmul.f32 %v3333, %v3354
    %v3368 = vmul.f32 %v3334, %v3356
    %v3369 = vlaneseq
    %v3370 = vshrl.u32 %v3369, 7
    %v3371 = vsub.s32 6, %v3370
    %v3372 = vrot.slane %v22, %v3371
    %v3374 = vcombine.high %v3372, %v3372
    %v3376 = vunpack.c.l.s4 1983009808
    %v3377 = vunpack.c.0.s8 %v3376
    %v3378 = vlaneseq
    %v3379 = vshrl.u32 %v3378, 7
    %v3380 = vsub.s32 %v3377, %v3379
    %v3381 = vrot.slane %v3372, %v3380
    %v3383 = vunpack.c.l.s4 1983009808
    %v3384 = vunpack.c.0.s8 %v3383
    %v3385 = vlaneseq
    %v3386 = vshrl.u32 %v3385, 7
    %v3387 = vsub.s32 %v3384, %v3386
    %v3388 = vrot.slane %v3374, %v3387
    %v3389 = vcombine.high %v3381, %v3381
    %v3390 = vcombine.high %v3388, %v3388
    %v3395 = vadd.f32 %v3361, %v3381
    %v3396 = vadd.f32 %v3362, %v3389
    %v3397 = vadd.f32 %v3363, %v3388
    %v3398 = vadd.f32 %v3364, %v3390
    %v3399 = vadd.f32 %v3365, %v3381
    %v3400 = vadd.f32 %v3366, %v3389
    %v3401 = vadd.f32 %v3367, %v3388
    %v3402 = vadd.f32 %v3368, %v3390
    %v3411 = vcombine.low %v3395, %v3396
    %v3412 = vcombine.low %v3397, %v3398
    %v3414 = vunpack.c.l.s4 1983009808
    %v3415 = vunpack.c.0.s8 %v3414
    %v3416 = vlaneseq
    %v3417 = vshrl.u32 %v3416, 7
    %v3418 = vsub.s32 %v3415, %v3417
    %v3419 = vrot.slane %v3411, %v3418
    %v3421 = vunpack.c.l.s4 1983009808
    %v3422 = vunpack.c.0.s8 %v3421
    %v3423 = vlaneseq
    %v3424 = vshrl.u32 %v3423, 7
    %v3425 = vsub.s32 %v3422, %v3424
    %v3426 = vrot.slane %v3412, %v3425
    %v3427 = vcombine.low %v3419, %v3426
    %v3428 = vcombine.low %v3399, %v3400
    %v3429 = vcombine.low %v3401, %v3402
    %v3431 = vunpack.c.l.s4 1983009808
    %v3432 = vunpack.c.0.s8 %v3431
    %v3433 = vlaneseq
    %v3434 = vshrl.u32 %v3433, 7
    %v3435 = vsub.s32 %v3432, %v3434
    %v3436 = vrot.slane %v3428, %v3435
    %v3438 = vunpack.c.l.s4 1983009808
    %v3439 = vunpack.c.0.s8 %v3438
    %v3440 = vlaneseq
    %v3441 = vshrl.u32 %v3440, 7
    %v3442 = vsub.s32 %v3439, %v3441
    %v3443 = vrot.slane %v3429, %v3442
    %v3444 = vcombine.low %v3436, %v3443
    %v3447 = vpack.c.bf16 %v3444, %v3427
    %v3448 = vlaneseq
    %v3449 = vshrl.u32 %v3448, 7
    %v3450 = vsub.s32 3, %v3449
    %v3451 = vrot.slane %v22, %v3450
    %v3456 = vunpack.c.l.b16 %v159
    %v3457 = vunpack.c.l.b16 %v160
    %v3458 = vunpack.c.l.b16 %v161
    %v3459 = vunpack.c.l.b16 %v162
    %v3460 = vpack.c.b16 %v3457, %v3456
    %v3461 = vpack.c.b16 %v3459, %v3458
    %v3465 = vsel %vm224, %v3447, 0
    %3467 = vmatprep.subr.bf16.mxu0 0
    %3468 = vmatpush1.bf16.msra.mxu0 0
    %3469 = vmatprep.subr.bf16.mxu0 0
    %3470 = vmatpush1.bf16.msra.mxu0 0
    %3471 = vmatprep.subr.bf16.mxu0 0
    %3472 = vmatpush1.bf16.msra.mxu0 0
    %3473 = vmatprep.subr.bf16.mxu0 0
    %3474 = vmatpush1.bf16.msra.mxu0 0
    %3475 = vmatprep.subr.bf16.mxu0 0
    %3476 = vmatpush1.bf16.msra.mxu0 0
    %3477 = vmatprep.subr.bf16.mxu0 0
    %3478 = vmatpush1.bf16.msra.mxu0 0
    %3479 = vmatprep.subr.bf16.mxu0 0
    %3480 = vmatpush1.bf16.msra.mxu0 %v3461
    %3481 = vmatprep.subr.bf16.mxu0 0
    %3482 = vmatpush1.bf16.msra.mxu0 %v3460
    %3483 = vmatprep.subr.bf16.mxu0 0
    %3484 = vmatpush2.bf16.msra.mxu0 0
    %3485 = vmatprep.subr.bf16.mxu0 0
    %3486 = vmatpush2.bf16.msra.mxu0 0
    %3487 = vmatprep.subr.bf16.mxu0 0
    %3488 = vmatpush2.bf16.msra.mxu0 0
    %3489 = vmatprep.subr.bf16.mxu0 0
    %3490 = vmatpush2.bf16.msra.mxu0 0
    %3491 = vmatprep.subr.bf16.mxu0 0
    %3492 = vmatpush2.bf16.msra.mxu0 0
    %3493 = vmatprep.subr.bf16.mxu0 0
    %3494 = vmatpush2.bf16.msra.mxu0 0
    %3495 = vmatprep.subr.bf16.mxu0 0
    %3496 = vmatpush2.bf16.msra.mxu0 0
    %3497 = vmatprep.subr.bf16.mxu0 0
    %3498 = vmatpush2.bf16.msra.mxu0 0
    %3499 = vmatprep.mubr.bf16.mxu0 0
    %3500 = vmatmul.mubr.bf16.gmra.mxu0 %v3465
    %v3501 = vpop.f32.mrf.mxu0
    %v3502 = vadd.f32 %v3451, %v3501
    %v3503 = vpop.f32.mrf.mxu0
    %v3504 = vpop.f32.mrf.mxu0
    %v3505 = vadd.f32 %v3451, %v3504
    %v3506 = vpop.f32.mrf.mxu0
    %3507 = vdwg.mxu0
    %v3508 = vmax.f32 %v3502, 0.0
    %v3509 = vmax.f32 %v3505, 0.0
    %v3510 = vpack.c.bf16 %v3509, %v3508
    %v3511 = vlaneseq
    %v3512 = vshrl.u32 %v3511, 7
    %v3513 = vsub.s32 4, %v3512
    %v3514 = vrot.slane %v22, %v3513
    %v3523 = vunpack.c.l.b16 %v147
    %v3524 = vunpack.c.l.b16 %v148
    %v3525 = vunpack.c.l.b16 %v149
    %v3526 = vunpack.c.l.b16 %v150
    %v3527 = vunpack.c.l.b16 %v151
    %v3528 = vunpack.c.l.b16 %v152
    %v3529 = vunpack.c.l.b16 %v153
    %v3530 = vunpack.c.l.b16 %v154
    %v3531 = vpack.c.b16 %v3524, %v3523
    %v3532 = vpack.c.b16 %v3526, %v3525
    %v3533 = vpack.c.b16 %v3528, %v3527
    %v3534 = vpack.c.b16 %v3530, %v3529
    %vm3539 = vcmask 523264
    %v3541 = vsel %vm3539, %v3510, 0
    %3543 = vmatprep.subr.bf16.mxu0 0
    %3544 = vmatpush1.bf16.msra.mxu0 0
    %3545 = vmatprep.subr.bf16.mxu0 0
    %3546 = vmatpush1.bf16.msra.mxu0 0
    %3547 = vmatprep.subr.bf16.mxu0 0
    %3548 = vmatpush1.bf16.msra.mxu0 0
    %3549 = vmatprep.subr.bf16.mxu0 0
    %3550 = vmatpush1.bf16.msra.mxu0 0
    %3551 = vmatprep.subr.bf16.mxu0 0
    %3552 = vmatpush1.bf16.msra.mxu0 %v3534
    %3553 = vmatprep.subr.bf16.mxu0 0
    %3554 = vmatpush1.bf16.msra.mxu0 %v3533
    %3555 = vmatprep.subr.bf16.mxu0 0
    %3556 = vmatpush1.bf16.msra.mxu0 %v3532
    %3557 = vmatprep.subr.bf16.mxu0 0
    %3558 = vmatpush1.bf16.msra.mxu0 %v3531
    %3559 = vmatprep.subr.bf16.mxu0 0
    %3560 = vmatpush2.bf16.msra.mxu0 0
    %3561 = vmatprep.subr.bf16.mxu0 0
    %3562 = vmatpush2.bf16.msra.mxu0 0
    %3563 = vmatprep.subr.bf16.mxu0 0
    %3564 = vmatpush2.bf16.msra.mxu0 0
    %3565 = vmatprep.subr.bf16.mxu0 0
    %3566 = vmatpush2.bf16.msra.mxu0 0
    %3567 = vmatprep.subr.bf16.mxu0 0
    %3568 = vmatpush2.bf16.msra.mxu0 0
    %3569 = vmatprep.subr.bf16.mxu0 0
    %3570 = vmatpush2.bf16.msra.mxu0 0
    %3571 = vmatprep.subr.bf16.mxu0 0
    %3572 = vmatpush2.bf16.msra.mxu0 0
    %3573 = vmatprep.subr.bf16.mxu0 0
    %3574 = vmatpush2.bf16.msra.mxu0 0
    %3575 = vmatprep.mubr.bf16.mxu0 0
    %3576 = vmatmul.mubr.bf16.gmra.mxu0 %v3541
    %v3577 = vpop.f32.mrf.mxu0
    %v3578 = vadd.f32 %v3514, %v3577
    %v3579 = vpop.f32.mrf.mxu0
    %v3580 = vpop.f32.mrf.mxu0
    %v3581 = vadd.f32 %v3514, %v3580
    %v3582 = vpop.f32.mrf.mxu0
    %3583 = vdwg.mxu0
    %v3586 = vcombine.high %v3578, %v3578
    %v3588 = vunpack.c.l.s4 1983009808
    %v3589 = vunpack.c.0.s8 %v3588
    %v3590 = vlaneseq
    %v3591 = vshrl.u32 %v3590, 7
    %v3592 = vsub.s32 %v3589, %v3591
    %v3593 = vrot.slane %v3578, %v3592
    %v3595 = vunpack.c.l.s4 1983009808
    %v3596 = vunpack.c.0.s8 %v3595
    %v3597 = vlaneseq
    %v3598 = vshrl.u32 %v3597, 7
    %v3599 = vsub.s32 %v3596, %v3598
    %v3600 = vrot.slane %v3586, %v3599
    %v3601 = vcombine.high %v3593, %v3593
    %v3602 = vcombine.high %v3600, %v3600
    %v3603 = vcombine.high %v3581, %v3581
    %v3605 = vunpack.c.l.s4 1983009808
    %v3606 = vunpack.c.0.s8 %v3605
    %v3607 = vlaneseq
    %v3608 = vshrl.u32 %v3607, 7
    %v3609 = vsub.s32 %v3606, %v3608
    %v3610 = vrot.slane %v3581, %v3609
    %v3612 = vunpack.c.l.s4 1983009808
    %v3613 = vunpack.c.0.s8 %v3612
    %v3614 = vlaneseq
    %v3615 = vshrl.u32 %v3614, 7
    %v3616 = vsub.s32 %v3613, %v3615
    %v3617 = vrot.slane %v3603, %v3616
    %v3618 = vcombine.high %v3610, %v3610
    %v3619 = vcombine.high %v3617, %v3617
    %v3628 = vadd.f32 %v3395, %v3593
    %v3629 = vadd.f32 %v3396, %v3601
    %v3630 = vadd.f32 %v3397, %v3600
    %v3631 = vadd.f32 %v3398, %v3602
    %v3632 = vadd.f32 %v3399, %v3610
    %v3633 = vadd.f32 %v3400, %v3618
    %v3634 = vadd.f32 %v3401, %v3617
    %v3635 = vadd.f32 %v3402, %v3619
    %v3644 = vcombine.low %v3628, %v3629
    %v3645 = vcombine.low %v3630, %v3631
    %v3647 = vunpack.c.l.s4 1983009808
    %v3648 = vunpack.c.0.s8 %v3647
    %v3649 = vlaneseq
    %v3650 = vshrl.u32 %v3649, 7
    %v3651 = vsub.s32 %v3648, %v3650
    %v3652 = vrot.slane %v3644, %v3651
    %v3654 = vunpack.c.l.s4 1983009808
    %v3655 = vunpack.c.0.s8 %v3654
    %v3656 = vlaneseq
    %v3657 = vshrl.u32 %v3656, 7
    %v3658 = vsub.s32 %v3655, %v3657
    %v3659 = vrot.slane %v3645, %v3658
    %v3660 = vcombine.low %v3652, %v3659
    %v3661 = vcombine.low %v3632, %v3633
    %v3662 = vcombine.low %v3634, %v3635
    %v3664 = vunpack.c.l.s4 1983009808
    %v3665 = vunpack.c.0.s8 %v3664
    %v3666 = vlaneseq
    %v3667 = vshrl.u32 %v3666, 7
    %v3668 = vsub.s32 %v3665, %v3667
    %v3669 = vrot.slane %v3661, %v3668
    %v3671 = vunpack.c.l.s4 1983009808
    %v3672 = vunpack.c.0.s8 %v3671
    %v3673 = vlaneseq
    %v3674 = vshrl.u32 %v3673, 7
    %v3675 = vsub.s32 %v3672, %v3674
    %v3676 = vrot.slane %v3662, %v3675
    %v3677 = vcombine.low %v3669, %v3676
    %v3680 = vsel %vm224, %v3660, 0.0
    %3681 = vadd.xlane.f32.xlu0 %v3680
    %v3682 = vpop.xlane.xlu0 %3681
    %v3683 = vsel %vm224, %v3677, 0.0
    %3684 = vadd.xlane.f32.xlu0 %v3683
    %v3685 = vpop.xlane.xlu0 %3684
    %v3686 = vmul.f32 %v3682, %v3116
    %v3687 = vmul.f32 %v3685, %v3116
    %v3688 = vmul.f32 %v3628, %v3628
    %v3689 = vmul.f32 %v3629, %v3629
    %v3690 = vmul.f32 %v3630, %v3630
    %v3691 = vmul.f32 %v3631, %v3631
    %v3692 = vmul.f32 %v3632, %v3632
    %v3693 = vmul.f32 %v3633, %v3633
    %v3694 = vmul.f32 %v3634, %v3634
    %v3695 = vmul.f32 %v3635, %v3635
    %v3704 = vcombine.low %v3688, %v3689
    %v3705 = vcombine.low %v3690, %v3691
    %v3707 = vunpack.c.l.s4 1983009808
    %v3708 = vunpack.c.0.s8 %v3707
    %v3709 = vlaneseq
    %v3710 = vshrl.u32 %v3709, 7
    %v3711 = vsub.s32 %v3708, %v3710
    %v3712 = vrot.slane %v3704, %v3711
    %v3714 = vunpack.c.l.s4 1983009808
    %v3715 = vunpack.c.0.s8 %v3714
    %v3716 = vlaneseq
    %v3717 = vshrl.u32 %v3716, 7
    %v3718 = vsub.s32 %v3715, %v3717
    %v3719 = vrot.slane %v3705, %v3718
    %v3720 = vcombine.low %v3712, %v3719
    %v3721 = vcombine.low %v3692, %v3693
    %v3722 = vcombine.low %v3694, %v3695
    %v3724 = vunpack.c.l.s4 1983009808
    %v3725 = vunpack.c.0.s8 %v3724
    %v3726 = vlaneseq
    %v3727 = vshrl.u32 %v3726, 7
    %v3728 = vsub.s32 %v3725, %v3727
    %v3729 = vrot.slane %v3721, %v3728
    %v3731 = vunpack.c.l.s4 1983009808
    %v3732 = vunpack.c.0.s8 %v3731
    %v3733 = vlaneseq
    %v3734 = vshrl.u32 %v3733, 7
    %v3735 = vsub.s32 %v3732, %v3734
    %v3736 = vrot.slane %v3722, %v3735
    %v3737 = vcombine.low %v3729, %v3736
    %v3740 = vsel %vm224, %v3720, 0.0
    %3741 = vadd.xlane.f32.xlu0 %v3740
    %v3742 = vpop.xlane.xlu0 %3741
    %v3743 = vsel %vm224, %v3737, 0.0
    %3744 = vadd.xlane.f32.xlu0 %v3743
    %v3745 = vpop.xlane.xlu0 %3744
    %v3746 = vmul.f32 %v3742, %v3116
    %v3747 = vmul.f32 %v3745, %v3116
    %v3748 = vmul.f32 %v3686, %v3686
    %v3749 = vmul.f32 %v3687, %v3687
    %v3750 = vsub.f32 %v3746, %v3748
    %v3751 = vsub.f32 %v3747, %v3749
    %v3755 = vunpack.c.l.s4 269488144
    %v3756 = vunpack.c.0.s8 %v3755
    %v3757 = vlaneseq
    %v3758 = vshrl.u32 %v3757, 7
    %v3759 = vsub.s32 %v3756, %v3758
    %v3760 = vrot.slane %v3686, %v3759
    %v3762 = vunpack.c.l.s4 842150450
    %v3763 = vunpack.c.0.s8 %v3762
    %v3764 = vlaneseq
    %v3765 = vshrl.u32 %v3764, 7
    %v3766 = vsub.s32 %v3763, %v3765
    %v3767 = vrot.slane %v3686, %v3766
    %v3769 = vunpack.c.l.s4 1414812756
    %v3770 = vunpack.c.0.s8 %v3769
    %v3771 = vlaneseq
    %v3772 = vshrl.u32 %v3771, 7
    %v3773 = vsub.s32 %v3770, %v3772
    %v3774 = vrot.slane %v3686, %v3773
    %v3776 = vunpack.c.l.s4 1987475062
    %v3777 = vunpack.c.0.s8 %v3776
    %v3778 = vlaneseq
    %v3779 = vshrl.u32 %v3778, 7
    %v3780 = vsub.s32 %v3777, %v3779
    %v3781 = vrot.slane %v3686, %v3780
    %v3783 = vunpack.c.l.s4 269488144
    %v3784 = vunpack.c.0.s8 %v3783
    %v3785 = vlaneseq
    %v3786 = vshrl.u32 %v3785, 7
    %v3787 = vsub.s32 %v3784, %v3786
    %v3788 = vrot.slane %v3687, %v3787
    %v3790 = vunpack.c.l.s4 842150450
    %v3791 = vunpack.c.0.s8 %v3790
    %v3792 = vlaneseq
    %v3793 = vshrl.u32 %v3792, 7
    %v3794 = vsub.s32 %v3791, %v3793
    %v3795 = vrot.slane %v3687, %v3794
    %v3797 = vunpack.c.l.s4 1414812756
    %v3798 = vunpack.c.0.s8 %v3797
    %v3799 = vlaneseq
    %v3800 = vshrl.u32 %v3799, 7
    %v3801 = vsub.s32 %v3798, %v3800
    %v3802 = vrot.slane %v3687, %v3801
    %v3804 = vunpack.c.l.s4 1987475062
    %v3805 = vunpack.c.0.s8 %v3804
    %v3806 = vlaneseq
    %v3807 = vshrl.u32 %v3806, 7
    %v3808 = vsub.s32 %v3805, %v3807
    %v3809 = vrot.slane %v3687, %v3808
    %v3818 = vsub.f32 %v3628, %v3760
    %v3819 = vsub.f32 %v3629, %v3767
    %v3820 = vsub.f32 %v3630, %v3774
    %v3821 = vsub.f32 %v3631, %v3781
    %v3822 = vsub.f32 %v3632, %v3788
    %v3823 = vsub.f32 %v3633, %v3795
    %v3824 = vsub.f32 %v3634, %v3802
    %v3825 = vsub.f32 %v3635, %v3809
    %v3826 = vadd.f32 %v3750, 1e-05
    %v3827 = vadd.f32 %v3751, 1e-05
    %v3828 = vrsqrt.pop %v3826
    %v3829 = vrsqrt.pop %v3827
    %v3833 = vunpack.c.l.s4 269488144
    %v3834 = vunpack.c.0.s8 %v3833
    %v3835 = vlaneseq
    %v3836 = vshrl.u32 %v3835, 7
    %v3837 = vsub.s32 %v3834, %v3836
    %v3838 = vrot.slane %v3828, %v3837
    %v3840 = vunpack.c.l.s4 842150450
    %v3841 = vunpack.c.0.s8 %v3840
    %v3842 = vlaneseq
    %v3843 = vshrl.u32 %v3842, 7
    %v3844 = vsub.s32 %v3841, %v3843
    %v3845 = vrot.slane %v3828, %v3844
    %v3847 = vunpack.c.l.s4 1414812756
    %v3848 = vunpack.c.0.s8 %v3847
    %v3849 = vlaneseq
    %v3850 = vshrl.u32 %v3849, 7
    %v3851 = vsub.s32 %v3848, %v3850
    %v3852 = vrot.slane %v3828, %v3851
    %v3854 = vunpack.c.l.s4 1987475062
    %v3855 = vunpack.c.0.s8 %v3854
    %v3856 = vlaneseq
    %v3857 = vshrl.u32 %v3856, 7
    %v3858 = vsub.s32 %v3855, %v3857
    %v3859 = vrot.slane %v3828, %v3858
    %v3861 = vunpack.c.l.s4 269488144
    %v3862 = vunpack.c.0.s8 %v3861
    %v3863 = vlaneseq
    %v3864 = vshrl.u32 %v3863, 7
    %v3865 = vsub.s32 %v3862, %v3864
    %v3866 = vrot.slane %v3829, %v3865
    %v3868 = vunpack.c.l.s4 842150450
    %v3869 = vunpack.c.0.s8 %v3868
    %v3870 = vlaneseq
    %v3871 = vshrl.u32 %v3870, 7
    %v3872 = vsub.s32 %v3869, %v3871
    %v3873 = vrot.slane %v3829, %v3872
    %v3875 = vunpack.c.l.s4 1414812756
    %v3876 = vunpack.c.0.s8 %v3875
    %v3877 = vlaneseq
    %v3878 = vshrl.u32 %v3877, 7
    %v3879 = vsub.s32 %v3876, %v3878
    %v3880 = vrot.slane %v3829, %v3879
    %v3882 = vunpack.c.l.s4 1987475062
    %v3883 = vunpack.c.0.s8 %v3882
    %v3884 = vlaneseq
    %v3885 = vshrl.u32 %v3884, 7
    %v3886 = vsub.s32 %v3883, %v3885
    %v3887 = vrot.slane %v3829, %v3886
    %v3896 = vmul.f32 %v3818, %v3838
    %v3897 = vmul.f32 %v3819, %v3845
    %v3898 = vmul.f32 %v3820, %v3852
    %v3899 = vmul.f32 %v3821, %v3859
    %v3900 = vmul.f32 %v3822, %v3866
    %v3901 = vmul.f32 %v3823, %v3873
    %v3902 = vmul.f32 %v3824, %v3880
    %v3903 = vmul.f32 %v3825, %v3887
    %v3904 = vlaneseq
    %v3905 = vshrl.u32 %v3904, 7
    %v3906 = vsub.s32 7, %v3905
    %v3907 = vrot.slane %v22, %v3906
    %v3909 = vcombine.high %v3907, %v3907
    %v3911 = vunpack.c.l.s4 1983009808
    %v3912 = vunpack.c.0.s8 %v3911
    %v3913 = vlaneseq
    %v3914 = vshrl.u32 %v3913, 7
    %v3915 = vsub.s32 %v3912, %v3914
    %v3916 = vrot.slane %v3907, %v3915
    %v3918 = vunpack.c.l.s4 1983009808
    %v3919 = vunpack.c.0.s8 %v3918
    %v3920 = vlaneseq
    %v3921 = vshrl.u32 %v3920, 7
    %v3922 = vsub.s32 %v3919, %v3921
    %v3923 = vrot.slane %v3909, %v3922
    %v3924 = vcombine.high %v3916, %v3916
    %v3925 = vcombine.high %v3923, %v3923
    %v3930 = vmul.f32 %v3896, %v3916
    %v3931 = vmul.f32 %v3897, %v3924
    %v3932 = vmul.f32 %v3898, %v3923
    %v3933 = vmul.f32 %v3899, %v3925
    %v3934 = vmul.f32 %v3900, %v3916
    %v3935 = vmul.f32 %v3901, %v3924
    %v3936 = vmul.f32 %v3902, %v3923
    %v3937 = vmul.f32 %v3903, %v3925
    %v3938 = vlaneseq
    %v3939 = vshrl.u32 %v3938, 7
    %v3940 = vsub.s32 0, %v3939
    %v3941 = vrot.slane %v23, %v3940
    %v3943 = vcombine.high %v3941, %v3941
    %v3945 = vunpack.c.l.s4 1983009808
    %v3946 = vunpack.c.0.s8 %v3945
    %v3947 = vlaneseq
    %v3948 = vshrl.u32 %v3947, 7
    %v3949 = vsub.s32 %v3946, %v3948
    %v3950 = vrot.slane %v3941, %v3949
    %v3952 = vunpack.c.l.s4 1983009808
    %v3953 = vunpack.c.0.s8 %v3952
    %v3954 = vlaneseq
    %v3955 = vshrl.u32 %v3954, 7
    %v3956 = vsub.s32 %v3953, %v3955
    %v3957 = vrot.slane %v3943, %v3956
    %v3958 = vcombine.high %v3950, %v3950
    %v3959 = vcombine.high %v3957, %v3957
    %v3964 = vadd.f32 %v3930, %v3950
    %v3965 = vadd.f32 %v3931, %v3958
    %v3966 = vadd.f32 %v3932, %v3957
    %v3967 = vadd.f32 %v3933, %v3959
    %v3968 = vadd.f32 %v3934, %v3950
    %v3969 = vadd.f32 %v3935, %v3958
    %v3970 = vadd.f32 %v3936, %v3957
    %v3971 = vadd.f32 %v3937, %v3959
    %s3972 = scalar_lea.vmem %s2, 64
    %v3973 = vld [vmem:[%s3972] sm:$0xf]
    %v3974 = vld [vmem:[%s3972 + $0x4] sm:$0xf]
    %v3975 = vld [vmem:[%s3972 + $0x8] sm:$0xf]
    %v3976 = vld [vmem:[%s3972 + $0xc] sm:$0xf]
    %v3977 = vld [vmem:[%s3972 + $0x10] sm:$0xf]
    %v3978 = vld [vmem:[%s3972 + $0x14] sm:$0xf]
    %v3979 = vld [vmem:[%s3972 + $0x18] sm:$0xf]
    %v3980 = vld [vmem:[%s3972 + $0x1c] sm:$0xf]
    %v3981 = vld [vmem:[%s3972 + $0x20] sm:$0xf]
    %v3982 = vld [vmem:[%s3972 + $0x24] sm:$0xf]
    %v3983 = vld [vmem:[%s3972 + $0x28] sm:$0xf]
    %v3984 = vld [vmem:[%s3972 + $0x2c] sm:$0xf]
    %v3985 = vld [vmem:[%s3972 + $0x30] sm:$0xf]
    %v3986 = vld [vmem:[%s3972 + $0x34] sm:$0xf]
    %v3987 = vld [vmem:[%s3972 + $0x38] sm:$0xf]
    %v3988 = vld [vmem:[%s3972 + $0x3c] sm:$0xf]
    %s3989 = scalar_lea.vmem %s3, 32
    %v3990 = vld [vmem:[%s3989] sm:$0xf]
    %v3991 = vld [vmem:[%s3989 + $0x4] sm:$0xf]
    %v3992 = vld [vmem:[%s3989 + $0x8] sm:$0xf]
    %v3993 = vld [vmem:[%s3989 + $0xc] sm:$0xf]
    %v3994 = vld [vmem:[%s3989 + $0x10] sm:$0xf]
    %v3995 = vld [vmem:[%s3989 + $0x14] sm:$0xf]
    %v3996 = vld [vmem:[%s3989 + $0x18] sm:$0xf]
    %v3997 = vld [vmem:[%s3989 + $0x1c] sm:$0xf]
    %v4006 = vcombine.low %v3964, %v3965
    %v4007 = vcombine.low %v3966, %v3967
    %v4009 = vunpack.c.l.s4 1983009808
    %v4010 = vunpack.c.0.s8 %v4009
    %v4011 = vlaneseq
    %v4012 = vshrl.u32 %v4011, 7
    %v4013 = vsub.s32 %v4010, %v4012
    %v4014 = vrot.slane %v4006, %v4013
    %v4016 = vunpack.c.l.s4 1983009808
    %v4017 = vunpack.c.0.s8 %v4016
    %v4018 = vlaneseq
    %v4019 = vshrl.u32 %v4018, 7
    %v4020 = vsub.s32 %v4017, %v4019
    %v4021 = vrot.slane %v4007, %v4020
    %v4022 = vcombine.low %v4014, %v4021
    %v4023 = vcombine.low %v3968, %v3969
    %v4024 = vcombine.low %v3970, %v3971
    %v4026 = vunpack.c.l.s4 1983009808
    %v4027 = vunpack.c.0.s8 %v4026
    %v4028 = vlaneseq
    %v4029 = vshrl.u32 %v4028, 7
    %v4030 = vsub.s32 %v4027, %v4029
    %v4031 = vrot.slane %v4023, %v4030
    %v4033 = vunpack.c.l.s4 1983009808
    %v4034 = vunpack.c.0.s8 %v4033
    %v4035 = vlaneseq
    %v4036 = vshrl.u32 %v4035, 7
    %v4037 = vsub.s32 %v4034, %v4036
    %v4038 = vrot.slane %v4024, %v4037
    %v4039 = vcombine.low %v4031, %v4038
    %v4042 = vpack.c.bf16 %v4039, %v4022
    %v4043 = vlaneseq
    %v4044 = vshrl.u32 %v4043, 7
    %v4045 = vsub.s32 1, %v4044
    %v4046 = vrot.slane %v23, %v4045
    %v4051 = vunpack.c.l.b16 %v3973
    %v4052 = vunpack.c.l.b16 %v3974
    %v4053 = vunpack.c.l.b16 %v3975
    %v4054 = vunpack.c.l.b16 %v3976
    %v4055 = vpack.c.b16 %v4052, %v4051
    %v4056 = vpack.c.b16 %v4054, %v4053
    %v4060 = vsel %vm224, %v4042, 0
    %4062 = vmatprep.subr.bf16.mxu0 0
    %4063 = vmatpush1.bf16.msra.mxu0 0
    %4064 = vmatprep.subr.bf16.mxu0 0
    %4065 = vmatpush1.bf16.msra.mxu0 0
    %4066 = vmatprep.subr.bf16.mxu0 0
    %4067 = vmatpush1.bf16.msra.mxu0 0
    %4068 = vmatprep.subr.bf16.mxu0 0
    %4069 = vmatpush1.bf16.msra.mxu0 0
    %4070 = vmatprep.subr.bf16.mxu0 0
    %4071 = vmatpush1.bf16.msra.mxu0 0
    %4072 = vmatprep.subr.bf16.mxu0 0
    %4073 = vmatpush1.bf16.msra.mxu0 0
    %4074 = vmatprep.subr.bf16.mxu0 0
    %4075 = vmatpush1.bf16.msra.mxu0 %v4056
    %4076 = vmatprep.subr.bf16.mxu0 0
    %4077 = vmatpush1.bf16.msra.mxu0 %v4055
    %4078 = vmatprep.subr.bf16.mxu0 0
    %4079 = vmatpush2.bf16.msra.mxu0 0
    %4080 = vmatprep.subr.bf16.mxu0 0
    %4081 = vmatpush2.bf16.msra.mxu0 0
    %4082 = vmatprep.subr.bf16.mxu0 0
    %4083 = vmatpush2.bf16.msra.mxu0 0
    %4084 = vmatprep.subr.bf16.mxu0 0
    %4085 = vmatpush2.bf16.msra.mxu0 0
    %4086 = vmatprep.subr.bf16.mxu0 0
    %4087 = vmatpush2.bf16.msra.mxu0 0
    %4088 = vmatprep.subr.bf16.mxu0 0
    %4089 = vmatpush2.bf16.msra.mxu0 0
    %4090 = vmatprep.subr.bf16.mxu0 0
    %4091 = vmatpush2.bf16.msra.mxu0 0
    %4092 = vmatprep.subr.bf16.mxu0 0
    %4093 = vmatpush2.bf16.msra.mxu0 0
    %4094 = vmatprep.mubr.bf16.mxu0 0
    %4095 = vmatmul.mubr.bf16.gmra.mxu0 %v4060
    %v4096 = vpop.f32.mrf.mxu0
    %v4097 = vadd.f32 %v4046, %v4096
    %v4098 = vpop.f32.mrf.mxu0
    %v4099 = vpop.f32.mrf.mxu0
    %v4100 = vadd.f32 %v4046, %v4099
    %v4101 = vpop.f32.mrf.mxu0
    %4102 = vdwg.mxu0
    %v4103 = vlaneseq
    %v4104 = vshrl.u32 %v4103, 7
    %v4105 = vsub.s32 2, %v4104
    %v4106 = vrot.slane %v23, %v4105
    %v4111 = vunpack.c.l.b16 %v3990
    %v4112 = vunpack.c.l.b16 %v3991
    %v4113 = vunpack.c.l.b16 %v3992
    %v4114 = vunpack.c.l.b16 %v3993
    %v4115 = vpack.c.b16 %v4112, %v4111
    %v4116 = vpack.c.b16 %v4114, %v4113
    %4119 = vmatprep.subr.bf16.mxu0 0
    %4120 = vmatpush1.bf16.msra.mxu0 0
    %4121 = vmatprep.subr.bf16.mxu0 0
    %4122 = vmatpush1.bf16.msra.mxu0 0
    %4123 = vmatprep.subr.bf16.mxu0 0
    %4124 = vmatpush1.bf16.msra.mxu0 0
    %4125 = vmatprep.subr.bf16.mxu0 0
    %4126 = vmatpush1.bf16.msra.mxu0 0
    %4127 = vmatprep.subr.bf16.mxu0 0
    %4128 = vmatpush1.bf16.msra.mxu0 0
    %4129 = vmatprep.subr.bf16.mxu0 0
    %4130 = vmatpush1.bf16.msra.mxu0 0
    %4131 = vmatprep.subr.bf16.mxu0 0
    %4132 = vmatpush1.bf16.msra.mxu0 %v4116
    %4133 = vmatprep.subr.bf16.mxu0 0
    %4134 = vmatpush1.bf16.msra.mxu0 %v4115
    %4135 = vmatprep.subr.bf16.mxu0 0
    %4136 = vmatpush2.bf16.msra.mxu0 0
    %4137 = vmatprep.subr.bf16.mxu0 0
    %4138 = vmatpush2.bf16.msra.mxu0 0
    %4139 = vmatprep.subr.bf16.mxu0 0
    %4140 = vmatpush2.bf16.msra.mxu0 0
    %4141 = vmatprep.subr.bf16.mxu0 0
    %4142 = vmatpush2.bf16.msra.mxu0 0
    %4143 = vmatprep.subr.bf16.mxu0 0
    %4144 = vmatpush2.bf16.msra.mxu0 0
    %4145 = vmatprep.subr.bf16.mxu0 0
    %4146 = vmatpush2.bf16.msra.mxu0 0
    %4147 = vmatprep.subr.bf16.mxu0 0
    %4148 = vmatpush2.bf16.msra.mxu0 0
    %4149 = vmatprep.subr.bf16.mxu0 0
    %4150 = vmatpush2.bf16.msra.mxu0 0
    %4151 = vmatprep.mubr.bf16.mxu0 0
    %4152 = vmatmul.mubr.bf16.gmra.mxu0 %v286
    %v4153 = vpop.f32.mrf.mxu0
    %v4154 = vadd.f32 %v4106, %v4153
    %v4155 = vpop.f32.mrf.mxu0
    %v4156 = vpop.f32.mrf.mxu0
    %v4157 = vadd.f32 %v4106, %v4156
    %v4158 = vpop.f32.mrf.mxu0
    %4159 = vmatprep.mubr.bf16.mxu0 0
    %4160 = vmatmul.mubr.bf16.gmra.mxu0 %v289
    %v4161 = vpop.f32.mrf.mxu0
    %v4162 = vadd.f32 %v4106, %v4161
    %v4163 = vpop.f32.mrf.mxu0
    %v4164 = vpop.f32.mrf.mxu0
    %v4165 = vadd.f32 %v4106, %v4164
    %v4166 = vpop.f32.mrf.mxu0
    %4167 = vdwg.mxu0
    %4170 = vrot.lane.b32.xlu0 %v4097, 120
    %v4171 = vpop.permute.xlu0 %4170
    %4172 = vrot.lane.b32.xlu0 %v4100, 120
    %v4173 = vpop.permute.xlu0 %4172
    %4176 = vrot.lane.b32.xlu0 %v4097, 112
    %v4177 = vpop.permute.xlu0 %4176
    %4178 = vrot.lane.b32.xlu0 %v4100, 112
    %v4179 = vpop.permute.xlu0 %4178
    %4182 = vrot.lane.b32.xlu0 %v4097, 104
    %v4183 = vpop.permute.xlu0 %4182
    %4184 = vrot.lane.b32.xlu0 %v4100, 104
    %v4185 = vpop.permute.xlu0 %4184
    %v4188 = vcombine.low %v4097, %v4177
    %v4189 = vcombine.high %v4097, %v4177
    %v4191 = vunpack.c.l.s4 1983009808
    %v4192 = vunpack.c.0.s8 %v4191
    %v4193 = vlaneseq
    %v4194 = vshrl.u32 %v4193, 7
    %v4195 = vsub.s32 %v4192, %v4194
    %v4196 = vrot.slane %v4188, %v4195
    %v4198 = vunpack.c.l.s4 1983009808
    %v4199 = vunpack.c.0.s8 %v4198
    %v4200 = vlaneseq
    %v4201 = vshrl.u32 %v4200, 7
    %v4202 = vsub.s32 %v4199, %v4201
    %v4203 = vrot.slane %v4189, %v4202
    %v4204 = vcombine.low %v4171, %v4183
    %v4205 = vcombine.high %v4171, %v4183
    %v4207 = vunpack.c.l.s4 1983009808
    %v4208 = vunpack.c.0.s8 %v4207
    %v4209 = vlaneseq
    %v4210 = vshrl.u32 %v4209, 7
    %v4211 = vsub.s32 %v4208, %v4210
    %v4212 = vrot.slane %v4204, %v4211
    %v4214 = vunpack.c.l.s4 1983009808
    %v4215 = vunpack.c.0.s8 %v4214
    %v4216 = vlaneseq
    %v4217 = vshrl.u32 %v4216, 7
    %v4218 = vsub.s32 %v4215, %v4217
    %v4219 = vrot.slane %v4205, %v4218
    %v4220 = vcombine.low %v4196, %v4212
    %v4221 = vcombine.high %v4196, %v4212
    %v4223 = vunpack.c.l.s4 1934713408
    %v4224 = vunpack.c.0.s8 %v4223
    %v4225 = vlaneseq
    %v4226 = vshrl.u32 %v4225, 7
    %v4227 = vsub.s32 %v4224, %v4226
    %v4228 = vrot.slane %v4220, %v4227
    %v4230 = vunpack.c.l.s4 1934713408
    %v4231 = vunpack.c.0.s8 %v4230
    %v4232 = vlaneseq
    %v4233 = vshrl.u32 %v4232, 7
    %v4234 = vsub.s32 %v4231, %v4233
    %v4235 = vrot.slane %v4221, %v4234
    %v4236 = vcombine.low %v4203, %v4219
    %v4237 = vcombine.high %v4203, %v4219
    %v4239 = vunpack.c.l.s4 1934713408
    %v4240 = vunpack.c.0.s8 %v4239
    %v4241 = vlaneseq
    %v4242 = vshrl.u32 %v4241, 7
    %v4243 = vsub.s32 %v4240, %v4242
    %v4244 = vrot.slane %v4236, %v4243
    %v4246 = vunpack.c.l.s4 1934713408
    %v4247 = vunpack.c.0.s8 %v4246
    %v4248 = vlaneseq
    %v4249 = vshrl.u32 %v4248, 7
    %v4250 = vsub.s32 %v4247, %v4249
    %v4251 = vrot.slane %v4237, %v4250
    %v4252 = vcombine.high %v4228, 0.0
    %v4253 = vcombine.high %v4235, 0.0
    %v4254 = vcombine.high %v4244, 0.0
    %v4255 = vcombine.high %v4251, 0.0
    %v4256 = vcombine.low %v4100, %v4179
    %v4257 = vcombine.high %v4100, %v4179
    %v4259 = vunpack.c.l.s4 1983009808
    %v4260 = vunpack.c.0.s8 %v4259
    %v4261 = vlaneseq
    %v4262 = vshrl.u32 %v4261, 7
    %v4263 = vsub.s32 %v4260, %v4262
    %v4264 = vrot.slane %v4256, %v4263
    %v4266 = vunpack.c.l.s4 1983009808
    %v4267 = vunpack.c.0.s8 %v4266
    %v4268 = vlaneseq
    %v4269 = vshrl.u32 %v4268, 7
    %v4270 = vsub.s32 %v4267, %v4269
    %v4271 = vrot.slane %v4257, %v4270
    %v4272 = vcombine.low %v4173, %v4185
    %v4273 = vcombine.high %v4173, %v4185
    %v4275 = vunpack.c.l.s4 1983009808
    %v4276 = vunpack.c.0.s8 %v4275
    %v4277 = vlaneseq
    %v4278 = vshrl.u32 %v4277, 7
    %v4279 = vsub.s32 %v4276, %v4278
    %v4280 = vrot.slane %v4272, %v4279
    %v4282 = vunpack.c.l.s4 1983009808
    %v4283 = vunpack.c.0.s8 %v4282
    %v4284 = vlaneseq
    %v4285 = vshrl.u32 %v4284, 7
    %v4286 = vsub.s32 %v4283, %v4285
    %v4287 = vrot.slane %v4273, %v4286
    %v4288 = vcombine.low %v4264, %v4280
    %v4289 = vcombine.high %v4264, %v4280
    %v4291 = vunpack.c.l.s4 1934713408
    %v4292 = vunpack.c.0.s8 %v4291
    %v4293 = vlaneseq
    %v4294 = vshrl.u32 %v4293, 7
    %v4295 = vsub.s32 %v4292, %v4294
    %v4296 = vrot.slane %v4288, %v4295
    %v4298 = vunpack.c.l.s4 1934713408
    %v4299 = vunpack.c.0.s8 %v4298
    %v4300 = vlaneseq
    %v4301 = vshrl.u32 %v4300, 7
    %v4302 = vsub.s32 %v4299, %v4301
    %v4303 = vrot.slane %v4289, %v4302
    %v4304 = vcombine.low %v4271, %v4287
    %v4305 = vcombine.high %v4271, %v4287
    %v4307 = vunpack.c.l.s4 1934713408
    %v4308 = vunpack.c.0.s8 %v4307
    %v4309 = vlaneseq
    %v4310 = vshrl.u32 %v4309, 7
    %v4311 = vsub.s32 %v4308, %v4310
    %v4312 = vrot.slane %v4304, %v4311
    %v4314 = vunpack.c.l.s4 1934713408
    %v4315 = vunpack.c.0.s8 %v4314
    %v4316 = vlaneseq
    %v4317 = vshrl.u32 %v4316, 7
    %v4318 = vsub.s32 %v4315, %v4317
    %v4319 = vrot.slane %v4305, %v4318
    %v4320 = vcombine.high %v4296, 0.0
    %v4321 = vcombine.high %v4303, 0.0
    %v4322 = vcombine.high %v4312, 0.0
    %v4323 = vcombine.high %v4319, 0.0
    %4328 = vrot.lane.b32.xlu0 %v4154, 120
    %v4329 = vpop.permute.xlu0 %4328
    %4330 = vrot.lane.b32.xlu0 %v4157, 120
    %v4331 = vpop.permute.xlu0 %4330
    %4332 = vrot.lane.b32.xlu0 %v4162, 120
    %v4333 = vpop.permute.xlu0 %4332
    %4334 = vrot.lane.b32.xlu0 %v4165, 120
    %v4335 = vpop.permute.xlu0 %4334
    %4340 = vrot.lane.b32.xlu0 %v4154, 112
    %v4341 = vpop.permute.xlu0 %4340
    %4342 = vrot.lane.b32.xlu0 %v4157, 112
    %v4343 = vpop.permute.xlu0 %4342
    %4344 = vrot.lane.b32.xlu0 %v4162, 112
    %v4345 = vpop.permute.xlu0 %4344
    %4346 = vrot.lane.b32.xlu0 %v4165, 112
    %v4347 = vpop.permute.xlu0 %4346
    %4352 = vrot.lane.b32.xlu0 %v4154, 104
    %v4353 = vpop.permute.xlu0 %4352
    %4354 = vrot.lane.b32.xlu0 %v4157, 104
    %v4355 = vpop.permute.xlu0 %4354
    %4356 = vrot.lane.b32.xlu0 %v4162, 104
    %v4357 = vpop.permute.xlu0 %4356
    %4358 = vrot.lane.b32.xlu0 %v4165, 104
    %v4359 = vpop.permute.xlu0 %4358
    %v4364 = vcombine.low %v4154, %v4341
    %v4365 = vcombine.high %v4154, %v4341
    %v4367 = vunpack.c.l.s4 1983009808
    %v4368 = vunpack.c.0.s8 %v4367
    %v4369 = vlaneseq
    %v4370 = vshrl.u32 %v4369, 7
    %v4371 = vsub.s32 %v4368, %v4370
    %v4372 = vrot.slane %v4364, %v4371
    %v4374 = vunpack.c.l.s4 1983009808
    %v4375 = vunpack.c.0.s8 %v4374
    %v4376 = vlaneseq
    %v4377 = vshrl.u32 %v4376, 7
    %v4378 = vsub.s32 %v4375, %v4377
    %v4379 = vrot.slane %v4365, %v4378
    %v4380 = vcombine.low %v4329, %v4353
    %v4381 = vcombine.high %v4329, %v4353
    %v4383 = vunpack.c.l.s4 1983009808
    %v4384 = vunpack.c.0.s8 %v4383
    %v4385 = vlaneseq
    %v4386 = vshrl.u32 %v4385, 7
    %v4387 = vsub.s32 %v4384, %v4386
    %v4388 = vrot.slane %v4380, %v4387
    %v4390 = vunpack.c.l.s4 1983009808
    %v4391 = vunpack.c.0.s8 %v4390
    %v4392 = vlaneseq
    %v4393 = vshrl.u32 %v4392, 7
    %v4394 = vsub.s32 %v4391, %v4393
    %v4395 = vrot.slane %v4381, %v4394
    %v4396 = vcombine.low %v4372, %v4388
    %v4397 = vcombine.high %v4372, %v4388
    %v4399 = vunpack.c.l.s4 1934713408
    %v4400 = vunpack.c.0.s8 %v4399
    %v4401 = vlaneseq
    %v4402 = vshrl.u32 %v4401, 7
    %v4403 = vsub.s32 %v4400, %v4402
    %v4404 = vrot.slane %v4396, %v4403
    %v4406 = vunpack.c.l.s4 1934713408
    %v4407 = vunpack.c.0.s8 %v4406
    %v4408 = vlaneseq
    %v4409 = vshrl.u32 %v4408, 7
    %v4410 = vsub.s32 %v4407, %v4409
    %v4411 = vrot.slane %v4397, %v4410
    %v4412 = vcombine.low %v4379, %v4395
    %v4413 = vcombine.high %v4379, %v4395
    %v4415 = vunpack.c.l.s4 1934713408
    %v4416 = vunpack.c.0.s8 %v4415
    %v4417 = vlaneseq
    %v4418 = vshrl.u32 %v4417, 7
    %v4419 = vsub.s32 %v4416, %v4418
    %v4420 = vrot.slane %v4412, %v4419
    %v4422 = vunpack.c.l.s4 1934713408
    %v4423 = vunpack.c.0.s8 %v4422
    %v4424 = vlaneseq
    %v4425 = vshrl.u32 %v4424, 7
    %v4426 = vsub.s32 %v4423, %v4425
    %v4427 = vrot.slane %v4413, %v4426
    %v4428 = vcombine.high %v4404, 0.0
    %v4429 = vcombine.high %v4411, 0.0
    %v4430 = vcombine.high %v4420, 0.0
    %v4431 = vcombine.high %v4427, 0.0
    %v4432 = vcombine.low %v4157, %v4343
    %v4433 = vcombine.high %v4157, %v4343
    %v4435 = vunpack.c.l.s4 1983009808
    %v4436 = vunpack.c.0.s8 %v4435
    %v4437 = vlaneseq
    %v4438 = vshrl.u32 %v4437, 7
    %v4439 = vsub.s32 %v4436, %v4438
    %v4440 = vrot.slane %v4432, %v4439
    %v4442 = vunpack.c.l.s4 1983009808
    %v4443 = vunpack.c.0.s8 %v4442
    %v4444 = vlaneseq
    %v4445 = vshrl.u32 %v4444, 7
    %v4446 = vsub.s32 %v4443, %v4445
    %v4447 = vrot.slane %v4433, %v4446
    %v4448 = vcombine.low %v4331, %v4355
    %v4449 = vcombine.high %v4331, %v4355
    %v4451 = vunpack.c.l.s4 1983009808
    %v4452 = vunpack.c.0.s8 %v4451
    %v4453 = vlaneseq
    %v4454 = vshrl.u32 %v4453, 7
    %v4455 = vsub.s32 %v4452, %v4454
    %v4456 = vrot.slane %v4448, %v4455
    %v4458 = vunpack.c.l.s4 1983009808
    %v4459 = vunpack.c.0.s8 %v4458
    %v4460 = vlaneseq
    %v4461 = vshrl.u32 %v4460, 7
    %v4462 = vsub.s32 %v4459, %v4461
    %v4463 = vrot.slane %v4449, %v4462
    %v4464 = vcombine.low %v4440, %v4456
    %v4465 = vcombine.high %v4440, %v4456
    %v4467 = vunpack.c.l.s4 1934713408
    %v4468 = vunpack.c.0.s8 %v4467
    %v4469 = vlaneseq
    %v4470 = vshrl.u32 %v4469, 7
    %v4471 = vsub.s32 %v4468, %v4470
    %v4472 = vrot.slane %v4464, %v4471
    %v4474 = vunpack.c.l.s4 1934713408
    %v4475 = vunpack.c.0.s8 %v4474
    %v4476 = vlaneseq
    %v4477 = vshrl.u32 %v4476, 7
    %v4478 = vsub.s32 %v4475, %v4477
    %v4479 = vrot.slane %v4465, %v4478
    %v4480 = vcombine.low %v4447, %v4463
    %v4481 = vcombine.high %v4447, %v4463
    %v4483 = vunpack.c.l.s4 1934713408
    %v4484 = vunpack.c.0.s8 %v4483
    %v4485 = vlaneseq
    %v4486 = vshrl.u32 %v4485, 7
    %v4487 = vsub.s32 %v4484, %v4486
    %v4488 = vrot.slane %v4480, %v4487
    %v4490 = vunpack.c.l.s4 1934713408
    %v4491 = vunpack.c.0.s8 %v4490
    %v4492 = vlaneseq
    %v4493 = vshrl.u32 %v4492, 7
    %v4494 = vsub.s32 %v4491, %v4493
    %v4495 = vrot.slane %v4481, %v4494
    %v4496 = vcombine.high %v4472, 0.0
    %v4497 = vcombine.high %v4479, 0.0
    %v4498 = vcombine.high %v4488, 0.0
    %v4499 = vcombine.high %v4495, 0.0
    %v4500 = vcombine.low %v4162, %v4345
    %v4501 = vcombine.high %v4162, %v4345
    %v4503 = vunpack.c.l.s4 1983009808
    %v4504 = vunpack.c.0.s8 %v4503
    %v4505 = vlaneseq
    %v4506 = vshrl.u32 %v4505, 7
    %v4507 = vsub.s32 %v4504, %v4506
    %v4508 = vrot.slane %v4500, %v4507
    %v4510 = vunpack.c.l.s4 1983009808
    %v4511 = vunpack.c.0.s8 %v4510
    %v4512 = vlaneseq
    %v4513 = vshrl.u32 %v4512, 7
    %v4514 = vsub.s32 %v4511, %v4513
    %v4515 = vrot.slane %v4501, %v4514
    %v4516 = vcombine.low %v4333, %v4357
    %v4517 = vcombine.high %v4333, %v4357
    %v4519 = vunpack.c.l.s4 1983009808
    %v4520 = vunpack.c.0.s8 %v4519
    %v4521 = vlaneseq
    %v4522 = vshrl.u32 %v4521, 7
    %v4523 = vsub.s32 %v4520, %v4522
    %v4524 = vrot.slane %v4516, %v4523
    %v4526 = vunpack.c.l.s4 1983009808
    %v4527 = vunpack.c.0.s8 %v4526
    %v4528 = vlaneseq
    %v4529 = vshrl.u32 %v4528, 7
    %v4530 = vsub.s32 %v4527, %v4529
    %v4531 = vrot.slane %v4517, %v4530
    %v4532 = vcombine.low %v4508, %v4524
    %v4533 = vcombine.high %v4508, %v4524
    %v4535 = vunpack.c.l.s4 1934713408
    %v4536 = vunpack.c.0.s8 %v4535
    %v4537 = vlaneseq
    %v4538 = vshrl.u32 %v4537, 7
    %v4539 = vsub.s32 %v4536, %v4538
    %v4540 = vrot.slane %v4532, %v4539
    %v4542 = vunpack.c.l.s4 1934713408
    %v4543 = vunpack.c.0.s8 %v4542
    %v4544 = vlaneseq
    %v4545 = vshrl.u32 %v4544, 7
    %v4546 = vsub.s32 %v4543, %v4545
    %v4547 = vrot.slane %v4533, %v4546
    %v4548 = vcombine.low %v4515, %v4531
    %v4549 = vcombine.high %v4515, %v4531
    %v4551 = vunpack.c.l.s4 1934713408
    %v4552 = vunpack.c.0.s8 %v4551
    %v4553 = vlaneseq
    %v4554 = vshrl.u32 %v4553, 7
    %v4555 = vsub.s32 %v4552, %v4554
    %v4556 = vrot.slane %v4548, %v4555
    %v4558 = vunpack.c.l.s4 1934713408
    %v4559 = vunpack.c.0.s8 %v4558
    %v4560 = vlaneseq
    %v4561 = vshrl.u32 %v4560, 7
    %v4562 = vsub.s32 %v4559, %v4561
    %v4563 = vrot.slane %v4549, %v4562
    %v4564 = vcombine.high %v4540, 0.0
    %v4565 = vcombine.high %v4547, 0.0
    %v4566 = vcombine.high %v4556, 0.0
    %v4567 = vcombine.high %v4563, 0.0
    %v4568 = vcombine.low %v4165, %v4347
    %v4569 = vcombine.high %v4165, %v4347
    %v4571 = vunpack.c.l.s4 1983009808
    %v4572 = vunpack.c.0.s8 %v4571
    %v4573 = vlaneseq
    %v4574 = vshrl.u32 %v4573, 7
    %v4575 = vsub.s32 %v4572, %v4574
    %v4576 = vrot.slane %v4568, %v4575
    %v4578 = vunpack.c.l.s4 1983009808
    %v4579 = vunpack.c.0.s8 %v4578
    %v4580 = vlaneseq
    %v4581 = vshrl.u32 %v4580, 7
    %v4582 = vsub.s32 %v4579, %v4581
    %v4583 = vrot.slane %v4569, %v4582
    %v4584 = vcombine.low %v4335, %v4359
    %v4585 = vcombine.high %v4335, %v4359
    %v4587 = vunpack.c.l.s4 1983009808
    %v4588 = vunpack.c.0.s8 %v4587
    %v4589 = vlaneseq
    %v4590 = vshrl.u32 %v4589, 7
    %v4591 = vsub.s32 %v4588, %v4590
    %v4592 = vrot.slane %v4584, %v4591
    %v4594 = vunpack.c.l.s4 1983009808
    %v4595 = vunpack.c.0.s8 %v4594
    %v4596 = vlaneseq
    %v4597 = vshrl.u32 %v4596, 7
    %v4598 = vsub.s32 %v4595, %v4597
    %v4599 = vrot.slane %v4585, %v4598
    %v4600 = vcombine.low %v4576, %v4592
    %v4601 = vcombine.high %v4576, %v4592
    %v4603 = vunpack.c.l.s4 1934713408
    %v4604 = vunpack.c.0.s8 %v4603
    %v4605 = vlaneseq
    %v4606 = vshrl.u32 %v4605, 7
    %v4607 = vsub.s32 %v4604, %v4606
    %v4608 = vrot.slane %v4600, %v4607
    %v4610 = vunpack.c.l.s4 1934713408
    %v4611 = vunpack.c.0.s8 %v4610
    %v4612 = vlaneseq
    %v4613 = vshrl.u32 %v4612, 7
    %v4614 = vsub.s32 %v4611, %v4613
    %v4615 = vrot.slane %v4601, %v4614
    %v4616 = vcombine.low %v4583, %v4599
    %v4617 = vcombine.high %v4583, %v4599
    %v4619 = vunpack.c.l.s4 1934713408
    %v4620 = vunpack.c.0.s8 %v4619
    %v4621 = vlaneseq
    %v4622 = vshrl.u32 %v4621, 7
    %v4623 = vsub.s32 %v4620, %v4622
    %v4624 = vrot.slane %v4616, %v4623
    %v4626 = vunpack.c.l.s4 1934713408
    %v4627 = vunpack.c.0.s8 %v4626
    %v4628 = vlaneseq
    %v4629 = vshrl.u32 %v4628, 7
    %v4630 = vsub.s32 %v4627, %v4629
    %v4631 = vrot.slane %v4617, %v4630
    %v4632 = vcombine.high %v4608, 0.0
    %v4633 = vcombine.high %v4615, 0.0
    %v4634 = vcombine.high %v4624, 0.0
    %v4635 = vcombine.high %v4631, 0.0
    %4636 = vrot.lane.b32.xlu0 %v4154, 96
    %v4637 = vpop.permute.xlu0 %4636
    %4638 = vrot.lane.b32.xlu0 %v4157, 96
    %v4639 = vpop.permute.xlu0 %4638
    %4640 = vrot.lane.b32.xlu0 %v4162, 96
    %v4641 = vpop.permute.xlu0 %4640
    %4642 = vrot.lane.b32.xlu0 %v4165, 96
    %v4643 = vpop.permute.xlu0 %4642
    %4644 = vrot.lane.b32.xlu0 %v4329, 96
    %v4645 = vpop.permute.xlu0 %4644
    %4646 = vrot.lane.b32.xlu0 %v4331, 96
    %v4647 = vpop.permute.xlu0 %4646
    %4648 = vrot.lane.b32.xlu0 %v4333, 96
    %v4649 = vpop.permute.xlu0 %4648
    %4650 = vrot.lane.b32.xlu0 %v4335, 96
    %v4651 = vpop.permute.xlu0 %4650
    %4652 = vrot.lane.b32.xlu0 %v4341, 96
    %v4653 = vpop.permute.xlu0 %4652
    %4654 = vrot.lane.b32.xlu0 %v4343, 96
    %v4655 = vpop.permute.xlu0 %4654
    %4656 = vrot.lane.b32.xlu0 %v4345, 96
    %v4657 = vpop.permute.xlu0 %4656
    %4658 = vrot.lane.b32.xlu0 %v4347, 96
    %v4659 = vpop.permute.xlu0 %4658
    %4660 = vrot.lane.b32.xlu0 %v4353, 96
    %v4661 = vpop.permute.xlu0 %4660
    %4662 = vrot.lane.b32.xlu0 %v4355, 96
    %v4663 = vpop.permute.xlu0 %4662
    %4664 = vrot.lane.b32.xlu0 %v4357, 96
    %v4665 = vpop.permute.xlu0 %4664
    %4666 = vrot.lane.b32.xlu0 %v4359, 96
    %v4667 = vpop.permute.xlu0 %4666
    %v4684 = vcombine.low %v4637, %v4653
    %v4685 = vcombine.high %v4637, %v4653
    %v4687 = vunpack.c.l.s4 1983009808
    %v4688 = vunpack.c.0.s8 %v4687
    %v4689 = vlaneseq
    %v4690 = vshrl.u32 %v4689, 7
    %v4691 = vsub.s32 %v4688, %v4690
    %v4692 = vrot.slane %v4684, %v4691
    %v4694 = vunpack.c.l.s4 1983009808
    %v4695 = vunpack.c.0.s8 %v4694
    %v4696 = vlaneseq
    %v4697 = vshrl.u32 %v4696, 7
    %v4698 = vsub.s32 %v4695, %v4697
    %v4699 = vrot.slane %v4685, %v4698
    %v4700 = vcombine.low %v4645, %v4661
    %v4701 = vcombine.high %v4645, %v4661
    %v4703 = vunpack.c.l.s4 1983009808
    %v4704 = vunpack.c.0.s8 %v4703
    %v4705 = vlaneseq
    %v4706 = vshrl.u32 %v4705, 7
    %v4707 = vsub.s32 %v4704, %v4706
    %v4708 = vrot.slane %v4700, %v4707
    %v4710 = vunpack.c.l.s4 1983009808
    %v4711 = vunpack.c.0.s8 %v4710
    %v4712 = vlaneseq
    %v4713 = vshrl.u32 %v4712, 7
    %v4714 = vsub.s32 %v4711, %v4713
    %v4715 = vrot.slane %v4701, %v4714
    %v4716 = vcombine.low %v4692, %v4708
    %v4717 = vcombine.high %v4692, %v4708
    %v4719 = vunpack.c.l.s4 1934713408
    %v4720 = vunpack.c.0.s8 %v4719
    %v4721 = vlaneseq
    %v4722 = vshrl.u32 %v4721, 7
    %v4723 = vsub.s32 %v4720, %v4722
    %v4724 = vrot.slane %v4716, %v4723
    %v4726 = vunpack.c.l.s4 1934713408
    %v4727 = vunpack.c.0.s8 %v4726
    %v4728 = vlaneseq
    %v4729 = vshrl.u32 %v4728, 7
    %v4730 = vsub.s32 %v4727, %v4729
    %v4731 = vrot.slane %v4717, %v4730
    %v4732 = vcombine.low %v4699, %v4715
    %v4733 = vcombine.high %v4699, %v4715
    %v4735 = vunpack.c.l.s4 1934713408
    %v4736 = vunpack.c.0.s8 %v4735
    %v4737 = vlaneseq
    %v4738 = vshrl.u32 %v4737, 7
    %v4739 = vsub.s32 %v4736, %v4738
    %v4740 = vrot.slane %v4732, %v4739
    %v4742 = vunpack.c.l.s4 1934713408
    %v4743 = vunpack.c.0.s8 %v4742
    %v4744 = vlaneseq
    %v4745 = vshrl.u32 %v4744, 7
    %v4746 = vsub.s32 %v4743, %v4745
    %v4747 = vrot.slane %v4733, %v4746
    %v4748 = vcombine.high %v4724, 0.0
    %v4749 = vcombine.high %v4731, 0.0
    %v4750 = vcombine.high %v4740, 0.0
    %v4751 = vcombine.high %v4747, 0.0
    %v4752 = vcombine.low %v4639, %v4655
    %v4753 = vcombine.high %v4639, %v4655
    %v4755 = vunpack.c.l.s4 1983009808
    %v4756 = vunpack.c.0.s8 %v4755
    %v4757 = vlaneseq
    %v4758 = vshrl.u32 %v4757, 7
    %v4759 = vsub.s32 %v4756, %v4758
    %v4760 = vrot.slane %v4752, %v4759
    %v4762 = vunpack.c.l.s4 1983009808
    %v4763 = vunpack.c.0.s8 %v4762
    %v4764 = vlaneseq
    %v4765 = vshrl.u32 %v4764, 7
    %v4766 = vsub.s32 %v4763, %v4765
    %v4767 = vrot.slane %v4753, %v4766
    %v4768 = vcombine.low %v4647, %v4663
    %v4769 = vcombine.high %v4647, %v4663
    %v4771 = vunpack.c.l.s4 1983009808
    %v4772 = vunpack.c.0.s8 %v4771
    %v4773 = vlaneseq
    %v4774 = vshrl.u32 %v4773, 7
    %v4775 = vsub.s32 %v4772, %v4774
    %v4776 = vrot.slane %v4768, %v4775
    %v4778 = vunpack.c.l.s4 1983009808
    %v4779 = vunpack.c.0.s8 %v4778
    %v4780 = vlaneseq
    %v4781 = vshrl.u32 %v4780, 7
    %v4782 = vsub.s32 %v4779, %v4781
    %v4783 = vrot.slane %v4769, %v4782
    %v4784 = vcombine.low %v4760, %v4776
    %v4785 = vcombine.high %v4760, %v4776
    %v4787 = vunpack.c.l.s4 1934713408
    %v4788 = vunpack.c.0.s8 %v4787
    %v4789 = vlaneseq
    %v4790 = vshrl.u32 %v4789, 7
    %v4791 = vsub.s32 %v4788, %v4790
    %v4792 = vrot.slane %v4784, %v4791
    %v4794 = vunpack.c.l.s4 1934713408
    %v4795 = vunpack.c.0.s8 %v4794
    %v4796 = vlaneseq
    %v4797 = vshrl.u32 %v4796, 7
    %v4798 = vsub.s32 %v4795, %v4797
    %v4799 = vrot.slane %v4785, %v4798
    %v4800 = vcombine.low %v4767, %v4783
    %v4801 = vcombine.high %v4767, %v4783
    %v4803 = vunpack.c.l.s4 1934713408
    %v4804 = vunpack.c.0.s8 %v4803
    %v4805 = vlaneseq
    %v4806 = vshrl.u32 %v4805, 7
    %v4807 = vsub.s32 %v4804, %v4806
    %v4808 = vrot.slane %v4800, %v4807
    %v4810 = vunpack.c.l.s4 1934713408
    %v4811 = vunpack.c.0.s8 %v4810
    %v4812 = vlaneseq
    %v4813 = vshrl.u32 %v4812, 7
    %v4814 = vsub.s32 %v4811, %v4813
    %v4815 = vrot.slane %v4801, %v4814
    %v4816 = vcombine.high %v4792, 0.0
    %v4817 = vcombine.high %v4799, 0.0
    %v4818 = vcombine.high %v4808, 0.0
    %v4819 = vcombine.high %v4815, 0.0
    %v4820 = vcombine.low %v4641, %v4657
    %v4821 = vcombine.high %v4641, %v4657
    %v4823 = vunpack.c.l.s4 1983009808
    %v4824 = vunpack.c.0.s8 %v4823
    %v4825 = vlaneseq
    %v4826 = vshrl.u32 %v4825, 7
    %v4827 = vsub.s32 %v4824, %v4826
    %v4828 = vrot.slane %v4820, %v4827
    %v4830 = vunpack.c.l.s4 1983009808
    %v4831 = vunpack.c.0.s8 %v4830
    %v4832 = vlaneseq
    %v4833 = vshrl.u32 %v4832, 7
    %v4834 = vsub.s32 %v4831, %v4833
    %v4835 = vrot.slane %v4821, %v4834
    %v4836 = vcombine.low %v4649, %v4665
    %v4837 = vcombine.high %v4649, %v4665
    %v4839 = vunpack.c.l.s4 1983009808
    %v4840 = vunpack.c.0.s8 %v4839
    %v4841 = vlaneseq
    %v4842 = vshrl.u32 %v4841, 7
    %v4843 = vsub.s32 %v4840, %v4842
    %v4844 = vrot.slane %v4836, %v4843
    %v4846 = vunpack.c.l.s4 1983009808
    %v4847 = vunpack.c.0.s8 %v4846
    %v4848 = vlaneseq
    %v4849 = vshrl.u32 %v4848, 7
    %v4850 = vsub.s32 %v4847, %v4849
    %v4851 = vrot.slane %v4837, %v4850
    %v4852 = vcombine.low %v4828, %v4844
    %v4853 = vcombine.high %v4828, %v4844
    %v4855 = vunpack.c.l.s4 1934713408
    %v4856 = vunpack.c.0.s8 %v4855
    %v4857 = vlaneseq
    %v4858 = vshrl.u32 %v4857, 7
    %v4859 = vsub.s32 %v4856, %v4858
    %v4860 = vrot.slane %v4852, %v4859
    %v4862 = vunpack.c.l.s4 1934713408
    %v4863 = vunpack.c.0.s8 %v4862
    %v4864 = vlaneseq
    %v4865 = vshrl.u32 %v4864, 7
    %v4866 = vsub.s32 %v4863, %v4865
    %v4867 = vrot.slane %v4853, %v4866
    %v4868 = vcombine.low %v4835, %v4851
    %v4869 = vcombine.high %v4835, %v4851
    %v4871 = vunpack.c.l.s4 1934713408
    %v4872 = vunpack.c.0.s8 %v4871
    %v4873 = vlaneseq
    %v4874 = vshrl.u32 %v4873, 7
    %v4875 = vsub.s32 %v4872, %v4874
    %v4876 = vrot.slane %v4868, %v4875
    %v4878 = vunpack.c.l.s4 1934713408
    %v4879 = vunpack.c.0.s8 %v4878
    %v4880 = vlaneseq
    %v4881 = vshrl.u32 %v4880, 7
    %v4882 = vsub.s32 %v4879, %v4881
    %v4883 = vrot.slane %v4869, %v4882
    %v4884 = vcombine.high %v4860, 0.0
    %v4885 = vcombine.high %v4867, 0.0
    %v4886 = vcombine.high %v4876, 0.0
    %v4887 = vcombine.high %v4883, 0.0
    %v4888 = vcombine.low %v4643, %v4659
    %v4889 = vcombine.high %v4643, %v4659
    %v4891 = vunpack.c.l.s4 1983009808
    %v4892 = vunpack.c.0.s8 %v4891
    %v4893 = vlaneseq
    %v4894 = vshrl.u32 %v4893, 7
    %v4895 = vsub.s32 %v4892, %v4894
    %v4896 = vrot.slane %v4888, %v4895
    %v4898 = vunpack.c.l.s4 1983009808
    %v4899 = vunpack.c.0.s8 %v4898
    %v4900 = vlaneseq
    %v4901 = vshrl.u32 %v4900, 7
    %v4902 = vsub.s32 %v4899, %v4901
    %v4903 = vrot.slane %v4889, %v4902
    %v4904 = vcombine.low %v4651, %v4667
    %v4905 = vcombine.high %v4651, %v4667
    %v4907 = vunpack.c.l.s4 1983009808
    %v4908 = vunpack.c.0.s8 %v4907
    %v4909 = vlaneseq
    %v4910 = vshrl.u32 %v4909, 7
    %v4911 = vsub.s32 %v4908, %v4910
    %v4912 = vrot.slane %v4904, %v4911
    %v4914 = vunpack.c.l.s4 1983009808
    %v4915 = vunpack.c.0.s8 %v4914
    %v4916 = vlaneseq
    %v4917 = vshrl.u32 %v4916, 7
    %v4918 = vsub.s32 %v4915, %v4917
    %v4919 = vrot.slane %v4905, %v4918
    %v4920 = vcombine.low %v4896, %v4912
    %v4921 = vcombine.high %v4896, %v4912
    %v4923 = vunpack.c.l.s4 1934713408
    %v4924 = vunpack.c.0.s8 %v4923
    %v4925 = vlaneseq
    %v4926 = vshrl.u32 %v4925, 7
    %v4927 = vsub.s32 %v4924, %v4926
    %v4928 = vrot.slane %v4920, %v4927
    %v4930 = vunpack.c.l.s4 1934713408
    %v4931 = vunpack.c.0.s8 %v4930
    %v4932 = vlaneseq
    %v4933 = vshrl.u32 %v4932, 7
    %v4934 = vsub.s32 %v4931, %v4933
    %v4935 = vrot.slane %v4921, %v4934
    %v4936 = vcombine.low %v4903, %v4919
    %v4937 = vcombine.high %v4903, %v4919
    %v4939 = vunpack.c.l.s4 1934713408
    %v4940 = vunpack.c.0.s8 %v4939
    %v4941 = vlaneseq
    %v4942 = vshrl.u32 %v4941, 7
    %v4943 = vsub.s32 %v4940, %v4942
    %v4944 = vrot.slane %v4936, %v4943
    %v4946 = vunpack.c.l.s4 1934713408
    %v4947 = vunpack.c.0.s8 %v4946
    %v4948 = vlaneseq
    %v4949 = vshrl.u32 %v4948, 7
    %v4950 = vsub.s32 %v4947, %v4949
    %v4951 = vrot.slane %v4937, %v4950
    %v4952 = vcombine.high %v4928, 0.0
    %v4953 = vcombine.high %v4935, 0.0
    %v4954 = vcombine.high %v4944, 0.0
    %v4955 = vcombine.high %v4951, 0.0
    %v4956 = vcombine.low %v4228, %v4244
    %v4958 = vunpack.c.l.s4 1983009808
    %v4959 = vunpack.c.0.s8 %v4958
    %v4960 = vlaneseq
    %v4961 = vshrl.u32 %v4960, 7
    %v4962 = vsub.s32 %v4959, %v4961
    %v4963 = vrot.slane %v4956, %v4962
    %v4964 = vcombine.low %v4235, %v4251
    %v4966 = vunpack.c.l.s4 1983009808
    %v4967 = vunpack.c.0.s8 %v4966
    %v4968 = vlaneseq
    %v4969 = vshrl.u32 %v4968, 7
    %v4970 = vsub.s32 %v4967, %v4969
    %v4971 = vrot.slane %v4964, %v4970
    %v4972 = vcombine.low %v4296, %v4312
    %v4974 = vunpack.c.l.s4 1983009808
    %v4975 = vunpack.c.0.s8 %v4974
    %v4976 = vlaneseq
    %v4977 = vshrl.u32 %v4976, 7
    %v4978 = vsub.s32 %v4975, %v4977
    %v4979 = vrot.slane %v4972, %v4978
    %v4980 = vcombine.low %v4303, %v4319
    %v4982 = vunpack.c.l.s4 1983009808
    %v4983 = vunpack.c.0.s8 %v4982
    %v4984 = vlaneseq
    %v4985 = vshrl.u32 %v4984, 7
    %v4986 = vsub.s32 %v4983, %v4985
    %v4987 = vrot.slane %v4980, %v4986
    %v4988 = vcombine.low %v4963, %v4971
    %v4989 = vcombine.high %v4963, %v4971
    %v4991 = vunpack.c.l.s4 1934713408
    %v4992 = vunpack.c.0.s8 %v4991
    %v4993 = vlaneseq
    %v4994 = vshrl.u32 %v4993, 7
    %v4995 = vsub.s32 %v4992, %v4994
    %v4996 = vrot.slane %v4988, %v4995
    %v4998 = vunpack.c.l.s4 1934713408
    %v4999 = vunpack.c.0.s8 %v4998
    %v5000 = vlaneseq
    %v5001 = vshrl.u32 %v5000, 7
    %v5002 = vsub.s32 %v4999, %v5001
    %v5003 = vrot.slane %v4989, %v5002
    %v5004 = vcombine.low %v4979, %v4987
    %v5005 = vcombine.high %v4979, %v4987
    %v5007 = vunpack.c.l.s4 1934713408
    %v5008 = vunpack.c.0.s8 %v5007
    %v5009 = vlaneseq
    %v5010 = vshrl.u32 %v5009, 7
    %v5011 = vsub.s32 %v5008, %v5010
    %v5012 = vrot.slane %v5004, %v5011
    %v5014 = vunpack.c.l.s4 1934713408
    %v5015 = vunpack.c.0.s8 %v5014
    %v5016 = vlaneseq
    %v5017 = vshrl.u32 %v5016, 7
    %v5018 = vsub.s32 %v5015, %v5017
    %v5019 = vrot.slane %v5005, %v5018
    %v5020 = vcombine.low %v4996, %v5012
    %v5021 = vcombine.high %v4996, %v5012
    %v5022 = vcombine.low %v5003, %v5019
    %v5023 = vcombine.high %v5003, %v5019
    %v5024 = vcombine.low %v4252, %v4254
    %v5026 = vunpack.c.l.s4 1983009808
    %v5027 = vunpack.c.0.s8 %v5026
    %v5028 = vlaneseq
    %v5029 = vshrl.u32 %v5028, 7
    %v5030 = vsub.s32 %v5027, %v5029
    %v5031 = vrot.slane %v5024, %v5030
    %v5032 = vcombine.low %v4253, %v4255
    %v5034 = vunpack.c.l.s4 1983009808
    %v5035 = vunpack.c.0.s8 %v5034
    %v5036 = vlaneseq
    %v5037 = vshrl.u32 %v5036, 7
    %v5038 = vsub.s32 %v5035, %v5037
    %v5039 = vrot.slane %v5032, %v5038
    %v5040 = vcombine.low %v4320, %v4322
    %v5042 = vunpack.c.l.s4 1983009808
    %v5043 = vunpack.c.0.s8 %v5042
    %v5044 = vlaneseq
    %v5045 = vshrl.u32 %v5044, 7
    %v5046 = vsub.s32 %v5043, %v5045
    %v5047 = vrot.slane %v5040, %v5046
    %v5048 = vcombine.low %v4321, %v4323
    %v5050 = vunpack.c.l.s4 1983009808
    %v5051 = vunpack.c.0.s8 %v5050
    %v5052 = vlaneseq
    %v5053 = vshrl.u32 %v5052, 7
    %v5054 = vsub.s32 %v5051, %v5053
    %v5055 = vrot.slane %v5048, %v5054
    %v5056 = vcombine.low %v5031, %v5039
    %v5057 = vcombine.high %v5031, %v5039
    %v5059 = vunpack.c.l.s4 1934713408
    %v5060 = vunpack.c.0.s8 %v5059
    %v5061 = vlaneseq
    %v5062 = vshrl.u32 %v5061, 7
    %v5063 = vsub.s32 %v5060, %v5062
    %v5064 = vrot.slane %v5056, %v5063
    %v5066 = vunpack.c.l.s4 1934713408
    %v5067 = vunpack.c.0.s8 %v5066
    %v5068 = vlaneseq
    %v5069 = vshrl.u32 %v5068, 7
    %v5070 = vsub.s32 %v5067, %v5069
    %v5071 = vrot.slane %v5057, %v5070
    %v5072 = vcombine.low %v5047, %v5055
    %v5073 = vcombine.high %v5047, %v5055
    %v5075 = vunpack.c.l.s4 1934713408
    %v5076 = vunpack.c.0.s8 %v5075
    %v5077 = vlaneseq
    %v5078 = vshrl.u32 %v5077, 7
    %v5079 = vsub.s32 %v5076, %v5078
    %v5080 = vrot.slane %v5072, %v5079
    %v5082 = vunpack.c.l.s4 1934713408
    %v5083 = vunpack.c.0.s8 %v5082
    %v5084 = vlaneseq
    %v5085 = vshrl.u32 %v5084, 7
    %v5086 = vsub.s32 %v5083, %v5085
    %v5087 = vrot.slane %v5073, %v5086
    %v5088 = vcombine.low %v5064, %v5080
    %v5089 = vcombine.high %v5064, %v5080
    %v5090 = vcombine.low %v5071, %v5087
    %v5091 = vcombine.high %v5071, %v5087
    %v5092 = vpack.c.bf16 %v5020, %v5020
    %v5093 = vpack.c.bf16 %v5021, %v5021
    %v5094 = vpack.c.bf16 %v5022, %v5022
    %v5095 = vpack.c.bf16 %v5023, %v5023
    %v5096 = vpack.c.bf16 %v5088, %v5088
    %v5097 = vpack.c.bf16 %v5089, %v5089
    %v5098 = vpack.c.bf16 %v5090, %v5090
    %v5099 = vpack.c.bf16 %v5091, %v5091
    %v5100 = vcombine.low %v4404, %v4420
    %v5102 = vunpack.c.l.s4 1983009808
    %v5103 = vunpack.c.0.s8 %v5102
    %v5104 = vlaneseq
    %v5105 = vshrl.u32 %v5104, 7
    %v5106 = vsub.s32 %v5103, %v5105
    %v5107 = vrot.slane %v5100, %v5106
    %v5108 = vcombine.low %v4411, %v4427
    %v5110 = vunpack.c.l.s4 1983009808
    %v5111 = vunpack.c.0.s8 %v5110
    %v5112 = vlaneseq
    %v5113 = vshrl.u32 %v5112, 7
    %v5114 = vsub.s32 %v5111, %v5113
    %v5115 = vrot.slane %v5108, %v5114
    %v5116 = vcombine.low %v4472, %v4488
    %v5118 = vunpack.c.l.s4 1983009808
    %v5119 = vunpack.c.0.s8 %v5118
    %v5120 = vlaneseq
    %v5121 = vshrl.u32 %v5120, 7
    %v5122 = vsub.s32 %v5119, %v5121
    %v5123 = vrot.slane %v5116, %v5122
    %v5124 = vcombine.low %v4479, %v4495
    %v5126 = vunpack.c.l.s4 1983009808
    %v5127 = vunpack.c.0.s8 %v5126
    %v5128 = vlaneseq
    %v5129 = vshrl.u32 %v5128, 7
    %v5130 = vsub.s32 %v5127, %v5129
    %v5131 = vrot.slane %v5124, %v5130
    %v5132 = vcombine.low %v5107, %v5115
    %v5133 = vcombine.high %v5107, %v5115
    %v5135 = vunpack.c.l.s4 1934713408
    %v5136 = vunpack.c.0.s8 %v5135
    %v5137 = vlaneseq
    %v5138 = vshrl.u32 %v5137, 7
    %v5139 = vsub.s32 %v5136, %v5138
    %v5140 = vrot.slane %v5132, %v5139
    %v5142 = vunpack.c.l.s4 1934713408
    %v5143 = vunpack.c.0.s8 %v5142
    %v5144 = vlaneseq
    %v5145 = vshrl.u32 %v5144, 7
    %v5146 = vsub.s32 %v5143, %v5145
    %v5147 = vrot.slane %v5133, %v5146
    %v5148 = vcombine.low %v5123, %v5131
    %v5149 = vcombine.high %v5123, %v5131
    %v5151 = vunpack.c.l.s4 1934713408
    %v5152 = vunpack.c.0.s8 %v5151
    %v5153 = vlaneseq
    %v5154 = vshrl.u32 %v5153, 7
    %v5155 = vsub.s32 %v5152, %v5154
    %v5156 = vrot.slane %v5148, %v5155
    %v5158 = vunpack.c.l.s4 1934713408
    %v5159 = vunpack.c.0.s8 %v5158
    %v5160 = vlaneseq
    %v5161 = vshrl.u32 %v5160, 7
    %v5162 = vsub.s32 %v5159, %v5161
    %v5163 = vrot.slane %v5149, %v5162
    %v5164 = vcombine.low %v5140, %v5156
    %v5165 = vcombine.high %v5140, %v5156
    %v5166 = vcombine.low %v5147, %v5163
    %v5167 = vcombine.high %v5147, %v5163
    %v5168 = vcombine.low %v4540, %v4556
    %v5170 = vunpack.c.l.s4 1983009808
    %v5171 = vunpack.c.0.s8 %v5170
    %v5172 = vlaneseq
    %v5173 = vshrl.u32 %v5172, 7
    %v5174 = vsub.s32 %v5171, %v5173
    %v5175 = vrot.slane %v5168, %v5174
    %v5176 = vcombine.low %v4547, %v4563
    %v5178 = vunpack.c.l.s4 1983009808
    %v5179 = vunpack.c.0.s8 %v5178
    %v5180 = vlaneseq
    %v5181 = vshrl.u32 %v5180, 7
    %v5182 = vsub.s32 %v5179, %v5181
    %v5183 = vrot.slane %v5176, %v5182
    %v5184 = vcombine.low %v4608, %v4624
    %v5186 = vunpack.c.l.s4 1983009808
    %v5187 = vunpack.c.0.s8 %v5186
    %v5188 = vlaneseq
    %v5189 = vshrl.u32 %v5188, 7
    %v5190 = vsub.s32 %v5187, %v5189
    %v5191 = vrot.slane %v5184, %v5190
    %v5192 = vcombine.low %v4615, %v4631
    %v5194 = vunpack.c.l.s4 1983009808
    %v5195 = vunpack.c.0.s8 %v5194
    %v5196 = vlaneseq
    %v5197 = vshrl.u32 %v5196, 7
    %v5198 = vsub.s32 %v5195, %v5197
    %v5199 = vrot.slane %v5192, %v5198
    %v5200 = vcombine.low %v5175, %v5183
    %v5201 = vcombine.high %v5175, %v5183
    %v5203 = vunpack.c.l.s4 1934713408
    %v5204 = vunpack.c.0.s8 %v5203
    %v5205 = vlaneseq
    %v5206 = vshrl.u32 %v5205, 7
    %v5207 = vsub.s32 %v5204, %v5206
    %v5208 = vrot.slane %v5200, %v5207
    %v5210 = vunpack.c.l.s4 1934713408
    %v5211 = vunpack.c.0.s8 %v5210
    %v5212 = vlaneseq
    %v5213 = vshrl.u32 %v5212, 7
    %v5214 = vsub.s32 %v5211, %v5213
    %v5215 = vrot.slane %v5201, %v5214
    %v5216 = vcombine.low %v5191, %v5199
    %v5217 = vcombine.high %v5191, %v5199
    %v5219 = vunpack.c.l.s4 1934713408
    %v5220 = vunpack.c.0.s8 %v5219
    %v5221 = vlaneseq
    %v5222 = vshrl.u32 %v5221, 7
    %v5223 = vsub.s32 %v5220, %v5222
    %v5224 = vrot.slane %v5216, %v5223
    %v5226 = vunpack.c.l.s4 1934713408
    %v5227 = vunpack.c.0.s8 %v5226
    %v5228 = vlaneseq
    %v5229 = vshrl.u32 %v5228, 7
    %v5230 = vsub.s32 %v5227, %v5229
    %v5231 = vrot.slane %v5217, %v5230
    %v5232 = vcombine.low %v5208, %v5224
    %v5233 = vcombine.high %v5208, %v5224
    %v5234 = vcombine.low %v5215, %v5231
    %v5235 = vcombine.high %v5215, %v5231
    %v5236 = vcombine.low %v4428, %v4430
    %v5238 = vunpack.c.l.s4 1983009808
    %v5239 = vunpack.c.0.s8 %v5238
    %v5240 = vlaneseq
    %v5241 = vshrl.u32 %v5240, 7
    %v5242 = vsub.s32 %v5239, %v5241
    %v5243 = vrot.slane %v5236, %v5242
    %v5244 = vcombine.low %v4429, %v4431
    %v5246 = vunpack.c.l.s4 1983009808
    %v5247 = vunpack.c.0.s8 %v5246
    %v5248 = vlaneseq
    %v5249 = vshrl.u32 %v5248, 7
    %v5250 = vsub.s32 %v5247, %v5249
    %v5251 = vrot.slane %v5244, %v5250
    %v5252 = vcombine.low %v4496, %v4498
    %v5254 = vunpack.c.l.s4 1983009808
    %v5255 = vunpack.c.0.s8 %v5254
    %v5256 = vlaneseq
    %v5257 = vshrl.u32 %v5256, 7
    %v5258 = vsub.s32 %v5255, %v5257
    %v5259 = vrot.slane %v5252, %v5258
    %v5260 = vcombine.low %v4497, %v4499
    %v5262 = vunpack.c.l.s4 1983009808
    %v5263 = vunpack.c.0.s8 %v5262
    %v5264 = vlaneseq
    %v5265 = vshrl.u32 %v5264, 7
    %v5266 = vsub.s32 %v5263, %v5265
    %v5267 = vrot.slane %v5260, %v5266
    %v5268 = vcombine.low %v5243, %v5251
    %v5269 = vcombine.high %v5243, %v5251
    %v5271 = vunpack.c.l.s4 1934713408
    %v5272 = vunpack.c.0.s8 %v5271
    %v5273 = vlaneseq
    %v5274 = vshrl.u32 %v5273, 7
    %v5275 = vsub.s32 %v5272, %v5274
    %v5276 = vrot.slane %v5268, %v5275
    %v5278 = vunpack.c.l.s4 1934713408
    %v5279 = vunpack.c.0.s8 %v5278
    %v5280 = vlaneseq
    %v5281 = vshrl.u32 %v5280, 7
    %v5282 = vsub.s32 %v5279, %v5281
    %v5283 = vrot.slane %v5269, %v5282
    %v5284 = vcombine.low %v5259, %v5267
    %v5285 = vcombine.high %v5259, %v5267
    %v5287 = vunpack.c.l.s4 1934713408
    %v5288 = vunpack.c.0.s8 %v5287
    %v5289 = vlaneseq
    %v5290 = vshrl.u32 %v5289, 7
    %v5291 = vsub.s32 %v5288, %v5290
    %v5292 = vrot.slane %v5284, %v5291
    %v5294 = vunpack.c.l.s4 1934713408
    %v5295 = vunpack.c.0.s8 %v5294
    %v5296 = vlaneseq
    %v5297 = vshrl.u32 %v5296, 7
    %v5298 = vsub.s32 %v5295, %v5297
    %v5299 = vrot.slane %v5285, %v5298
    %v5300 = vcombine.low %v5276, %v5292
    %v5301 = vcombine.high %v5276, %v5292
    %v5302 = vcombine.low %v5283, %v5299
    %v5303 = vcombine.high %v5283, %v5299
    %v5304 = vcombine.low %v4564, %v4566
    %v5306 = vunpack.c.l.s4 1983009808
    %v5307 = vunpack.c.0.s8 %v5306
    %v5308 = vlaneseq
    %v5309 = vshrl.u32 %v5308, 7
    %v5310 = vsub.s32 %v5307, %v5309
    %v5311 = vrot.slane %v5304, %v5310
    %v5312 = vcombine.low %v4565, %v4567
    %v5314 = vunpack.c.l.s4 1983009808
    %v5315 = vunpack.c.0.s8 %v5314
    %v5316 = vlaneseq
    %v5317 = vshrl.u32 %v5316, 7
    %v5318 = vsub.s32 %v5315, %v5317
    %v5319 = vrot.slane %v5312, %v5318
    %v5320 = vcombine.low %v4632, %v4634
    %v5322 = vunpack.c.l.s4 1983009808
    %v5323 = vunpack.c.0.s8 %v5322
    %v5324 = vlaneseq
    %v5325 = vshrl.u32 %v5324, 7
    %v5326 = vsub.s32 %v5323, %v5325
    %v5327 = vrot.slane %v5320, %v5326
    %v5328 = vcombine.low %v4633, %v4635
    %v5330 = vunpack.c.l.s4 1983009808
    %v5331 = vunpack.c.0.s8 %v5330
    %v5332 = vlaneseq
    %v5333 = vshrl.u32 %v5332, 7
    %v5334 = vsub.s32 %v5331, %v5333
    %v5335 = vrot.slane %v5328, %v5334
    %v5336 = vcombine.low %v5311, %v5319
    %v5337 = vcombine.high %v5311, %v5319
    %v5339 = vunpack.c.l.s4 1934713408
    %v5340 = vunpack.c.0.s8 %v5339
    %v5341 = vlaneseq
    %v5342 = vshrl.u32 %v5341, 7
    %v5343 = vsub.s32 %v5340, %v5342
    %v5344 = vrot.slane %v5336, %v5343
    %v5346 = vunpack.c.l.s4 1934713408
    %v5347 = vunpack.c.0.s8 %v5346
    %v5348 = vlaneseq
    %v5349 = vshrl.u32 %v5348, 7
    %v5350 = vsub.s32 %v5347, %v5349
    %v5351 = vrot.slane %v5337, %v5350
    %v5352 = vcombine.low %v5327, %v5335
    %v5353 = vcombine.high %v5327, %v5335
    %v5355 = vunpack.c.l.s4 1934713408
    %v5356 = vunpack.c.0.s8 %v5355
    %v5357 = vlaneseq
    %v5358 = vshrl.u32 %v5357, 7
    %v5359 = vsub.s32 %v5356, %v5358
    %v5360 = vrot.slane %v5352, %v5359
    %v5362 = vunpack.c.l.s4 1934713408
    %v5363 = vunpack.c.0.s8 %v5362
    %v5364 = vlaneseq
    %v5365 = vshrl.u32 %v5364, 7
    %v5366 = vsub.s32 %v5363, %v5365
    %v5367 = vrot.slane %v5353, %v5366
    %v5368 = vcombine.low %v5344, %v5360
    %v5369 = vcombine.high %v5344, %v5360
    %v5370 = vcombine.low %v5351, %v5367
    %v5371 = vcombine.high %v5351, %v5367
    %v5372 = vpack.c.bf16 %v5232, %v5164
    %v5373 = vpack.c.bf16 %v5233, %v5165
    %v5374 = vpack.c.bf16 %v5234, %v5166
    %v5375 = vpack.c.bf16 %v5235, %v5167
    %v5376 = vpack.c.bf16 %v5368, %v5300
    %v5377 = vpack.c.bf16 %v5369, %v5301
    %v5378 = vpack.c.bf16 %v5370, %v5302
    %v5379 = vpack.c.bf16 %v5371, %v5303
    %v5380 = vcombine.low %v4724, %v4740
    %v5382 = vunpack.c.l.s4 1983009808
    %v5383 = vunpack.c.0.s8 %v5382
    %v5384 = vlaneseq
    %v5385 = vshrl.u32 %v5384, 7
    %v5386 = vsub.s32 %v5383, %v5385
    %v5387 = vrot.slane %v5380, %v5386
    %v5388 = vcombine.low %v4731, %v4747
    %v5390 = vunpack.c.l.s4 1983009808
    %v5391 = vunpack.c.0.s8 %v5390
    %v5392 = vlaneseq
    %v5393 = vshrl.u32 %v5392, 7
    %v5394 = vsub.s32 %v5391, %v5393
    %v5395 = vrot.slane %v5388, %v5394
    %v5396 = vcombine.low %v4792, %v4808
    %v5398 = vunpack.c.l.s4 1983009808
    %v5399 = vunpack.c.0.s8 %v5398
    %v5400 = vlaneseq
    %v5401 = vshrl.u32 %v5400, 7
    %v5402 = vsub.s32 %v5399, %v5401
    %v5403 = vrot.slane %v5396, %v5402
    %v5404 = vcombine.low %v4799, %v4815
    %v5406 = vunpack.c.l.s4 1983009808
    %v5407 = vunpack.c.0.s8 %v5406
    %v5408 = vlaneseq
    %v5409 = vshrl.u32 %v5408, 7
    %v5410 = vsub.s32 %v5407, %v5409
    %v5411 = vrot.slane %v5404, %v5410
    %v5412 = vcombine.low %v5387, %v5395
    %v5413 = vcombine.high %v5387, %v5395
    %v5415 = vunpack.c.l.s4 1934713408
    %v5416 = vunpack.c.0.s8 %v5415
    %v5417 = vlaneseq
    %v5418 = vshrl.u32 %v5417, 7
    %v5419 = vsub.s32 %v5416, %v5418
    %v5420 = vrot.slane %v5412, %v5419
    %v5422 = vunpack.c.l.s4 1934713408
    %v5423 = vunpack.c.0.s8 %v5422
    %v5424 = vlaneseq
    %v5425 = vshrl.u32 %v5424, 7
    %v5426 = vsub.s32 %v5423, %v5425
    %v5427 = vrot.slane %v5413, %v5426
    %v5428 = vcombine.low %v5403, %v5411
    %v5429 = vcombine.high %v5403, %v5411
    %v5431 = vunpack.c.l.s4 1934713408
    %v5432 = vunpack.c.0.s8 %v5431
    %v5433 = vlaneseq
    %v5434 = vshrl.u32 %v5433, 7
    %v5435 = vsub.s32 %v5432, %v5434
    %v5436 = vrot.slane %v5428, %v5435
    %v5438 = vunpack.c.l.s4 1934713408
    %v5439 = vunpack.c.0.s8 %v5438
    %v5440 = vlaneseq
    %v5441 = vshrl.u32 %v5440, 7
    %v5442 = vsub.s32 %v5439, %v5441
    %v5443 = vrot.slane %v5429, %v5442
    %v5444 = vcombine.low %v5420, %v5436
    %v5445 = vcombine.high %v5420, %v5436
    %v5446 = vcombine.low %v5427, %v5443
    %v5447 = vcombine.high %v5427, %v5443
    %v5448 = vcombine.low %v4860, %v4876
    %v5450 = vunpack.c.l.s4 1983009808
    %v5451 = vunpack.c.0.s8 %v5450
    %v5452 = vlaneseq
    %v5453 = vshrl.u32 %v5452, 7
    %v5454 = vsub.s32 %v5451, %v5453
    %v5455 = vrot.slane %v5448, %v5454
    %v5456 = vcombine.low %v4867, %v4883
    %v5458 = vunpack.c.l.s4 1983009808
    %v5459 = vunpack.c.0.s8 %v5458
    %v5460 = vlaneseq
    %v5461 = vshrl.u32 %v5460, 7
    %v5462 = vsub.s32 %v5459, %v5461
    %v5463 = vrot.slane %v5456, %v5462
    %v5464 = vcombine.low %v4928, %v4944
    %v5466 = vunpack.c.l.s4 1983009808
    %v5467 = vunpack.c.0.s8 %v5466
    %v5468 = vlaneseq
    %v5469 = vshrl.u32 %v5468, 7
    %v5470 = vsub.s32 %v5467, %v5469
    %v5471 = vrot.slane %v5464, %v5470
    %v5472 = vcombine.low %v4935, %v4951
    %v5474 = vunpack.c.l.s4 1983009808
    %v5475 = vunpack.c.0.s8 %v5474
    %v5476 = vlaneseq
    %v5477 = vshrl.u32 %v5476, 7
    %v5478 = vsub.s32 %v5475, %v5477
    %v5479 = vrot.slane %v5472, %v5478
    %v5480 = vcombine.low %v5455, %v5463
    %v5481 = vcombine.high %v5455, %v5463
    %v5483 = vunpack.c.l.s4 1934713408
    %v5484 = vunpack.c.0.s8 %v5483
    %v5485 = vlaneseq
    %v5486 = vshrl.u32 %v5485, 7
    %v5487 = vsub.s32 %v5484, %v5486
    %v5488 = vrot.slane %v5480, %v5487
    %v5490 = vunpack.c.l.s4 1934713408
    %v5491 = vunpack.c.0.s8 %v5490
    %v5492 = vlaneseq
    %v5493 = vshrl.u32 %v5492, 7
    %v5494 = vsub.s32 %v5491, %v5493
    %v5495 = vrot.slane %v5481, %v5494
    %v5496 = vcombine.low %v5471, %v5479
    %v5497 = vcombine.high %v5471, %v5479
    %v5499 = vunpack.c.l.s4 1934713408
    %v5500 = vunpack.c.0.s8 %v5499
    %v5501 = vlaneseq
    %v5502 = vshrl.u32 %v5501, 7
    %v5503 = vsub.s32 %v5500, %v5502
    %v5504 = vrot.slane %v5496, %v5503
    %v5506 = vunpack.c.l.s4 1934713408
    %v5507 = vunpack.c.0.s8 %v5506
    %v5508 = vlaneseq
    %v5509 = vshrl.u32 %v5508, 7
    %v5510 = vsub.s32 %v5507, %v5509
    %v5511 = vrot.slane %v5497, %v5510
    %v5512 = vcombine.low %v5488, %v5504
    %v5513 = vcombine.high %v5488, %v5504
    %v5514 = vcombine.low %v5495, %v5511
    %v5515 = vcombine.high %v5495, %v5511
    %v5516 = vcombine.low %v4748, %v4750
    %v5518 = vunpack.c.l.s4 1983009808
    %v5519 = vunpack.c.0.s8 %v5518
    %v5520 = vlaneseq
    %v5521 = vshrl.u32 %v5520, 7
    %v5522 = vsub.s32 %v5519, %v5521
    %v5523 = vrot.slane %v5516, %v5522
    %v5524 = vcombine.low %v4749, %v4751
    %v5526 = vunpack.c.l.s4 1983009808
    %v5527 = vunpack.c.0.s8 %v5526
    %v5528 = vlaneseq
    %v5529 = vshrl.u32 %v5528, 7
    %v5530 = vsub.s32 %v5527, %v5529
    %v5531 = vrot.slane %v5524, %v5530
    %v5532 = vcombine.low %v4816, %v4818
    %v5534 = vunpack.c.l.s4 1983009808
    %v5535 = vunpack.c.0.s8 %v5534
    %v5536 = vlaneseq
    %v5537 = vshrl.u32 %v5536, 7
    %v5538 = vsub.s32 %v5535, %v5537
    %v5539 = vrot.slane %v5532, %v5538
    %v5540 = vcombine.low %v4817, %v4819
    %v5542 = vunpack.c.l.s4 1983009808
    %v5543 = vunpack.c.0.s8 %v5542
    %v5544 = vlaneseq
    %v5545 = vshrl.u32 %v5544, 7
    %v5546 = vsub.s32 %v5543, %v5545
    %v5547 = vrot.slane %v5540, %v5546
    %v5548 = vcombine.low %v5523, %v5531
    %v5549 = vcombine.high %v5523, %v5531
    %v5551 = vunpack.c.l.s4 1934713408
    %v5552 = vunpack.c.0.s8 %v5551
    %v5553 = vlaneseq
    %v5554 = vshrl.u32 %v5553, 7
    %v5555 = vsub.s32 %v5552, %v5554
    %v5556 = vrot.slane %v5548, %v5555
    %v5558 = vunpack.c.l.s4 1934713408
    %v5559 = vunpack.c.0.s8 %v5558
    %v5560 = vlaneseq
    %v5561 = vshrl.u32 %v5560, 7
    %v5562 = vsub.s32 %v5559, %v5561
    %v5563 = vrot.slane %v5549, %v5562
    %v5564 = vcombine.low %v5539, %v5547
    %v5565 = vcombine.high %v5539, %v5547
    %v5567 = vunpack.c.l.s4 1934713408
    %v5568 = vunpack.c.0.s8 %v5567
    %v5569 = vlaneseq
    %v5570 = vshrl.u32 %v5569, 7
    %v5571 = vsub.s32 %v5568, %v5570
    %v5572 = vrot.slane %v5564, %v5571
    %v5574 = vunpack.c.l.s4 1934713408
    %v5575 = vunpack.c.0.s8 %v5574
    %v5576 = vlaneseq
    %v5577 = vshrl.u32 %v5576, 7
    %v5578 = vsub.s32 %v5575, %v5577
    %v5579 = vrot.slane %v5565, %v5578
    %v5580 = vcombine.low %v5556, %v5572
    %v5581 = vcombine.high %v5556, %v5572
    %v5582 = vcombine.low %v5563, %v5579
    %v5583 = vcombine.high %v5563, %v5579
    %v5584 = vcombine.low %v4884, %v4886
    %v5586 = vunpack.c.l.s4 1983009808
    %v5587 = vunpack.c.0.s8 %v5586
    %v5588 = vlaneseq
    %v5589 = vshrl.u32 %v5588, 7
    %v5590 = vsub.s32 %v5587, %v5589
    %v5591 = vrot.slane %v5584, %v5590
    %v5592 = vcombine.low %v4885, %v4887
    %v5594 = vunpack.c.l.s4 1983009808
    %v5595 = vunpack.c.0.s8 %v5594
    %v5596 = vlaneseq
    %v5597 = vshrl.u32 %v5596, 7
    %v5598 = vsub.s32 %v5595, %v5597
    %v5599 = vrot.slane %v5592, %v5598
    %v5600 = vcombine.low %v4952, %v4954
    %v5602 = vunpack.c.l.s4 1983009808
    %v5603 = vunpack.c.0.s8 %v5602
    %v5604 = vlaneseq
    %v5605 = vshrl.u32 %v5604, 7
    %v5606 = vsub.s32 %v5603, %v5605
    %v5607 = vrot.slane %v5600, %v5606
    %v5608 = vcombine.low %v4953, %v4955
    %v5610 = vunpack.c.l.s4 1983009808
    %v5611 = vunpack.c.0.s8 %v5610
    %v5612 = vlaneseq
    %v5613 = vshrl.u32 %v5612, 7
    %v5614 = vsub.s32 %v5611, %v5613
    %v5615 = vrot.slane %v5608, %v5614
    %v5616 = vcombine.low %v5591, %v5599
    %v5617 = vcombine.high %v5591, %v5599
    %v5619 = vunpack.c.l.s4 1934713408
    %v5620 = vunpack.c.0.s8 %v5619
    %v5621 = vlaneseq
    %v5622 = vshrl.u32 %v5621, 7
    %v5623 = vsub.s32 %v5620, %v5622
    %v5624 = vrot.slane %v5616, %v5623
    %v5626 = vunpack.c.l.s4 1934713408
    %v5627 = vunpack.c.0.s8 %v5626
    %v5628 = vlaneseq
    %v5629 = vshrl.u32 %v5628, 7
    %v5630 = vsub.s32 %v5627, %v5629
    %v5631 = vrot.slane %v5617, %v5630
    %v5632 = vcombine.low %v5607, %v5615
    %v5633 = vcombine.high %v5607, %v5615
    %v5635 = vunpack.c.l.s4 1934713408
    %v5636 = vunpack.c.0.s8 %v5635
    %v5637 = vlaneseq
    %v5638 = vshrl.u32 %v5637, 7
    %v5639 = vsub.s32 %v5636, %v5638
    %v5640 = vrot.slane %v5632, %v5639
    %v5642 = vunpack.c.l.s4 1934713408
    %v5643 = vunpack.c.0.s8 %v5642
    %v5644 = vlaneseq
    %v5645 = vshrl.u32 %v5644, 7
    %v5646 = vsub.s32 %v5643, %v5645
    %v5647 = vrot.slane %v5633, %v5646
    %v5648 = vcombine.low %v5624, %v5640
    %v5649 = vcombine.high %v5624, %v5640
    %v5650 = vcombine.low %v5631, %v5647
    %v5651 = vcombine.high %v5631, %v5647
    %v5652 = vpack.c.bf16 %v5512, %v5444
    %v5653 = vpack.c.bf16 %v5513, %v5445
    %v5654 = vpack.c.bf16 %v5514, %v5446
    %v5655 = vpack.c.bf16 %v5515, %v5447
    %v5656 = vpack.c.bf16 %v5648, %v5580
    %v5657 = vpack.c.bf16 %v5649, %v5581
    %v5658 = vpack.c.bf16 %v5650, %v5582
    %v5659 = vpack.c.bf16 %v5651, %v5583
    %v5661 = vsel %vm1832, %v5092, 0
    %v5664 = vsel %vm1832, %v5372, 0
    %5666 = vmatprep.subr.bf16.mxu0 0
    %5667 = vmatpush1.bf16.xpose.msra.mxu0 0
    %5668 = vmatprep.subr.bf16.mxu0 0
    %5669 = vmatpush1.bf16.xpose.msra.mxu0 0
    %5670 = vmatprep.subr.bf16.mxu0 0
    %5671 = vmatpush1.bf16.xpose.msra.mxu0 0
    %5672 = vmatprep.subr.bf16.mxu0 0
    %5673 = vmatpush1.bf16.xpose.msra.mxu0 0
    %5674 = vmatprep.subr.bf16.mxu0 0
    %5675 = vmatpush1.bf16.xpose.msra.mxu0 0
    %5676 = vmatprep.subr.bf16.mxu0 0
    %5677 = vmatpush1.bf16.xpose.msra.mxu0 0
    %5678 = vmatprep.subr.bf16.mxu0 0
    %5679 = vmatpush1.bf16.xpose.msra.mxu0 0
    %5680 = vmatprep.subr.bf16.mxu0 0
    %5681 = vmatpush1.bf16.xpose.msra.mxu0 %v5664
    %5682 = vmatprep.subr.bf16.mxu0 0
    %5683 = vmatpush2.bf16.xpose.msra.mxu0 0
    %5684 = vmatprep.subr.bf16.mxu0 0
    %5685 = vmatpush2.bf16.xpose.msra.mxu0 0
    %5686 = vmatprep.subr.bf16.mxu0 0
    %5687 = vmatpush2.bf16.xpose.msra.mxu0 0
    %5688 = vmatprep.subr.bf16.mxu0 0
    %5689 = vmatpush2.bf16.xpose.msra.mxu0 0
    %5690 = vmatprep.subr.bf16.mxu0 0
    %5691 = vmatpush2.bf16.xpose.msra.mxu0 0
    %5692 = vmatprep.subr.bf16.mxu0 0
    %5693 = vmatpush2.bf16.xpose.msra.mxu0 0
    %5694 = vmatprep.subr.bf16.mxu0 0
    %5695 = vmatpush2.bf16.xpose.msra.mxu0 0
    %5696 = vmatprep.subr.bf16.mxu0 0
    %5697 = vmatpush2.bf16.xpose.msra.mxu0 0
    %5698 = vmatprep.mubr.bf16.mxu0 0
    %5699 = vmatmul.mubr.bf16.gmra.mxu0 %v5661
    %v5700 = vpop.f32.mrf.mxu0
    %v5701 = vadd.f32 0.0, %v5700
    %v5702 = vpop.f32.mrf.mxu0
    %v5703 = vpop.f32.mrf.mxu0
    %v5704 = vpop.f32.mrf.mxu0
    %5705 = vdwg.mxu0
    %v5707 = vsel %vm1832, %v5093, 0
    %v5710 = vsel %vm1832, %v5373, 0
    %5712 = vmatprep.subr.bf16.mxu0 0
    %5713 = vmatpush1.bf16.xpose.msra.mxu0 0
    %5714 = vmatprep.subr.bf16.mxu0 0
    %5715 = vmatpush1.bf16.xpose.msra.mxu0 0
    %5716 = vmatprep.subr.bf16.mxu0 0
    %5717 = vmatpush1.bf16.xpose.msra.mxu0 0
    %5718 = vmatprep.subr.bf16.mxu0 0
    %5719 = vmatpush1.bf16.xpose.msra.mxu0 0
    %5720 = vmatprep.subr.bf16.mxu0 0
    %5721 = vmatpush1.bf16.xpose.msra.mxu0 0
    %5722 = vmatprep.subr.bf16.mxu0 0
    %5723 = vmatpush1.bf16.xpose.msra.mxu0 0
    %5724 = vmatprep.subr.bf16.mxu0 0
    %5725 = vmatpush1.bf16.xpose.msra.mxu0 0
    %5726 = vmatprep.subr.bf16.mxu0 0
    %5727 = vmatpush1.bf16.xpose.msra.mxu0 %v5710
    %5728 = vmatprep.subr.bf16.mxu0 0
    %5729 = vmatpush2.bf16.xpose.msra.mxu0 0
    %5730 = vmatprep.subr.bf16.mxu0 0
    %5731 = vmatpush2.bf16.xpose.msra.mxu0 0
    %5732 = vmatprep.subr.bf16.mxu0 0
    %5733 = vmatpush2.bf16.xpose.msra.mxu0 0
    %5734 = vmatprep.subr.bf16.mxu0 0
    %5735 = vmatpush2.bf16.xpose.msra.mxu0 0
    %5736 = vmatprep.subr.bf16.mxu0 0
    %5737 = vmatpush2.bf16.xpose.msra.mxu0 0
    %5738 = vmatprep.subr.bf16.mxu0 0
    %5739 = vmatpush2.bf16.xpose.msra.mxu0 0
    %5740 = vmatprep.subr.bf16.mxu0 0
    %5741 = vmatpush2.bf16.xpose.msra.mxu0 0
    %5742 = vmatprep.subr.bf16.mxu0 0
    %5743 = vmatpush2.bf16.xpose.msra.mxu0 0
    %5744 = vmatprep.mubr.bf16.mxu0 0
    %5745 = vmatmul.mubr.bf16.gmra.mxu0 %v5707
    %v5746 = vpop.f32.mrf.mxu0
    %v5747 = vadd.f32 0.0, %v5746
    %v5748 = vpop.f32.mrf.mxu0
    %v5749 = vpop.f32.mrf.mxu0
    %v5750 = vpop.f32.mrf.mxu0
    %5751 = vdwg.mxu0
    %v5753 = vsel %vm1832, %v5094, 0
    %v5756 = vsel %vm1832, %v5374, 0
    %5758 = vmatprep.subr.bf16.mxu0 0
    %5759 = vmatpush1.bf16.xpose.msra.mxu0 0
    %5760 = vmatprep.subr.bf16.mxu0 0
    %5761 = vmatpush1.bf16.xpose.msra.mxu0 0
    %5762 = vmatprep.subr.bf16.mxu0 0
    %5763 = vmatpush1.bf16.xpose.msra.mxu0 0
    %5764 = vmatprep.subr.bf16.mxu0 0
    %5765 = vmatpush1.bf16.xpose.msra.mxu0 0
    %5766 = vmatprep.subr.bf16.mxu0 0
    %5767 = vmatpush1.bf16.xpose.msra.mxu0 0
    %5768 = vmatprep.subr.bf16.mxu0 0
    %5769 = vmatpush1.bf16.xpose.msra.mxu0 0
    %5770 = vmatprep.subr.bf16.mxu0 0
    %5771 = vmatpush1.bf16.xpose.msra.mxu0 0
    %5772 = vmatprep.subr.bf16.mxu0 0
    %5773 = vmatpush1.bf16.xpose.msra.mxu0 %v5756
    %5774 = vmatprep.subr.bf16.mxu0 0
    %5775 = vmatpush2.bf16.xpose.msra.mxu0 0
    %5776 = vmatprep.subr.bf16.mxu0 0
    %5777 = vmatpush2.bf16.xpose.msra.mxu0 0
    %5778 = vmatprep.subr.bf16.mxu0 0
    %5779 = vmatpush2.bf16.xpose.msra.mxu0 0
    %5780 = vmatprep.subr.bf16.mxu0 0
    %5781 = vmatpush2.bf16.xpose.msra.mxu0 0
    %5782 = vmatprep.subr.bf16.mxu0 0
    %5783 = vmatpush2.bf16.xpose.msra.mxu0 0
    %5784 = vmatprep.subr.bf16.mxu0 0
    %5785 = vmatpush2.bf16.xpose.msra.mxu0 0
    %5786 = vmatprep.subr.bf16.mxu0 0
    %5787 = vmatpush2.bf16.xpose.msra.mxu0 0
    %5788 = vmatprep.subr.bf16.mxu0 0
    %5789 = vmatpush2.bf16.xpose.msra.mxu0 0
    %5790 = vmatprep.mubr.bf16.mxu0 0
    %5791 = vmatmul.mubr.bf16.gmra.mxu0 %v5753
    %v5792 = vpop.f32.mrf.mxu0
    %v5793 = vadd.f32 0.0, %v5792
    %v5794 = vpop.f32.mrf.mxu0
    %v5795 = vpop.f32.mrf.mxu0
    %v5796 = vpop.f32.mrf.mxu0
    %5797 = vdwg.mxu0
    %v5799 = vsel %vm1832, %v5095, 0
    %v5802 = vsel %vm1832, %v5375, 0
    %5804 = vmatprep.subr.bf16.mxu0 0
    %5805 = vmatpush1.bf16.xpose.msra.mxu0 0
    %5806 = vmatprep.subr.bf16.mxu0 0
    %5807 = vmatpush1.bf16.xpose.msra.mxu0 0
    %5808 = vmatprep.subr.bf16.mxu0 0
    %5809 = vmatpush1.bf16.xpose.msra.mxu0 0
    %5810 = vmatprep.subr.bf16.mxu0 0
    %5811 = vmatpush1.bf16.xpose.msra.mxu0 0
    %5812 = vmatprep.subr.bf16.mxu0 0
    %5813 = vmatpush1.bf16.xpose.msra.mxu0 0
    %5814 = vmatprep.subr.bf16.mxu0 0
    %5815 = vmatpush1.bf16.xpose.msra.mxu0 0
    %5816 = vmatprep.subr.bf16.mxu0 0
    %5817 = vmatpush1.bf16.xpose.msra.mxu0 0
    %5818 = vmatprep.subr.bf16.mxu0 0
    %5819 = vmatpush1.bf16.xpose.msra.mxu0 %v5802
    %5820 = vmatprep.subr.bf16.mxu0 0
    %5821 = vmatpush2.bf16.xpose.msra.mxu0 0
    %5822 = vmatprep.subr.bf16.mxu0 0
    %5823 = vmatpush2.bf16.xpose.msra.mxu0 0
    %5824 = vmatprep.subr.bf16.mxu0 0
    %5825 = vmatpush2.bf16.xpose.msra.mxu0 0
    %5826 = vmatprep.subr.bf16.mxu0 0
    %5827 = vmatpush2.bf16.xpose.msra.mxu0 0
    %5828 = vmatprep.subr.bf16.mxu0 0
    %5829 = vmatpush2.bf16.xpose.msra.mxu0 0
    %5830 = vmatprep.subr.bf16.mxu0 0
    %5831 = vmatpush2.bf16.xpose.msra.mxu0 0
    %5832 = vmatprep.subr.bf16.mxu0 0
    %5833 = vmatpush2.bf16.xpose.msra.mxu0 0
    %5834 = vmatprep.subr.bf16.mxu0 0
    %5835 = vmatpush2.bf16.xpose.msra.mxu0 0
    %5836 = vmatprep.mubr.bf16.mxu0 0
    %5837 = vmatmul.mubr.bf16.gmra.mxu0 %v5799
    %v5838 = vpop.f32.mrf.mxu0
    %v5839 = vadd.f32 0.0, %v5838
    %v5840 = vpop.f32.mrf.mxu0
    %v5841 = vpop.f32.mrf.mxu0
    %v5842 = vpop.f32.mrf.mxu0
    %5843 = vdwg.mxu0
    %v5845 = vsel %vm1832, %v5096, 0
    %v5848 = vsel %vm1832, %v5376, 0
    %5850 = vmatprep.subr.bf16.mxu0 0
    %5851 = vmatpush1.bf16.xpose.msra.mxu0 0
    %5852 = vmatprep.subr.bf16.mxu0 0
    %5853 = vmatpush1.bf16.xpose.msra.mxu0 0
    %5854 = vmatprep.subr.bf16.mxu0 0
    %5855 = vmatpush1.bf16.xpose.msra.mxu0 0
    %5856 = vmatprep.subr.bf16.mxu0 0
    %5857 = vmatpush1.bf16.xpose.msra.mxu0 0
    %5858 = vmatprep.subr.bf16.mxu0 0
    %5859 = vmatpush1.bf16.xpose.msra.mxu0 0
    %5860 = vmatprep.subr.bf16.mxu0 0
    %5861 = vmatpush1.bf16.xpose.msra.mxu0 0
    %5862 = vmatprep.subr.bf16.mxu0 0
    %5863 = vmatpush1.bf16.xpose.msra.mxu0 0
    %5864 = vmatprep.subr.bf16.mxu0 0
    %5865 = vmatpush1.bf16.xpose.msra.mxu0 %v5848
    %5866 = vmatprep.subr.bf16.mxu0 0
    %5867 = vmatpush2.bf16.xpose.msra.mxu0 0
    %5868 = vmatprep.subr.bf16.mxu0 0
    %5869 = vmatpush2.bf16.xpose.msra.mxu0 0
    %5870 = vmatprep.subr.bf16.mxu0 0
    %5871 = vmatpush2.bf16.xpose.msra.mxu0 0
    %5872 = vmatprep.subr.bf16.mxu0 0
    %5873 = vmatpush2.bf16.xpose.msra.mxu0 0
    %5874 = vmatprep.subr.bf16.mxu0 0
    %5875 = vmatpush2.bf16.xpose.msra.mxu0 0
    %5876 = vmatprep.subr.bf16.mxu0 0
    %5877 = vmatpush2.bf16.xpose.msra.mxu0 0
    %5878 = vmatprep.subr.bf16.mxu0 0
    %5879 = vmatpush2.bf16.xpose.msra.mxu0 0
    %5880 = vmatprep.subr.bf16.mxu0 0
    %5881 = vmatpush2.bf16.xpose.msra.mxu0 0
    %5882 = vmatprep.mubr.bf16.mxu0 0
    %5883 = vmatmul.mubr.bf16.gmra.mxu0 %v5845
    %v5884 = vpop.f32.mrf.mxu0
    %v5885 = vadd.f32 0.0, %v5884
    %v5886 = vpop.f32.mrf.mxu0
    %v5887 = vpop.f32.mrf.mxu0
    %v5888 = vpop.f32.mrf.mxu0
    %5889 = vdwg.mxu0
    %v5891 = vsel %vm1832, %v5097, 0
    %v5894 = vsel %vm1832, %v5377, 0
    %5896 = vmatprep.subr.bf16.mxu0 0
    %5897 = vmatpush1.bf16.xpose.msra.mxu0 0
    %5898 = vmatprep.subr.bf16.mxu0 0
    %5899 = vmatpush1.bf16.xpose.msra.mxu0 0
    %5900 = vmatprep.subr.bf16.mxu0 0
    %5901 = vmatpush1.bf16.xpose.msra.mxu0 0
    %5902 = vmatprep.subr.bf16.mxu0 0
    %5903 = vmatpush1.bf16.xpose.msra.mxu0 0
    %5904 = vmatprep.subr.bf16.mxu0 0
    %5905 = vmatpush1.bf16.xpose.msra.mxu0 0
    %5906 = vmatprep.subr.bf16.mxu0 0
    %5907 = vmatpush1.bf16.xpose.msra.mxu0 0
    %5908 = vmatprep.subr.bf16.mxu0 0
    %5909 = vmatpush1.bf16.xpose.msra.mxu0 0
    %5910 = vmatprep.subr.bf16.mxu0 0
    %5911 = vmatpush1.bf16.xpose.msra.mxu0 %v5894
    %5912 = vmatprep.subr.bf16.mxu0 0
    %5913 = vmatpush2.bf16.xpose.msra.mxu0 0
    %5914 = vmatprep.subr.bf16.mxu0 0
    %5915 = vmatpush2.bf16.xpose.msra.mxu0 0
    %5916 = vmatprep.subr.bf16.mxu0 0
    %5917 = vmatpush2.bf16.xpose.msra.mxu0 0
    %5918 = vmatprep.subr.bf16.mxu0 0
    %5919 = vmatpush2.bf16.xpose.msra.mxu0 0
    %5920 = vmatprep.subr.bf16.mxu0 0
    %5921 = vmatpush2.bf16.xpose.msra.mxu0 0
    %5922 = vmatprep.subr.bf16.mxu0 0
    %5923 = vmatpush2.bf16.xpose.msra.mxu0 0
    %5924 = vmatprep.subr.bf16.mxu0 0
    %5925 = vmatpush2.bf16.xpose.msra.mxu0 0
    %5926 = vmatprep.subr.bf16.mxu0 0
    %5927 = vmatpush2.bf16.xpose.msra.mxu0 0
    %5928 = vmatprep.mubr.bf16.mxu0 0
    %5929 = vmatmul.mubr.bf16.gmra.mxu0 %v5891
    %v5930 = vpop.f32.mrf.mxu0
    %v5931 = vadd.f32 0.0, %v5930
    %v5932 = vpop.f32.mrf.mxu0
    %v5933 = vpop.f32.mrf.mxu0
    %v5934 = vpop.f32.mrf.mxu0
    %5935 = vdwg.mxu0
    %v5937 = vsel %vm1832, %v5098, 0
    %v5940 = vsel %vm1832, %v5378, 0
    %5942 = vmatprep.subr.bf16.mxu0 0
    %5943 = vmatpush1.bf16.xpose.msra.mxu0 0
    %5944 = vmatprep.subr.bf16.mxu0 0
    %5945 = vmatpush1.bf16.xpose.msra.mxu0 0
    %5946 = vmatprep.subr.bf16.mxu0 0
    %5947 = vmatpush1.bf16.xpose.msra.mxu0 0
    %5948 = vmatprep.subr.bf16.mxu0 0
    %5949 = vmatpush1.bf16.xpose.msra.mxu0 0
    %5950 = vmatprep.subr.bf16.mxu0 0
    %5951 = vmatpush1.bf16.xpose.msra.mxu0 0
    %5952 = vmatprep.subr.bf16.mxu0 0
    %5953 = vmatpush1.bf16.xpose.msra.mxu0 0
    %5954 = vmatprep.subr.bf16.mxu0 0
    %5955 = vmatpush1.bf16.xpose.msra.mxu0 0
    %5956 = vmatprep.subr.bf16.mxu0 0
    %5957 = vmatpush1.bf16.xpose.msra.mxu0 %v5940
    %5958 = vmatprep.subr.bf16.mxu0 0
    %5959 = vmatpush2.bf16.xpose.msra.mxu0 0
    %5960 = vmatprep.subr.bf16.mxu0 0
    %5961 = vmatpush2.bf16.xpose.msra.mxu0 0
    %5962 = vmatprep.subr.bf16.mxu0 0
    %5963 = vmatpush2.bf16.xpose.msra.mxu0 0
    %5964 = vmatprep.subr.bf16.mxu0 0
    %5965 = vmatpush2.bf16.xpose.msra.mxu0 0
    %5966 = vmatprep.subr.bf16.mxu0 0
    %5967 = vmatpush2.bf16.xpose.msra.mxu0 0
    %5968 = vmatprep.subr.bf16.mxu0 0
    %5969 = vmatpush2.bf16.xpose.msra.mxu0 0
    %5970 = vmatprep.subr.bf16.mxu0 0
    %5971 = vmatpush2.bf16.xpose.msra.mxu0 0
    %5972 = vmatprep.subr.bf16.mxu0 0
    %5973 = vmatpush2.bf16.xpose.msra.mxu0 0
    %5974 = vmatprep.mubr.bf16.mxu0 0
    %5975 = vmatmul.mubr.bf16.gmra.mxu0 %v5937
    %v5976 = vpop.f32.mrf.mxu0
    %v5977 = vadd.f32 0.0, %v5976
    %v5978 = vpop.f32.mrf.mxu0
    %v5979 = vpop.f32.mrf.mxu0
    %v5980 = vpop.f32.mrf.mxu0
    %5981 = vdwg.mxu0
    %v5983 = vsel %vm1832, %v5099, 0
    %v5986 = vsel %vm1832, %v5379, 0
    %5988 = vmatprep.subr.bf16.mxu0 0
    %5989 = vmatpush1.bf16.xpose.msra.mxu0 0
    %5990 = vmatprep.subr.bf16.mxu0 0
    %5991 = vmatpush1.bf16.xpose.msra.mxu0 0
    %5992 = vmatprep.subr.bf16.mxu0 0
    %5993 = vmatpush1.bf16.xpose.msra.mxu0 0
    %5994 = vmatprep.subr.bf16.mxu0 0
    %5995 = vmatpush1.bf16.xpose.msra.mxu0 0
    %5996 = vmatprep.subr.bf16.mxu0 0
    %5997 = vmatpush1.bf16.xpose.msra.mxu0 0
    %5998 = vmatprep.subr.bf16.mxu0 0
    %5999 = vmatpush1.bf16.xpose.msra.mxu0 0
    %6000 = vmatprep.subr.bf16.mxu0 0
    %6001 = vmatpush1.bf16.xpose.msra.mxu0 0
    %6002 = vmatprep.subr.bf16.mxu0 0
    %6003 = vmatpush1.bf16.xpose.msra.mxu0 %v5986
    %6004 = vmatprep.subr.bf16.mxu0 0
    %6005 = vmatpush2.bf16.xpose.msra.mxu0 0
    %6006 = vmatprep.subr.bf16.mxu0 0
    %6007 = vmatpush2.bf16.xpose.msra.mxu0 0
    %6008 = vmatprep.subr.bf16.mxu0 0
    %6009 = vmatpush2.bf16.xpose.msra.mxu0 0
    %6010 = vmatprep.subr.bf16.mxu0 0
    %6011 = vmatpush2.bf16.xpose.msra.mxu0 0
    %6012 = vmatprep.subr.bf16.mxu0 0
    %6013 = vmatpush2.bf16.xpose.msra.mxu0 0
    %6014 = vmatprep.subr.bf16.mxu0 0
    %6015 = vmatpush2.bf16.xpose.msra.mxu0 0
    %6016 = vmatprep.subr.bf16.mxu0 0
    %6017 = vmatpush2.bf16.xpose.msra.mxu0 0
    %6018 = vmatprep.subr.bf16.mxu0 0
    %6019 = vmatpush2.bf16.xpose.msra.mxu0 0
    %6020 = vmatprep.mubr.bf16.mxu0 0
    %6021 = vmatmul.mubr.bf16.gmra.mxu0 %v5983
    %v6022 = vpop.f32.mrf.mxu0
    %v6023 = vadd.f32 0.0, %v6022
    %v6024 = vpop.f32.mrf.mxu0
    %v6025 = vpop.f32.mrf.mxu0
    %v6026 = vpop.f32.mrf.mxu0
    %6027 = vdwg.mxu0
    %v6028 = vmul.f32 %v5701, 0.35355338
    %v6029 = vmul.f32 %v5747, 0.35355338
    %v6030 = vmul.f32 %v5793, 0.35355338
    %v6031 = vmul.f32 %v5839, 0.35355338
    %v6032 = vmul.f32 %v5885, 0.35355338
    %v6033 = vmul.f32 %v5931, 0.35355338
    %v6034 = vmul.f32 %v5977, 0.35355338
    %v6035 = vmul.f32 %v6023, 0.35355338
    %v6036 = vsel %vm2209, %v6028, -inf
    %6037 = vmax.xlane.f32.xlu0 %v6036
    %v6038 = vpop.xlane.xlu0 %6037
    %v6039 = vsel %vm2209, %v6029, -inf
    %6040 = vmax.xlane.f32.xlu0 %v6039
    %v6041 = vpop.xlane.xlu0 %6040
    %v6042 = vsel %vm2209, %v6030, -inf
    %6043 = vmax.xlane.f32.xlu0 %v6042
    %v6044 = vpop.xlane.xlu0 %6043
    %v6045 = vsel %vm2209, %v6031, -inf
    %6046 = vmax.xlane.f32.xlu0 %v6045
    %v6047 = vpop.xlane.xlu0 %6046
    %v6048 = vsel %vm2209, %v6032, -inf
    %6049 = vmax.xlane.f32.xlu0 %v6048
    %v6050 = vpop.xlane.xlu0 %6049
    %v6051 = vsel %vm2209, %v6033, -inf
    %6052 = vmax.xlane.f32.xlu0 %v6051
    %v6053 = vpop.xlane.xlu0 %6052
    %v6054 = vsel %vm2209, %v6034, -inf
    %6055 = vmax.xlane.f32.xlu0 %v6054
    %v6056 = vpop.xlane.xlu0 %6055
    %v6057 = vsel %vm2209, %v6035, -inf
    %6058 = vmax.xlane.f32.xlu0 %v6057
    %v6059 = vpop.xlane.xlu0 %6058
    %v6060 = vsub.f32 %v6028, %v6038
    %v6061 = vsub.f32 %v6029, %v6041
    %v6062 = vsub.f32 %v6030, %v6044
    %v6063 = vsub.f32 %v6031, %v6047
    %v6064 = vsub.f32 %v6032, %v6050
    %v6065 = vsub.f32 %v6033, %v6053
    %v6066 = vsub.f32 %v6034, %v6056
    %v6067 = vsub.f32 %v6035, %v6059
    %v6068 = vmul.f32 %v6060, 1.442695
    %v6069 = vpow.pop %v6068
    %v6070 = vmul.f32 %v6061, 1.442695
    %v6071 = vpow.pop %v6070
    %v6072 = vmul.f32 %v6062, 1.442695
    %v6073 = vpow.pop %v6072
    %v6074 = vmul.f32 %v6063, 1.442695
    %v6075 = vpow.pop %v6074
    %v6076 = vmul.f32 %v6064, 1.442695
    %v6077 = vpow.pop %v6076
    %v6078 = vmul.f32 %v6065, 1.442695
    %v6079 = vpow.pop %v6078
    %v6080 = vmul.f32 %v6066, 1.442695
    %v6081 = vpow.pop %v6080
    %v6082 = vmul.f32 %v6067, 1.442695
    %v6083 = vpow.pop %v6082
    %v6084 = vsel %vm2209, %v6069, 0.0
    %6085 = vadd.xlane.f32.xlu0 %v6084
    %v6086 = vpop.xlane.xlu0 %6085
    %v6087 = vsel %vm2209, %v6071, 0.0
    %6088 = vadd.xlane.f32.xlu0 %v6087
    %v6089 = vpop.xlane.xlu0 %6088
    %v6090 = vsel %vm2209, %v6073, 0.0
    %6091 = vadd.xlane.f32.xlu0 %v6090
    %v6092 = vpop.xlane.xlu0 %6091
    %v6093 = vsel %vm2209, %v6075, 0.0
    %6094 = vadd.xlane.f32.xlu0 %v6093
    %v6095 = vpop.xlane.xlu0 %6094
    %v6096 = vsel %vm2209, %v6077, 0.0
    %6097 = vadd.xlane.f32.xlu0 %v6096
    %v6098 = vpop.xlane.xlu0 %6097
    %v6099 = vsel %vm2209, %v6079, 0.0
    %6100 = vadd.xlane.f32.xlu0 %v6099
    %v6101 = vpop.xlane.xlu0 %6100
    %v6102 = vsel %vm2209, %v6081, 0.0
    %6103 = vadd.xlane.f32.xlu0 %v6102
    %v6104 = vpop.xlane.xlu0 %6103
    %v6105 = vsel %vm2209, %v6083, 0.0
    %6106 = vadd.xlane.f32.xlu0 %v6105
    %v6107 = vpop.xlane.xlu0 %6106
    %v6108 = vrcp.pop %v6086
    %v6109 = vrcp.pop %v6089
    %v6110 = vrcp.pop %v6092
    %v6111 = vrcp.pop %v6095
    %v6112 = vrcp.pop %v6098
    %v6113 = vrcp.pop %v6101
    %v6114 = vrcp.pop %v6104
    %v6115 = vrcp.pop %v6107
    %v6116 = vmul.f32 %v6069, %v6108
    %v6117 = vmul.f32 %v6071, %v6109
    %v6118 = vmul.f32 %v6073, %v6110
    %v6119 = vmul.f32 %v6075, %v6111
    %v6120 = vmul.f32 %v6077, %v6112
    %v6121 = vmul.f32 %v6079, %v6113
    %v6122 = vmul.f32 %v6081, %v6114
    %v6123 = vmul.f32 %v6083, %v6115
    %v6124 = vpack.c.bf16 %v6116, %v6116
    %v6125 = vpack.c.bf16 %v6117, %v6117
    %v6126 = vpack.c.bf16 %v6118, %v6118
    %v6127 = vpack.c.bf16 %v6119, %v6119
    %v6128 = vpack.c.bf16 %v6120, %v6120
    %v6129 = vpack.c.bf16 %v6121, %v6121
    %v6130 = vpack.c.bf16 %v6122, %v6122
    %v6131 = vpack.c.bf16 %v6123, %v6123
    %v6133 = vsel %vm2209, %v6124, 0
    %6135 = vmatprep.subr.bf16.mxu0 0
    %6136 = vmatpush1.bf16.msra.mxu0 0
    %6137 = vmatprep.subr.bf16.mxu0 0
    %6138 = vmatpush1.bf16.msra.mxu0 0
    %6139 = vmatprep.subr.bf16.mxu0 0
    %6140 = vmatpush1.bf16.msra.mxu0 0
    %6141 = vmatprep.subr.bf16.mxu0 0
    %6142 = vmatpush1.bf16.msra.mxu0 0
    %6143 = vmatprep.subr.bf16.mxu0 0
    %6144 = vmatpush1.bf16.msra.mxu0 0
    %6145 = vmatprep.subr.bf16.mxu0 0
    %6146 = vmatpush1.bf16.msra.mxu0 0
    %6147 = vmatprep.subr.bf16.mxu0 0
    %6148 = vmatpush1.bf16.msra.mxu0 0
    %6149 = vmatprep.subr.bf16.mxu0 0
    %6150 = vmatpush1.bf16.msra.mxu0 %v5652
    %6151 = vmatprep.subr.bf16.mxu0 0
    %6152 = vmatpush2.bf16.msra.mxu0 0
    %6153 = vmatprep.subr.bf16.mxu0 0
    %6154 = vmatpush2.bf16.msra.mxu0 0
    %6155 = vmatprep.subr.bf16.mxu0 0
    %6156 = vmatpush2.bf16.msra.mxu0 0
    %6157 = vmatprep.subr.bf16.mxu0 0
    %6158 = vmatpush2.bf16.msra.mxu0 0
    %6159 = vmatprep.subr.bf16.mxu0 0
    %6160 = vmatpush2.bf16.msra.mxu0 0
    %6161 = vmatprep.subr.bf16.mxu0 0
    %6162 = vmatpush2.bf16.msra.mxu0 0
    %6163 = vmatprep.subr.bf16.mxu0 0
    %6164 = vmatpush2.bf16.msra.mxu0 0
    %6165 = vmatprep.subr.bf16.mxu0 0
    %6166 = vmatpush2.bf16.msra.mxu0 0
    %6167 = vmatprep.mubr.bf16.mxu0 0
    %6168 = vmatmul.mubr.bf16.gmra.mxu0 %v6133
    %v6169 = vpop.f32.mrf.mxu0
    %v6170 = vadd.f32 0.0, %v6169
    %v6171 = vpop.f32.mrf.mxu0
    %v6172 = vpop.f32.mrf.mxu0
    %v6173 = vpop.f32.mrf.mxu0
    %6174 = vdwg.mxu0
    %v6176 = vsel %vm2209, %v6125, 0
    %6178 = vmatprep.subr.bf16.mxu0 0
    %6179 = vmatpush1.bf16.msra.mxu0 0
    %6180 = vmatprep.subr.bf16.mxu0 0
    %6181 = vmatpush1.bf16.msra.mxu0 0
    %6182 = vmatprep.subr.bf16.mxu0 0
    %6183 = vmatpush1.bf16.msra.mxu0 0
    %6184 = vmatprep.subr.bf16.mxu0 0
    %6185 = vmatpush1.bf16.msra.mxu0 0
    %6186 = vmatprep.subr.bf16.mxu0 0
    %6187 = vmatpush1.bf16.msra.mxu0 0
    %6188 = vmatprep.subr.bf16.mxu0 0
    %6189 = vmatpush1.bf16.msra.mxu0 0
    %6190 = vmatprep.subr.bf16.mxu0 0
    %6191 = vmatpush1.bf16.msra.mxu0 0
    %6192 = vmatprep.subr.bf16.mxu0 0
    %6193 = vmatpush1.bf16.msra.mxu0 %v5653
    %6194 = vmatprep.subr.bf16.mxu0 0
    %6195 = vmatpush2.bf16.msra.mxu0 0
    %6196 = vmatprep.subr.bf16.mxu0 0
    %6197 = vmatpush2.bf16.msra.mxu0 0
    %6198 = vmatprep.subr.bf16.mxu0 0
    %6199 = vmatpush2.bf16.msra.mxu0 0
    %6200 = vmatprep.subr.bf16.mxu0 0
    %6201 = vmatpush2.bf16.msra.mxu0 0
    %6202 = vmatprep.subr.bf16.mxu0 0
    %6203 = vmatpush2.bf16.msra.mxu0 0
    %6204 = vmatprep.subr.bf16.mxu0 0
    %6205 = vmatpush2.bf16.msra.mxu0 0
    %6206 = vmatprep.subr.bf16.mxu0 0
    %6207 = vmatpush2.bf16.msra.mxu0 0
    %6208 = vmatprep.subr.bf16.mxu0 0
    %6209 = vmatpush2.bf16.msra.mxu0 0
    %6210 = vmatprep.mubr.bf16.mxu0 0
    %6211 = vmatmul.mubr.bf16.gmra.mxu0 %v6176
    %v6212 = vpop.f32.mrf.mxu0
    %v6213 = vadd.f32 0.0, %v6212
    %v6214 = vpop.f32.mrf.mxu0
    %v6215 = vpop.f32.mrf.mxu0
    %v6216 = vpop.f32.mrf.mxu0
    %6217 = vdwg.mxu0
    %v6219 = vsel %vm2209, %v6126, 0
    %6221 = vmatprep.subr.bf16.mxu0 0
    %6222 = vmatpush1.bf16.msra.mxu0 0
    %6223 = vmatprep.subr.bf16.mxu0 0
    %6224 = vmatpush1.bf16.msra.mxu0 0
    %6225 = vmatprep.subr.bf16.mxu0 0
    %6226 = vmatpush1.bf16.msra.mxu0 0
    %6227 = vmatprep.subr.bf16.mxu0 0
    %6228 = vmatpush1.bf16.msra.mxu0 0
    %6229 = vmatprep.subr.bf16.mxu0 0
    %6230 = vmatpush1.bf16.msra.mxu0 0
    %6231 = vmatprep.subr.bf16.mxu0 0
    %6232 = vmatpush1.bf16.msra.mxu0 0
    %6233 = vmatprep.subr.bf16.mxu0 0
    %6234 = vmatpush1.bf16.msra.mxu0 0
    %6235 = vmatprep.subr.bf16.mxu0 0
    %6236 = vmatpush1.bf16.msra.mxu0 %v5654
    %6237 = vmatprep.subr.bf16.mxu0 0
    %6238 = vmatpush2.bf16.msra.mxu0 0
    %6239 = vmatprep.subr.bf16.mxu0 0
    %6240 = vmatpush2.bf16.msra.mxu0 0
    %6241 = vmatprep.subr.bf16.mxu0 0
    %6242 = vmatpush2.bf16.msra.mxu0 0
    %6243 = vmatprep.subr.bf16.mxu0 0
    %6244 = vmatpush2.bf16.msra.mxu0 0
    %6245 = vmatprep.subr.bf16.mxu0 0
    %6246 = vmatpush2.bf16.msra.mxu0 0
    %6247 = vmatprep.subr.bf16.mxu0 0
    %6248 = vmatpush2.bf16.msra.mxu0 0
    %6249 = vmatprep.subr.bf16.mxu0 0
    %6250 = vmatpush2.bf16.msra.mxu0 0
    %6251 = vmatprep.subr.bf16.mxu0 0
    %6252 = vmatpush2.bf16.msra.mxu0 0
    %6253 = vmatprep.mubr.bf16.mxu0 0
    %6254 = vmatmul.mubr.bf16.gmra.mxu0 %v6219
    %v6255 = vpop.f32.mrf.mxu0
    %v6256 = vadd.f32 0.0, %v6255
    %v6257 = vpop.f32.mrf.mxu0
    %v6258 = vpop.f32.mrf.mxu0
    %v6259 = vpop.f32.mrf.mxu0
    %6260 = vdwg.mxu0
    %v6262 = vsel %vm2209, %v6127, 0
    %6264 = vmatprep.subr.bf16.mxu0 0
    %6265 = vmatpush1.bf16.msra.mxu0 0
    %6266 = vmatprep.subr.bf16.mxu0 0
    %6267 = vmatpush1.bf16.msra.mxu0 0
    %6268 = vmatprep.subr.bf16.mxu0 0
    %6269 = vmatpush1.bf16.msra.mxu0 0
    %6270 = vmatprep.subr.bf16.mxu0 0
    %6271 = vmatpush1.bf16.msra.mxu0 0
    %6272 = vmatprep.subr.bf16.mxu0 0
    %6273 = vmatpush1.bf16.msra.mxu0 0
    %6274 = vmatprep.subr.bf16.mxu0 0
    %6275 = vmatpush1.bf16.msra.mxu0 0
    %6276 = vmatprep.subr.bf16.mxu0 0
    %6277 = vmatpush1.bf16.msra.mxu0 0
    %6278 = vmatprep.subr.bf16.mxu0 0
    %6279 = vmatpush1.bf16.msra.mxu0 %v5655
    %6280 = vmatprep.subr.bf16.mxu0 0
    %6281 = vmatpush2.bf16.msra.mxu0 0
    %6282 = vmatprep.subr.bf16.mxu0 0
    %6283 = vmatpush2.bf16.msra.mxu0 0
    %6284 = vmatprep.subr.bf16.mxu0 0
    %6285 = vmatpush2.bf16.msra.mxu0 0
    %6286 = vmatprep.subr.bf16.mxu0 0
    %6287 = vmatpush2.bf16.msra.mxu0 0
    %6288 = vmatprep.subr.bf16.mxu0 0
    %6289 = vmatpush2.bf16.msra.mxu0 0
    %6290 = vmatprep.subr.bf16.mxu0 0
    %6291 = vmatpush2.bf16.msra.mxu0 0
    %6292 = vmatprep.subr.bf16.mxu0 0
    %6293 = vmatpush2.bf16.msra.mxu0 0
    %6294 = vmatprep.subr.bf16.mxu0 0
    %6295 = vmatpush2.bf16.msra.mxu0 0
    %6296 = vmatprep.mubr.bf16.mxu0 0
    %6297 = vmatmul.mubr.bf16.gmra.mxu0 %v6262
    %v6298 = vpop.f32.mrf.mxu0
    %v6299 = vadd.f32 0.0, %v6298
    %v6300 = vpop.f32.mrf.mxu0
    %v6301 = vpop.f32.mrf.mxu0
    %v6302 = vpop.f32.mrf.mxu0
    %6303 = vdwg.mxu0
    %v6305 = vsel %vm2209, %v6128, 0
    %6307 = vmatprep.subr.bf16.mxu0 0
    %6308 = vmatpush1.bf16.msra.mxu0 0
    %6309 = vmatprep.subr.bf16.mxu0 0
    %6310 = vmatpush1.bf16.msra.mxu0 0
    %6311 = vmatprep.subr.bf16.mxu0 0
    %6312 = vmatpush1.bf16.msra.mxu0 0
    %6313 = vmatprep.subr.bf16.mxu0 0
    %6314 = vmatpush1.bf16.msra.mxu0 0
    %6315 = vmatprep.subr.bf16.mxu0 0
    %6316 = vmatpush1.bf16.msra.mxu0 0
    %6317 = vmatprep.subr.bf16.mxu0 0
    %6318 = vmatpush1.bf16.msra.mxu0 0
    %6319 = vmatprep.subr.bf16.mxu0 0
    %6320 = vmatpush1.bf16.msra.mxu0 0
    %6321 = vmatprep.subr.bf16.mxu0 0
    %6322 = vmatpush1.bf16.msra.mxu0 %v5656
    %6323 = vmatprep.subr.bf16.mxu0 0
    %6324 = vmatpush2.bf16.msra.mxu0 0
    %6325 = vmatprep.subr.bf16.mxu0 0
    %6326 = vmatpush2.bf16.msra.mxu0 0
    %6327 = vmatprep.subr.bf16.mxu0 0
    %6328 = vmatpush2.bf16.msra.mxu0 0
    %6329 = vmatprep.subr.bf16.mxu0 0
    %6330 = vmatpush2.bf16.msra.mxu0 0
    %6331 = vmatprep.subr.bf16.mxu0 0
    %6332 = vmatpush2.bf16.msra.mxu0 0
    %6333 = vmatprep.subr.bf16.mxu0 0
    %6334 = vmatpush2.bf16.msra.mxu0 0
    %6335 = vmatprep.subr.bf16.mxu0 0
    %6336 = vmatpush2.bf16.msra.mxu0 0
    %6337 = vmatprep.subr.bf16.mxu0 0
    %6338 = vmatpush2.bf16.msra.mxu0 0
    %6339 = vmatprep.mubr.bf16.mxu0 0
    %6340 = vmatmul.mubr.bf16.gmra.mxu0 %v6305
    %v6341 = vpop.f32.mrf.mxu0
    %v6342 = vadd.f32 0.0, %v6341
    %v6343 = vpop.f32.mrf.mxu0
    %v6344 = vpop.f32.mrf.mxu0
    %v6345 = vpop.f32.mrf.mxu0
    %6346 = vdwg.mxu0
    %v6348 = vsel %vm2209, %v6129, 0
    %6350 = vmatprep.subr.bf16.mxu0 0
    %6351 = vmatpush1.bf16.msra.mxu0 0
    %6352 = vmatprep.subr.bf16.mxu0 0
    %6353 = vmatpush1.bf16.msra.mxu0 0
    %6354 = vmatprep.subr.bf16.mxu0 0
    %6355 = vmatpush1.bf16.msra.mxu0 0
    %6356 = vmatprep.subr.bf16.mxu0 0
    %6357 = vmatpush1.bf16.msra.mxu0 0
    %6358 = vmatprep.subr.bf16.mxu0 0
    %6359 = vmatpush1.bf16.msra.mxu0 0
    %6360 = vmatprep.subr.bf16.mxu0 0
    %6361 = vmatpush1.bf16.msra.mxu0 0
    %6362 = vmatprep.subr.bf16.mxu0 0
    %6363 = vmatpush1.bf16.msra.mxu0 0
    %6364 = vmatprep.subr.bf16.mxu0 0
    %6365 = vmatpush1.bf16.msra.mxu0 %v5657
    %6366 = vmatprep.subr.bf16.mxu0 0
    %6367 = vmatpush2.bf16.msra.mxu0 0
    %6368 = vmatprep.subr.bf16.mxu0 0
    %6369 = vmatpush2.bf16.msra.mxu0 0
    %6370 = vmatprep.subr.bf16.mxu0 0
    %6371 = vmatpush2.bf16.msra.mxu0 0
    %6372 = vmatprep.subr.bf16.mxu0 0
    %6373 = vmatpush2.bf16.msra.mxu0 0
    %6374 = vmatprep.subr.bf16.mxu0 0
    %6375 = vmatpush2.bf16.msra.mxu0 0
    %6376 = vmatprep.subr.bf16.mxu0 0
    %6377 = vmatpush2.bf16.msra.mxu0 0
    %6378 = vmatprep.subr.bf16.mxu0 0
    %6379 = vmatpush2.bf16.msra.mxu0 0
    %6380 = vmatprep.subr.bf16.mxu0 0
    %6381 = vmatpush2.bf16.msra.mxu0 0
    %6382 = vmatprep.mubr.bf16.mxu0 0
    %6383 = vmatmul.mubr.bf16.gmra.mxu0 %v6348
    %v6384 = vpop.f32.mrf.mxu0
    %v6385 = vadd.f32 0.0, %v6384
    %v6386 = vpop.f32.mrf.mxu0
    %v6387 = vpop.f32.mrf.mxu0
    %v6388 = vpop.f32.mrf.mxu0
    %6389 = vdwg.mxu0
    %v6391 = vsel %vm2209, %v6130, 0
    %6393 = vmatprep.subr.bf16.mxu0 0
    %6394 = vmatpush1.bf16.msra.mxu0 0
    %6395 = vmatprep.subr.bf16.mxu0 0
    %6396 = vmatpush1.bf16.msra.mxu0 0
    %6397 = vmatprep.subr.bf16.mxu0 0
    %6398 = vmatpush1.bf16.msra.mxu0 0
    %6399 = vmatprep.subr.bf16.mxu0 0
    %6400 = vmatpush1.bf16.msra.mxu0 0
    %6401 = vmatprep.subr.bf16.mxu0 0
    %6402 = vmatpush1.bf16.msra.mxu0 0
    %6403 = vmatprep.subr.bf16.mxu0 0
    %6404 = vmatpush1.bf16.msra.mxu0 0
    %6405 = vmatprep.subr.bf16.mxu0 0
    %6406 = vmatpush1.bf16.msra.mxu0 0
    %6407 = vmatprep.subr.bf16.mxu0 0
    %6408 = vmatpush1.bf16.msra.mxu0 %v5658
    %6409 = vmatprep.subr.bf16.mxu0 0
    %6410 = vmatpush2.bf16.msra.mxu0 0
    %6411 = vmatprep.subr.bf16.mxu0 0
    %6412 = vmatpush2.bf16.msra.mxu0 0
    %6413 = vmatprep.subr.bf16.mxu0 0
    %6414 = vmatpush2.bf16.msra.mxu0 0
    %6415 = vmatprep.subr.bf16.mxu0 0
    %6416 = vmatpush2.bf16.msra.mxu0 0
    %6417 = vmatprep.subr.bf16.mxu0 0
    %6418 = vmatpush2.bf16.msra.mxu0 0
    %6419 = vmatprep.subr.bf16.mxu0 0
    %6420 = vmatpush2.bf16.msra.mxu0 0
    %6421 = vmatprep.subr.bf16.mxu0 0
    %6422 = vmatpush2.bf16.msra.mxu0 0
    %6423 = vmatprep.subr.bf16.mxu0 0
    %6424 = vmatpush2.bf16.msra.mxu0 0
    %6425 = vmatprep.mubr.bf16.mxu0 0
    %6426 = vmatmul.mubr.bf16.gmra.mxu0 %v6391
    %v6427 = vpop.f32.mrf.mxu0
    %v6428 = vadd.f32 0.0, %v6427
    %v6429 = vpop.f32.mrf.mxu0
    %v6430 = vpop.f32.mrf.mxu0
    %v6431 = vpop.f32.mrf.mxu0
    %6432 = vdwg.mxu0
    %v6434 = vsel %vm2209, %v6131, 0
    %6436 = vmatprep.subr.bf16.mxu0 0
    %6437 = vmatpush1.bf16.msra.mxu0 0
    %6438 = vmatprep.subr.bf16.mxu0 0
    %6439 = vmatpush1.bf16.msra.mxu0 0
    %6440 = vmatprep.subr.bf16.mxu0 0
    %6441 = vmatpush1.bf16.msra.mxu0 0
    %6442 = vmatprep.subr.bf16.mxu0 0
    %6443 = vmatpush1.bf16.msra.mxu0 0
    %6444 = vmatprep.subr.bf16.mxu0 0
    %6445 = vmatpush1.bf16.msra.mxu0 0
    %6446 = vmatprep.subr.bf16.mxu0 0
    %6447 = vmatpush1.bf16.msra.mxu0 0
    %6448 = vmatprep.subr.bf16.mxu0 0
    %6449 = vmatpush1.bf16.msra.mxu0 0
    %6450 = vmatprep.subr.bf16.mxu0 0
    %6451 = vmatpush1.bf16.msra.mxu0 %v5659
    %6452 = vmatprep.subr.bf16.mxu0 0
    %6453 = vmatpush2.bf16.msra.mxu0 0
    %6454 = vmatprep.subr.bf16.mxu0 0
    %6455 = vmatpush2.bf16.msra.mxu0 0
    %6456 = vmatprep.subr.bf16.mxu0 0
    %6457 = vmatpush2.bf16.msra.mxu0 0
    %6458 = vmatprep.subr.bf16.mxu0 0
    %6459 = vmatpush2.bf16.msra.mxu0 0
    %6460 = vmatprep.subr.bf16.mxu0 0
    %6461 = vmatpush2.bf16.msra.mxu0 0
    %6462 = vmatprep.subr.bf16.mxu0 0
    %6463 = vmatpush2.bf16.msra.mxu0 0
    %6464 = vmatprep.subr.bf16.mxu0 0
    %6465 = vmatpush2.bf16.msra.mxu0 0
    %6466 = vmatprep.subr.bf16.mxu0 0
    %6467 = vmatpush2.bf16.msra.mxu0 0
    %6468 = vmatprep.mubr.bf16.mxu0 0
    %6469 = vmatmul.mubr.bf16.gmra.mxu0 %v6434
    %v6470 = vpop.f32.mrf.mxu0
    %v6471 = vadd.f32 0.0, %v6470
    %v6472 = vpop.f32.mrf.mxu0
    %v6473 = vpop.f32.mrf.mxu0
    %v6474 = vpop.f32.mrf.mxu0
    %6475 = vdwg.mxu0
    %v6476 = vcombine.low %v6170, %v6256
    %v6477 = vcombine.high %v6170, %v6256
    %v6479 = vunpack.c.l.s4 1983009808
    %v6480 = vunpack.c.0.s8 %v6479
    %v6481 = vlaneseq
    %v6482 = vshrl.u32 %v6481, 7
    %v6483 = vsub.s32 %v6480, %v6482
    %v6484 = vrot.slane %v6476, %v6483
    %v6486 = vunpack.c.l.s4 1983009808
    %v6487 = vunpack.c.0.s8 %v6486
    %v6488 = vlaneseq
    %v6489 = vshrl.u32 %v6488, 7
    %v6490 = vsub.s32 %v6487, %v6489
    %v6491 = vrot.slane %v6477, %v6490
    %v6492 = vcombine.low %v6213, %v6299
    %v6493 = vcombine.high %v6213, %v6299
    %v6495 = vunpack.c.l.s4 1983009808
    %v6496 = vunpack.c.0.s8 %v6495
    %v6497 = vlaneseq
    %v6498 = vshrl.u32 %v6497, 7
    %v6499 = vsub.s32 %v6496, %v6498
    %v6500 = vrot.slane %v6492, %v6499
    %v6502 = vunpack.c.l.s4 1983009808
    %v6503 = vunpack.c.0.s8 %v6502
    %v6504 = vlaneseq
    %v6505 = vshrl.u32 %v6504, 7
    %v6506 = vsub.s32 %v6503, %v6505
    %v6507 = vrot.slane %v6493, %v6506
    %v6508 = vcombine.low %v6484, %v6500
    %v6509 = vcombine.high %v6484, %v6500
    %v6511 = vunpack.c.l.s4 1934713408
    %v6512 = vunpack.c.0.s8 %v6511
    %v6513 = vlaneseq
    %v6514 = vshrl.u32 %v6513, 7
    %v6515 = vsub.s32 %v6512, %v6514
    %v6516 = vrot.slane %v6508, %v6515
    %v6518 = vunpack.c.l.s4 1934713408
    %v6519 = vunpack.c.0.s8 %v6518
    %v6520 = vlaneseq
    %v6521 = vshrl.u32 %v6520, 7
    %v6522 = vsub.s32 %v6519, %v6521
    %v6523 = vrot.slane %v6509, %v6522
    %v6524 = vcombine.low %v6491, %v6507
    %v6525 = vcombine.high %v6491, %v6507
    %v6527 = vunpack.c.l.s4 1934713408
    %v6528 = vunpack.c.0.s8 %v6527
    %v6529 = vlaneseq
    %v6530 = vshrl.u32 %v6529, 7
    %v6531 = vsub.s32 %v6528, %v6530
    %v6532 = vrot.slane %v6524, %v6531
    %v6534 = vunpack.c.l.s4 1934713408
    %v6535 = vunpack.c.0.s8 %v6534
    %v6536 = vlaneseq
    %v6537 = vshrl.u32 %v6536, 7
    %v6538 = vsub.s32 %v6535, %v6537
    %v6539 = vrot.slane %v6525, %v6538
    %v6540 = vcombine.high %v6516, 0.0
    %v6541 = vcombine.high %v6523, 0.0
    %v6542 = vcombine.high %v6532, 0.0
    %v6543 = vcombine.high %v6539, 0.0
    %v6544 = vcombine.low %v6342, %v6428
    %v6545 = vcombine.high %v6342, %v6428
    %v6547 = vunpack.c.l.s4 1983009808
    %v6548 = vunpack.c.0.s8 %v6547
    %v6549 = vlaneseq
    %v6550 = vshrl.u32 %v6549, 7
    %v6551 = vsub.s32 %v6548, %v6550
    %v6552 = vrot.slane %v6544, %v6551
    %v6554 = vunpack.c.l.s4 1983009808
    %v6555 = vunpack.c.0.s8 %v6554
    %v6556 = vlaneseq
    %v6557 = vshrl.u32 %v6556, 7
    %v6558 = vsub.s32 %v6555, %v6557
    %v6559 = vrot.slane %v6545, %v6558
    %v6560 = vcombine.low %v6385, %v6471
    %v6561 = vcombine.high %v6385, %v6471
    %v6563 = vunpack.c.l.s4 1983009808
    %v6564 = vunpack.c.0.s8 %v6563
    %v6565 = vlaneseq
    %v6566 = vshrl.u32 %v6565, 7
    %v6567 = vsub.s32 %v6564, %v6566
    %v6568 = vrot.slane %v6560, %v6567
    %v6570 = vunpack.c.l.s4 1983009808
    %v6571 = vunpack.c.0.s8 %v6570
    %v6572 = vlaneseq
    %v6573 = vshrl.u32 %v6572, 7
    %v6574 = vsub.s32 %v6571, %v6573
    %v6575 = vrot.slane %v6561, %v6574
    %v6576 = vcombine.low %v6552, %v6568
    %v6577 = vcombine.high %v6552, %v6568
    %v6579 = vunpack.c.l.s4 1934713408
    %v6580 = vunpack.c.0.s8 %v6579
    %v6581 = vlaneseq
    %v6582 = vshrl.u32 %v6581, 7
    %v6583 = vsub.s32 %v6580, %v6582
    %v6584 = vrot.slane %v6576, %v6583
    %v6586 = vunpack.c.l.s4 1934713408
    %v6587 = vunpack.c.0.s8 %v6586
    %v6588 = vlaneseq
    %v6589 = vshrl.u32 %v6588, 7
    %v6590 = vsub.s32 %v6587, %v6589
    %v6591 = vrot.slane %v6577, %v6590
    %v6592 = vcombine.low %v6559, %v6575
    %v6593 = vcombine.high %v6559, %v6575
    %v6595 = vunpack.c.l.s4 1934713408
    %v6596 = vunpack.c.0.s8 %v6595
    %v6597 = vlaneseq
    %v6598 = vshrl.u32 %v6597, 7
    %v6599 = vsub.s32 %v6596, %v6598
    %v6600 = vrot.slane %v6592, %v6599
    %v6602 = vunpack.c.l.s4 1934713408
    %v6603 = vunpack.c.0.s8 %v6602
    %v6604 = vlaneseq
    %v6605 = vshrl.u32 %v6604, 7
    %v6606 = vsub.s32 %v6603, %v6605
    %v6607 = vrot.slane %v6593, %v6606
    %v6608 = vcombine.high %v6584, 0.0
    %v6609 = vcombine.high %v6591, 0.0
    %v6610 = vcombine.high %v6600, 0.0
    %v6611 = vcombine.high %v6607, 0.0
    %v6612 = vcombine.low %v6516, %v6540
    %v6614 = vunpack.c.l.s4 1983009808
    %v6615 = vunpack.c.0.s8 %v6614
    %v6616 = vlaneseq
    %v6617 = vshrl.u32 %v6616, 7
    %v6618 = vsub.s32 %v6615, %v6617
    %v6619 = vrot.slane %v6612, %v6618
    %v6620 = vcombine.low %v6584, %v6608
    %v6622 = vunpack.c.l.s4 1983009808
    %v6623 = vunpack.c.0.s8 %v6622
    %v6624 = vlaneseq
    %v6625 = vshrl.u32 %v6624, 7
    %v6626 = vsub.s32 %v6623, %v6625
    %v6627 = vrot.slane %v6620, %v6626
    %v6628 = vcombine.low %v6523, %v6541
    %v6630 = vunpack.c.l.s4 1983009808
    %v6631 = vunpack.c.0.s8 %v6630
    %v6632 = vlaneseq
    %v6633 = vshrl.u32 %v6632, 7
    %v6634 = vsub.s32 %v6631, %v6633
    %v6635 = vrot.slane %v6628, %v6634
    %v6636 = vcombine.low %v6591, %v6609
    %v6638 = vunpack.c.l.s4 1983009808
    %v6639 = vunpack.c.0.s8 %v6638
    %v6640 = vlaneseq
    %v6641 = vshrl.u32 %v6640, 7
    %v6642 = vsub.s32 %v6639, %v6641
    %v6643 = vrot.slane %v6636, %v6642
    %v6644 = vcombine.low %v6619, %v6627
    %v6645 = vcombine.high %v6619, %v6627
    %v6647 = vunpack.c.l.s4 1934713408
    %v6648 = vunpack.c.0.s8 %v6647
    %v6649 = vlaneseq
    %v6650 = vshrl.u32 %v6649, 7
    %v6651 = vsub.s32 %v6648, %v6650
    %v6652 = vrot.slane %v6644, %v6651
    %v6654 = vunpack.c.l.s4 1934713408
    %v6655 = vunpack.c.0.s8 %v6654
    %v6656 = vlaneseq
    %v6657 = vshrl.u32 %v6656, 7
    %v6658 = vsub.s32 %v6655, %v6657
    %v6659 = vrot.slane %v6645, %v6658
    %v6660 = vcombine.low %v6635, %v6643
    %v6661 = vcombine.high %v6635, %v6643
    %v6663 = vunpack.c.l.s4 1934713408
    %v6664 = vunpack.c.0.s8 %v6663
    %v6665 = vlaneseq
    %v6666 = vshrl.u32 %v6665, 7
    %v6667 = vsub.s32 %v6664, %v6666
    %v6668 = vrot.slane %v6660, %v6667
    %v6670 = vunpack.c.l.s4 1934713408
    %v6671 = vunpack.c.0.s8 %v6670
    %v6672 = vlaneseq
    %v6673 = vshrl.u32 %v6672, 7
    %v6674 = vsub.s32 %v6671, %v6673
    %v6675 = vrot.slane %v6661, %v6674
    %v6676 = vcombine.low %v6652, %v6668
    %v6677 = vcombine.high %v6652, %v6668
    %v6678 = vcombine.low %v6659, %v6675
    %v6679 = vcombine.high %v6659, %v6675
    %v6680 = vcombine.low %v6532, %v6542
    %v6682 = vunpack.c.l.s4 1983009808
    %v6683 = vunpack.c.0.s8 %v6682
    %v6684 = vlaneseq
    %v6685 = vshrl.u32 %v6684, 7
    %v6686 = vsub.s32 %v6683, %v6685
    %v6687 = vrot.slane %v6680, %v6686
    %v6688 = vcombine.low %v6600, %v6610
    %v6690 = vunpack.c.l.s4 1983009808
    %v6691 = vunpack.c.0.s8 %v6690
    %v6692 = vlaneseq
    %v6693 = vshrl.u32 %v6692, 7
    %v6694 = vsub.s32 %v6691, %v6693
    %v6695 = vrot.slane %v6688, %v6694
    %v6696 = vcombine.low %v6539, %v6543
    %v6698 = vunpack.c.l.s4 1983009808
    %v6699 = vunpack.c.0.s8 %v6698
    %v6700 = vlaneseq
    %v6701 = vshrl.u32 %v6700, 7
    %v6702 = vsub.s32 %v6699, %v6701
    %v6703 = vrot.slane %v6696, %v6702
    %v6704 = vcombine.low %v6607, %v6611
    %v6706 = vunpack.c.l.s4 1983009808
    %v6707 = vunpack.c.0.s8 %v6706
    %v6708 = vlaneseq
    %v6709 = vshrl.u32 %v6708, 7
    %v6710 = vsub.s32 %v6707, %v6709
    %v6711 = vrot.slane %v6704, %v6710
    %v6712 = vcombine.low %v6687, %v6695
    %v6713 = vcombine.high %v6687, %v6695
    %v6715 = vunpack.c.l.s4 1934713408
    %v6716 = vunpack.c.0.s8 %v6715
    %v6717 = vlaneseq
    %v6718 = vshrl.u32 %v6717, 7
    %v6719 = vsub.s32 %v6716, %v6718
    %v6720 = vrot.slane %v6712, %v6719
    %v6722 = vunpack.c.l.s4 1934713408
    %v6723 = vunpack.c.0.s8 %v6722
    %v6724 = vlaneseq
    %v6725 = vshrl.u32 %v6724, 7
    %v6726 = vsub.s32 %v6723, %v6725
    %v6727 = vrot.slane %v6713, %v6726
    %v6728 = vcombine.low %v6703, %v6711
    %v6729 = vcombine.high %v6703, %v6711
    %v6731 = vunpack.c.l.s4 1934713408
    %v6732 = vunpack.c.0.s8 %v6731
    %v6733 = vlaneseq
    %v6734 = vshrl.u32 %v6733, 7
    %v6735 = vsub.s32 %v6732, %v6734
    %v6736 = vrot.slane %v6728, %v6735
    %v6738 = vunpack.c.l.s4 1934713408
    %v6739 = vunpack.c.0.s8 %v6738
    %v6740 = vlaneseq
    %v6741 = vshrl.u32 %v6740, 7
    %v6742 = vsub.s32 %v6739, %v6741
    %v6743 = vrot.slane %v6729, %v6742
    %v6744 = vcombine.low %v6720, %v6736
    %v6745 = vcombine.high %v6720, %v6736
    %v6746 = vcombine.low %v6727, %v6743
    %v6747 = vcombine.high %v6727, %v6743
    %6750 = vrot.lane.b32.xlu0 %v6677, 8
    %v6751 = vpop.permute.xlu0 %6750
    %6752 = vrot.lane.b32.xlu0 %v6745, 8
    %v6753 = vpop.permute.xlu0 %6752
    %6758 = vrot.lane.b32.xlu0 %v6678, 16
    %v6759 = vpop.permute.xlu0 %6758
    %6760 = vrot.lane.b32.xlu0 %v6746, 16
    %v6761 = vpop.permute.xlu0 %6760
    %6766 = vrot.lane.b32.xlu0 %v6679, 24
    %v6767 = vpop.permute.xlu0 %6766
    %6768 = vrot.lane.b32.xlu0 %v6747, 24
    %v6769 = vpop.permute.xlu0 %6768
    %v6772 = vsel %vm1832, %v6676, %v6751
    %v6773 = vsel %vm1832, %v6744, %v6753
    %v6774 = vsel %vm2209, %v6772, %v6759
    %v6775 = vsel %vm2209, %v6773, %v6761
    %v6776 = vsel %vm2950, %v6774, %v6767
    %v6777 = vsel %vm2950, %v6775, %v6769
    %v6778 = vpack.c.bf16 %v6777, %v6776
    %v6779 = vlaneseq
    %v6780 = vshrl.u32 %v6779, 7
    %v6781 = vsub.s32 3, %v6780
    %v6782 = vrot.slane %v23, %v6781
    %v6787 = vunpack.c.l.b16 %v3977
    %v6788 = vunpack.c.l.b16 %v3978
    %v6789 = vunpack.c.l.b16 %v3979
    %v6790 = vunpack.c.l.b16 %v3980
    %v6791 = vpack.c.b16 %v6788, %v6787
    %v6792 = vpack.c.b16 %v6790, %v6789
    %v6796 = vsel %vm224, %v6778, 0
    %6798 = vmatprep.subr.bf16.mxu0 0
    %6799 = vmatpush1.bf16.msra.mxu0 0
    %6800 = vmatprep.subr.bf16.mxu0 0
    %6801 = vmatpush1.bf16.msra.mxu0 0
    %6802 = vmatprep.subr.bf16.mxu0 0
    %6803 = vmatpush1.bf16.msra.mxu0 0
    %6804 = vmatprep.subr.bf16.mxu0 0
    %6805 = vmatpush1.bf16.msra.mxu0 0
    %6806 = vmatprep.subr.bf16.mxu0 0
    %6807 = vmatpush1.bf16.msra.mxu0 0
    %6808 = vmatprep.subr.bf16.mxu0 0
    %6809 = vmatpush1.bf16.msra.mxu0 0
    %6810 = vmatprep.subr.bf16.mxu0 0
    %6811 = vmatpush1.bf16.msra.mxu0 %v6792
    %6812 = vmatprep.subr.bf16.mxu0 0
    %6813 = vmatpush1.bf16.msra.mxu0 %v6791
    %6814 = vmatprep.subr.bf16.mxu0 0
    %6815 = vmatpush2.bf16.msra.mxu0 0
    %6816 = vmatprep.subr.bf16.mxu0 0
    %6817 = vmatpush2.bf16.msra.mxu0 0
    %6818 = vmatprep.subr.bf16.mxu0 0
    %6819 = vmatpush2.bf16.msra.mxu0 0
    %6820 = vmatprep.subr.bf16.mxu0 0
    %6821 = vmatpush2.bf16.msra.mxu0 0
    %6822 = vmatprep.subr.bf16.mxu0 0
    %6823 = vmatpush2.bf16.msra.mxu0 0
    %6824 = vmatprep.subr.bf16.mxu0 0
    %6825 = vmatpush2.bf16.msra.mxu0 0
    %6826 = vmatprep.subr.bf16.mxu0 0
    %6827 = vmatpush2.bf16.msra.mxu0 0
    %6828 = vmatprep.subr.bf16.mxu0 0
    %6829 = vmatpush2.bf16.msra.mxu0 0
    %6830 = vmatprep.mubr.bf16.mxu0 0
    %6831 = vmatmul.mubr.bf16.gmra.mxu0 %v6796
    %v6832 = vpop.f32.mrf.mxu0
    %v6833 = vadd.f32 %v6782, %v6832
    %v6834 = vpop.f32.mrf.mxu0
    %v6835 = vpop.f32.mrf.mxu0
    %v6836 = vadd.f32 %v6782, %v6835
    %v6837 = vpop.f32.mrf.mxu0
    %6838 = vdwg.mxu0
    %v6841 = vcombine.high %v6833, %v6833
    %v6843 = vunpack.c.l.s4 1983009808
    %v6844 = vunpack.c.0.s8 %v6843
    %v6845 = vlaneseq
    %v6846 = vshrl.u32 %v6845, 7
    %v6847 = vsub.s32 %v6844, %v6846
    %v6848 = vrot.slane %v6833, %v6847
    %v6850 = vunpack.c.l.s4 1983009808
    %v6851 = vunpack.c.0.s8 %v6850
    %v6852 = vlaneseq
    %v6853 = vshrl.u32 %v6852, 7
    %v6854 = vsub.s32 %v6851, %v6853
    %v6855 = vrot.slane %v6841, %v6854
    %v6856 = vcombine.high %v6848, %v6848
    %v6857 = vcombine.high %v6855, %v6855
    %v6858 = vcombine.high %v6836, %v6836
    %v6860 = vunpack.c.l.s4 1983009808
    %v6861 = vunpack.c.0.s8 %v6860
    %v6862 = vlaneseq
    %v6863 = vshrl.u32 %v6862, 7
    %v6864 = vsub.s32 %v6861, %v6863
    %v6865 = vrot.slane %v6836, %v6864
    %v6867 = vunpack.c.l.s4 1983009808
    %v6868 = vunpack.c.0.s8 %v6867
    %v6869 = vlaneseq
    %v6870 = vshrl.u32 %v6869, 7
    %v6871 = vsub.s32 %v6868, %v6870
    %v6872 = vrot.slane %v6858, %v6871
    %v6873 = vcombine.high %v6865, %v6865
    %v6874 = vcombine.high %v6872, %v6872
    %v6883 = vadd.f32 %v3964, %v6848
    %v6884 = vadd.f32 %v3965, %v6856
    %v6885 = vadd.f32 %v3966, %v6855
    %v6886 = vadd.f32 %v3967, %v6857
    %v6887 = vadd.f32 %v3968, %v6865
    %v6888 = vadd.f32 %v3969, %v6873
    %v6889 = vadd.f32 %v3970, %v6872
    %v6890 = vadd.f32 %v3971, %v6874
    %v6899 = vcombine.low %v6883, %v6884
    %v6900 = vcombine.low %v6885, %v6886
    %v6902 = vunpack.c.l.s4 1983009808
    %v6903 = vunpack.c.0.s8 %v6902
    %v6904 = vlaneseq
    %v6905 = vshrl.u32 %v6904, 7
    %v6906 = vsub.s32 %v6903, %v6905
    %v6907 = vrot.slane %v6899, %v6906
    %v6909 = vunpack.c.l.s4 1983009808
    %v6910 = vunpack.c.0.s8 %v6909
    %v6911 = vlaneseq
    %v6912 = vshrl.u32 %v6911, 7
    %v6913 = vsub.s32 %v6910, %v6912
    %v6914 = vrot.slane %v6900, %v6913
    %v6915 = vcombine.low %v6907, %v6914
    %v6916 = vcombine.low %v6887, %v6888
    %v6917 = vcombine.low %v6889, %v6890
    %v6919 = vunpack.c.l.s4 1983009808
    %v6920 = vunpack.c.0.s8 %v6919
    %v6921 = vlaneseq
    %v6922 = vshrl.u32 %v6921, 7
    %v6923 = vsub.s32 %v6920, %v6922
    %v6924 = vrot.slane %v6916, %v6923
    %v6926 = vunpack.c.l.s4 1983009808
    %v6927 = vunpack.c.0.s8 %v6926
    %v6928 = vlaneseq
    %v6929 = vshrl.u32 %v6928, 7
    %v6930 = vsub.s32 %v6927, %v6929
    %v6931 = vrot.slane %v6917, %v6930
    %v6932 = vcombine.low %v6924, %v6931
    %v6935 = vsel %vm224, %v6915, 0.0
    %6936 = vadd.xlane.f32.xlu0 %v6935
    %v6937 = vpop.xlane.xlu0 %6936
    %v6938 = vsel %vm224, %v6932, 0.0
    %6939 = vadd.xlane.f32.xlu0 %v6938
    %v6940 = vpop.xlane.xlu0 %6939
    %v6941 = vmul.f32 %v6937, %v3116
    %v6942 = vmul.f32 %v6940, %v3116
    %v6943 = vmul.f32 %v6883, %v6883
    %v6944 = vmul.f32 %v6884, %v6884
    %v6945 = vmul.f32 %v6885, %v6885
    %v6946 = vmul.f32 %v6886, %v6886
    %v6947 = vmul.f32 %v6887, %v6887
    %v6948 = vmul.f32 %v6888, %v6888
    %v6949 = vmul.f32 %v6889, %v6889
    %v6950 = vmul.f32 %v6890, %v6890
    %v6959 = vcombine.low %v6943, %v6944
    %v6960 = vcombine.low %v6945, %v6946
    %v6962 = vunpack.c.l.s4 1983009808
    %v6963 = vunpack.c.0.s8 %v6962
    %v6964 = vlaneseq
    %v6965 = vshrl.u32 %v6964, 7
    %v6966 = vsub.s32 %v6963, %v6965
    %v6967 = vrot.slane %v6959, %v6966
    %v6969 = vunpack.c.l.s4 1983009808
    %v6970 = vunpack.c.0.s8 %v6969
    %v6971 = vlaneseq
    %v6972 = vshrl.u32 %v6971, 7
    %v6973 = vsub.s32 %v6970, %v6972
    %v6974 = vrot.slane %v6960, %v6973
    %v6975 = vcombine.low %v6967, %v6974
    %v6976 = vcombine.low %v6947, %v6948
    %v6977 = vcombine.low %v6949, %v6950
    %v6979 = vunpack.c.l.s4 1983009808
    %v6980 = vunpack.c.0.s8 %v6979
    %v6981 = vlaneseq
    %v6982 = vshrl.u32 %v6981, 7
    %v6983 = vsub.s32 %v6980, %v6982
    %v6984 = vrot.slane %v6976, %v6983
    %v6986 = vunpack.c.l.s4 1983009808
    %v6987 = vunpack.c.0.s8 %v6986
    %v6988 = vlaneseq
    %v6989 = vshrl.u32 %v6988, 7
    %v6990 = vsub.s32 %v6987, %v6989
    %v6991 = vrot.slane %v6977, %v6990
    %v6992 = vcombine.low %v6984, %v6991
    %v6995 = vsel %vm224, %v6975, 0.0
    %6996 = vadd.xlane.f32.xlu0 %v6995
    %v6997 = vpop.xlane.xlu0 %6996
    %v6998 = vsel %vm224, %v6992, 0.0
    %6999 = vadd.xlane.f32.xlu0 %v6998
    %v7000 = vpop.xlane.xlu0 %6999
    %v7001 = vmul.f32 %v6997, %v3116
    %v7002 = vmul.f32 %v7000, %v3116
    %v7003 = vmul.f32 %v6941, %v6941
    %v7004 = vmul.f32 %v6942, %v6942
    %v7005 = vsub.f32 %v7001, %v7003
    %v7006 = vsub.f32 %v7002, %v7004
    %v7010 = vunpack.c.l.s4 269488144
    %v7011 = vunpack.c.0.s8 %v7010
    %v7012 = vlaneseq
    %v7013 = vshrl.u32 %v7012, 7
    %v7014 = vsub.s32 %v7011, %v7013
    %v7015 = vrot.slane %v6941, %v7014
    %v7017 = vunpack.c.l.s4 842150450
    %v7018 = vunpack.c.0.s8 %v7017
    %v7019 = vlaneseq
    %v7020 = vshrl.u32 %v7019, 7
    %v7021 = vsub.s32 %v7018, %v7020
    %v7022 = vrot.slane %v6941, %v7021
    %v7024 = vunpack.c.l.s4 1414812756
    %v7025 = vunpack.c.0.s8 %v7024
    %v7026 = vlaneseq
    %v7027 = vshrl.u32 %v7026, 7
    %v7028 = vsub.s32 %v7025, %v7027
    %v7029 = vrot.slane %v6941, %v7028
    %v7031 = vunpack.c.l.s4 1987475062
    %v7032 = vunpack.c.0.s8 %v7031
    %v7033 = vlaneseq
    %v7034 = vshrl.u32 %v7033, 7
    %v7035 = vsub.s32 %v7032, %v7034
    %v7036 = vrot.slane %v6941, %v7035
    %v7038 = vunpack.c.l.s4 269488144
    %v7039 = vunpack.c.0.s8 %v7038
    %v7040 = vlaneseq
    %v7041 = vshrl.u32 %v7040, 7
    %v7042 = vsub.s32 %v7039, %v7041
    %v7043 = vrot.slane %v6942, %v7042
    %v7045 = vunpack.c.l.s4 842150450
    %v7046 = vunpack.c.0.s8 %v7045
    %v7047 = vlaneseq
    %v7048 = vshrl.u32 %v7047, 7
    %v7049 = vsub.s32 %v7046, %v7048
    %v7050 = vrot.slane %v6942, %v7049
    %v7052 = vunpack.c.l.s4 1414812756
    %v7053 = vunpack.c.0.s8 %v7052
    %v7054 = vlaneseq
    %v7055 = vshrl.u32 %v7054, 7
    %v7056 = vsub.s32 %v7053, %v7055
    %v7057 = vrot.slane %v6942, %v7056
    %v7059 = vunpack.c.l.s4 1987475062
    %v7060 = vunpack.c.0.s8 %v7059
    %v7061 = vlaneseq
    %v7062 = vshrl.u32 %v7061, 7
    %v7063 = vsub.s32 %v7060, %v7062
    %v7064 = vrot.slane %v6942, %v7063
    %v7073 = vsub.f32 %v6883, %v7015
    %v7074 = vsub.f32 %v6884, %v7022
    %v7075 = vsub.f32 %v6885, %v7029
    %v7076 = vsub.f32 %v6886, %v7036
    %v7077 = vsub.f32 %v6887, %v7043
    %v7078 = vsub.f32 %v6888, %v7050
    %v7079 = vsub.f32 %v6889, %v7057
    %v7080 = vsub.f32 %v6890, %v7064
    %v7081 = vadd.f32 %v7005, 1e-05
    %v7082 = vadd.f32 %v7006, 1e-05
    %v7083 = vrsqrt.pop %v7081
    %v7084 = vrsqrt.pop %v7082
    %v7088 = vunpack.c.l.s4 269488144
    %v7089 = vunpack.c.0.s8 %v7088
    %v7090 = vlaneseq
    %v7091 = vshrl.u32 %v7090, 7
    %v7092 = vsub.s32 %v7089, %v7091
    %v7093 = vrot.slane %v7083, %v7092
    %v7095 = vunpack.c.l.s4 842150450
    %v7096 = vunpack.c.0.s8 %v7095
    %v7097 = vlaneseq
    %v7098 = vshrl.u32 %v7097, 7
    %v7099 = vsub.s32 %v7096, %v7098
    %v7100 = vrot.slane %v7083, %v7099
    %v7102 = vunpack.c.l.s4 1414812756
    %v7103 = vunpack.c.0.s8 %v7102
    %v7104 = vlaneseq
    %v7105 = vshrl.u32 %v7104, 7
    %v7106 = vsub.s32 %v7103, %v7105
    %v7107 = vrot.slane %v7083, %v7106
    %v7109 = vunpack.c.l.s4 1987475062
    %v7110 = vunpack.c.0.s8 %v7109
    %v7111 = vlaneseq
    %v7112 = vshrl.u32 %v7111, 7
    %v7113 = vsub.s32 %v7110, %v7112
    %v7114 = vrot.slane %v7083, %v7113
    %v7116 = vunpack.c.l.s4 269488144
    %v7117 = vunpack.c.0.s8 %v7116
    %v7118 = vlaneseq
    %v7119 = vshrl.u32 %v7118, 7
    %v7120 = vsub.s32 %v7117, %v7119
    %v7121 = vrot.slane %v7084, %v7120
    %v7123 = vunpack.c.l.s4 842150450
    %v7124 = vunpack.c.0.s8 %v7123
    %v7125 = vlaneseq
    %v7126 = vshrl.u32 %v7125, 7
    %v7127 = vsub.s32 %v7124, %v7126
    %v7128 = vrot.slane %v7084, %v7127
    %v7130 = vunpack.c.l.s4 1414812756
    %v7131 = vunpack.c.0.s8 %v7130
    %v7132 = vlaneseq
    %v7133 = vshrl.u32 %v7132, 7
    %v7134 = vsub.s32 %v7131, %v7133
    %v7135 = vrot.slane %v7084, %v7134
    %v7137 = vunpack.c.l.s4 1987475062
    %v7138 = vunpack.c.0.s8 %v7137
    %v7139 = vlaneseq
    %v7140 = vshrl.u32 %v7139, 7
    %v7141 = vsub.s32 %v7138, %v7140
    %v7142 = vrot.slane %v7084, %v7141
    %v7151 = vmul.f32 %v7073, %v7093
    %v7152 = vmul.f32 %v7074, %v7100
    %v7153 = vmul.f32 %v7075, %v7107
    %v7154 = vmul.f32 %v7076, %v7114
    %v7155 = vmul.f32 %v7077, %v7121
    %v7156 = vmul.f32 %v7078, %v7128
    %v7157 = vmul.f32 %v7079, %v7135
    %v7158 = vmul.f32 %v7080, %v7142
    %v7159 = vlaneseq
    %v7160 = vshrl.u32 %v7159, 7
    %v7161 = vsub.s32 6, %v7160
    %v7162 = vrot.slane %v23, %v7161
    %v7164 = vcombine.high %v7162, %v7162
    %v7166 = vunpack.c.l.s4 1983009808
    %v7167 = vunpack.c.0.s8 %v7166
    %v7168 = vlaneseq
    %v7169 = vshrl.u32 %v7168, 7
    %v7170 = vsub.s32 %v7167, %v7169
    %v7171 = vrot.slane %v7162, %v7170
    %v7173 = vunpack.c.l.s4 1983009808
    %v7174 = vunpack.c.0.s8 %v7173
    %v7175 = vlaneseq
    %v7176 = vshrl.u32 %v7175, 7
    %v7177 = vsub.s32 %v7174, %v7176
    %v7178 = vrot.slane %v7164, %v7177
    %v7179 = vcombine.high %v7171, %v7171
    %v7180 = vcombine.high %v7178, %v7178
    %v7185 = vmul.f32 %v7151, %v7171
    %v7186 = vmul.f32 %v7152, %v7179
    %v7187 = vmul.f32 %v7153, %v7178
    %v7188 = vmul.f32 %v7154, %v7180
    %v7189 = vmul.f32 %v7155, %v7171
    %v7190 = vmul.f32 %v7156, %v7179
    %v7191 = vmul.f32 %v7157, %v7178
    %v7192 = vmul.f32 %v7158, %v7180
    %v7193 = vlaneseq
    %v7194 = vshrl.u32 %v7193, 7
    %v7195 = vsub.s32 7, %v7194
    %v7196 = vrot.slane %v23, %v7195
    %v7198 = vcombine.high %v7196, %v7196
    %v7200 = vunpack.c.l.s4 1983009808
    %v7201 = vunpack.c.0.s8 %v7200
    %v7202 = vlaneseq
    %v7203 = vshrl.u32 %v7202, 7
    %v7204 = vsub.s32 %v7201, %v7203
    %v7205 = vrot.slane %v7196, %v7204
    %v7207 = vunpack.c.l.s4 1983009808
    %v7208 = vunpack.c.0.s8 %v7207
    %v7209 = vlaneseq
    %v7210 = vshrl.u32 %v7209, 7
    %v7211 = vsub.s32 %v7208, %v7210
    %v7212 = vrot.slane %v7198, %v7211
    %v7213 = vcombine.high %v7205, %v7205
    %v7214 = vcombine.high %v7212, %v7212
    %v7219 = vadd.f32 %v7185, %v7205
    %v7220 = vadd.f32 %v7186, %v7213
    %v7221 = vadd.f32 %v7187, %v7212
    %v7222 = vadd.f32 %v7188, %v7214
    %v7223 = vadd.f32 %v7189, %v7205
    %v7224 = vadd.f32 %v7190, %v7213
    %v7225 = vadd.f32 %v7191, %v7212
    %v7226 = vadd.f32 %v7192, %v7214
    %v7235 = vcombine.low %v7219, %v7220
    %v7236 = vcombine.low %v7221, %v7222
    %v7238 = vunpack.c.l.s4 1983009808
    %v7239 = vunpack.c.0.s8 %v7238
    %v7240 = vlaneseq
    %v7241 = vshrl.u32 %v7240, 7
    %v7242 = vsub.s32 %v7239, %v7241
    %v7243 = vrot.slane %v7235, %v7242
    %v7245 = vunpack.c.l.s4 1983009808
    %v7246 = vunpack.c.0.s8 %v7245
    %v7247 = vlaneseq
    %v7248 = vshrl.u32 %v7247, 7
    %v7249 = vsub.s32 %v7246, %v7248
    %v7250 = vrot.slane %v7236, %v7249
    %v7251 = vcombine.low %v7243, %v7250
    %v7252 = vcombine.low %v7223, %v7224
    %v7253 = vcombine.low %v7225, %v7226
    %v7255 = vunpack.c.l.s4 1983009808
    %v7256 = vunpack.c.0.s8 %v7255
    %v7257 = vlaneseq
    %v7258 = vshrl.u32 %v7257, 7
    %v7259 = vsub.s32 %v7256, %v7258
    %v7260 = vrot.slane %v7252, %v7259
    %v7262 = vunpack.c.l.s4 1983009808
    %v7263 = vunpack.c.0.s8 %v7262
    %v7264 = vlaneseq
    %v7265 = vshrl.u32 %v7264, 7
    %v7266 = vsub.s32 %v7263, %v7265
    %v7267 = vrot.slane %v7253, %v7266
    %v7268 = vcombine.low %v7260, %v7267
    %v7271 = vpack.c.bf16 %v7268, %v7251
    %v7272 = vlaneseq
    %v7273 = vshrl.u32 %v7272, 7
    %v7274 = vsub.s32 4, %v7273
    %v7275 = vrot.slane %v23, %v7274
    %v7280 = vunpack.c.l.b16 %v3994
    %v7281 = vunpack.c.l.b16 %v3995
    %v7282 = vunpack.c.l.b16 %v3996
    %v7283 = vunpack.c.l.b16 %v3997
    %v7284 = vpack.c.b16 %v7281, %v7280
    %v7285 = vpack.c.b16 %v7283, %v7282
    %v7289 = vsel %vm224, %v7271, 0
    %7291 = vmatprep.subr.bf16.mxu0 0
    %7292 = vmatpush1.bf16.msra.mxu0 0
    %7293 = vmatprep.subr.bf16.mxu0 0
    %7294 = vmatpush1.bf16.msra.mxu0 0
    %7295 = vmatprep.subr.bf16.mxu0 0
    %7296 = vmatpush1.bf16.msra.mxu0 0
    %7297 = vmatprep.subr.bf16.mxu0 0
    %7298 = vmatpush1.bf16.msra.mxu0 0
    %7299 = vmatprep.subr.bf16.mxu0 0
    %7300 = vmatpush1.bf16.msra.mxu0 0
    %7301 = vmatprep.subr.bf16.mxu0 0
    %7302 = vmatpush1.bf16.msra.mxu0 0
    %7303 = vmatprep.subr.bf16.mxu0 0
    %7304 = vmatpush1.bf16.msra.mxu0 %v7285
    %7305 = vmatprep.subr.bf16.mxu0 0
    %7306 = vmatpush1.bf16.msra.mxu0 %v7284
    %7307 = vmatprep.subr.bf16.mxu0 0
    %7308 = vmatpush2.bf16.msra.mxu0 0
    %7309 = vmatprep.subr.bf16.mxu0 0
    %7310 = vmatpush2.bf16.msra.mxu0 0
    %7311 = vmatprep.subr.bf16.mxu0 0
    %7312 = vmatpush2.bf16.msra.mxu0 0
    %7313 = vmatprep.subr.bf16.mxu0 0
    %7314 = vmatpush2.bf16.msra.mxu0 0
    %7315 = vmatprep.subr.bf16.mxu0 0
    %7316 = vmatpush2.bf16.msra.mxu0 0
    %7317 = vmatprep.subr.bf16.mxu0 0
    %7318 = vmatpush2.bf16.msra.mxu0 0
    %7319 = vmatprep.subr.bf16.mxu0 0
    %7320 = vmatpush2.bf16.msra.mxu0 0
    %7321 = vmatprep.subr.bf16.mxu0 0
    %7322 = vmatpush2.bf16.msra.mxu0 0
    %7323 = vmatprep.mubr.bf16.mxu0 0
    %7324 = vmatmul.mubr.bf16.gmra.mxu0 %v7289
    %v7325 = vpop.f32.mrf.mxu0
    %v7326 = vadd.f32 %v7275, %v7325
    %v7327 = vpop.f32.mrf.mxu0
    %v7328 = vpop.f32.mrf.mxu0
    %v7329 = vadd.f32 %v7275, %v7328
    %v7330 = vpop.f32.mrf.mxu0
    %7331 = vdwg.mxu0
    %v7332 = vmax.f32 %v7326, 0.0
    %v7333 = vmax.f32 %v7329, 0.0
    %v7334 = vpack.c.bf16 %v7333, %v7332
    %v7335 = vlaneseq
    %v7336 = vshrl.u32 %v7335, 7
    %v7337 = vsub.s32 5, %v7336
    %v7338 = vrot.slane %v23, %v7337
    %v7347 = vunpack.c.l.b16 %v3981
    %v7348 = vunpack.c.l.b16 %v3982
    %v7349 = vunpack.c.l.b16 %v3983
    %v7350 = vunpack.c.l.b16 %v3984
    %v7351 = vunpack.c.l.b16 %v3985
    %v7352 = vunpack.c.l.b16 %v3986
    %v7353 = vunpack.c.l.b16 %v3987
    %v7354 = vunpack.c.l.b16 %v3988
    %v7355 = vpack.c.b16 %v7348, %v7347
    %v7356 = vpack.c.b16 %v7350, %v7349
    %v7357 = vpack.c.b16 %v7352, %v7351
    %v7358 = vpack.c.b16 %v7354, %v7353
    %v7364 = vsel %vm3539, %v7334, 0
    %7366 = vmatprep.subr.bf16.mxu0 0
    %7367 = vmatpush1.bf16.msra.mxu0 0
    %7368 = vmatprep.subr.bf16.mxu0 0
    %7369 = vmatpush1.bf16.msra.mxu0 0
    %7370 = vmatprep.subr.bf16.mxu0 0
    %7371 = vmatpush1.bf16.msra.mxu0 0
    %7372 = vmatprep.subr.bf16.mxu0 0
    %7373 = vmatpush1.bf16.msra.mxu0 0
    %7374 = vmatprep.subr.bf16.mxu0 0
    %7375 = vmatpush1.bf16.msra.mxu0 %v7358
    %7376 = vmatprep.subr.bf16.mxu0 0
    %7377 = vmatpush1.bf16.msra.mxu0 %v7357
    %7378 = vmatprep.subr.bf16.mxu0 0
    %7379 = vmatpush1.bf16.msra.mxu0 %v7356
    %7380 = vmatprep.subr.bf16.mxu0 0
    %7381 = vmatpush1.bf16.msra.mxu0 %v7355
    %7382 = vmatprep.subr.bf16.mxu0 0
    %7383 = vmatpush2.bf16.msra.mxu0 0
    %7384 = vmatprep.subr.bf16.mxu0 0
    %7385 = vmatpush2.bf16.msra.mxu0 0
    %7386 = vmatprep.subr.bf16.mxu0 0
    %7387 = vmatpush2.bf16.msra.mxu0 0
    %7388 = vmatprep.subr.bf16.mxu0 0
    %7389 = vmatpush2.bf16.msra.mxu0 0
    %7390 = vmatprep.subr.bf16.mxu0 0
    %7391 = vmatpush2.bf16.msra.mxu0 0
    %7392 = vmatprep.subr.bf16.mxu0 0
    %7393 = vmatpush2.bf16.msra.mxu0 0
    %7394 = vmatprep.subr.bf16.mxu0 0
    %7395 = vmatpush2.bf16.msra.mxu0 0
    %7396 = vmatprep.subr.bf16.mxu0 0
    %7397 = vmatpush2.bf16.msra.mxu0 0
    %7398 = vmatprep.mubr.bf16.mxu0 0
    %7399 = vmatmul.mubr.bf16.gmra.mxu0 %v7364
    %v7400 = vpop.f32.mrf.mxu0
    %v7401 = vadd.f32 %v7338, %v7400
    %v7402 = vpop.f32.mrf.mxu0
    %v7403 = vpop.f32.mrf.mxu0
    %v7404 = vadd.f32 %v7338, %v7403
    %v7405 = vpop.f32.mrf.mxu0
    %7406 = vdwg.mxu0
    %v7409 = vcombine.high %v7401, %v7401
    %v7411 = vunpack.c.l.s4 1983009808
    %v7412 = vunpack.c.0.s8 %v7411
    %v7413 = vlaneseq
    %v7414 = vshrl.u32 %v7413, 7
    %v7415 = vsub.s32 %v7412, %v7414
    %v7416 = vrot.slane %v7401, %v7415
    %v7418 = vunpack.c.l.s4 1983009808
    %v7419 = vunpack.c.0.s8 %v7418
    %v7420 = vlaneseq
    %v7421 = vshrl.u32 %v7420, 7
    %v7422 = vsub.s32 %v7419, %v7421
    %v7423 = vrot.slane %v7409, %v7422
    %v7424 = vcombine.high %v7416, %v7416
    %v7425 = vcombine.high %v7423, %v7423
    %v7426 = vcombine.high %v7404, %v7404
    %v7428 = vunpack.c.l.s4 1983009808
    %v7429 = vunpack.c.0.s8 %v7428
    %v7430 = vlaneseq
    %v7431 = vshrl.u32 %v7430, 7
    %v7432 = vsub.s32 %v7429, %v7431
    %v7433 = vrot.slane %v7404, %v7432
    %v7435 = vunpack.c.l.s4 1983009808
    %v7436 = vunpack.c.0.s8 %v7435
    %v7437 = vlaneseq
    %v7438 = vshrl.u32 %v7437, 7
    %v7439 = vsub.s32 %v7436, %v7438
    %v7440 = vrot.slane %v7426, %v7439
    %v7441 = vcombine.high %v7433, %v7433
    %v7442 = vcombine.high %v7440, %v7440
    %v7451 = vadd.f32 %v7219, %v7416
    %v7452 = vadd.f32 %v7220, %v7424
    %v7453 = vadd.f32 %v7221, %v7423
    %v7454 = vadd.f32 %v7222, %v7425
    %v7455 = vadd.f32 %v7223, %v7433
    %v7456 = vadd.f32 %v7224, %v7441
    %v7457 = vadd.f32 %v7225, %v7440
    %v7458 = vadd.f32 %v7226, %v7442
    %v7467 = vcombine.low %v7451, %v7452
    %v7468 = vcombine.low %v7453, %v7454
    %v7470 = vunpack.c.l.s4 1983009808
    %v7471 = vunpack.c.0.s8 %v7470
    %v7472 = vlaneseq
    %v7473 = vshrl.u32 %v7472, 7
    %v7474 = vsub.s32 %v7471, %v7473
    %v7475 = vrot.slane %v7467, %v7474
    %v7477 = vunpack.c.l.s4 1983009808
    %v7478 = vunpack.c.0.s8 %v7477
    %v7479 = vlaneseq
    %v7480 = vshrl.u32 %v7479, 7
    %v7481 = vsub.s32 %v7478, %v7480
    %v7482 = vrot.slane %v7468, %v7481
    %v7483 = vcombine.low %v7475, %v7482
    %v7484 = vcombine.low %v7455, %v7456
    %v7485 = vcombine.low %v7457, %v7458
    %v7487 = vunpack.c.l.s4 1983009808
    %v7488 = vunpack.c.0.s8 %v7487
    %v7489 = vlaneseq
    %v7490 = vshrl.u32 %v7489, 7
    %v7491 = vsub.s32 %v7488, %v7490
    %v7492 = vrot.slane %v7484, %v7491
    %v7494 = vunpack.c.l.s4 1983009808
    %v7495 = vunpack.c.0.s8 %v7494
    %v7496 = vlaneseq
    %v7497 = vshrl.u32 %v7496, 7
    %v7498 = vsub.s32 %v7495, %v7497
    %v7499 = vrot.slane %v7485, %v7498
    %v7500 = vcombine.low %v7492, %v7499
    %v7503 = vsel %vm224, %v7483, 0.0
    %7504 = vadd.xlane.f32.xlu0 %v7503
    %v7505 = vpop.xlane.xlu0 %7504
    %v7506 = vsel %vm224, %v7500, 0.0
    %7507 = vadd.xlane.f32.xlu0 %v7506
    %v7508 = vpop.xlane.xlu0 %7507
    %v7509 = vmul.f32 %v7505, %v3116
    %v7510 = vmul.f32 %v7508, %v3116
    %v7511 = vmul.f32 %v7451, %v7451
    %v7512 = vmul.f32 %v7452, %v7452
    %v7513 = vmul.f32 %v7453, %v7453
    %v7514 = vmul.f32 %v7454, %v7454
    %v7515 = vmul.f32 %v7455, %v7455
    %v7516 = vmul.f32 %v7456, %v7456
    %v7517 = vmul.f32 %v7457, %v7457
    %v7518 = vmul.f32 %v7458, %v7458
    %v7527 = vcombine.low %v7511, %v7512
    %v7528 = vcombine.low %v7513, %v7514
    %v7530 = vunpack.c.l.s4 1983009808
    %v7531 = vunpack.c.0.s8 %v7530
    %v7532 = vlaneseq
    %v7533 = vshrl.u32 %v7532, 7
    %v7534 = vsub.s32 %v7531, %v7533
    %v7535 = vrot.slane %v7527, %v7534
    %v7537 = vunpack.c.l.s4 1983009808
    %v7538 = vunpack.c.0.s8 %v7537
    %v7539 = vlaneseq
    %v7540 = vshrl.u32 %v7539, 7
    %v7541 = vsub.s32 %v7538, %v7540
    %v7542 = vrot.slane %v7528, %v7541
    %v7543 = vcombine.low %v7535, %v7542
    %v7544 = vcombine.low %v7515, %v7516
    %v7545 = vcombine.low %v7517, %v7518
    %v7547 = vunpack.c.l.s4 1983009808
    %v7548 = vunpack.c.0.s8 %v7547
    %v7549 = vlaneseq
    %v7550 = vshrl.u32 %v7549, 7
    %v7551 = vsub.s32 %v7548, %v7550
    %v7552 = vrot.slane %v7544, %v7551
    %v7554 = vunpack.c.l.s4 1983009808
    %v7555 = vunpack.c.0.s8 %v7554
    %v7556 = vlaneseq
    %v7557 = vshrl.u32 %v7556, 7
    %v7558 = vsub.s32 %v7555, %v7557
    %v7559 = vrot.slane %v7545, %v7558
    %v7560 = vcombine.low %v7552, %v7559
    %v7563 = vsel %vm224, %v7543, 0.0
    %7564 = vadd.xlane.f32.xlu0 %v7563
    %v7565 = vpop.xlane.xlu0 %7564
    %v7566 = vsel %vm224, %v7560, 0.0
    %7567 = vadd.xlane.f32.xlu0 %v7566
    %v7568 = vpop.xlane.xlu0 %7567
    %v7569 = vmul.f32 %v7565, %v3116
    %v7570 = vmul.f32 %v7568, %v3116
    %v7571 = vmul.f32 %v7509, %v7509
    %v7572 = vmul.f32 %v7510, %v7510
    %v7573 = vsub.f32 %v7569, %v7571
    %v7574 = vsub.f32 %v7570, %v7572
    %v7578 = vunpack.c.l.s4 269488144
    %v7579 = vunpack.c.0.s8 %v7578
    %v7580 = vlaneseq
    %v7581 = vshrl.u32 %v7580, 7
    %v7582 = vsub.s32 %v7579, %v7581
    %v7583 = vrot.slane %v7509, %v7582
    %v7585 = vunpack.c.l.s4 842150450
    %v7586 = vunpack.c.0.s8 %v7585
    %v7587 = vlaneseq
    %v7588 = vshrl.u32 %v7587, 7
    %v7589 = vsub.s32 %v7586, %v7588
    %v7590 = vrot.slane %v7509, %v7589
    %v7592 = vunpack.c.l.s4 1414812756
    %v7593 = vunpack.c.0.s8 %v7592
    %v7594 = vlaneseq
    %v7595 = vshrl.u32 %v7594, 7
    %v7596 = vsub.s32 %v7593, %v7595
    %v7597 = vrot.slane %v7509, %v7596
    %v7599 = vunpack.c.l.s4 1987475062
    %v7600 = vunpack.c.0.s8 %v7599
    %v7601 = vlaneseq
    %v7602 = vshrl.u32 %v7601, 7
    %v7603 = vsub.s32 %v7600, %v7602
    %v7604 = vrot.slane %v7509, %v7603
    %v7606 = vunpack.c.l.s4 269488144
    %v7607 = vunpack.c.0.s8 %v7606
    %v7608 = vlaneseq
    %v7609 = vshrl.u32 %v7608, 7
    %v7610 = vsub.s32 %v7607, %v7609
    %v7611 = vrot.slane %v7510, %v7610
    %v7613 = vunpack.c.l.s4 842150450
    %v7614 = vunpack.c.0.s8 %v7613
    %v7615 = vlaneseq
    %v7616 = vshrl.u32 %v7615, 7
    %v7617 = vsub.s32 %v7614, %v7616
    %v7618 = vrot.slane %v7510, %v7617
    %v7620 = vunpack.c.l.s4 1414812756
    %v7621 = vunpack.c.0.s8 %v7620
    %v7622 = vlaneseq
    %v7623 = vshrl.u32 %v7622, 7
    %v7624 = vsub.s32 %v7621, %v7623
    %v7625 = vrot.slane %v7510, %v7624
    %v7627 = vunpack.c.l.s4 1987475062
    %v7628 = vunpack.c.0.s8 %v7627
    %v7629 = vlaneseq
    %v7630 = vshrl.u32 %v7629, 7
    %v7631 = vsub.s32 %v7628, %v7630
    %v7632 = vrot.slane %v7510, %v7631
    %v7641 = vsub.f32 %v7451, %v7583
    %v7642 = vsub.f32 %v7452, %v7590
    %v7643 = vsub.f32 %v7453, %v7597
    %v7644 = vsub.f32 %v7454, %v7604
    %v7645 = vsub.f32 %v7455, %v7611
    %v7646 = vsub.f32 %v7456, %v7618
    %v7647 = vsub.f32 %v7457, %v7625
    %v7648 = vsub.f32 %v7458, %v7632
    %v7649 = vadd.f32 %v7573, 1e-05
    %v7650 = vadd.f32 %v7574, 1e-05
    %v7651 = vrsqrt.pop %v7649
    %v7652 = vrsqrt.pop %v7650
    %v7656 = vunpack.c.l.s4 269488144
    %v7657 = vunpack.c.0.s8 %v7656
    %v7658 = vlaneseq
    %v7659 = vshrl.u32 %v7658, 7
    %v7660 = vsub.s32 %v7657, %v7659
    %v7661 = vrot.slane %v7651, %v7660
    %v7663 = vunpack.c.l.s4 842150450
    %v7664 = vunpack.c.0.s8 %v7663
    %v7665 = vlaneseq
    %v7666 = vshrl.u32 %v7665, 7
    %v7667 = vsub.s32 %v7664, %v7666
    %v7668 = vrot.slane %v7651, %v7667
    %v7670 = vunpack.c.l.s4 1414812756
    %v7671 = vunpack.c.0.s8 %v7670
    %v7672 = vlaneseq
    %v7673 = vshrl.u32 %v7672, 7
    %v7674 = vsub.s32 %v7671, %v7673
    %v7675 = vrot.slane %v7651, %v7674
    %v7677 = vunpack.c.l.s4 1987475062
    %v7678 = vunpack.c.0.s8 %v7677
    %v7679 = vlaneseq
    %v7680 = vshrl.u32 %v7679, 7
    %v7681 = vsub.s32 %v7678, %v7680
    %v7682 = vrot.slane %v7651, %v7681
    %v7684 = vunpack.c.l.s4 269488144
    %v7685 = vunpack.c.0.s8 %v7684
    %v7686 = vlaneseq
    %v7687 = vshrl.u32 %v7686, 7
    %v7688 = vsub.s32 %v7685, %v7687
    %v7689 = vrot.slane %v7652, %v7688
    %v7691 = vunpack.c.l.s4 842150450
    %v7692 = vunpack.c.0.s8 %v7691
    %v7693 = vlaneseq
    %v7694 = vshrl.u32 %v7693, 7
    %v7695 = vsub.s32 %v7692, %v7694
    %v7696 = vrot.slane %v7652, %v7695
    %v7698 = vunpack.c.l.s4 1414812756
    %v7699 = vunpack.c.0.s8 %v7698
    %v7700 = vlaneseq
    %v7701 = vshrl.u32 %v7700, 7
    %v7702 = vsub.s32 %v7699, %v7701
    %v7703 = vrot.slane %v7652, %v7702
    %v7705 = vunpack.c.l.s4 1987475062
    %v7706 = vunpack.c.0.s8 %v7705
    %v7707 = vlaneseq
    %v7708 = vshrl.u32 %v7707, 7
    %v7709 = vsub.s32 %v7706, %v7708
    %v7710 = vrot.slane %v7652, %v7709
    %v7719 = vmul.f32 %v7641, %v7661
    %v7720 = vmul.f32 %v7642, %v7668
    %v7721 = vmul.f32 %v7643, %v7675
    %v7722 = vmul.f32 %v7644, %v7682
    %v7723 = vmul.f32 %v7645, %v7689
    %v7724 = vmul.f32 %v7646, %v7696
    %v7725 = vmul.f32 %v7647, %v7703
    %v7726 = vmul.f32 %v7648, %v7710
    %v7727 = vlaneseq
    %v7728 = vshrl.u32 %v7727, 7
    %v7729 = vsub.s32 0, %v7728
    %v7730 = vrot.slane %v24, %v7729
    %v7732 = vcombine.high %v7730, %v7730
    %v7734 = vunpack.c.l.s4 1983009808
    %v7735 = vunpack.c.0.s8 %v7734
    %v7736 = vlaneseq
    %v7737 = vshrl.u32 %v7736, 7
    %v7738 = vsub.s32 %v7735, %v7737
    %v7739 = vrot.slane %v7730, %v7738
    %v7741 = vunpack.c.l.s4 1983009808
    %v7742 = vunpack.c.0.s8 %v7741
    %v7743 = vlaneseq
    %v7744 = vshrl.u32 %v7743, 7
    %v7745 = vsub.s32 %v7742, %v7744
    %v7746 = vrot.slane %v7732, %v7745
    %v7747 = vcombine.high %v7739, %v7739
    %v7748 = vcombine.high %v7746, %v7746
    %v7753 = vmul.f32 %v7719, %v7739
    %v7754 = vmul.f32 %v7720, %v7747
    %v7755 = vmul.f32 %v7721, %v7746
    %v7756 = vmul.f32 %v7722, %v7748
    %v7757 = vmul.f32 %v7723, %v7739
    %v7758 = vmul.f32 %v7724, %v7747
    %v7759 = vmul.f32 %v7725, %v7746
    %v7760 = vmul.f32 %v7726, %v7748
    %v7761 = vlaneseq
    %v7762 = vshrl.u32 %v7761, 7
    %v7763 = vsub.s32 1, %v7762
    %v7764 = vrot.slane %v24, %v7763
    %v7766 = vcombine.high %v7764, %v7764
    %v7768 = vunpack.c.l.s4 1983009808
    %v7769 = vunpack.c.0.s8 %v7768
    %v7770 = vlaneseq
    %v7771 = vshrl.u32 %v7770, 7
    %v7772 = vsub.s32 %v7769, %v7771
    %v7773 = vrot.slane %v7764, %v7772
    %v7775 = vunpack.c.l.s4 1983009808
    %v7776 = vunpack.c.0.s8 %v7775
    %v7777 = vlaneseq
    %v7778 = vshrl.u32 %v7777, 7
    %v7779 = vsub.s32 %v7776, %v7778
    %v7780 = vrot.slane %v7766, %v7779
    %v7781 = vcombine.high %v7773, %v7773
    %v7782 = vcombine.high %v7780, %v7780
    %v7787 = vadd.f32 %v7753, %v7773
    %v7788 = vadd.f32 %v7754, %v7781
    %v7789 = vadd.f32 %v7755, %v7780
    %v7790 = vadd.f32 %v7756, %v7782
    %v7791 = vadd.f32 %v7757, %v7773
    %v7792 = vadd.f32 %v7758, %v7781
    %v7793 = vadd.f32 %v7759, %v7780
    %v7794 = vadd.f32 %v7760, %v7782
    %v7803 = vcombine.low %v7787, %v7788
    %v7804 = vcombine.low %v7789, %v7790
    %v7806 = vunpack.c.l.s4 1983009808
    %v7807 = vunpack.c.0.s8 %v7806
    %v7808 = vlaneseq
    %v7809 = vshrl.u32 %v7808, 7
    %v7810 = vsub.s32 %v7807, %v7809
    %v7811 = vrot.slane %v7803, %v7810
    %v7813 = vunpack.c.l.s4 1983009808
    %v7814 = vunpack.c.0.s8 %v7813
    %v7815 = vlaneseq
    %v7816 = vshrl.u32 %v7815, 7
    %v7817 = vsub.s32 %v7814, %v7816
    %v7818 = vrot.slane %v7804, %v7817
    %v7819 = vcombine.low %v7811, %v7818
    %v7820 = vcombine.low %v7791, %v7792
    %v7821 = vcombine.low %v7793, %v7794
    %v7823 = vunpack.c.l.s4 1983009808
    %v7824 = vunpack.c.0.s8 %v7823
    %v7825 = vlaneseq
    %v7826 = vshrl.u32 %v7825, 7
    %v7827 = vsub.s32 %v7824, %v7826
    %v7828 = vrot.slane %v7820, %v7827
    %v7830 = vunpack.c.l.s4 1983009808
    %v7831 = vunpack.c.0.s8 %v7830
    %v7832 = vlaneseq
    %v7833 = vshrl.u32 %v7832, 7
    %v7834 = vsub.s32 %v7831, %v7833
    %v7835 = vrot.slane %v7821, %v7834
    %v7836 = vcombine.low %v7828, %v7835
    %v7839 = vsel %vm224, %v7819, 0.0
    %7840 = vadd.xlane.f32.xlu0 %v7839
    %v7841 = vpop.xlane.xlu0 %7840
    %v7842 = vsel %vm224, %v7836, 0.0
    %7843 = vadd.xlane.f32.xlu0 %v7842
    %v7844 = vpop.xlane.xlu0 %7843
    %v7845 = vmul.f32 %v7841, %v3116
    %v7846 = vmul.f32 %v7844, %v3116
    %v7847 = vmul.f32 %v7787, %v7787
    %v7848 = vmul.f32 %v7788, %v7788
    %v7849 = vmul.f32 %v7789, %v7789
    %v7850 = vmul.f32 %v7790, %v7790
    %v7851 = vmul.f32 %v7791, %v7791
    %v7852 = vmul.f32 %v7792, %v7792
    %v7853 = vmul.f32 %v7793, %v7793
    %v7854 = vmul.f32 %v7794, %v7794
    %v7863 = vcombine.low %v7847, %v7848
    %v7864 = vcombine.low %v7849, %v7850
    %v7866 = vunpack.c.l.s4 1983009808
    %v7867 = vunpack.c.0.s8 %v7866
    %v7868 = vlaneseq
    %v7869 = vshrl.u32 %v7868, 7
    %v7870 = vsub.s32 %v7867, %v7869
    %v7871 = vrot.slane %v7863, %v7870
    %v7873 = vunpack.c.l.s4 1983009808
    %v7874 = vunpack.c.0.s8 %v7873
    %v7875 = vlaneseq
    %v7876 = vshrl.u32 %v7875, 7
    %v7877 = vsub.s32 %v7874, %v7876
    %v7878 = vrot.slane %v7864, %v7877
    %v7879 = vcombine.low %v7871, %v7878
    %v7880 = vcombine.low %v7851, %v7852
    %v7881 = vcombine.low %v7853, %v7854
    %v7883 = vunpack.c.l.s4 1983009808
    %v7884 = vunpack.c.0.s8 %v7883
    %v7885 = vlaneseq
    %v7886 = vshrl.u32 %v7885, 7
    %v7887 = vsub.s32 %v7884, %v7886
    %v7888 = vrot.slane %v7880, %v7887
    %v7890 = vunpack.c.l.s4 1983009808
    %v7891 = vunpack.c.0.s8 %v7890
    %v7892 = vlaneseq
    %v7893 = vshrl.u32 %v7892, 7
    %v7894 = vsub.s32 %v7891, %v7893
    %v7895 = vrot.slane %v7881, %v7894
    %v7896 = vcombine.low %v7888, %v7895
    %v7899 = vsel %vm224, %v7879, 0.0
    %7900 = vadd.xlane.f32.xlu0 %v7899
    %v7901 = vpop.xlane.xlu0 %7900
    %v7902 = vsel %vm224, %v7896, 0.0
    %7903 = vadd.xlane.f32.xlu0 %v7902
    %v7904 = vpop.xlane.xlu0 %7903
    %v7905 = vmul.f32 %v7901, %v3116
    %v7906 = vmul.f32 %v7904, %v3116
    %v7907 = vmul.f32 %v7845, %v7845
    %v7908 = vmul.f32 %v7846, %v7846
    %v7909 = vsub.f32 %v7905, %v7907
    %v7910 = vsub.f32 %v7906, %v7908
    %v7914 = vunpack.c.l.s4 269488144
    %v7915 = vunpack.c.0.s8 %v7914
    %v7916 = vlaneseq
    %v7917 = vshrl.u32 %v7916, 7
    %v7918 = vsub.s32 %v7915, %v7917
    %v7919 = vrot.slane %v7845, %v7918
    %v7921 = vunpack.c.l.s4 842150450
    %v7922 = vunpack.c.0.s8 %v7921
    %v7923 = vlaneseq
    %v7924 = vshrl.u32 %v7923, 7
    %v7925 = vsub.s32 %v7922, %v7924
    %v7926 = vrot.slane %v7845, %v7925
    %v7928 = vunpack.c.l.s4 1414812756
    %v7929 = vunpack.c.0.s8 %v7928
    %v7930 = vlaneseq
    %v7931 = vshrl.u32 %v7930, 7
    %v7932 = vsub.s32 %v7929, %v7931
    %v7933 = vrot.slane %v7845, %v7932
    %v7935 = vunpack.c.l.s4 1987475062
    %v7936 = vunpack.c.0.s8 %v7935
    %v7937 = vlaneseq
    %v7938 = vshrl.u32 %v7937, 7
    %v7939 = vsub.s32 %v7936, %v7938
    %v7940 = vrot.slane %v7845, %v7939
    %v7942 = vunpack.c.l.s4 269488144
    %v7943 = vunpack.c.0.s8 %v7942
    %v7944 = vlaneseq
    %v7945 = vshrl.u32 %v7944, 7
    %v7946 = vsub.s32 %v7943, %v7945
    %v7947 = vrot.slane %v7846, %v7946
    %v7949 = vunpack.c.l.s4 842150450
    %v7950 = vunpack.c.0.s8 %v7949
    %v7951 = vlaneseq
    %v7952 = vshrl.u32 %v7951, 7
    %v7953 = vsub.s32 %v7950, %v7952
    %v7954 = vrot.slane %v7846, %v7953
    %v7956 = vunpack.c.l.s4 1414812756
    %v7957 = vunpack.c.0.s8 %v7956
    %v7958 = vlaneseq
    %v7959 = vshrl.u32 %v7958, 7
    %v7960 = vsub.s32 %v7957, %v7959
    %v7961 = vrot.slane %v7846, %v7960
    %v7963 = vunpack.c.l.s4 1987475062
    %v7964 = vunpack.c.0.s8 %v7963
    %v7965 = vlaneseq
    %v7966 = vshrl.u32 %v7965, 7
    %v7967 = vsub.s32 %v7964, %v7966
    %v7968 = vrot.slane %v7846, %v7967
    %v7977 = vsub.f32 %v7787, %v7919
    %v7978 = vsub.f32 %v7788, %v7926
    %v7979 = vsub.f32 %v7789, %v7933
    %v7980 = vsub.f32 %v7790, %v7940
    %v7981 = vsub.f32 %v7791, %v7947
    %v7982 = vsub.f32 %v7792, %v7954
    %v7983 = vsub.f32 %v7793, %v7961
    %v7984 = vsub.f32 %v7794, %v7968
    %v7985 = vadd.f32 %v7909, 1e-05
    %v7986 = vadd.f32 %v7910, 1e-05
    %v7987 = vrsqrt.pop %v7985
    %v7988 = vrsqrt.pop %v7986
    %v7992 = vunpack.c.l.s4 269488144
    %v7993 = vunpack.c.0.s8 %v7992
    %v7994 = vlaneseq
    %v7995 = vshrl.u32 %v7994, 7
    %v7996 = vsub.s32 %v7993, %v7995
    %v7997 = vrot.slane %v7987, %v7996
    %v7999 = vunpack.c.l.s4 842150450
    %v8000 = vunpack.c.0.s8 %v7999
    %v8001 = vlaneseq
    %v8002 = vshrl.u32 %v8001, 7
    %v8003 = vsub.s32 %v8000, %v8002
    %v8004 = vrot.slane %v7987, %v8003
    %v8006 = vunpack.c.l.s4 1414812756
    %v8007 = vunpack.c.0.s8 %v8006
    %v8008 = vlaneseq
    %v8009 = vshrl.u32 %v8008, 7
    %v8010 = vsub.s32 %v8007, %v8009
    %v8011 = vrot.slane %v7987, %v8010
    %v8013 = vunpack.c.l.s4 1987475062
    %v8014 = vunpack.c.0.s8 %v8013
    %v8015 = vlaneseq
    %v8016 = vshrl.u32 %v8015, 7
    %v8017 = vsub.s32 %v8014, %v8016
    %v8018 = vrot.slane %v7987, %v8017
    %v8020 = vunpack.c.l.s4 269488144
    %v8021 = vunpack.c.0.s8 %v8020
    %v8022 = vlaneseq
    %v8023 = vshrl.u32 %v8022, 7
    %v8024 = vsub.s32 %v8021, %v8023
    %v8025 = vrot.slane %v7988, %v8024
    %v8027 = vunpack.c.l.s4 842150450
    %v8028 = vunpack.c.0.s8 %v8027
    %v8029 = vlaneseq
    %v8030 = vshrl.u32 %v8029, 7
    %v8031 = vsub.s32 %v8028, %v8030
    %v8032 = vrot.slane %v7988, %v8031
    %v8034 = vunpack.c.l.s4 1414812756
    %v8035 = vunpack.c.0.s8 %v8034
    %v8036 = vlaneseq
    %v8037 = vshrl.u32 %v8036, 7
    %v8038 = vsub.s32 %v8035, %v8037
    %v8039 = vrot.slane %v7988, %v8038
    %v8041 = vunpack.c.l.s4 1987475062
    %v8042 = vunpack.c.0.s8 %v8041
    %v8043 = vlaneseq
    %v8044 = vshrl.u32 %v8043, 7
    %v8045 = vsub.s32 %v8042, %v8044
    %v8046 = vrot.slane %v7988, %v8045
    %v8055 = vmul.f32 %v7977, %v7997
    %v8056 = vmul.f32 %v7978, %v8004
    %v8057 = vmul.f32 %v7979, %v8011
    %v8058 = vmul.f32 %v7980, %v8018
    %v8059 = vmul.f32 %v7981, %v8025
    %v8060 = vmul.f32 %v7982, %v8032
    %v8061 = vmul.f32 %v7983, %v8039
    %v8062 = vmul.f32 %v7984, %v8046
    %v8063 = vlaneseq
    %v8064 = vshrl.u32 %v8063, 7
    %v8065 = vsub.s32 2, %v8064
    %v8066 = vrot.slane %v24, %v8065
    %v8068 = vcombine.high %v8066, %v8066
    %v8070 = vunpack.c.l.s4 1983009808
    %v8071 = vunpack.c.0.s8 %v8070
    %v8072 = vlaneseq
    %v8073 = vshrl.u32 %v8072, 7
    %v8074 = vsub.s32 %v8071, %v8073
    %v8075 = vrot.slane %v8066, %v8074
    %v8077 = vunpack.c.l.s4 1983009808
    %v8078 = vunpack.c.0.s8 %v8077
    %v8079 = vlaneseq
    %v8080 = vshrl.u32 %v8079, 7
    %v8081 = vsub.s32 %v8078, %v8080
    %v8082 = vrot.slane %v8068, %v8081
    %v8083 = vcombine.high %v8075, %v8075
    %v8084 = vcombine.high %v8082, %v8082
    %v8089 = vmul.f32 %v8055, %v8075
    %v8090 = vmul.f32 %v8056, %v8083
    %v8091 = vmul.f32 %v8057, %v8082
    %v8092 = vmul.f32 %v8058, %v8084
    %v8093 = vmul.f32 %v8059, %v8075
    %v8094 = vmul.f32 %v8060, %v8083
    %v8095 = vmul.f32 %v8061, %v8082
    %v8096 = vmul.f32 %v8062, %v8084
    %v8097 = vlaneseq
    %v8098 = vshrl.u32 %v8097, 7
    %v8099 = vsub.s32 3, %v8098
    %v8100 = vrot.slane %v24, %v8099
    %v8102 = vcombine.high %v8100, %v8100
    %v8104 = vunpack.c.l.s4 1983009808
    %v8105 = vunpack.c.0.s8 %v8104
    %v8106 = vlaneseq
    %v8107 = vshrl.u32 %v8106, 7
    %v8108 = vsub.s32 %v8105, %v8107
    %v8109 = vrot.slane %v8100, %v8108
    %v8111 = vunpack.c.l.s4 1983009808
    %v8112 = vunpack.c.0.s8 %v8111
    %v8113 = vlaneseq
    %v8114 = vshrl.u32 %v8113, 7
    %v8115 = vsub.s32 %v8112, %v8114
    %v8116 = vrot.slane %v8102, %v8115
    %v8117 = vcombine.high %v8109, %v8109
    %v8118 = vcombine.high %v8116, %v8116
    %v8123 = vadd.f32 %v8089, %v8109
    %v8124 = vadd.f32 %v8090, %v8117
    %v8125 = vadd.f32 %v8091, %v8116
    %v8126 = vadd.f32 %v8092, %v8118
    %v8127 = vadd.f32 %v8093, %v8109
    %v8128 = vadd.f32 %v8094, %v8117
    %v8129 = vadd.f32 %v8095, %v8116
    %v8130 = vadd.f32 %v8096, %v8118
    %vm8131 = vcmask 254976
    %8132 = vst.msk [vmem:[#allocation2] sm:$0x3] %vm8131, %v8123
    %8133 = vst.msk [vmem:[#allocation2 + $0x2] sm:$0x3] %vm8131, %v8124
    %8134 = vst.msk [vmem:[#allocation2 + $0x4] sm:$0x3] %vm8131, %v8125
    %8135 = vst.msk [vmem:[#allocation2 + $0x6] sm:$0x3] %vm8131, %v8126
    %8136 = vst.msk [vmem:[#allocation2 + $0x8] sm:$0x3] %vm8131, %v8127
    %8137 = vst.msk [vmem:[#allocation2 + $0xa] sm:$0x3] %vm8131, %v8128
    %8138 = vst.msk [vmem:[#allocation2 + $0xc] sm:$0x3] %vm8131, %v8129
    %8139 = vst.msk [vmem:[#allocation2 + $0xe] sm:$0x3] %vm8131, %v8130
    // Predicated region
    $region22: #{tpu_custom_call.1} parent=1 // pred_check
      _
    $region23: #{tpu_custom_call.1} parent=1 // pred_check_branch
      %8141 = sbr.rel (0) target = $region25
    $region24: #{tpu_custom_call.1} parent=1 // pred_region
      %s8143 = ssub.s32 256, 256
      %8144 = vsyncadd [#allocation3], %s8143
      %s8145 = sshll.u32 [#allocation2], 4
      %s8146 = int_to_ptr.vmem [resolvable:$true] %s8145
      %8151 = dma.vmem_to_hbm [thread:$0]  %s8146, 256, %s5, [#allocation3], 32, 32, 2
    $region25: #{tpu_custom_call.1} parent=1 // pred_fallthru
      _
    // Predicated region
    $region26: #{tpu_custom_call.1} parent=1 // pred_check
      _
    $region27: #{tpu_custom_call.1} parent=1 // pred_check_branch
      %8153 = sbr.rel (0) target = $region29
    $region28: #{tpu_custom_call.1} parent=1 // pred_region
      %8154 = dma.done [#allocation3], 256
    $region29: #{tpu_custom_call.1} parent=1 // pred_fallthru
      _
    %8155 = vsyncpa [#allocation3], 1

</llo_original>
